<compile_context>
chip_gen: v5e
topology: v5e:2x2
jax: 0.10.0
libtpu: 0.0.40
codegen_flags: <defaults>
</compile_context>

<pallas_src>
import jax
import jax.numpy as jnp
from jax import lax
from jax.experimental import pallas as pl
from jax.experimental.pallas import tpu as pltpu


def _round_up(n, m):
    return ((n + m - 1) // m) * m


def _pick_row_tile(m, cap):
    """Row tile: multiple of 8, <= cap, and >= 2 grid steps whenever m allows
    (keeps both v7x TensorCores busy; neutral on single-TC v5e/v6e)."""
    t = _round_up(pl.cdiv(m, 2), 8)
    return max(8, min(t, cap))


def _vmem_limit(*byte_counts):
    """Scoped-VMEM request: ~1.25x the actual block bytes plus headroom,
    capped at 40 MiB (v7x physical VMEM is 64 MiB/TC; v5e/v6e have 128 MiB)."""
    total = sum(int(b) for b in byte_counts)
    return int(min(max(int(total * 1.25) + (4 << 20), 12 << 20), 40 << 20))


# ---------------------------------------------------------------------------
# In-kernel math
# ---------------------------------------------------------------------------
def _mish_f32(x):
    # mish(x) = x * tanh(softplus(x)) = x * n/(n+2),  n = e*(e+2),  e = exp(x).
    # One EUP exp + approx reciprocal; the clamp keeps exp finite (mish(x)~=x
    # for x > 20 anyway).  All activation math stays in f32 (v5e has no bf16
    # VPU/EUP), only the MXU operands are bf16.
    e = jnp.exp(jnp.minimum(x, 20.0))
    n = e * (e + 2.0)
    return x * n * pl.reciprocal(n + 2.0, approx=True)


def _mm_bias_mish_kernel(x_ref, w_ref, b_ref, o_ref):
    # bf16 operands -> MXU, f32 accumulate; bias-add + Mish in f32; bf16 out.
    acc = jnp.dot(x_ref[...], w_ref[...], preferred_element_type=jnp.float32)
    o_ref[...] = _mish_f32(acc + b_ref[...]).astype(o_ref.dtype)


def _fc_head_kernel(x_ref, w1_ref, b1_ref, w2_ref, b2_ref, o_ref):
    # Fused Linear(3136->512)+Mish -> Linear(512->1); hidden stays in VMEM.
    h = jnp.dot(x_ref[...], w1_ref[...], preferred_element_type=jnp.float32)
    h = _mish_f32(h + b1_ref[...]).astype(jnp.bfloat16)
    o = jnp.dot(h, w2_ref[...], preferred_element_type=jnp.float32)
    o_ref[...] = (o + b2_ref[...]).astype(o_ref.dtype)


# ---------------------------------------------------------------------------
# Pallas wrappers
# ---------------------------------------------------------------------------
def matmul_bias_mish(x, w, b, *, row_cap=2048):
    """x: (M, K) bf16, w: (K, N) bf16 (VMEM-resident), b: (1, N) f32.
    Returns (M, N) bf16 (no row/channel padding leaks to the caller)."""
    M, K = x.shape
    K2, N = w.shape
    assert K == K2
    Mr = M
    if Mr < 8:                          # micro-batch guard only; convs never hit it
        x = jnp.pad(x, ((0, 8 - Mr), (0, 0)))
        Mr = 8
    TM = _pick_row_tile(Mr, row_cap)
    grid = (pl.cdiv(Mr, TM),)
    vmem = _vmem_limit(2 * TM * K * 2,            # double-buffered x tiles (bf16)
                       2 * (K * N * 2 + N * 4),   # resident weight + bias
                       2 * TM * N * 2,            # double-buffered out tiles (bf16)
                       4 * TM * N * 4)            # f32 accumulator / Mish temps
    cost = pl.CostEstimate(
        flops=2 * Mr * K * N,
        transcendentals=Mr * N,
        bytes_accessed=Mr * K * 2 + K * N * 2 + N * 4 + Mr * N * 2)
    out = pl.pallas_call(
        _mm_bias_mish_kernel,
        out_shape=jax.ShapeDtypeStruct((Mr, N), jnp.bfloat16),
        grid=grid,
        in_specs=[
            # TODO(synk): sweep pipeline_mode=pl.Buffered(3) on this input once
            # the target jax version is pinned (MXU work per tile is short).
            pl.BlockSpec((TM, K), lambda i: (i, 0)),
            pl.BlockSpec((K, N), lambda i: (0, 0)),   # weight stays resident
            pl.BlockSpec((1, N), lambda i: (0, 0)),
        ],
        out_specs=pl.BlockSpec((TM, N), lambda i: (i, 0)),
        compiler_params=pltpu.CompilerParams(
            dimension_semantics=("parallel",), vmem_limit_bytes=vmem),
        cost_estimate=cost,
    )(x, w, b)
    return out[:M] if Mr != M else out


def fc_head(x, w1, b1, w2, b2, *, row_cap=1024):
    """Fused FC head: x (B, 3136) bf16 -> (B,) f32.  row_cap=1024 keeps the
    working set comfortably inside v7x's 64 MiB VMEM (fine on v5e/v6e too)."""
    B, K = x.shape
    H = w1.shape[1]          # 512
    No = w2.shape[1]         # 128 (true N=1, lane-padded once at prep time)
    Br = B
    if Br < 8:
        x = jnp.pad(x, ((0, 8 - Br), (0, 0)))
        Br = 8
    TB = _pick_row_tile(Br, row_cap)
    grid = (pl.cdiv(Br, TB),)
    vmem = _vmem_limit(2 * TB * K * 2,
                       2 * (K * H * 2 + H * 4 + H * No * 2 + No * 4),
                       2 * TB * No * 4,
                       2 * TB * H * 4)            # hidden + accumulator (f32)
    cost = pl.CostEstimate(
        flops=2 * Br * (K * H + H * No),
        transcendentals=Br * H,
        bytes_accessed=Br * K * 2 + K * H * 2 + H * No * 2 + Br * No * 4)
    out = pl.pallas_call(
        _fc_head_kernel,
        out_shape=jax.ShapeDtypeStruct((Br, No), jnp.float32),
        grid=grid,
        in_specs=[
            pl.BlockSpec((TB, K), lambda i: (i, 0)),
            pl.BlockSpec((K, H), lambda i: (0, 0)),
            pl.BlockSpec((1, H), lambda i: (0, 0)),
            pl.BlockSpec((H, No), lambda i: (0, 0)),
            pl.BlockSpec((1, No), lambda i: (0, 0)),
        ],
        out_specs=pl.BlockSpec((TB, No), lambda i: (i, 0)),
        compiler_params=pltpu.CompilerParams(
            dimension_semantics=("parallel",), vmem_limit_bytes=vmem),
        cost_estimate=cost,
    )(x, w1, b1, w2, b2)
    return out[:B, 0]


# ---------------------------------------------------------------------------
# Conv-as-im2col glue (plain JAX, gather-free); hot path is the Pallas matmul.
# ---------------------------------------------------------------------------
def _im2col(x_nhwc, k, s):
    """Patch extraction via k*k static strided slices (no XLA gather).
    Last axis ordered (ky, kx, c) to match the weight-row order in prepare_params."""
    B, H, W, C = x_nhwc.shape
    Ho = (H - k) // s + 1
    Wo = (W - k) // s + 1
    cols = []
    for ky in range(k):
        for kx in range(k):
            sl = lax.slice(x_nhwc,
                           (0, ky, kx, 0),
                           (B, ky + s * (Ho - 1) + 1, kx + s * (Wo - 1) + 1, C),
                           (1, s, s, 1))
            cols.append(sl)                       # (B, Ho, Wo, C)
    patches = jnp.concatenate(cols, axis=-1)      # (B, Ho, Wo, k*k*C)
    return patches.reshape(B * Ho * Wo, k * k * C), Ho, Wo


def conv2d_mish(x_nhwc, w_mat, b_row, *, k, stride):
    B = x_nhwc.shape[0]
    cout = w_mat.shape[1]                 # static: read from the weight shape
    patches, Ho, Wo = _im2col(x_nhwc, k, stride)
    out = matmul_bias_mish(patches, w_mat, b_row)    # (B*Ho*Wo, cout), no slicing
    return out.reshape(B, Ho, Wo, cout)


# ---------------------------------------------------------------------------
# Params: synthetic PyTorch-layout init + one-time hoisted preparation
# ---------------------------------------------------------------------------
def init_params(key):
    ks = jax.random.split(key, 10)

    def conv_p(k1, k2, o, c, ksz):
        fan_in = c * ksz * ksz
        w = jax.random.normal(k1, (o, c, ksz, ksz), jnp.float32) / jnp.sqrt(fan_in)
        b = jax.random.normal(k2, (o,), jnp.float32) * 0.01
        return w, b

    def lin_p(k1, k2, o, i):
        w = jax.random.normal(k1, (o, i), jnp.float32) / jnp.sqrt(i)   # (out, in)
        b = jax.random.normal(k2, (o,), jnp.float32) * 0.01
        return w, b

    return {
        "c1": conv_p(ks[0], ks[1], 32, 1, 8),
        "c2": conv_p(ks[2], ks[3], 64, 32, 4),
        "c3": conv_p(ks[4], ks[5], 64, 64, 3),
        "fc1": lin_p(ks[6], ks[7], 512, 64 * 7 * 7),
        "fc2": lin_p(ks[8], ks[9], 1, 512),
    }


def prepare_params(params):
    """One-time weight prep (transposes, reshapes, bf16 casts), hoisted out of
    the hot path.  Returned pytree contains only arrays (safe to pass to jit)."""
    def conv_prep(w, b):
        o, cin, kh, kw = w.shape
        # rows ordered (ky, kx, ci) -> matches _im2col's patch-column order
        wm = jnp.transpose(w, (2, 3, 1, 0)).reshape(kh * kw * cin, o)
        return wm.astype(jnp.bfloat16), b.astype(jnp.float32).reshape(1, o)

    c1w, c1b = conv_prep(*params["c1"])
    c2w, c2b = conv_prep(*params["c2"])
    c3w, c3b = conv_prep(*params["c3"])

    # fc1: permute rows from PyTorch (C,H,W) flatten order to NHWC flatten
    # order so no activation transpose is needed before the FC head.
    w1, b1 = params["fc1"]                                   # (512, 3136), (512,)
    w1m = jnp.transpose(w1.reshape(512, 64, 7, 7), (2, 3, 1, 0))
    w1m = w1m.reshape(64 * 7 * 7, 512).astype(jnp.bfloat16)  # (3136, 512)
    b1r = b1.astype(jnp.float32).reshape(1, 512)

    # fc2: (1, 512) -> (512, 128) lane-padded once (true N=1 value head).
    w2, b2 = params["fc2"]
    w2m = jnp.pad(w2.T, ((0, 0), (0, 127))).astype(jnp.bfloat16)
    b2r = jnp.pad(b2, ((0, 127),)).astype(jnp.float32).reshape(1, 128)

    return {"c1w": c1w, "c1b": c1b, "c2w": c2w, "c2b": c2b,
            "c3w": c3w, "c3b": c3b,
            "fc1w": w1m, "fc1b": b1r, "fc2w": w2m, "fc2b": b2r}


# ---------------------------------------------------------------------------
# Full forward
# ---------------------------------------------------------------------------
def value_network_forward(prep, x_nchw):
    x = jnp.transpose(x_nchw, (0, 2, 3, 1)).astype(jnp.bfloat16)     # NCHW -> NHWC
    x = conv2d_mish(x, prep["c1w"], prep["c1b"], k=8, stride=4)      # (B,20,20,32)
    x = conv2d_mish(x, prep["c2w"], prep["c2b"], k=4, stride=2)      # (B,9,9,64)
    x = conv2d_mish(x, prep["c3w"], prep["c3b"], k=3, stride=1)      # (B,7,7,64)
    B = x.shape[0]
    x = x.reshape(B, 64 * 7 * 7)   # NHWC flatten (fc1 rows pre-permuted to match)
    return fc_head(x, prep["fc1w"], prep["fc1b"], prep["fc2w"], prep["fc2b"])  # (B,)


if __name__ == "__main__":
    key = jax.random.PRNGKey(0)
    pkey, xkey = jax.random.split(key)
    params = init_params(pkey)
    prep = prepare_params(params)          # hoisted, one-time weight prep
    # 84x84 input is implied by Linear(64*7*7, 512) with this conv stack.
    x = jax.random.normal(xkey, (2, 1, 84, 84), jnp.float32)

    fwd = jax.jit(value_network_forward)
    out = jax.block_until_ready(fwd(prep, x))
    assert out.shape == (2,), out.shape
    assert bool(jnp.all(jnp.isfinite(out)))
    print("KERNEL_OK")
</pallas_src>

<mosaic_0001>
module attributes {stable_mosaic.version = 11 : i64} {
  func.func @_mm_bias_mish_kernel(%arg0: i32, %arg1: memref<400x64xbf16, #tpu.memory_space<vmem>>, %arg2: memref<64x32xbf16, #tpu.memory_space<vmem>>, %arg3: memref<1x32xf32, #tpu.memory_space<vmem>>, %arg4: memref<400x32xbf16, #tpu.memory_space<vmem>>) attributes {dimension_semantics = [#tpu.dimension_semantics<parallel>], iteration_bounds = array<i64: 2>, scalar_prefetch = 0 : i64, scratch_operands = 0 : i64, tpu.core_type = #tpu.core_type<tc>, window_params = [{transform_indices = @transform_0, window_bounds = array<i64: 400, 64>}, {pipeline_mode = #tpu.pipeline_mode<synchronous>, transform_indices = @transform_1, window_bounds = array<i64: 64, 32>}, {pipeline_mode = #tpu.pipeline_mode<synchronous>, transform_indices = @transform_2, window_bounds = array<i64: 1, 32>}, {transform_indices = @transform_3, window_bounds = array<i64: 400, 32>}]} {
    %c0 = arith.constant 0 : index
    %c0_0 = arith.constant 0 : index
    %0 = vector.load %arg1[%c0, %c0_0] : memref<400x64xbf16, #tpu.memory_space<vmem>>, vector<400x64xbf16>
    %c0_1 = arith.constant 0 : index
    %c0_2 = arith.constant 0 : index
    %1 = vector.load %arg2[%c0_1, %c0_2] : memref<64x32xbf16, #tpu.memory_space<vmem>>, vector<64x32xbf16>
    %cst = arith.constant dense<0.000000e+00> : vector<400x32xf32>
    %2 = tpu.matmul %0, %1, %cst {dimension_numbers = #tpu.dot_dimension_numbers<[1], [0], [0], [1], [0, 0, 1, 1], [], []>} : vector<400x64xbf16>, vector<64x32xbf16>, vector<400x32xf32> -> vector<400x32xf32>
    %c0_3 = arith.constant 0 : index
    %c0_4 = arith.constant 0 : index
    %3 = vector.load %arg3[%c0_3, %c0_4] : memref<1x32xf32, #tpu.memory_space<vmem>>, vector<1x32xf32>
    %4 = vector.broadcast %3 : vector<1x32xf32> to vector<400x32xf32>
    %5 = arith.addf %2, %4 : vector<400x32xf32>
    %cst_5 = arith.constant 2.000000e+01 : f32
    %6 = vector.broadcast %cst_5 : f32 to vector<400x32xf32>
    %7 = arith.minimumf %5, %6 : vector<400x32xf32>
    %8 = math.exp %7 : vector<400x32xf32>
    %cst_6 = arith.constant 2.000000e+00 : f32
    %9 = vector.broadcast %cst_6 : f32 to vector<400x32xf32>
    %10 = arith.addf %8, %9 : vector<400x32xf32>
    %11 = arith.mulf %8, %10 : vector<400x32xf32>
    %12 = arith.mulf %5, %11 : vector<400x32xf32>
    %cst_7 = arith.constant 2.000000e+00 : f32
    %13 = vector.broadcast %cst_7 : f32 to vector<400x32xf32>
    %14 = arith.addf %11, %13 : vector<400x32xf32>
    %15 = tpu.reciprocal %14 {approx = true} : vector<400x32xf32> -> vector<400x32xf32>
    %16 = arith.mulf %12, %15 : vector<400x32xf32>
    %17 = arith.truncf %16 : vector<400x32xf32> to vector<400x32xbf16>
    %c0_8 = arith.constant 0 : index
    %c0_9 = arith.constant 0 : index
    %18 = vector.load %arg4[%c0_8, %c0_9] : memref<400x32xbf16, #tpu.memory_space<vmem>>, vector<400x32xbf16>
    tpu.vector_store %arg4[%c0_8, %c0_9], %17 {strides = array<i32>} : memref<400x32xbf16, #tpu.memory_space<vmem>>, vector<400x32xbf16>,
    return
  }
  func.func @transform_0(%arg0: i32) -> (i32, i32) {
    %c0_i32 = arith.constant 0 : i32
    %c0_i32_0 = arith.constant 0 : i32
    return %arg0, %c0_i32 : i32, i32
  }
  func.func @transform_1(%arg0: i32) -> (i32, i32) {
    %c0_i32 = arith.constant 0 : i32
    %c0_i32_0 = arith.constant 0 : i32
    %c0_i32_1 = arith.constant 0 : i32
    return %c0_i32, %c0_i32_0 : i32, i32
  }
  func.func @transform_2(%arg0: i32) -> (i32, i32) {
    %c0_i32 = arith.constant 0 : i32
    %c0_i32_0 = arith.constant 0 : i32
    %c0_i32_1 = arith.constant 0 : i32
    return %c0_i32, %c0_i32_0 : i32, i32
  }
  func.func @transform_3(%arg0: i32) -> (i32, i32) {
    %c0_i32 = arith.constant 0 : i32
    %c0_i32_0 = arith.constant 0 : i32
    return %arg0, %c0_i32 : i32, i32
  }
}

module attributes {stable_mosaic.version = 11 : i64} {
  func.func @_mm_bias_mish_kernel(%arg0: i32, %arg1: memref<88x512xbf16, #tpu.memory_space<vmem>>, %arg2: memref<512x64xbf16, #tpu.memory_space<vmem>>, %arg3: memref<1x64xf32, #tpu.memory_space<vmem>>, %arg4: memref<88x64xbf16, #tpu.memory_space<vmem>>) attributes {dimension_semantics = [#tpu.dimension_semantics<parallel>], iteration_bounds = array<i64: 2>, scalar_prefetch = 0 : i64, scratch_operands = 0 : i64, tpu.core_type = #tpu.core_type<tc>, window_params = [{transform_indices = @transform_0, window_bounds = array<i64: 88, 512>}, {pipeline_mode = #tpu.pipeline_mode<synchronous>, transform_indices = @transform_1, window_bounds = array<i64: 512, 64>}, {pipeline_mode = #tpu.pipeline_mode<synchronous>, transform_indices = @transform_2, window_bounds = array<i64: 1, 64>}, {transform_indices = @transform_3, window_bounds = array<i64: 88, 64>}]} {
    %c0 = arith.constant 0 : index
    %c0_0 = arith.constant 0 : index
    %0 = vector.load %arg1[%c0, %c0_0] : memref<88x512xbf16, #tpu.memory_space<vmem>>, vector<88x512xbf16>
    %c0_1 = arith.constant 0 : index
    %c0_2 = arith.constant 0 : index
    %1 = vector.load %arg2[%c0_1, %c0_2] : memref<512x64xbf16, #tpu.memory_space<vmem>>, vector<512x64xbf16>
    %cst = arith.constant dense<0.000000e+00> : vector<88x64xf32>
    %2 = tpu.matmul %0, %1, %cst {dimension_numbers = #tpu.dot_dimension_numbers<[1], [0], [0], [1], [0, 0, 1, 1], [], []>} : vector<88x512xbf16>, vector<512x64xbf16>, vector<88x64xf32> -> vector<88x64xf32>
    %c0_3 = arith.constant 0 : index
    %c0_4 = arith.constant 0 : index
    %3 = vector.load %arg3[%c0_3, %c0_4] : memref<1x64xf32, #tpu.memory_space<vmem>>, vector<1x64xf32>
    %4 = vector.broadcast %3 : vector<1x64xf32> to vector<88x64xf32>
    %5 = arith.addf %2, %4 : vector<88x64xf32>
    %cst_5 = arith.constant 2.000000e+01 : f32
    %6 = vector.broadcast %cst_5 : f32 to vector<88x64xf32>
    %7 = arith.minimumf %5, %6 : vector<88x64xf32>
    %8 = math.exp %7 : vector<88x64xf32>
    %cst_6 = arith.constant 2.000000e+00 : f32
    %9 = vector.broadcast %cst_6 : f32 to vector<88x64xf32>
    %10 = arith.addf %8, %9 : vector<88x64xf32>
    %11 = arith.mulf %8, %10 : vector<88x64xf32>
    %12 = arith.mulf %5, %11 : vector<88x64xf32>
    %cst_7 = arith.constant 2.000000e+00 : f32
    %13 = vector.broadcast %cst_7 : f32 to vector<88x64xf32>
    %14 = arith.addf %11, %13 : vector<88x64xf32>
    %15 = tpu.reciprocal %14 {approx = true} : vector<88x64xf32> -> vector<88x64xf32>
    %16 = arith.mulf %12, %15 : vector<88x64xf32>
    %17 = arith.truncf %16 : vector<88x64xf32> to vector<88x64xbf16>
    %c0_8 = arith.constant 0 : index
    %c0_9 = arith.constant 0 : index
    %18 = vector.load %arg4[%c0_8, %c0_9] : memref<88x64xbf16, #tpu.memory_space<vmem>>, vector<88x64xbf16>
    tpu.vector_store %arg4[%c0_8, %c0_9], %17 {strides = array<i32>} : memref<88x64xbf16, #tpu.memory_space<vmem>>, vector<88x64xbf16>,
    return
  }
  func.func @transform_0(%arg0: i32) -> (i32, i32) {
    %c0_i32 = arith.constant 0 : i32
    %c0_i32_0 = arith.constant 0 : i32
    return %arg0, %c0_i32 : i32, i32
  }
  func.func @transform_1(%arg0: i32) -> (i32, i32) {
    %c0_i32 = arith.constant 0 : i32
    %c0_i32_0 = arith.constant 0 : i32
    %c0_i32_1 = arith.constant 0 : i32
    return %c0_i32, %c0_i32_0 : i32, i32
  }
  func.func @transform_2(%arg0: i32) -> (i32, i32) {
    %c0_i32 = arith.constant 0 : i32
    %c0_i32_0 = arith.constant 0 : i32
    %c0_i32_1 = arith.constant 0 : i32
    return %c0_i32, %c0_i32_0 : i32, i32
  }
  func.func @transform_3(%arg0: i32) -> (i32, i32) {
    %c0_i32 = arith.constant 0 : i32
    %c0_i32_0 = arith.constant 0 : i32
    return %arg0, %c0_i32 : i32, i32
  }
}

module attributes {stable_mosaic.version = 11 : i64} {
  func.func @_mm_bias_mish_kernel(%arg0: i32, %arg1: memref<56x576xbf16, #tpu.memory_space<vmem>>, %arg2: memref<576x64xbf16, #tpu.memory_space<vmem>>, %arg3: memref<1x64xf32, #tpu.memory_space<vmem>>, %arg4: memref<56x64xbf16, #tpu.memory_space<vmem>>) attributes {dimension_semantics = [#tpu.dimension_semantics<parallel>], iteration_bounds = array<i64: 2>, scalar_prefetch = 0 : i64, scratch_operands = 0 : i64, tpu.core_type = #tpu.core_type<tc>, window_params = [{transform_indices = @transform_0, window_bounds = array<i64: 56, 576>}, {pipeline_mode = #tpu.pipeline_mode<synchronous>, transform_indices = @transform_1, window_bounds = array<i64: 576, 64>}, {pipeline_mode = #tpu.pipeline_mode<synchronous>, transform_indices = @transform_2, window_bounds = array<i64: 1, 64>}, {transform_indices = @transform_3, window_bounds = array<i64: 56, 64>}]} {
    %c0 = arith.constant 0 : index
    %c0_0 = arith.constant 0 : index
    %0 = vector.load %arg1[%c0, %c0_0] : memref<56x576xbf16, #tpu.memory_space<vmem>>, vector<56x576xbf16>
    %c0_1 = arith.constant 0 : index
    %c0_2 = arith.constant 0 : index
    %1 = vector.load %arg2[%c0_1, %c0_2] : memref<576x64xbf16, #tpu.memory_space<vmem>>, vector<576x64xbf16>
    %cst = arith.constant dense<0.000000e+00> : vector<56x64xf32>
    %2 = tpu.matmul %0, %1, %cst {dimension_numbers = #tpu.dot_dimension_numbers<[1], [0], [0], [1], [0, 0, 1, 1], [], []>} : vector<56x576xbf16>, vector<576x64xbf16>, vector<56x64xf32> -> vector<56x64xf32>
    %c0_3 = arith.constant 0 : index
    %c0_4 = arith.constant 0 : index
    %3 = vector.load %arg3[%c0_3, %c0_4] : memref<1x64xf32, #tpu.memory_space<vmem>>, vector<1x64xf32>
    %4 = vector.broadcast %3 : vector<1x64xf32> to vector<56x64xf32>
    %5 = arith.addf %2, %4 : vector<56x64xf32>
    %cst_5 = arith.constant 2.000000e+01 : f32
    %6 = vector.broadcast %cst_5 : f32 to vector<56x64xf32>
    %7 = arith.minimumf %5, %6 : vector<56x64xf32>
    %8 = math.exp %7 : vector<56x64xf32>
    %cst_6 = arith.constant 2.000000e+00 : f32
    %9 = vector.broadcast %cst_6 : f32 to vector<56x64xf32>
    %10 = arith.addf %8, %9 : vector<56x64xf32>
    %11 = arith.mulf %8, %10 : vector<56x64xf32>
    %12 = arith.mulf %5, %11 : vector<56x64xf32>
    %cst_7 = arith.constant 2.000000e+00 : f32
    %13 = vector.broadcast %cst_7 : f32 to vector<56x64xf32>
    %14 = arith.addf %11, %13 : vector<56x64xf32>
    %15 = tpu.reciprocal %14 {approx = true} : vector<56x64xf32> -> vector<56x64xf32>
    %16 = arith.mulf %12, %15 : vector<56x64xf32>
    %17 = arith.truncf %16 : vector<56x64xf32> to vector<56x64xbf16>
    %c0_8 = arith.constant 0 : index
    %c0_9 = arith.constant 0 : index
    %18 = vector.load %arg4[%c0_8, %c0_9] : memref<56x64xbf16, #tpu.memory_space<vmem>>, vector<56x64xbf16>
    tpu.vector_store %arg4[%c0_8, %c0_9], %17 {strides = array<i32>} : memref<56x64xbf16, #tpu.memory_space<vmem>>, vector<56x64xbf16>,
    return
  }
  func.func @transform_0(%arg0: i32) -> (i32, i32) {
    %c0_i32 = arith.constant 0 : i32
    %c0_i32_0 = arith.constant 0 : i32
    return %arg0, %c0_i32 : i32, i32
  }
  func.func @transform_1(%arg0: i32) -> (i32, i32) {
    %c0_i32 = arith.constant 0 : i32
    %c0_i32_0 = arith.constant 0 : i32
    %c0_i32_1 = arith.constant 0 : i32
    return %c0_i32, %c0_i32_0 : i32, i32
  }
  func.func @transform_2(%arg0: i32) -> (i32, i32) {
    %c0_i32 = arith.constant 0 : i32
    %c0_i32_0 = arith.constant 0 : i32
    %c0_i32_1 = arith.constant 0 : i32
    return %c0_i32, %c0_i32_0 : i32, i32
  }
  func.func @transform_3(%arg0: i32) -> (i32, i32) {
    %c0_i32 = arith.constant 0 : i32
    %c0_i32_0 = arith.constant 0 : i32
    return %arg0, %c0_i32 : i32, i32
  }
}

module attributes {stable_mosaic.version = 11 : i64} {
  func.func @_fc_head_kernel(%arg0: i32, %arg1: memref<8x3136xbf16, #tpu.memory_space<vmem>>, %arg2: memref<3136x512xbf16, #tpu.memory_space<vmem>>, %arg3: memref<1x512xf32, #tpu.memory_space<vmem>>, %arg4: memref<512x128xbf16, #tpu.memory_space<vmem>>, %arg5: memref<1x128xf32, #tpu.memory_space<vmem>>, %arg6: memref<8x128xf32, #tpu.memory_space<vmem>>) attributes {dimension_semantics = [#tpu.dimension_semantics<parallel>], iteration_bounds = array<i64: 1>, scalar_prefetch = 0 : i64, scratch_operands = 0 : i64, tpu.core_type = #tpu.core_type<tc>, window_params = [{transform_indices = @transform_0, window_bounds = array<i64: 8, 3136>}, {pipeline_mode = #tpu.pipeline_mode<synchronous>, transform_indices = @transform_1, window_bounds = array<i64: 3136, 512>}, {pipeline_mode = #tpu.pipeline_mode<synchronous>, transform_indices = @transform_2, window_bounds = array<i64: 1, 512>}, {pipeline_mode = #tpu.pipeline_mode<synchronous>, transform_indices = @transform_3, window_bounds = array<i64: 512, 128>}, {pipeline_mode = #tpu.pipeline_mode<synchronous>, transform_indices = @transform_4, window_bounds = array<i64: 1, 128>}, {transform_indices = @transform_5, window_bounds = array<i64: 8, 128>}]} {
    %c0 = arith.constant 0 : index
    %c0_0 = arith.constant 0 : index
    %0 = vector.load %arg1[%c0, %c0_0] : memref<8x3136xbf16, #tpu.memory_space<vmem>>, vector<8x3136xbf16>
    %c0_1 = arith.constant 0 : index
    %c0_2 = arith.constant 0 : index
    %1 = vector.load %arg2[%c0_1, %c0_2] : memref<3136x512xbf16, #tpu.memory_space<vmem>>, vector<3136x512xbf16>
    %cst = arith.constant dense<0.000000e+00> : vector<8x512xf32>
    %2 = tpu.matmul %0, %1, %cst {dimension_numbers = #tpu.dot_dimension_numbers<[1], [0], [0], [1], [0, 0, 1, 1], [], []>} : vector<8x3136xbf16>, vector<3136x512xbf16>, vector<8x512xf32> -> vector<8x512xf32>
    %c0_3 = arith.constant 0 : index
    %c0_4 = arith.constant 0 : index
    %3 = vector.load %arg3[%c0_3, %c0_4] : memref<1x512xf32, #tpu.memory_space<vmem>>, vector<1x512xf32>
    %4 = vector.broadcast %3 : vector<1x512xf32> to vector<8x512xf32>
    %5 = arith.addf %2, %4 : vector<8x512xf32>
    %cst_5 = arith.constant 2.000000e+01 : f32
    %6 = vector.broadcast %cst_5 : f32 to vector<8x512xf32>
    %7 = arith.minimumf %5, %6 : vector<8x512xf32>
    %8 = math.exp %7 : vector<8x512xf32>
    %cst_6 = arith.constant 2.000000e+00 : f32
    %9 = vector.broadcast %cst_6 : f32 to vector<8x512xf32>
    %10 = arith.addf %8, %9 : vector<8x512xf32>
    %11 = arith.mulf %8, %10 : vector<8x512xf32>
    %12 = arith.mulf %5, %11 : vector<8x512xf32>
    %cst_7 = arith.constant 2.000000e+00 : f32
    %13 = vector.broadcast %cst_7 : f32 to vector<8x512xf32>
    %14 = arith.addf %11, %13 : vector<8x512xf32>
    %15 = tpu.reciprocal %14 {approx = true} : vector<8x512xf32> -> vector<8x512xf32>
    %16 = arith.mulf %12, %15 : vector<8x512xf32>
    %17 = arith.truncf %16 : vector<8x512xf32> to vector<8x512xbf16>
    %c0_8 = arith.constant 0 : index
    %c0_9 = arith.constant 0 : index
    %18 = vector.load %arg4[%c0_8, %c0_9] : memref<512x128xbf16, #tpu.memory_space<vmem>>, vector<512x128xbf16>
    %cst_10 = arith.constant dense<0.000000e+00> : vector<8x128xf32>
    %19 = tpu.matmul %17, %18, %cst_10 {dimension_numbers = #tpu.dot_dimension_numbers<[1], [0], [0], [1], [0, 0, 1, 1], [], []>} : vector<8x512xbf16>, vector<512x128xbf16>, vector<8x128xf32> -> vector<8x128xf32>
    %c0_11 = arith.constant 0 : index
    %c0_12 = arith.constant 0 : index
    %20 = vector.load %arg5[%c0_11, %c0_12] : memref<1x128xf32, #tpu.memory_space<vmem>>, vector<1x128xf32>
    %21 = vector.broadcast %20 : vector<1x128xf32> to vector<8x128xf32>
    %22 = arith.addf %19, %21 : vector<8x128xf32>
    %c0_13 = arith.constant 0 : index
    %c0_14 = arith.constant 0 : index
    %23 = vector.load %arg6[%c0_13, %c0_14] : memref<8x128xf32, #tpu.memory_space<vmem>>, vector<8x128xf32>
    tpu.vector_store %arg6[%c0_13, %c0_14], %22 {strides = array<i32>} : memref<8x128xf32, #tpu.memory_space<vmem>>, vector<8x128xf32>,
    return
  }
  func.func @transform_0(%arg0: i32) -> (i32, i32) {
    %c0_i32 = arith.constant 0 : i32
    %c0_i32_0 = arith.constant 0 : i32
    return %arg0, %c0_i32 : i32, i32
  }
  func.func @transform_1(%arg0: i32) -> (i32, i32) {
    %c0_i32 = arith.constant 0 : i32
    %c0_i32_0 = arith.constant 0 : i32
    %c0_i32_1 = arith.constant 0 : i32
    return %c0_i32, %c0_i32_0 : i32, i32
  }
  func.func @transform_2(%arg0: i32) -> (i32, i32) {
    %c0_i32 = arith.constant 0 : i32
    %c0_i32_0 = arith.constant 0 : i32
    %c0_i32_1 = arith.constant 0 : i32
    return %c0_i32, %c0_i32_0 : i32, i32
  }
  func.func @transform_3(%arg0: i32) -> (i32, i32) {
    %c0_i32 = arith.constant 0 : i32
    %c0_i32_0 = arith.constant 0 : i32
    %c0_i32_1 = arith.constant 0 : i32
    return %c0_i32, %c0_i32_0 : i32, i32
  }
  func.func @transform_4(%arg0: i32) -> (i32, i32) {
    %c0_i32 = arith.constant 0 : i32
    %c0_i32_0 = arith.constant 0 : i32
    %c0_i32_1 = arith.constant 0 : i32
    return %c0_i32, %c0_i32_0 : i32, i32
  }
  func.func @transform_5(%arg0: i32) -> (i32, i32) {
    %c0_i32 = arith.constant 0 : i32
    %c0_i32_0 = arith.constant 0 : i32
    return %arg0, %c0_i32 : i32, i32
  }
}

</mosaic_0001>

<llo_original>
// kernel: value_network_forward.4
$region0: #{value_network_forward.4}
  #allocation0 [shape = 'u32[]', space=smem, size = 0x4, offset = 0x4, fixed_abs, tag = 'smem constant byte address 0x4 - core index']
  #allocation1 [shape = 'u32[72,128]{1,0:T(1,128)}', space=vmem, size = 0x9000, scoped, tag = 'internal scratch']
  %s0 = inlined_call_operand.vmem [shape: bf16[800,64], index: 0, kind: input, shape index: {}]
  %s1 = inlined_call_operand.vmem [shape: bf16[64,32], index: 1, kind: input, shape index: {}]
  %s2 = inlined_call_operand.vmem [shape: f32[1,32], index: 2, kind: input, shape index: {}]
  %s3 = inlined_call_operand.vmem [shape: bf16[800,32], index: 3, kind: output, shape index: {}]
  %s4 = sld [smem:[#allocation0]]
  $region45: #{value_network_forward.4} parent=0
    _
  %s6 = ssub.s32 1, %s4
  %s7 = scalar_select 0, %s6, %s4
  loop: start=0, step=1, limit=4
  $region2: #{value_network_forward.4} parent=0 // loop_pre_header
    _
  $region3: #{value_network_forward.4} parent=0 // loop_header
    %s9 = sphi 0, %s13
    %p10 = scmp.ge.s32.totalorder %s9, 4
    %s19 = sphi 0, %s21
    %s22 = sphi 0, %s19
    %s23 = sphi 0, %s22
    %s39 = sphi 0, %s23
    %s43 = sphi 0, %s43
    %s45 = sphi 0, %s43
    %s46 = sphi 0, %s45
    %s60 = sphi 0, %s46
    %s64 = sphi 0, %s64
    %s66 = sphi 0, %s64
    %s67 = sphi 0, %s66
    %s81 = sphi 0, %s67
    %s87 = sphi 0, %s89
    %s90 = sphi 0, %s87
    %s91 = sphi 0, %s90
    %s107 = sphi 0, %s91
  $region4: #{value_network_forward.4} parent=0 // loop_header_branch
    %12 = sbr.rel (%p10) target = $region8
  $region5: #{value_network_forward.4} parent=0 // loop_body
    %s14 = ssub.s32 %s9, 1
    %s15 = ssub.s32 %s9, 2
    %s16 = sadd.s32 %s9, 1
    %s17 = ssub.s32 %s9, %s16
    %p18 = scmp.eq.s32.totalorder %s17, 0
    %s20 = sadd.s32 %s19, 1
    %s21 = scalar_select %p18, %s19, %s20
    %p24 = pneg %p18
    %p25 = scmp.eq.s32.totalorder %s9, 1
    %p26 = por %p24, %p25
    %p27 = scmp.ne.s32.totalorder %s19, %s22
    %p28 = scmp.eq.s32.totalorder %s9, 0
    %p29 = por %p27, %p28
    %p30 = scmp.ne.s32.totalorder %s19, %s22
    %p31 = scmp.eq.s32.totalorder %s14, 1
    %p32 = por %p30, %p31
    %p33 = scmp.ne.s32.totalorder %s22, %s23
    %p34 = scmp.eq.s32.totalorder %s14, 0
    %p35 = por %p33, %p34
    %p36 = scmp.ne.s32.totalorder %s22, %s23
    %p37 = scmp.eq.s32.totalorder %s15, 1
    %p38 = por %p36, %p37
    %p40 = scmp.ne.s32.totalorder %s23, %s39
    %p41 = scmp.eq.s32.totalorder %s15, 0
    %p42 = por %p40, %p41
    %s44 = sadd.s32 %s43, 1
    %p47 = scmp.eq.s32.totalorder %s9, 1
    %p48 = scmp.ne.s32.totalorder %s43, %s45
    %p49 = scmp.eq.s32.totalorder %s9, 0
    %p50 = por %p48, %p49
    %p51 = scmp.ne.s32.totalorder %s43, %s45
    %p52 = scmp.eq.s32.totalorder %s14, 1
    %p53 = por %p51, %p52
    %p54 = scmp.ne.s32.totalorder %s45, %s46
    %p55 = scmp.eq.s32.totalorder %s14, 0
    %p56 = por %p54, %p55
    %p57 = scmp.ne.s32.totalorder %s45, %s46
    %p58 = scmp.eq.s32.totalorder %s15, 1
    %p59 = por %p57, %p58
    %p61 = scmp.ne.s32.totalorder %s46, %s60
    %p62 = scmp.eq.s32.totalorder %s15, 0
    %p63 = por %p61, %p62
    %s65 = sadd.s32 %s64, 1
    %p68 = scmp.eq.s32.totalorder %s9, 1
    %p69 = scmp.ne.s32.totalorder %s64, %s66
    %p70 = scmp.eq.s32.totalorder %s9, 0
    %p71 = por %p69, %p70
    %p72 = scmp.ne.s32.totalorder %s64, %s66
    %p73 = scmp.eq.s32.totalorder %s14, 1
    %p74 = por %p72, %p73
    %p75 = scmp.ne.s32.totalorder %s66, %s67
    %p76 = scmp.eq.s32.totalorder %s14, 0
    %p77 = por %p75, %p76
    %p78 = scmp.ne.s32.totalorder %s66, %s67
    %p79 = scmp.eq.s32.totalorder %s15, 1
    %p80 = por %p78, %p79
    %p82 = scmp.ne.s32.totalorder %s67, %s81
    %p83 = scmp.eq.s32.totalorder %s15, 0
    %p84 = por %p82, %p83
    %s85 = ssub.s32 %s9, %s16
    %p86 = scmp.eq.s32.totalorder %s85, 0
    %s88 = sadd.s32 %s87, 1
    %s89 = scalar_select %p86, %s87, %s88
    %p92 = pneg %p86
    %p93 = scmp.eq.s32.totalorder %s9, 1
    %p94 = por %p92, %p93
    %p95 = scmp.ne.s32.totalorder %s87, %s90
    %p96 = scmp.eq.s32.totalorder %s9, 0
    %p97 = por %p95, %p96
    %p98 = scmp.ne.s32.totalorder %s87, %s90
    %p99 = scmp.eq.s32.totalorder %s14, 1
    %p100 = por %p98, %p99
    %p101 = scmp.ne.s32.totalorder %s90, %s91
    %p102 = scmp.eq.s32.totalorder %s14, 0
    %p103 = por %p101, %p102
    %p104 = scmp.ne.s32.totalorder %s90, %s91
    %p105 = scmp.eq.s32.totalorder %s15, 1
    %p106 = por %p104, %p105
    %p108 = scmp.ne.s32.totalorder %s91, %s107
    %p109 = scmp.eq.s32.totalorder %s15, 0
    %p110 = por %p108, %p109
    %p111 = scmp.le.s32.totalorder 1, %s9
    %p112 = scmp.lt.s32.totalorder %s9, 3
    %p113 = pnand %p111, %p112
    %p114 = pneg %p113
    // Predicated region
    $region9: #{value_network_forward.4} parent=5 // pred_check
      _
    $region10: #{value_network_forward.4} parent=5 // pred_check_branch
      %116 = sbr.rel (%p113) target = $region12
    $region11: #{value_network_forward.4} parent=5 // pred_region
      %s117 = ssub.s32 %s9, 1
      // Predicated region
      $region13: #{value_network_forward.4} parent=11 // pred_check
        %p118 = pneg %p56
      $region14: #{value_network_forward.4} parent=11 // pred_check_branch
        %120 = sbr.rel (%p118) target = $region16
      $region15: #{value_network_forward.4} parent=11 // pred_region
        _
      $region16: #{value_network_forward.4} parent=11 // pred_fallthru
        _
      // Predicated region
      $region17: #{value_network_forward.4} parent=11 // pred_check
        %p121 = pneg %p77
      $region18: #{value_network_forward.4} parent=11 // pred_check_branch
        %123 = sbr.rel (%p121) target = $region20
      $region19: #{value_network_forward.4} parent=11 // pred_region
        _
      $region20: #{value_network_forward.4} parent=11 // pred_fallthru
        _
    $region12: #{value_network_forward.4} parent=5 // pred_fallthru
      _
    %p124 = scmp.lt.s32.totalorder %s9, 2
    // Predicated region
    $region21: #{value_network_forward.4} parent=5 // pred_check
      %p125 = pneg %p124
    $region22: #{value_network_forward.4} parent=5 // pred_check_branch
      %127 = sbr.rel (%p125) target = $region24
    $region23: #{value_network_forward.4} parent=5 // pred_region
      // Predicated region
      $region25: #{value_network_forward.4} parent=23 // pred_check
        %p128 = pneg %p29
      $region26: #{value_network_forward.4} parent=23 // pred_check_branch
        %130 = sbr.rel (%p128) target = $region28
      $region27: #{value_network_forward.4} parent=23 // pred_region
        %s131 = smul.u32 50, %s9
        %p132 = scmp.lt.s32.totalorder %s131, 99
        %s133 = scalar_select %p132, %s131, 99
        %s134 = smul.addr %s133, 4
        %s135 = scalar_lea.vmem %s0, %s134
        %s136 = smul.u32 50, %s9
      $region28: #{value_network_forward.4} parent=23 // pred_fallthru
        _
    $region24: #{value_network_forward.4} parent=5 // pred_fallthru
      _
    %p137 = scmp.le.s32.totalorder 1, %s9
    %p138 = scmp.lt.s32.totalorder %s9, 3
    %p139 = pnand %p137, %p138
    %p140 = pneg %p139
    // Predicated region
    $region29: #{value_network_forward.4} parent=5 // pred_check
      _
    $region30: #{value_network_forward.4} parent=5 // pred_check_branch
      %142 = sbr.rel (%p139) target = $region32
    $region31: #{value_network_forward.4} parent=5 // pred_region
      %s143 = ssub.s32 %s9, 1
      %s144 = smul.u32 50, %s14
      %p145 = scmp.lt.s32.totalorder %s144, 99
      %s146 = scalar_select %p145, %s144, 99
      %s147 = smul.addr %s146, 4
      %s148 = scalar_lea.vmem %s0, %s147
      %p149 = pneg %p35
      %p150 = pneg %p32
      %p151 = pneg %p56
      %p152 = pneg %p53
      %p153 = pneg %p77
      %p154 = pneg %p74
      %p155 = pneg %p103
      %p156 = pneg %p100
      %s157 = smul.u32 50, %s14
      %p158 = scmp.lt.s32.totalorder %s157, 99
      %s159 = scalar_select %p158, %s157, 99
      %s160 = smul.addr %s159, 4
      %s161 = scalar_lea.vmem %s3, %s160
      %s162 = smul.u32 50, %s14
      %p163 = scmp.lt.s32.totalorder %s162, 99
      %s164 = scalar_select %p163, %s162, 99
      %s165 = smul.addr %s164, 4
      %s166 = scalar_lea.vmem %s0, %s165
      %s167 = smul.u32 50, %s14
      %s168 = smul.u32 50, %s14
      %p169 = scmp.lt.s32.totalorder %s168, 99
      %s170 = scalar_select %p169, %s168, 99
      %s171 = smul.addr %s170, 4
      %s172 = scalar_lea.vmem %s3, %s171
      %s173 = smul.u32 50, %s14
      %v175 = vld [vmem:[%s166] sm:$0xf]
      %v176 = vld [vmem:[%s166 + $0x4] sm:$0xf]
      %v177 = vld [vmem:[%s166 + $0x8] sm:$0xf]
      %v178 = vld [vmem:[%s166 + $0xc] sm:$0xf]
      %v179 = vld [vmem:[%s166 + $0x10] sm:$0xf]
      %v180 = vld [vmem:[%s166 + $0x14] sm:$0xf]
      %v181 = vld [vmem:[%s166 + $0x18] sm:$0xf]
      %v182 = vld [vmem:[%s166 + $0x1c] sm:$0xf]
      %v183 = vld [vmem:[%s166 + $0x20] sm:$0xf]
      %v184 = vld [vmem:[%s166 + $0x24] sm:$0xf]
      %v185 = vld [vmem:[%s166 + $0x28] sm:$0xf]
      %v186 = vld [vmem:[%s166 + $0x2c] sm:$0xf]
      %v187 = vld [vmem:[%s166 + $0x30] sm:$0xf]
      %v188 = vld [vmem:[%s166 + $0x34] sm:$0xf]
      %v189 = vld [vmem:[%s166 + $0x38] sm:$0xf]
      %v190 = vld [vmem:[%s166 + $0x3c] sm:$0xf]
      %v191 = vld [vmem:[%s166 + $0x40] sm:$0xf]
      %v192 = vld [vmem:[%s166 + $0x44] sm:$0xf]
      %v193 = vld [vmem:[%s166 + $0x48] sm:$0xf]
      %v194 = vld [vmem:[%s166 + $0x4c] sm:$0xf]
      %v195 = vld [vmem:[%s166 + $0x50] sm:$0xf]
      %v196 = vld [vmem:[%s166 + $0x54] sm:$0xf]
      %v197 = vld [vmem:[%s166 + $0x58] sm:$0xf]
      %v198 = vld [vmem:[%s166 + $0x5c] sm:$0xf]
      %v199 = vld [vmem:[%s166 + $0x60] sm:$0xf]
      %v200 = vld [vmem:[%s166 + $0x64] sm:$0xf]
      %v201 = vld [vmem:[%s166 + $0x68] sm:$0xf]
      %v202 = vld [vmem:[%s166 + $0x6c] sm:$0xf]
      %v203 = vld [vmem:[%s166 + $0x70] sm:$0xf]
      %v204 = vld [vmem:[%s166 + $0x74] sm:$0xf]
      %v205 = vld [vmem:[%s166 + $0x78] sm:$0xf]
      %v206 = vld [vmem:[%s166 + $0x7c] sm:$0xf]
      %v207 = vld [vmem:[%s166 + $0x80] sm:$0xf]
      %v208 = vld [vmem:[%s166 + $0x84] sm:$0xf]
      %v209 = vld [vmem:[%s166 + $0x88] sm:$0xf]
      %v210 = vld [vmem:[%s166 + $0x8c] sm:$0xf]
      %v211 = vld [vmem:[%s166 + $0x90] sm:$0xf]
      %v212 = vld [vmem:[%s166 + $0x94] sm:$0xf]
      %v213 = vld [vmem:[%s166 + $0x98] sm:$0xf]
      %v214 = vld [vmem:[%s166 + $0x9c] sm:$0xf]
      %v215 = vld [vmem:[%s166 + $0xa0] sm:$0xf]
      %v216 = vld [vmem:[%s166 + $0xa4] sm:$0xf]
      %v217 = vld [vmem:[%s166 + $0xa8] sm:$0xf]
      %v218 = vld [vmem:[%s166 + $0xac] sm:$0xf]
      %v219 = vld [vmem:[%s166 + $0xb0] sm:$0xf]
      %v220 = vld [vmem:[%s166 + $0xb4] sm:$0xf]
      %v221 = vld [vmem:[%s166 + $0xb8] sm:$0xf]
      %v222 = vld [vmem:[%s166 + $0xbc] sm:$0xf]
      %v223 = vld [vmem:[%s166 + $0xc0] sm:$0xf]
      %v224 = vld [vmem:[%s166 + $0xc4] sm:$0xf]
      %v225 = vld [vmem:[%s1] sm:$0xf]
      %v226 = vld [vmem:[%s1 + $0x4] sm:$0xf]
      %v227 = vld [vmem:[%s1 + $0x8] sm:$0xf]
      %v228 = vld [vmem:[%s1 + $0xc] sm:$0xf]
      %v229 = vld [vmem:[%s1 + $0x10] sm:$0xf]
      %v230 = vld [vmem:[%s1 + $0x14] sm:$0xf]
      %v231 = vld [vmem:[%s1 + $0x18] sm:$0xf]
      %v232 = vld [vmem:[%s1 + $0x1c] sm:$0xf]
      %v233 = vld [vmem:[%s2] sm:$0x1]
      %v235 = vperm.slane %v233, 0
      %v287 = vunpack.c.l.b16 %v175
      %v288 = vunpack.c.l.b16 %v176
      %v289 = vunpack.c.l.b16 %v177
      %v290 = vunpack.c.l.b16 %v178
      %v291 = vunpack.c.l.b16 %v179
      %v292 = vunpack.c.l.b16 %v180
      %v293 = vunpack.c.l.b16 %v181
      %v294 = vunpack.c.l.b16 %v182
      %v295 = vunpack.c.l.b16 %v183
      %v296 = vunpack.c.l.b16 %v184
      %v297 = vunpack.c.l.b16 %v185
      %v298 = vunpack.c.l.b16 %v186
      %v299 = vunpack.c.l.b16 %v187
      %v300 = vunpack.c.l.b16 %v188
      %v301 = vunpack.c.l.b16 %v189
      %v302 = vunpack.c.l.b16 %v190
      %v303 = vunpack.c.l.b16 %v191
      %v304 = vunpack.c.l.b16 %v192
      %v305 = vunpack.c.l.b16 %v193
      %v306 = vunpack.c.l.b16 %v194
      %v307 = vunpack.c.l.b16 %v195
      %v308 = vunpack.c.l.b16 %v196
      %v309 = vunpack.c.l.b16 %v197
      %v310 = vunpack.c.l.b16 %v198
      %v311 = vunpack.c.l.b16 %v199
      %v312 = vunpack.c.l.b16 %v200
      %v313 = vunpack.c.l.b16 %v201
      %v314 = vunpack.c.l.b16 %v202
      %v315 = vunpack.c.l.b16 %v203
      %v316 = vunpack.c.l.b16 %v204
      %v317 = vunpack.c.l.b16 %v205
      %v318 = vunpack.c.l.b16 %v206
      %v319 = vunpack.c.l.b16 %v207
      %v320 = vunpack.c.l.b16 %v208
      %v321 = vunpack.c.l.b16 %v209
      %v322 = vunpack.c.l.b16 %v210
      %v323 = vunpack.c.l.b16 %v211
      %v324 = vunpack.c.l.b16 %v212
      %v325 = vunpack.c.l.b16 %v213
      %v326 = vunpack.c.l.b16 %v214
      %v327 = vunpack.c.l.b16 %v215
      %v328 = vunpack.c.l.b16 %v216
      %v329 = vunpack.c.l.b16 %v217
      %v330 = vunpack.c.l.b16 %v218
      %v331 = vunpack.c.l.b16 %v219
      %v332 = vunpack.c.l.b16 %v220
      %v333 = vunpack.c.l.b16 %v221
      %v334 = vunpack.c.l.b16 %v222
      %v335 = vunpack.c.l.b16 %v223
      %v336 = vunpack.c.l.b16 %v224
      %v337 = vpack.c.b16 %v288, %v287
      %v338 = vpack.c.b16 %v290, %v289
      %v339 = vpack.c.b16 %v292, %v291
      %v340 = vpack.c.b16 %v294, %v293
      %v341 = vpack.c.b16 %v296, %v295
      %v342 = vpack.c.b16 %v298, %v297
      %v343 = vpack.c.b16 %v300, %v299
      %v344 = vpack.c.b16 %v302, %v301
      %v345 = vpack.c.b16 %v304, %v303
      %v346 = vpack.c.b16 %v306, %v305
      %v347 = vpack.c.b16 %v308, %v307
      %v348 = vpack.c.b16 %v310, %v309
      %v349 = vpack.c.b16 %v312, %v311
      %v350 = vpack.c.b16 %v314, %v313
      %v351 = vpack.c.b16 %v316, %v315
      %v352 = vpack.c.b16 %v318, %v317
      %v353 = vpack.c.b16 %v320, %v319
      %v354 = vpack.c.b16 %v322, %v321
      %v355 = vpack.c.b16 %v324, %v323
      %v356 = vpack.c.b16 %v326, %v325
      %v357 = vpack.c.b16 %v328, %v327
      %v358 = vpack.c.b16 %v330, %v329
      %v359 = vpack.c.b16 %v332, %v331
      %v360 = vpack.c.b16 %v334, %v333
      %v361 = vpack.c.b16 %v336, %v335
      %v370 = vunpack.c.l.b16 %v225
      %v371 = vunpack.c.l.b16 %v226
      %v372 = vunpack.c.l.b16 %v227
      %v373 = vunpack.c.l.b16 %v228
      %v374 = vunpack.c.l.b16 %v229
      %v375 = vunpack.c.l.b16 %v230
      %v376 = vunpack.c.l.b16 %v231
      %v377 = vunpack.c.l.b16 %v232
      %v378 = vpack.c.b16 %v371, %v370
      %v379 = vpack.c.b16 %v373, %v372
      %v380 = vpack.c.b16 %v375, %v374
      %v381 = vpack.c.b16 %v377, %v376
      %vm386 = vcmask 523264
      %v388 = vsel %vm386, %v337, 0
      %v391 = vsel %vm386, %v338, 0
      %v394 = vsel %vm386, %v339, 0
      %v397 = vsel %vm386, %v340, 0
      %v400 = vsel %vm386, %v341, 0
      %v403 = vsel %vm386, %v342, 0
      %v406 = vsel %vm386, %v343, 0
      %v409 = vsel %vm386, %v344, 0
      %v412 = vsel %vm386, %v345, 0
      %v415 = vsel %vm386, %v346, 0
      %v418 = vsel %vm386, %v347, 0
      %v421 = vsel %vm386, %v348, 0
      %v424 = vsel %vm386, %v349, 0
      %v427 = vsel %vm386, %v350, 0
      %v430 = vsel %vm386, %v351, 0
      %v433 = vsel %vm386, %v352, 0
      %v436 = vsel %vm386, %v353, 0
      %v439 = vsel %vm386, %v354, 0
      %v442 = vsel %vm386, %v355, 0
      %v445 = vsel %vm386, %v356, 0
      %v448 = vsel %vm386, %v357, 0
      %v451 = vsel %vm386, %v358, 0
      %v454 = vsel %vm386, %v359, 0
      %v457 = vsel %vm386, %v360, 0
      %v460 = vsel %vm386, %v361, 0
      %462 = vmatpush.bf16.msra.mxu0 0
      %463 = vmatpush.bf16.msra.mxu0 0
      %464 = vmatpush.bf16.msra.mxu0 0
      %465 = vmatpush.bf16.msra.mxu0 0
      %466 = vmatpush.bf16.msra.mxu0 %v381
      %467 = vmatpush.bf16.msra.mxu0 %v380
      %468 = vmatpush.bf16.msra.mxu0 %v379
      %469 = vmatpush.bf16.msra.mxu0 %v378
      %470 = vmatmul.bf16.gmra.mxu0 %v388
      %v471 = vpop.f32.mrf.mxu0
      %v472 = vadd.f32 %v235, %v471
      %v473 = vpop.f32.mrf.mxu0
      %v474 = vadd.f32 %v235, %v473
      %475 = vmatmul.bf16.gmra.mxu0 %v391
      %v476 = vpop.f32.mrf.mxu0
      %v477 = vadd.f32 %v235, %v476
      %v478 = vpop.f32.mrf.mxu0
      %v479 = vadd.f32 %v235, %v478
      %480 = vmatmul.bf16.gmra.mxu0 %v394
      %v481 = vpop.f32.mrf.mxu0
      %v482 = vadd.f32 %v235, %v481
      %v483 = vpop.f32.mrf.mxu0
      %v484 = vadd.f32 %v235, %v483
      %485 = vmatmul.bf16.gmra.mxu0 %v397
      %v486 = vpop.f32.mrf.mxu0
      %v487 = vadd.f32 %v235, %v486
      %v488 = vpop.f32.mrf.mxu0
      %v489 = vadd.f32 %v235, %v488
      %490 = vmatmul.bf16.gmra.mxu0 %v400
      %v491 = vpop.f32.mrf.mxu0
      %v492 = vadd.f32 %v235, %v491
      %v493 = vpop.f32.mrf.mxu0
      %v494 = vadd.f32 %v235, %v493
      %495 = vmatmul.bf16.gmra.mxu0 %v403
      %v496 = vpop.f32.mrf.mxu0
      %v497 = vadd.f32 %v235, %v496
      %v498 = vpop.f32.mrf.mxu0
      %v499 = vadd.f32 %v235, %v498
      %500 = vmatmul.bf16.gmra.mxu0 %v406
      %v501 = vpop.f32.mrf.mxu0
      %v502 = vadd.f32 %v235, %v501
      %v503 = vpop.f32.mrf.mxu0
      %v504 = vadd.f32 %v235, %v503
      %505 = vmatmul.bf16.gmra.mxu0 %v409
      %v506 = vpop.f32.mrf.mxu0
      %v507 = vadd.f32 %v235, %v506
      %v508 = vpop.f32.mrf.mxu0
      %v509 = vadd.f32 %v235, %v508
      %510 = vmatmul.bf16.gmra.mxu0 %v412
      %v511 = vpop.f32.mrf.mxu0
      %v512 = vadd.f32 %v235, %v511
      %v513 = vpop.f32.mrf.mxu0
      %v514 = vadd.f32 %v235, %v513
      %515 = vmatmul.bf16.gmra.mxu0 %v415
      %v516 = vpop.f32.mrf.mxu0
      %v517 = vadd.f32 %v235, %v516
      %v518 = vpop.f32.mrf.mxu0
      %v519 = vadd.f32 %v235, %v518
      %520 = vmatmul.bf16.gmra.mxu0 %v418
      %v521 = vpop.f32.mrf.mxu0
      %v522 = vadd.f32 %v235, %v521
      %v523 = vpop.f32.mrf.mxu0
      %v524 = vadd.f32 %v235, %v523
      %525 = vmatmul.bf16.gmra.mxu0 %v421
      %v526 = vpop.f32.mrf.mxu0
      %v527 = vadd.f32 %v235, %v526
      %v528 = vpop.f32.mrf.mxu0
      %v529 = vadd.f32 %v235, %v528
      %530 = vmatmul.bf16.gmra.mxu0 %v424
      %v531 = vpop.f32.mrf.mxu0
      %v532 = vadd.f32 %v235, %v531
      %v533 = vpop.f32.mrf.mxu0
      %v534 = vadd.f32 %v235, %v533
      %535 = vmatmul.bf16.gmra.mxu0 %v427
      %v536 = vpop.f32.mrf.mxu0
      %v537 = vadd.f32 %v235, %v536
      %v538 = vpop.f32.mrf.mxu0
      %v539 = vadd.f32 %v235, %v538
      %540 = vmatmul.bf16.gmra.mxu0 %v430
      %v541 = vpop.f32.mrf.mxu0
      %v542 = vadd.f32 %v235, %v541
      %v543 = vpop.f32.mrf.mxu0
      %v544 = vadd.f32 %v235, %v543
      %545 = vmatmul.bf16.gmra.mxu0 %v433
      %v546 = vpop.f32.mrf.mxu0
      %v547 = vadd.f32 %v235, %v546
      %v548 = vpop.f32.mrf.mxu0
      %v549 = vadd.f32 %v235, %v548
      %550 = vmatmul.bf16.gmra.mxu0 %v436
      %v551 = vpop.f32.mrf.mxu0
      %v552 = vadd.f32 %v235, %v551
      %v553 = vpop.f32.mrf.mxu0
      %v554 = vadd.f32 %v235, %v553
      %555 = vmatmul.bf16.gmra.mxu0 %v439
      %v556 = vpop.f32.mrf.mxu0
      %v557 = vadd.f32 %v235, %v556
      %v558 = vpop.f32.mrf.mxu0
      %v559 = vadd.f32 %v235, %v558
      %560 = vmatmul.bf16.gmra.mxu0 %v442
      %v561 = vpop.f32.mrf.mxu0
      %v562 = vadd.f32 %v235, %v561
      %v563 = vpop.f32.mrf.mxu0
      %v564 = vadd.f32 %v235, %v563
      %565 = vmatmul.bf16.gmra.mxu0 %v445
      %v566 = vpop.f32.mrf.mxu0
      %v567 = vadd.f32 %v235, %v566
      %v568 = vpop.f32.mrf.mxu0
      %v569 = vadd.f32 %v235, %v568
      %570 = vmatmul.bf16.gmra.mxu0 %v448
      %v571 = vpop.f32.mrf.mxu0
      %v572 = vadd.f32 %v235, %v571
      %v573 = vpop.f32.mrf.mxu0
      %v574 = vadd.f32 %v235, %v573
      %575 = vmatmul.bf16.gmra.mxu0 %v451
      %v576 = vpop.f32.mrf.mxu0
      %v577 = vadd.f32 %v235, %v576
      %v578 = vpop.f32.mrf.mxu0
      %v579 = vadd.f32 %v235, %v578
      %580 = vmatmul.bf16.gmra.mxu0 %v454
      %v581 = vpop.f32.mrf.mxu0
      %v582 = vadd.f32 %v235, %v581
      %v583 = vpop.f32.mrf.mxu0
      %v584 = vadd.f32 %v235, %v583
      %585 = vmatmul.bf16.gmra.mxu0 %v457
      %v586 = vpop.f32.mrf.mxu0
      %v587 = vadd.f32 %v235, %v586
      %v588 = vpop.f32.mrf.mxu0
      %v589 = vadd.f32 %v235, %v588
      %590 = vmatmul.bf16.gmra.mxu0 %v460
      %v591 = vpop.f32.mrf.mxu0
      %v592 = vadd.f32 %v235, %v591
      %v593 = vpop.f32.mrf.mxu0
      %v594 = vadd.f32 %v235, %v593
      %595 = vdwg.mxu0
      %v596 = vmin.f32 %v472, 20.0
      %v597 = vmin.f32 %v474, 20.0
      %v598 = vmin.f32 %v477, 20.0
      %v599 = vmin.f32 %v479, 20.0
      %v600 = vmin.f32 %v482, 20.0
      %v601 = vmin.f32 %v484, 20.0
      %v602 = vmin.f32 %v487, 20.0
      %v603 = vmin.f32 %v489, 20.0
      %v604 = vmin.f32 %v492, 20.0
      %v605 = vmin.f32 %v494, 20.0
      %v606 = vmin.f32 %v497, 20.0
      %v607 = vmin.f32 %v499, 20.0
      %v608 = vmin.f32 %v502, 20.0
      %v609 = vmin.f32 %v504, 20.0
      %v610 = vmin.f32 %v507, 20.0
      %v611 = vmin.f32 %v509, 20.0
      %v612 = vmin.f32 %v512, 20.0
      %v613 = vmin.f32 %v514, 20.0
      %v614 = vmin.f32 %v517, 20.0
      %v615 = vmin.f32 %v519, 20.0
      %v616 = vmin.f32 %v522, 20.0
      %v617 = vmin.f32 %v524, 20.0
      %v618 = vmin.f32 %v527, 20.0
      %v619 = vmin.f32 %v529, 20.0
      %v620 = vmin.f32 %v532, 20.0
      %v621 = vmin.f32 %v534, 20.0
      %v622 = vmin.f32 %v537, 20.0
      %v623 = vmin.f32 %v539, 20.0
      %v624 = vmin.f32 %v542, 20.0
      %v625 = vmin.f32 %v544, 20.0
      %v626 = vmin.f32 %v547, 20.0
      %v627 = vmin.f32 %v549, 20.0
      %v628 = vmin.f32 %v552, 20.0
      %v629 = vmin.f32 %v554, 20.0
      %v630 = vmin.f32 %v557, 20.0
      %v631 = vmin.f32 %v559, 20.0
      %v632 = vmin.f32 %v562, 20.0
      %v633 = vmin.f32 %v564, 20.0
      %v634 = vmin.f32 %v567, 20.0
      %v635 = vmin.f32 %v569, 20.0
      %v636 = vmin.f32 %v572, 20.0
      %v637 = vmin.f32 %v574, 20.0
      %v638 = vmin.f32 %v577, 20.0
      %v639 = vmin.f32 %v579, 20.0
      %v640 = vmin.f32 %v582, 20.0
      %v641 = vmin.f32 %v584, 20.0
      %v642 = vmin.f32 %v587, 20.0
      %v643 = vmin.f32 %v589, 20.0
      %v644 = vmin.f32 %v592, 20.0
      %v645 = vmin.f32 %v594, 20.0
      %v646 = vmul.f32 %v596, 1.442695
      %v647 = vpow.pop %v646
      %v648 = vmul.f32 %v597, 1.442695
      %v649 = vpow.pop %v648
      %v650 = vmul.f32 %v598, 1.442695
      %v651 = vpow.pop %v650
      %v652 = vmul.f32 %v599, 1.442695
      %v653 = vpow.pop %v652
      %v654 = vmul.f32 %v600, 1.442695
      %v655 = vpow.pop %v654
      %v656 = vmul.f32 %v601, 1.442695
      %v657 = vpow.pop %v656
      %v658 = vmul.f32 %v602, 1.442695
      %v659 = vpow.pop %v658
      %v660 = vmul.f32 %v603, 1.442695
      %v661 = vpow.pop %v660
      %v662 = vmul.f32 %v604, 1.442695
      %v663 = vpow.pop %v662
      %v664 = vmul.f32 %v605, 1.442695
      %v665 = vpow.pop %v664
      %v666 = vmul.f32 %v606, 1.442695
      %v667 = vpow.pop %v666
      %v668 = vmul.f32 %v607, 1.442695
      %v669 = vpow.pop %v668
      %v670 = vmul.f32 %v608, 1.442695
      %v671 = vpow.pop %v670
      %v672 = vmul.f32 %v609, 1.442695
      %v673 = vpow.pop %v672
      %v674 = vmul.f32 %v610, 1.442695
      %v675 = vpow.pop %v674
      %v676 = vmul.f32 %v611, 1.442695
      %v677 = vpow.pop %v676
      %v678 = vmul.f32 %v612, 1.442695
      %v679 = vpow.pop %v678
      %v680 = vmul.f32 %v613, 1.442695
      %v681 = vpow.pop %v680
      %v682 = vmul.f32 %v614, 1.442695
      %v683 = vpow.pop %v682
      %v684 = vmul.f32 %v615, 1.442695
      %v685 = vpow.pop %v684
      %v686 = vmul.f32 %v616, 1.442695
      %v687 = vpow.pop %v686
      %v688 = vmul.f32 %v617, 1.442695
      %v689 = vpow.pop %v688
      %v690 = vmul.f32 %v618, 1.442695
      %v691 = vpow.pop %v690
      %v692 = vmul.f32 %v619, 1.442695
      %v693 = vpow.pop %v692
      %v694 = vmul.f32 %v620, 1.442695
      %v695 = vpow.pop %v694
      %v696 = vmul.f32 %v621, 1.442695
      %v697 = vpow.pop %v696
      %v698 = vmul.f32 %v622, 1.442695
      %v699 = vpow.pop %v698
      %v700 = vmul.f32 %v623, 1.442695
      %v701 = vpow.pop %v700
      %v702 = vmul.f32 %v624, 1.442695
      %v703 = vpow.pop %v702
      %v704 = vmul.f32 %v625, 1.442695
      %v705 = vpow.pop %v704
      %v706 = vmul.f32 %v626, 1.442695
      %v707 = vpow.pop %v706
      %v708 = vmul.f32 %v627, 1.442695
      %v709 = vpow.pop %v708
      %v710 = vmul.f32 %v628, 1.442695
      %v711 = vpow.pop %v710
      %v712 = vmul.f32 %v629, 1.442695
      %v713 = vpow.pop %v712
      %v714 = vmul.f32 %v630, 1.442695
      %v715 = vpow.pop %v714
      %v716 = vmul.f32 %v631, 1.442695
      %v717 = vpow.pop %v716
      %v718 = vmul.f32 %v632, 1.442695
      %v719 = vpow.pop %v718
      %v720 = vmul.f32 %v633, 1.442695
      %v721 = vpow.pop %v720
      %v722 = vmul.f32 %v634, 1.442695
      %v723 = vpow.pop %v722
      %v724 = vmul.f32 %v635, 1.442695
      %v725 = vpow.pop %v724
      %v726 = vmul.f32 %v636, 1.442695
      %v727 = vpow.pop %v726
      %v728 = vmul.f32 %v637, 1.442695
      %v729 = vpow.pop %v728
      %v730 = vmul.f32 %v638, 1.442695
      %v731 = vpow.pop %v730
      %v732 = vmul.f32 %v639, 1.442695
      %v733 = vpow.pop %v732
      %v734 = vmul.f32 %v640, 1.442695
      %v735 = vpow.pop %v734
      %v736 = vmul.f32 %v641, 1.442695
      %v737 = vpow.pop %v736
      %v738 = vmul.f32 %v642, 1.442695
      %v739 = vpow.pop %v738
      %v740 = vmul.f32 %v643, 1.442695
      %v741 = vpow.pop %v740
      %v742 = vmul.f32 %v644, 1.442695
      %v743 = vpow.pop %v742
      %v744 = vmul.f32 %v645, 1.442695
      %v745 = vpow.pop %v744
      %v746 = vadd.f32 %v647, 2.0
      %v747 = vadd.f32 %v649, 2.0
      %v748 = vadd.f32 %v651, 2.0
      %v749 = vadd.f32 %v653, 2.0
      %v750 = vadd.f32 %v655, 2.0
      %v751 = vadd.f32 %v657, 2.0
      %v752 = vadd.f32 %v659, 2.0
      %v753 = vadd.f32 %v661, 2.0
      %v754 = vadd.f32 %v663, 2.0
      %v755 = vadd.f32 %v665, 2.0
      %v756 = vadd.f32 %v667, 2.0
      %v757 = vadd.f32 %v669, 2.0
      %v758 = vadd.f32 %v671, 2.0
      %v759 = vadd.f32 %v673, 2.0
      %v760 = vadd.f32 %v675, 2.0
      %v761 = vadd.f32 %v677, 2.0
      %v762 = vadd.f32 %v679, 2.0
      %v763 = vadd.f32 %v681, 2.0
      %v764 = vadd.f32 %v683, 2.0
      %v765 = vadd.f32 %v685, 2.0
      %v766 = vadd.f32 %v687, 2.0
      %v767 = vadd.f32 %v689, 2.0
      %v768 = vadd.f32 %v691, 2.0
      %v769 = vadd.f32 %v693, 2.0
      %v770 = vadd.f32 %v695, 2.0
      %v771 = vadd.f32 %v697, 2.0
      %v772 = vadd.f32 %v699, 2.0
      %v773 = vadd.f32 %v701, 2.0
      %v774 = vadd.f32 %v703, 2.0
      %v775 = vadd.f32 %v705, 2.0
      %v776 = vadd.f32 %v707, 2.0
      %v777 = vadd.f32 %v709, 2.0
      %v778 = vadd.f32 %v711, 2.0
      %v779 = vadd.f32 %v713, 2.0
      %v780 = vadd.f32 %v715, 2.0
      %v781 = vadd.f32 %v717, 2.0
      %v782 = vadd.f32 %v719, 2.0
      %v783 = vadd.f32 %v721, 2.0
      %v784 = vadd.f32 %v723, 2.0
      %v785 = vadd.f32 %v725, 2.0
      %v786 = vadd.f32 %v727, 2.0
      %v787 = vadd.f32 %v729, 2.0
      %v788 = vadd.f32 %v731, 2.0
      %v789 = vadd.f32 %v733, 2.0
      %v790 = vadd.f32 %v735, 2.0
      %v791 = vadd.f32 %v737, 2.0
      %v792 = vadd.f32 %v739, 2.0
      %v793 = vadd.f32 %v741, 2.0
      %v794 = vadd.f32 %v743, 2.0
      %v795 = vadd.f32 %v745, 2.0
      %v796 = vmul.f32 %v647, %v746
      %v797 = vmul.f32 %v649, %v747
      %v798 = vmul.f32 %v651, %v748
      %v799 = vmul.f32 %v653, %v749
      %v800 = vmul.f32 %v655, %v750
      %v801 = vmul.f32 %v657, %v751
      %v802 = vmul.f32 %v659, %v752
      %v803 = vmul.f32 %v661, %v753
      %v804 = vmul.f32 %v663, %v754
      %v805 = vmul.f32 %v665, %v755
      %v806 = vmul.f32 %v667, %v756
      %v807 = vmul.f32 %v669, %v757
      %v808 = vmul.f32 %v671, %v758
      %v809 = vmul.f32 %v673, %v759
      %v810 = vmul.f32 %v675, %v760
      %v811 = vmul.f32 %v677, %v761
      %v812 = vmul.f32 %v679, %v762
      %v813 = vmul.f32 %v681, %v763
      %v814 = vmul.f32 %v683, %v764
      %v815 = vmul.f32 %v685, %v765
      %v816 = vmul.f32 %v687, %v766
      %v817 = vmul.f32 %v689, %v767
      %v818 = vmul.f32 %v691, %v768
      %v819 = vmul.f32 %v693, %v769
      %v820 = vmul.f32 %v695, %v770
      %v821 = vmul.f32 %v697, %v771
      %v822 = vmul.f32 %v699, %v772
      %v823 = vmul.f32 %v701, %v773
      %v824 = vmul.f32 %v703, %v774
      %v825 = vmul.f32 %v705, %v775
      %v826 = vmul.f32 %v707, %v776
      %v827 = vmul.f32 %v709, %v777
      %v828 = vmul.f32 %v711, %v778
      %v829 = vmul.f32 %v713, %v779
      %v830 = vmul.f32 %v715, %v780
      %v831 = vmul.f32 %v717, %v781
      %v832 = vmul.f32 %v719, %v782
      %v833 = vmul.f32 %v721, %v783
      %v834 = vmul.f32 %v723, %v784
      %v835 = vmul.f32 %v725, %v785
      %v836 = vmul.f32 %v727, %v786
      %v837 = vmul.f32 %v729, %v787
      %v838 = vmul.f32 %v731, %v788
      %v839 = vmul.f32 %v733, %v789
      %v840 = vmul.f32 %v735, %v790
      %v841 = vmul.f32 %v737, %v791
      %v842 = vmul.f32 %v739, %v792
      %v843 = vmul.f32 %v741, %v793
      %v844 = vmul.f32 %v743, %v794
      %v845 = vmul.f32 %v745, %v795
      %v846 = vmul.f32 %v472, %v796
      %v847 = vmul.f32 %v474, %v797
      %v848 = vmul.f32 %v477, %v798
      %v849 = vmul.f32 %v479, %v799
      %v850 = vmul.f32 %v482, %v800
      %v851 = vmul.f32 %v484, %v801
      %v852 = vmul.f32 %v487, %v802
      %v853 = vmul.f32 %v489, %v803
      %v854 = vmul.f32 %v492, %v804
      %v855 = vmul.f32 %v494, %v805
      %v856 = vmul.f32 %v497, %v806
      %v857 = vmul.f32 %v499, %v807
      %v858 = vmul.f32 %v502, %v808
      %v859 = vmul.f32 %v504, %v809
      %v860 = vmul.f32 %v507, %v810
      %v861 = vmul.f32 %v509, %v811
      %v862 = vmul.f32 %v512, %v812
      %v863 = vmul.f32 %v514, %v813
      %v864 = vmul.f32 %v517, %v814
      %v865 = vmul.f32 %v519, %v815
      %v866 = vmul.f32 %v522, %v816
      %v867 = vmul.f32 %v524, %v817
      %v868 = vmul.f32 %v527, %v818
      %v869 = vmul.f32 %v529, %v819
      %v870 = vmul.f32 %v532, %v820
      %v871 = vmul.f32 %v534, %v821
      %v872 = vmul.f32 %v537, %v822
      %v873 = vmul.f32 %v539, %v823
      %v874 = vmul.f32 %v542, %v824
      %v875 = vmul.f32 %v544, %v825
      %v876 = vmul.f32 %v547, %v826
      %v877 = vmul.f32 %v549, %v827
      %v878 = vmul.f32 %v552, %v828
      %v879 = vmul.f32 %v554, %v829
      %v880 = vmul.f32 %v557, %v830
      %v881 = vmul.f32 %v559, %v831
      %v882 = vmul.f32 %v562, %v832
      %v883 = vmul.f32 %v564, %v833
      %v884 = vmul.f32 %v567, %v834
      %v885 = vmul.f32 %v569, %v835
      %v886 = vmul.f32 %v572, %v836
      %v887 = vmul.f32 %v574, %v837
      %v888 = vmul.f32 %v577, %v838
      %v889 = vmul.f32 %v579, %v839
      %v890 = vmul.f32 %v582, %v840
      %v891 = vmul.f32 %v584, %v841
      %v892 = vmul.f32 %v587, %v842
      %v893 = vmul.f32 %v589, %v843
      %v894 = vmul.f32 %v592, %v844
      %v895 = vmul.f32 %v594, %v845
      %v896 = vadd.f32 %v796, 2.0
      %v897 = vadd.f32 %v797, 2.0
      %v898 = vadd.f32 %v798, 2.0
      %v899 = vadd.f32 %v799, 2.0
      %v900 = vadd.f32 %v800, 2.0
      %v901 = vadd.f32 %v801, 2.0
      %v902 = vadd.f32 %v802, 2.0
      %v903 = vadd.f32 %v803, 2.0
      %v904 = vadd.f32 %v804, 2.0
      %v905 = vadd.f32 %v805, 2.0
      %v906 = vadd.f32 %v806, 2.0
      %v907 = vadd.f32 %v807, 2.0
      %v908 = vadd.f32 %v808, 2.0
      %v909 = vadd.f32 %v809, 2.0
      %v910 = vadd.f32 %v810, 2.0
      %v911 = vadd.f32 %v811, 2.0
      %v912 = vadd.f32 %v812, 2.0
      %v913 = vadd.f32 %v813, 2.0
      %v914 = vadd.f32 %v814, 2.0
      %v915 = vadd.f32 %v815, 2.0
      %v916 = vadd.f32 %v816, 2.0
      %v917 = vadd.f32 %v817, 2.0
      %v918 = vadd.f32 %v818, 2.0
      %v919 = vadd.f32 %v819, 2.0
      %v920 = vadd.f32 %v820, 2.0
      %v921 = vadd.f32 %v821, 2.0
      %v922 = vadd.f32 %v822, 2.0
      %v923 = vadd.f32 %v823, 2.0
      %v924 = vadd.f32 %v824, 2.0
      %v925 = vadd.f32 %v825, 2.0
      %v926 = vadd.f32 %v826, 2.0
      %v927 = vadd.f32 %v827, 2.0
      %v928 = vadd.f32 %v828, 2.0
      %v929 = vadd.f32 %v829, 2.0
      %v930 = vadd.f32 %v830, 2.0
      %v931 = vadd.f32 %v831, 2.0
      %v932 = vadd.f32 %v832, 2.0
      %v933 = vadd.f32 %v833, 2.0
      %v934 = vadd.f32 %v834, 2.0
      %v935 = vadd.f32 %v835, 2.0
      %v936 = vadd.f32 %v836, 2.0
      %v937 = vadd.f32 %v837, 2.0
      %v938 = vadd.f32 %v838, 2.0
      %v939 = vadd.f32 %v839, 2.0
      %v940 = vadd.f32 %v840, 2.0
      %v941 = vadd.f32 %v841, 2.0
      %v942 = vadd.f32 %v842, 2.0
      %v943 = vadd.f32 %v843, 2.0
      %v944 = vadd.f32 %v844, 2.0
      %v945 = vadd.f32 %v845, 2.0
      %v946 = vrcp.pop %v896
      %v947 = vrcp.pop %v897
      %v948 = vrcp.pop %v898
      %v949 = vrcp.pop %v899
      %v950 = vrcp.pop %v900
      %v951 = vrcp.pop %v901
      %v952 = vrcp.pop %v902
      %v953 = vrcp.pop %v903
      %v954 = vrcp.pop %v904
      %v955 = vrcp.pop %v905
      %v956 = vrcp.pop %v906
      %v957 = vrcp.pop %v907
      %v958 = vrcp.pop %v908
      %v959 = vrcp.pop %v909
      %v960 = vrcp.pop %v910
      %v961 = vrcp.pop %v911
      %v962 = vrcp.pop %v912
      %v963 = vrcp.pop %v913
      %v964 = vrcp.pop %v914
      %v965 = vrcp.pop %v915
      %v966 = vrcp.pop %v916
      %v967 = vrcp.pop %v917
      %v968 = vrcp.pop %v918
      %v969 = vrcp.pop %v919
      %v970 = vrcp.pop %v920
      %v971 = vrcp.pop %v921
      %v972 = vrcp.pop %v922
      %v973 = vrcp.pop %v923
      %v974 = vrcp.pop %v924
      %v975 = vrcp.pop %v925
      %v976 = vrcp.pop %v926
      %v977 = vrcp.pop %v927
      %v978 = vrcp.pop %v928
      %v979 = vrcp.pop %v929
      %v980 = vrcp.pop %v930
      %v981 = vrcp.pop %v931
      %v982 = vrcp.pop %v932
      %v983 = vrcp.pop %v933
      %v984 = vrcp.pop %v934
      %v985 = vrcp.pop %v935
      %v986 = vrcp.pop %v936
      %v987 = vrcp.pop %v937
      %v988 = vrcp.pop %v938
      %v989 = vrcp.pop %v939
      %v990 = vrcp.pop %v940
      %v991 = vrcp.pop %v941
      %v992 = vrcp.pop %v942
      %v993 = vrcp.pop %v943
      %v994 = vrcp.pop %v944
      %v995 = vrcp.pop %v945
      %v996 = vmul.f32 %v846, %v946
      %v997 = vmul.f32 %v847, %v947
      %v998 = vmul.f32 %v848, %v948
      %v999 = vmul.f32 %v849, %v949
      %v1000 = vmul.f32 %v850, %v950
      %v1001 = vmul.f32 %v851, %v951
      %v1002 = vmul.f32 %v852, %v952
      %v1003 = vmul.f32 %v853, %v953
      %v1004 = vmul.f32 %v854, %v954
      %v1005 = vmul.f32 %v855, %v955
      %v1006 = vmul.f32 %v856, %v956
      %v1007 = vmul.f32 %v857, %v957
      %v1008 = vmul.f32 %v858, %v958
      %v1009 = vmul.f32 %v859, %v959
      %v1010 = vmul.f32 %v860, %v960
      %v1011 = vmul.f32 %v861, %v961
      %v1012 = vmul.f32 %v862, %v962
      %v1013 = vmul.f32 %v863, %v963
      %v1014 = vmul.f32 %v864, %v964
      %v1015 = vmul.f32 %v865, %v965
      %v1016 = vmul.f32 %v866, %v966
      %v1017 = vmul.f32 %v867, %v967
      %v1018 = vmul.f32 %v868, %v968
      %v1019 = vmul.f32 %v869, %v969
      %v1020 = vmul.f32 %v870, %v970
      %v1021 = vmul.f32 %v871, %v971
      %v1022 = vmul.f32 %v872, %v972
      %v1023 = vmul.f32 %v873, %v973
      %v1024 = vmul.f32 %v874, %v974
      %v1025 = vmul.f32 %v875, %v975
      %v1026 = vmul.f32 %v876, %v976
      %v1027 = vmul.f32 %v877, %v977
      %v1028 = vmul.f32 %v878, %v978
      %v1029 = vmul.f32 %v879, %v979
      %v1030 = vmul.f32 %v880, %v980
      %v1031 = vmul.f32 %v881, %v981
      %v1032 = vmul.f32 %v882, %v982
      %v1033 = vmul.f32 %v883, %v983
      %v1034 = vmul.f32 %v884, %v984
      %v1035 = vmul.f32 %v885, %v985
      %v1036 = vmul.f32 %v886, %v986
      %v1037 = vmul.f32 %v887, %v987
      %v1038 = vmul.f32 %v888, %v988
      %v1039 = vmul.f32 %v889, %v989
      %v1040 = vmul.f32 %v890, %v990
      %v1041 = vmul.f32 %v891, %v991
      %v1042 = vmul.f32 %v892, %v992
      %v1043 = vmul.f32 %v893, %v993
      %v1044 = vmul.f32 %v894, %v994
      %v1045 = vmul.f32 %v895, %v995
      %v1046 = vpack.c.bf16 %v996, %v996
      %v1047 = vpack.c.bf16 %v997, %v997
      %v1048 = vpack.c.bf16 %v998, %v998
      %v1049 = vpack.c.bf16 %v999, %v999
      %v1050 = vpack.c.bf16 %v1000, %v1000
      %v1051 = vpack.c.bf16 %v1001, %v1001
      %v1052 = vpack.c.bf16 %v1002, %v1002
      %v1053 = vpack.c.bf16 %v1003, %v1003
      %v1054 = vpack.c.bf16 %v1004, %v1004
      %v1055 = vpack.c.bf16 %v1005, %v1005
      %v1056 = vpack.c.bf16 %v1006, %v1006
      %v1057 = vpack.c.bf16 %v1007, %v1007
      %v1058 = vpack.c.bf16 %v1008, %v1008
      %v1059 = vpack.c.bf16 %v1009, %v1009
      %v1060 = vpack.c.bf16 %v1010, %v1010
      %v1061 = vpack.c.bf16 %v1011, %v1011
      %v1062 = vpack.c.bf16 %v1012, %v1012
      %v1063 = vpack.c.bf16 %v1013, %v1013
      %v1064 = vpack.c.bf16 %v1014, %v1014
      %v1065 = vpack.c.bf16 %v1015, %v1015
      %v1066 = vpack.c.bf16 %v1016, %v1016
      %v1067 = vpack.c.bf16 %v1017, %v1017
      %v1068 = vpack.c.bf16 %v1018, %v1018
      %v1069 = vpack.c.bf16 %v1019, %v1019
      %v1070 = vpack.c.bf16 %v1020, %v1020
      %v1071 = vpack.c.bf16 %v1021, %v1021
      %v1072 = vpack.c.bf16 %v1022, %v1022
      %v1073 = vpack.c.bf16 %v1023, %v1023
      %v1074 = vpack.c.bf16 %v1024, %v1024
      %v1075 = vpack.c.bf16 %v1025, %v1025
      %v1076 = vpack.c.bf16 %v1026, %v1026
      %v1077 = vpack.c.bf16 %v1027, %v1027
      %v1078 = vpack.c.bf16 %v1028, %v1028
      %v1079 = vpack.c.bf16 %v1029, %v1029
      %v1080 = vpack.c.bf16 %v1030, %v1030
      %v1081 = vpack.c.bf16 %v1031, %v1031
      %v1082 = vpack.c.bf16 %v1032, %v1032
      %v1083 = vpack.c.bf16 %v1033, %v1033
      %v1084 = vpack.c.bf16 %v1034, %v1034
      %v1085 = vpack.c.bf16 %v1035, %v1035
      %v1086 = vpack.c.bf16 %v1036, %v1036
      %v1087 = vpack.c.bf16 %v1037, %v1037
      %v1088 = vpack.c.bf16 %v1038, %v1038
      %v1089 = vpack.c.bf16 %v1039, %v1039
      %v1090 = vpack.c.bf16 %v1040, %v1040
      %v1091 = vpack.c.bf16 %v1041, %v1041
      %v1092 = vpack.c.bf16 %v1042, %v1042
      %v1093 = vpack.c.bf16 %v1043, %v1043
      %v1094 = vpack.c.bf16 %v1044, %v1044
      %v1095 = vpack.c.bf16 %v1045, %v1045
      %vm1096 = vcmask 257024
      %1097 = vst.msk [vmem:[%s172] sm:$0xf] %vm1096, %v1046
      %1098 = vst.msk [vmem:[%s172 + $0x4] sm:$0xf] %vm1096, %v1047
      %1099 = vst.msk [vmem:[%s172 + $0x8] sm:$0xf] %vm1096, %v1048
      %1100 = vst.msk [vmem:[%s172 + $0xc] sm:$0xf] %vm1096, %v1049
      %1101 = vst.msk [vmem:[%s172 + $0x10] sm:$0xf] %vm1096, %v1050
      %1102 = vst.msk [vmem:[%s172 + $0x14] sm:$0xf] %vm1096, %v1051
      %1103 = vst.msk [vmem:[%s172 + $0x18] sm:$0xf] %vm1096, %v1052
      %1104 = vst.msk [vmem:[%s172 + $0x1c] sm:$0xf] %vm1096, %v1053
      %1105 = vst.msk [vmem:[%s172 + $0x20] sm:$0xf] %vm1096, %v1054
      %1106 = vst.msk [vmem:[%s172 + $0x24] sm:$0xf] %vm1096, %v1055
      %1107 = vst.msk [vmem:[%s172 + $0x28] sm:$0xf] %vm1096, %v1056
      %1108 = vst.msk [vmem:[%s172 + $0x2c] sm:$0xf] %vm1096, %v1057
      %1109 = vst.msk [vmem:[%s172 + $0x30] sm:$0xf] %vm1096, %v1058
      %1110 = vst.msk [vmem:[%s172 + $0x34] sm:$0xf] %vm1096, %v1059
      %1111 = vst.msk [vmem:[%s172 + $0x38] sm:$0xf] %vm1096, %v1060
      %1112 = vst.msk [vmem:[%s172 + $0x3c] sm:$0xf] %vm1096, %v1061
      %1113 = vst.msk [vmem:[%s172 + $0x40] sm:$0xf] %vm1096, %v1062
      %1114 = vst.msk [vmem:[%s172 + $0x44] sm:$0xf] %vm1096, %v1063
      %1115 = vst.msk [vmem:[%s172 + $0x48] sm:$0xf] %vm1096, %v1064
      %1116 = vst.msk [vmem:[%s172 + $0x4c] sm:$0xf] %vm1096, %v1065
      %1117 = vst.msk [vmem:[%s172 + $0x50] sm:$0xf] %vm1096, %v1066
      %1118 = vst.msk [vmem:[%s172 + $0x54] sm:$0xf] %vm1096, %v1067
      %1119 = vst.msk [vmem:[%s172 + $0x58] sm:$0xf] %vm1096, %v1068
      %1120 = vst.msk [vmem:[%s172 + $0x5c] sm:$0xf] %vm1096, %v1069
      %1121 = vst.msk [vmem:[%s172 + $0x60] sm:$0xf] %vm1096, %v1070
      %1122 = vst.msk [vmem:[%s172 + $0x64] sm:$0xf] %vm1096, %v1071
      %1123 = vst.msk [vmem:[%s172 + $0x68] sm:$0xf] %vm1096, %v1072
      %1124 = vst.msk [vmem:[%s172 + $0x6c] sm:$0xf] %vm1096, %v1073
      %1125 = vst.msk [vmem:[%s172 + $0x70] sm:$0xf] %vm1096, %v1074
      %1126 = vst.msk [vmem:[%s172 + $0x74] sm:$0xf] %vm1096, %v1075
      %1127 = vst.msk [vmem:[%s172 + $0x78] sm:$0xf] %vm1096, %v1076
      %1128 = vst.msk [vmem:[%s172 + $0x7c] sm:$0xf] %vm1096, %v1077
      %1129 = vst.msk [vmem:[%s172 + $0x80] sm:$0xf] %vm1096, %v1078
      %1130 = vst.msk [vmem:[%s172 + $0x84] sm:$0xf] %vm1096, %v1079
      %1131 = vst.msk [vmem:[%s172 + $0x88] sm:$0xf] %vm1096, %v1080
      %1132 = vst.msk [vmem:[%s172 + $0x8c] sm:$0xf] %vm1096, %v1081
      %1133 = vst.msk [vmem:[%s172 + $0x90] sm:$0xf] %vm1096, %v1082
      %1134 = vst.msk [vmem:[%s172 + $0x94] sm:$0xf] %vm1096, %v1083
      %1135 = vst.msk [vmem:[%s172 + $0x98] sm:$0xf] %vm1096, %v1084
      %1136 = vst.msk [vmem:[%s172 + $0x9c] sm:$0xf] %vm1096, %v1085
      %1137 = vst.msk [vmem:[%s172 + $0xa0] sm:$0xf] %vm1096, %v1086
      %1138 = vst.msk [vmem:[%s172 + $0xa4] sm:$0xf] %vm1096, %v1087
      %1139 = vst.msk [vmem:[%s172 + $0xa8] sm:$0xf] %vm1096, %v1088
      %1140 = vst.msk [vmem:[%s172 + $0xac] sm:$0xf] %vm1096, %v1089
      %1141 = vst.msk [vmem:[%s172 + $0xb0] sm:$0xf] %vm1096, %v1090
      %1142 = vst.msk [vmem:[%s172 + $0xb4] sm:$0xf] %vm1096, %v1091
      %1143 = vst.msk [vmem:[%s172 + $0xb8] sm:$0xf] %vm1096, %v1092
      %1144 = vst.msk [vmem:[%s172 + $0xbc] sm:$0xf] %vm1096, %v1093
      %1145 = vst.msk [vmem:[%s172 + $0xc0] sm:$0xf] %vm1096, %v1094
      %1146 = vst.msk [vmem:[%s172 + $0xc4] sm:$0xf] %vm1096, %v1095
      %s1147 = smul.u32 50, %s14
      %p1148 = scmp.lt.s32.totalorder %s1147, 99
      %s1149 = scalar_select %p1148, %s1147, 99
      %s1150 = smul.addr %s1149, 4
      %s1151 = scalar_lea.vmem %s3, %s1150
      // Predicated region
      $region33: #{value_network_forward.4} parent=31 // pred_check
        %p1152 = pneg %p100
      $region34: #{value_network_forward.4} parent=31 // pred_check_branch
        %1154 = sbr.rel (%p1152) target = $region36
      $region35: #{value_network_forward.4} parent=31 // pred_region
        %s1155 = smul.u32 50, %s14
      $region36: #{value_network_forward.4} parent=31 // pred_fallthru
        _
    $region32: #{value_network_forward.4} parent=5 // pred_fallthru
      _
    %p1156 = scmp.le.s32.totalorder 2, %s9
    // Predicated region
    $region37: #{value_network_forward.4} parent=5 // pred_check
      %p1157 = pneg %p1156
    $region38: #{value_network_forward.4} parent=5 // pred_check_branch
      %1159 = sbr.rel (%p1157) target = $region40
    $region39: #{value_network_forward.4} parent=5 // pred_region
      %s1160 = ssub.s32 %s9, 2
      // Predicated region
      $region41: #{value_network_forward.4} parent=39 // pred_check
        %p1161 = pneg %p106
      $region42: #{value_network_forward.4} parent=39 // pred_check_branch
        %1163 = sbr.rel (%p1161) target = $region44
      $region43: #{value_network_forward.4} parent=39 // pred_region
        %s1164 = smul.u32 50, %s15
        %p1165 = scmp.lt.s32.totalorder %s1164, 99
        %s1166 = scalar_select %p1165, %s1164, 99
        %s1167 = smul.addr %s1166, 4
        %s1168 = scalar_lea.vmem %s3, %s1167
      $region44: #{value_network_forward.4} parent=39 // pred_fallthru
        _
    $region40: #{value_network_forward.4} parent=5 // pred_fallthru
      _
  $region6: #{value_network_forward.4} parent=0 // loop_footer
    %s13 = sadd.s32 1, %s9
  $region7: #{value_network_forward.4} parent=0 // loop_footer_branch
    %8 = sbr.rel target = $region3
  $region8: #{value_network_forward.4} parent=0 // loop_exit
    _

// kernel: value_network_forward.5
$region0: #{value_network_forward.5}
  #allocation0 [shape = 'u32[]', space=smem, size = 0x4, offset = 0x4, fixed_abs, tag = 'smem constant byte address 0x4 - core index']
  #allocation1 [shape = 'u32[72,128]{1,0:T(1,128)}', space=vmem, size = 0x9000, scoped, tag = 'internal scratch']
  %s0 = inlined_call_operand.vmem [shape: bf16[162,512], index: 0, kind: input, shape index: {}]
  %s1 = inlined_call_operand.vmem [shape: bf16[512,64], index: 1, kind: input, shape index: {}]
  %s2 = inlined_call_operand.vmem [shape: f32[1,64], index: 2, kind: input, shape index: {}]
  %s3 = inlined_call_operand.vmem [shape: bf16[162,64], index: 3, kind: output, shape index: {}]
  %s4 = sld [smem:[#allocation0]]
  $region89: #{value_network_forward.5} parent=0
    _
  %s6 = ssub.s32 1, %s4
  %s7 = scalar_select 0, %s6, %s4
  $region1: #{value_network_forward.5} parent=0
    #allocation2 [shape = 'u8[45056]{0}', space=vmem, size = 0xb000, scoped, tag = 'output window, operand 0']
    loop: start=0, step=1, limit=4
    $region2: #{value_network_forward.5} parent=1 // loop_pre_header
      _
    $region3: #{value_network_forward.5} parent=1 // loop_header
      %s9 = sphi 0, %s13
      %p10 = scmp.ge.s32.totalorder %s9, 4
      %s19 = sphi 0, %s21
      %s22 = sphi 0, %s19
      %s23 = sphi 0, %s22
      %s39 = sphi 0, %s23
      %s43 = sphi 0, %s43
      %s45 = sphi 0, %s43
      %s46 = sphi 0, %s45
      %s60 = sphi 0, %s46
      %s64 = sphi 0, %s64
      %s66 = sphi 0, %s64
      %s67 = sphi 0, %s66
      %s81 = sphi 0, %s67
      %s87 = sphi 0, %s89
      %s90 = sphi 0, %s87
      %s91 = sphi 0, %s90
      %s107 = sphi 0, %s91
    $region4: #{value_network_forward.5} parent=1 // loop_header_branch
      %12 = sbr.rel (%p10) target = $region8
    $region5: #{value_network_forward.5} parent=1 // loop_body
      %s14 = ssub.s32 %s9, 1
      %s15 = ssub.s32 %s9, 2
      %s16 = sadd.s32 %s9, 1
      %s17 = ssub.s32 %s9, %s16
      %p18 = scmp.eq.s32.totalorder %s17, 0
      %s20 = sadd.s32 %s19, 1
      %s21 = scalar_select %p18, %s19, %s20
      %p24 = pneg %p18
      %p25 = scmp.eq.s32.totalorder %s9, 1
      %p26 = por %p24, %p25
      %p27 = scmp.ne.s32.totalorder %s19, %s22
      %p28 = scmp.eq.s32.totalorder %s9, 0
      %p29 = por %p27, %p28
      %p30 = scmp.ne.s32.totalorder %s19, %s22
      %p31 = scmp.eq.s32.totalorder %s14, 1
      %p32 = por %p30, %p31
      %p33 = scmp.ne.s32.totalorder %s22, %s23
      %p34 = scmp.eq.s32.totalorder %s14, 0
      %p35 = por %p33, %p34
      %p36 = scmp.ne.s32.totalorder %s22, %s23
      %p37 = scmp.eq.s32.totalorder %s15, 1
      %p38 = por %p36, %p37
      %p40 = scmp.ne.s32.totalorder %s23, %s39
      %p41 = scmp.eq.s32.totalorder %s15, 0
      %p42 = por %p40, %p41
      %s44 = sadd.s32 %s43, 1
      %p47 = scmp.eq.s32.totalorder %s9, 1
      %p48 = scmp.ne.s32.totalorder %s43, %s45
      %p49 = scmp.eq.s32.totalorder %s9, 0
      %p50 = por %p48, %p49
      %p51 = scmp.ne.s32.totalorder %s43, %s45
      %p52 = scmp.eq.s32.totalorder %s14, 1
      %p53 = por %p51, %p52
      %p54 = scmp.ne.s32.totalorder %s45, %s46
      %p55 = scmp.eq.s32.totalorder %s14, 0
      %p56 = por %p54, %p55
      %p57 = scmp.ne.s32.totalorder %s45, %s46
      %p58 = scmp.eq.s32.totalorder %s15, 1
      %p59 = por %p57, %p58
      %p61 = scmp.ne.s32.totalorder %s46, %s60
      %p62 = scmp.eq.s32.totalorder %s15, 0
      %p63 = por %p61, %p62
      %s65 = sadd.s32 %s64, 1
      %p68 = scmp.eq.s32.totalorder %s9, 1
      %p69 = scmp.ne.s32.totalorder %s64, %s66
      %p70 = scmp.eq.s32.totalorder %s9, 0
      %p71 = por %p69, %p70
      %p72 = scmp.ne.s32.totalorder %s64, %s66
      %p73 = scmp.eq.s32.totalorder %s14, 1
      %p74 = por %p72, %p73
      %p75 = scmp.ne.s32.totalorder %s66, %s67
      %p76 = scmp.eq.s32.totalorder %s14, 0
      %p77 = por %p75, %p76
      %p78 = scmp.ne.s32.totalorder %s66, %s67
      %p79 = scmp.eq.s32.totalorder %s15, 1
      %p80 = por %p78, %p79
      %p82 = scmp.ne.s32.totalorder %s67, %s81
      %p83 = scmp.eq.s32.totalorder %s15, 0
      %p84 = por %p82, %p83
      %s85 = ssub.s32 %s9, %s16
      %p86 = scmp.eq.s32.totalorder %s85, 0
      %s88 = sadd.s32 %s87, 1
      %s89 = scalar_select %p86, %s87, %s88
      %p92 = pneg %p86
      %p93 = scmp.eq.s32.totalorder %s9, 1
      %p94 = por %p92, %p93
      %p95 = scmp.ne.s32.totalorder %s87, %s90
      %p96 = scmp.eq.s32.totalorder %s9, 0
      %p97 = por %p95, %p96
      %p98 = scmp.ne.s32.totalorder %s87, %s90
      %p99 = scmp.eq.s32.totalorder %s14, 1
      %p100 = por %p98, %p99
      %p101 = scmp.ne.s32.totalorder %s90, %s91
      %p102 = scmp.eq.s32.totalorder %s14, 0
      %p103 = por %p101, %p102
      %p104 = scmp.ne.s32.totalorder %s90, %s91
      %p105 = scmp.eq.s32.totalorder %s15, 1
      %p106 = por %p104, %p105
      %p108 = scmp.ne.s32.totalorder %s91, %s107
      %p109 = scmp.eq.s32.totalorder %s15, 0
      %p110 = por %p108, %p109
      %p111 = scmp.le.s32.totalorder 1, %s9
      %p112 = scmp.lt.s32.totalorder %s9, 3
      %p113 = pnand %p111, %p112
      %p114 = pneg %p113
      // Predicated region
      $region9: #{value_network_forward.5} parent=5 // pred_check
        _
      $region10: #{value_network_forward.5} parent=5 // pred_check_branch
        %116 = sbr.rel (%p113) target = $region12
      $region11: #{value_network_forward.5} parent=5 // pred_region
        %s117 = ssub.s32 %s9, 1
        // Predicated region
        $region13: #{value_network_forward.5} parent=11 // pred_check
          %p118 = pneg %p56
        $region14: #{value_network_forward.5} parent=11 // pred_check_branch
          %120 = sbr.rel (%p118) target = $region16
        $region15: #{value_network_forward.5} parent=11 // pred_region
          _
        $region16: #{value_network_forward.5} parent=11 // pred_fallthru
          _
        // Predicated region
        $region17: #{value_network_forward.5} parent=11 // pred_check
          %p121 = pneg %p77
        $region18: #{value_network_forward.5} parent=11 // pred_check_branch
          %123 = sbr.rel (%p121) target = $region20
        $region19: #{value_network_forward.5} parent=11 // pred_region
          _
        $region20: #{value_network_forward.5} parent=11 // pred_fallthru
          _
      $region12: #{value_network_forward.5} parent=5 // pred_fallthru
        _
      %p124 = scmp.lt.s32.totalorder %s9, 2
      // Predicated region
      $region21: #{value_network_forward.5} parent=5 // pred_check
        %p125 = pneg %p124
      $region22: #{value_network_forward.5} parent=5 // pred_check_branch
        %127 = sbr.rel (%p125) target = $region24
      $region23: #{value_network_forward.5} parent=5 // pred_region
        // Predicated region
        $region25: #{value_network_forward.5} parent=23 // pred_check
          %p128 = pneg %p29
        $region26: #{value_network_forward.5} parent=23 // pred_check_branch
          %130 = sbr.rel (%p128) target = $region28
        $region27: #{value_network_forward.5} parent=23 // pred_region
          %s131 = smul.u32 11, %s9
          %s132 = ssub.s32 21, %s131
          %p133 = scmp.lt.s32.totalorder %s132, 11
          %s134 = scalar_select %p133, %s132, 11
          %s135 = smul.u32 4, %s134
          %s136 = smul.u32 %s135, 4
          %p137 = scmp.lt.s32.totalorder %s131, 20
          %s138 = scalar_select %p137, %s131, 20
          %s139 = smul.addr %s138, 4
          %s140 = smul.addr %s139, 4
          %s141 = scalar_lea.vmem %s0, %s140
          %s142 = smul.u32 11, %s9
          %s143 = ssub.s32 21, %s142
          %p144 = scmp.lt.s32.totalorder %s143, 11
          %s145 = scalar_select %p144, %s143, 11
          %s146 = smul.u32 4, %s145
          %s147 = smul.u32 %s146, 4
        $region28: #{value_network_forward.5} parent=23 // pred_fallthru
          _
      $region24: #{value_network_forward.5} parent=5 // pred_fallthru
        _
      %p148 = scmp.le.s32.totalorder 1, %s9
      %p149 = scmp.lt.s32.totalorder %s9, 3
      %p150 = pnand %p148, %p149
      %p151 = pneg %p150
      // Predicated region
      $region29: #{value_network_forward.5} parent=5 // pred_check
        _
      $region30: #{value_network_forward.5} parent=5 // pred_check_branch
        %153 = sbr.rel (%p150) target = $region32
      $region31: #{value_network_forward.5} parent=5 // pred_region
        %s154 = ssub.s32 %s9, 1
        %s155 = smul.u32 11, %s14
        %s156 = ssub.s32 21, %s155
        %p157 = scmp.lt.s32.totalorder %s156, 11
        %s158 = scalar_select %p157, %s156, 11
        %s159 = smul.u32 4, %s158
        %s160 = smul.u32 %s159, 4
        %p161 = scmp.lt.s32.totalorder %s155, 20
        %s162 = scalar_select %p161, %s155, 20
        %s163 = smul.addr %s162, 4
        %s164 = smul.addr %s163, 4
        %s165 = scalar_lea.vmem %s0, %s164
        %p166 = pneg %p35
        %p167 = pneg %p32
        %p168 = pneg %p56
        %p169 = pneg %p53
        %p170 = pneg %p77
        %p171 = pneg %p74
        %p172 = pneg %p103
        %p173 = pneg %p100
        %s174 = sand.u32 %s90, 1
        %s175 = sand.u32 %s90, 1
        %s176 = smul.addr %s175, 44
        %s177 = scalar_lea.vmem [#allocation2], %s176
        %s178 = smul.u32 11, %s14
        %s179 = ssub.s32 21, %s178
        %p180 = scmp.lt.s32.totalorder %s179, 11
        %s181 = scalar_select %p180, %s179, 11
        %s182 = smul.u32 4, %s181
        %s183 = smul.u32 %s182, 4
        %p184 = scmp.lt.s32.totalorder %s178, 20
        %s185 = scalar_select %p184, %s178, 20
        %s186 = smul.addr %s185, 4
        %s187 = smul.addr %s186, 4
        %s188 = scalar_lea.vmem %s0, %s187
        %s189 = smul.u32 11, %s14
        %s190 = ssub.s32 21, %s189
        %p191 = scmp.lt.s32.totalorder %s190, 11
        %s192 = scalar_select %p191, %s190, 11
        %s193 = smul.u32 4, %s192
        %s194 = smul.u32 %s193, 4
        %s195 = smul.u32 11, %s14
        %s196 = ssub.s32 21, %s195
        %p197 = scmp.lt.s32.totalorder %s196, 11
        %s198 = scalar_select %p197, %s196, 11
        %s199 = smul.u32 4, %s198
        %v200 = vld [vmem:[%s188] sm:$0xff]
        %v201 = vld [vmem:[%s188 + $0x8] sm:$0xff]
        %v202 = vld [vmem:[%s188 + $0x10] sm:$0xff]
        %v203 = vld [vmem:[%s188 + $0x18] sm:$0xff]
        %v204 = vld [vmem:[%s188 + $0x20] sm:$0xff]
        %v205 = vld [vmem:[%s188 + $0x28] sm:$0xff]
        %v206 = vld [vmem:[%s188 + $0x30] sm:$0xff]
        %v207 = vld [vmem:[%s188 + $0x38] sm:$0xff]
        %v208 = vld [vmem:[%s188 + $0x40] sm:$0xff]
        %v209 = vld [vmem:[%s188 + $0x48] sm:$0xff]
        %v210 = vld [vmem:[%s188 + $0x50] sm:$0xff]
        %v211 = vld [vmem:[%s188 + $0x58] sm:$0xff]
        %v212 = vld [vmem:[%s188 + $0x60] sm:$0xff]
        %v213 = vld [vmem:[%s188 + $0x68] sm:$0xff]
        %v214 = vld [vmem:[%s188 + $0x70] sm:$0xff]
        %v215 = vld [vmem:[%s188 + $0x78] sm:$0xff]
        %v216 = vld [vmem:[%s188 + $0x80] sm:$0xff]
        %v217 = vld [vmem:[%s188 + $0x88] sm:$0xff]
        %v218 = vld [vmem:[%s188 + $0x90] sm:$0xff]
        %v219 = vld [vmem:[%s188 + $0x98] sm:$0xff]
        %v220 = vld [vmem:[%s188 + $0xa0] sm:$0xff]
        %v221 = vld [vmem:[%s188 + $0xa8] sm:$0xff]
        %v222 = vld [vmem:[%s1] sm:$0xf]
        %v223 = vld [vmem:[%s1 + $0x4] sm:$0xf]
        %v224 = vld [vmem:[%s1 + $0x8] sm:$0xf]
        %v225 = vld [vmem:[%s1 + $0xc] sm:$0xf]
        %v226 = vld [vmem:[%s1 + $0x10] sm:$0xf]
        %v227 = vld [vmem:[%s1 + $0x14] sm:$0xf]
        %v228 = vld [vmem:[%s1 + $0x18] sm:$0xf]
        %v229 = vld [vmem:[%s1 + $0x1c] sm:$0xf]
        %v230 = vld [vmem:[%s1 + $0x20] sm:$0xf]
        %v231 = vld [vmem:[%s1 + $0x24] sm:$0xf]
        %v232 = vld [vmem:[%s1 + $0x28] sm:$0xf]
        %v233 = vld [vmem:[%s1 + $0x2c] sm:$0xf]
        %v234 = vld [vmem:[%s1 + $0x30] sm:$0xf]
        %v235 = vld [vmem:[%s1 + $0x34] sm:$0xf]
        %v236 = vld [vmem:[%s1 + $0x38] sm:$0xf]
        %v237 = vld [vmem:[%s1 + $0x3c] sm:$0xf]
        %v238 = vld [vmem:[%s1 + $0x40] sm:$0xf]
        %v239 = vld [vmem:[%s1 + $0x44] sm:$0xf]
        %v240 = vld [vmem:[%s1 + $0x48] sm:$0xf]
        %v241 = vld [vmem:[%s1 + $0x4c] sm:$0xf]
        %v242 = vld [vmem:[%s1 + $0x50] sm:$0xf]
        %v243 = vld [vmem:[%s1 + $0x54] sm:$0xf]
        %v244 = vld [vmem:[%s1 + $0x58] sm:$0xf]
        %v245 = vld [vmem:[%s1 + $0x5c] sm:$0xf]
        %v246 = vld [vmem:[%s1 + $0x60] sm:$0xf]
        %v247 = vld [vmem:[%s1 + $0x64] sm:$0xf]
        %v248 = vld [vmem:[%s1 + $0x68] sm:$0xf]
        %v249 = vld [vmem:[%s1 + $0x6c] sm:$0xf]
        %v250 = vld [vmem:[%s1 + $0x70] sm:$0xf]
        %v251 = vld [vmem:[%s1 + $0x74] sm:$0xf]
        %v252 = vld [vmem:[%s1 + $0x78] sm:$0xf]
        %v253 = vld [vmem:[%s1 + $0x7c] sm:$0xf]
        %v254 = vld [vmem:[%s1 + $0x80] sm:$0xf]
        %v255 = vld [vmem:[%s1 + $0x84] sm:$0xf]
        %v256 = vld [vmem:[%s1 + $0x88] sm:$0xf]
        %v257 = vld [vmem:[%s1 + $0x8c] sm:$0xf]
        %v258 = vld [vmem:[%s1 + $0x90] sm:$0xf]
        %v259 = vld [vmem:[%s1 + $0x94] sm:$0xf]
        %v260 = vld [vmem:[%s1 + $0x98] sm:$0xf]
        %v261 = vld [vmem:[%s1 + $0x9c] sm:$0xf]
        %v262 = vld [vmem:[%s1 + $0xa0] sm:$0xf]
        %v263 = vld [vmem:[%s1 + $0xa4] sm:$0xf]
        %v264 = vld [vmem:[%s1 + $0xa8] sm:$0xf]
        %v265 = vld [vmem:[%s1 + $0xac] sm:$0xf]
        %v266 = vld [vmem:[%s1 + $0xb0] sm:$0xf]
        %v267 = vld [vmem:[%s1 + $0xb4] sm:$0xf]
        %v268 = vld [vmem:[%s1 + $0xb8] sm:$0xf]
        %v269 = vld [vmem:[%s1 + $0xbc] sm:$0xf]
        %v270 = vld [vmem:[%s1 + $0xc0] sm:$0xf]
        %v271 = vld [vmem:[%s1 + $0xc4] sm:$0xf]
        %v272 = vld [vmem:[%s1 + $0xc8] sm:$0xf]
        %v273 = vld [vmem:[%s1 + $0xcc] sm:$0xf]
        %v274 = vld [vmem:[%s1 + $0xd0] sm:$0xf]
        %v275 = vld [vmem:[%s1 + $0xd4] sm:$0xf]
        %v276 = vld [vmem:[%s1 + $0xd8] sm:$0xf]
        %v277 = vld [vmem:[%s1 + $0xdc] sm:$0xf]
        %v278 = vld [vmem:[%s1 + $0xe0] sm:$0xf]
        %v279 = vld [vmem:[%s1 + $0xe4] sm:$0xf]
        %v280 = vld [vmem:[%s1 + $0xe8] sm:$0xf]
        %v281 = vld [vmem:[%s1 + $0xec] sm:$0xf]
        %v282 = vld [vmem:[%s1 + $0xf0] sm:$0xf]
        %v283 = vld [vmem:[%s1 + $0xf4] sm:$0xf]
        %v284 = vld [vmem:[%s1 + $0xf8] sm:$0xf]
        %v285 = vld [vmem:[%s1 + $0xfc] sm:$0xf]
        %v286 = vld [vmem:[%s2] sm:$0x1]
        %v288 = vperm.slane %v286, 0
        %v312 = vunpack.c.l.b16 %v200
        %v313 = vunpack.c.h.b16 %v200
        %v314 = vunpack.c.l.b16 %v201
        %v315 = vunpack.c.h.b16 %v201
        %v316 = vunpack.c.l.b16 %v202
        %v317 = vunpack.c.h.b16 %v202
        %v318 = vunpack.c.l.b16 %v203
        %v319 = vunpack.c.h.b16 %v203
        %v320 = vunpack.c.l.b16 %v204
        %v321 = vunpack.c.h.b16 %v204
        %v322 = vunpack.c.l.b16 %v205
        %v323 = vunpack.c.h.b16 %v205
        %v324 = vunpack.c.l.b16 %v206
        %v325 = vunpack.c.h.b16 %v206
        %v326 = vunpack.c.l.b16 %v207
        %v327 = vunpack.c.h.b16 %v207
        %v328 = vunpack.c.l.b16 %v208
        %v329 = vunpack.c.h.b16 %v208
        %v330 = vunpack.c.l.b16 %v209
        %v331 = vunpack.c.h.b16 %v209
        %v332 = vunpack.c.l.b16 %v210
        %v333 = vunpack.c.h.b16 %v210
        %v334 = vunpack.c.l.b16 %v211
        %v335 = vunpack.c.h.b16 %v211
        %v336 = vunpack.c.l.b16 %v212
        %v337 = vunpack.c.h.b16 %v212
        %v338 = vunpack.c.l.b16 %v213
        %v339 = vunpack.c.h.b16 %v213
        %v340 = vunpack.c.l.b16 %v214
        %v341 = vunpack.c.h.b16 %v214
        %v342 = vunpack.c.l.b16 %v215
        %v343 = vunpack.c.h.b16 %v215
        %v344 = vunpack.c.l.b16 %v216
        %v345 = vunpack.c.h.b16 %v216
        %v346 = vunpack.c.l.b16 %v217
        %v347 = vunpack.c.h.b16 %v217
        %v348 = vunpack.c.l.b16 %v218
        %v349 = vunpack.c.h.b16 %v218
        %v350 = vunpack.c.l.b16 %v219
        %v351 = vunpack.c.h.b16 %v219
        %v352 = vunpack.c.l.b16 %v220
        %v353 = vunpack.c.h.b16 %v220
        %v354 = vunpack.c.l.b16 %v221
        %v355 = vunpack.c.h.b16 %v221
        %v356 = vpack.c.b16 %v316, %v312
        %v357 = vpack.c.b16 %v317, %v313
        %v358 = vpack.c.b16 %v318, %v314
        %v359 = vpack.c.b16 %v319, %v315
        %v360 = vpack.c.b16 %v324, %v320
        %v361 = vpack.c.b16 %v325, %v321
        %v362 = vpack.c.b16 %v326, %v322
        %v363 = vpack.c.b16 %v327, %v323
        %v364 = vpack.c.b16 %v332, %v328
        %v365 = vpack.c.b16 %v333, %v329
        %v366 = vpack.c.b16 %v334, %v330
        %v367 = vpack.c.b16 %v335, %v331
        %v368 = vpack.c.b16 %v340, %v336
        %v369 = vpack.c.b16 %v341, %v337
        %v370 = vpack.c.b16 %v342, %v338
        %v371 = vpack.c.b16 %v343, %v339
        %v372 = vpack.c.b16 %v348, %v344
        %v373 = vpack.c.b16 %v349, %v345
        %v374 = vpack.c.b16 %v350, %v346
        %v375 = vpack.c.b16 %v351, %v347
        %v376 = vpack.c.b16 %v352, %v352
        %v377 = vpack.c.b16 %v353, %v353
        %v378 = vpack.c.b16 %v354, %v354
        %v379 = vpack.c.b16 %v355, %v355
        %v468 = vunpack.c.l.b16 %v222
        %v469 = vunpack.c.l.b16 %v223
        %v470 = vunpack.c.l.b16 %v224
        %v471 = vunpack.c.l.b16 %v225
        %v472 = vunpack.c.l.b16 %v226
        %v473 = vunpack.c.l.b16 %v227
        %v474 = vunpack.c.l.b16 %v228
        %v475 = vunpack.c.l.b16 %v229
        %v476 = vunpack.c.l.b16 %v230
        %v477 = vunpack.c.l.b16 %v231
        %v478 = vunpack.c.l.b16 %v232
        %v479 = vunpack.c.l.b16 %v233
        %v480 = vunpack.c.l.b16 %v234
        %v481 = vunpack.c.l.b16 %v235
        %v482 = vunpack.c.l.b16 %v236
        %v483 = vunpack.c.l.b16 %v237
        %v484 = vunpack.c.l.b16 %v238
        %v485 = vunpack.c.l.b16 %v239
        %v486 = vunpack.c.l.b16 %v240
        %v487 = vunpack.c.l.b16 %v241
        %v488 = vunpack.c.l.b16 %v242
        %v489 = vunpack.c.l.b16 %v243
        %v490 = vunpack.c.l.b16 %v244
        %v491 = vunpack.c.l.b16 %v245
        %v492 = vunpack.c.l.b16 %v246
        %v493 = vunpack.c.l.b16 %v247
        %v494 = vunpack.c.l.b16 %v248
        %v495 = vunpack.c.l.b16 %v249
        %v496 = vunpack.c.l.b16 %v250
        %v497 = vunpack.c.l.b16 %v251
        %v498 = vunpack.c.l.b16 %v252
        %v499 = vunpack.c.l.b16 %v253
        %v500 = vunpack.c.l.b16 %v254
        %v501 = vunpack.c.l.b16 %v255
        %v502 = vunpack.c.l.b16 %v256
        %v503 = vunpack.c.l.b16 %v257
        %v504 = vunpack.c.l.b16 %v258
        %v505 = vunpack.c.l.b16 %v259
        %v506 = vunpack.c.l.b16 %v260
        %v507 = vunpack.c.l.b16 %v261
        %v508 = vunpack.c.l.b16 %v262
        %v509 = vunpack.c.l.b16 %v263
        %v510 = vunpack.c.l.b16 %v264
        %v511 = vunpack.c.l.b16 %v265
        %v512 = vunpack.c.l.b16 %v266
        %v513 = vunpack.c.l.b16 %v267
        %v514 = vunpack.c.l.b16 %v268
        %v515 = vunpack.c.l.b16 %v269
        %v516 = vunpack.c.l.b16 %v270
        %v517 = vunpack.c.l.b16 %v271
        %v518 = vunpack.c.l.b16 %v272
        %v519 = vunpack.c.l.b16 %v273
        %v520 = vunpack.c.l.b16 %v274
        %v521 = vunpack.c.l.b16 %v275
        %v522 = vunpack.c.l.b16 %v276
        %v523 = vunpack.c.l.b16 %v277
        %v524 = vunpack.c.l.b16 %v278
        %v525 = vunpack.c.l.b16 %v279
        %v526 = vunpack.c.l.b16 %v280
        %v527 = vunpack.c.l.b16 %v281
        %v528 = vunpack.c.l.b16 %v282
        %v529 = vunpack.c.l.b16 %v283
        %v530 = vunpack.c.l.b16 %v284
        %v531 = vunpack.c.l.b16 %v285
        %v532 = vpack.c.b16 %v469, %v468
        %v533 = vpack.c.b16 %v471, %v470
        %v534 = vpack.c.b16 %v473, %v472
        %v535 = vpack.c.b16 %v475, %v474
        %v536 = vpack.c.b16 %v477, %v476
        %v537 = vpack.c.b16 %v479, %v478
        %v538 = vpack.c.b16 %v481, %v480
        %v539 = vpack.c.b16 %v483, %v482
        %v540 = vpack.c.b16 %v485, %v484
        %v541 = vpack.c.b16 %v487, %v486
        %v542 = vpack.c.b16 %v489, %v488
        %v543 = vpack.c.b16 %v491, %v490
        %v544 = vpack.c.b16 %v493, %v492
        %v545 = vpack.c.b16 %v495, %v494
        %v546 = vpack.c.b16 %v497, %v496
        %v547 = vpack.c.b16 %v499, %v498
        %v548 = vpack.c.b16 %v501, %v500
        %v549 = vpack.c.b16 %v503, %v502
        %v550 = vpack.c.b16 %v505, %v504
        %v551 = vpack.c.b16 %v507, %v506
        %v552 = vpack.c.b16 %v509, %v508
        %v553 = vpack.c.b16 %v511, %v510
        %v554 = vpack.c.b16 %v513, %v512
        %v555 = vpack.c.b16 %v515, %v514
        %v556 = vpack.c.b16 %v517, %v516
        %v557 = vpack.c.b16 %v519, %v518
        %v558 = vpack.c.b16 %v521, %v520
        %v559 = vpack.c.b16 %v523, %v522
        %v560 = vpack.c.b16 %v525, %v524
        %v561 = vpack.c.b16 %v527, %v526
        %v562 = vpack.c.b16 %v529, %v528
        %v563 = vpack.c.b16 %v531, %v530
        %596 = vmatpush.bf16.msra.mxu0 %v539
        %597 = vmatpush.bf16.msra.mxu0 %v538
        %598 = vmatpush.bf16.msra.mxu0 %v537
        %599 = vmatpush.bf16.msra.mxu0 %v536
        %600 = vmatpush.bf16.msra.mxu0 %v535
        %601 = vmatpush.bf16.msra.mxu0 %v534
        %602 = vmatpush.bf16.msra.mxu0 %v533
        %603 = vmatpush.bf16.msra.mxu0 %v532
        %604 = vmatmul.bf16.gmra.mxu0 %v356
        %v605 = vpop.f32.mrf.mxu0
        %v606 = vadd.f32 %v288, %v605
        %v607 = vpop.f32.mrf.mxu0
        %v608 = vadd.f32 %v288, %v607
        %609 = vmatmul.bf16.gmra.mxu0 %v360
        %v610 = vpop.f32.mrf.mxu0
        %v611 = vadd.f32 %v288, %v610
        %v612 = vpop.f32.mrf.mxu0
        %v613 = vadd.f32 %v288, %v612
        %614 = vmatmul.bf16.gmra.mxu0 %v364
        %v615 = vpop.f32.mrf.mxu0
        %v616 = vadd.f32 %v288, %v615
        %v617 = vpop.f32.mrf.mxu0
        %v618 = vadd.f32 %v288, %v617
        %619 = vmatmul.bf16.gmra.mxu0 %v368
        %v620 = vpop.f32.mrf.mxu0
        %v621 = vadd.f32 %v288, %v620
        %v622 = vpop.f32.mrf.mxu0
        %v623 = vadd.f32 %v288, %v622
        %624 = vmatmul.bf16.gmra.mxu0 %v372
        %v625 = vpop.f32.mrf.mxu0
        %v626 = vadd.f32 %v288, %v625
        %v627 = vpop.f32.mrf.mxu0
        %v628 = vadd.f32 %v288, %v627
        %629 = vmatmul.bf16.gmra.mxu0 %v376
        %v630 = vpop.f32.mrf.mxu0
        %v631 = vadd.f32 %v288, %v630
        %v632 = vpop.f32.mrf.mxu0
        %633 = vdwg.mxu0
        %634 = vmatpush.bf16.msra.mxu0 %v547
        %635 = vmatpush.bf16.msra.mxu0 %v546
        %636 = vmatpush.bf16.msra.mxu0 %v545
        %637 = vmatpush.bf16.msra.mxu0 %v544
        %638 = vmatpush.bf16.msra.mxu0 %v543
        %639 = vmatpush.bf16.msra.mxu0 %v542
        %640 = vmatpush.bf16.msra.mxu0 %v541
        %641 = vmatpush.bf16.msra.mxu0 %v540
        %642 = vmatmul.bf16.gmra.mxu0 %v357
        %v643 = vpop.f32.mrf.mxu0
        %v644 = vadd.f32 %v606, %v643
        %v645 = vpop.f32.mrf.mxu0
        %v646 = vadd.f32 %v608, %v645
        %647 = vmatmul.bf16.gmra.mxu0 %v361
        %v648 = vpop.f32.mrf.mxu0
        %v649 = vadd.f32 %v611, %v648
        %v650 = vpop.f32.mrf.mxu0
        %v651 = vadd.f32 %v613, %v650
        %652 = vmatmul.bf16.gmra.mxu0 %v365
        %v653 = vpop.f32.mrf.mxu0
        %v654 = vadd.f32 %v616, %v653
        %v655 = vpop.f32.mrf.mxu0
        %v656 = vadd.f32 %v618, %v655
        %657 = vmatmul.bf16.gmra.mxu0 %v369
        %v658 = vpop.f32.mrf.mxu0
        %v659 = vadd.f32 %v621, %v658
        %v660 = vpop.f32.mrf.mxu0
        %v661 = vadd.f32 %v623, %v660
        %662 = vmatmul.bf16.gmra.mxu0 %v373
        %v663 = vpop.f32.mrf.mxu0
        %v664 = vadd.f32 %v626, %v663
        %v665 = vpop.f32.mrf.mxu0
        %v666 = vadd.f32 %v628, %v665
        %667 = vmatmul.bf16.gmra.mxu0 %v377
        %v668 = vpop.f32.mrf.mxu0
        %v669 = vadd.f32 %v631, %v668
        %v670 = vpop.f32.mrf.mxu0
        %671 = vdwg.mxu0
        %672 = vmatpush.bf16.msra.mxu0 %v555
        %673 = vmatpush.bf16.msra.mxu0 %v554
        %674 = vmatpush.bf16.msra.mxu0 %v553
        %675 = vmatpush.bf16.msra.mxu0 %v552
        %676 = vmatpush.bf16.msra.mxu0 %v551
        %677 = vmatpush.bf16.msra.mxu0 %v550
        %678 = vmatpush.bf16.msra.mxu0 %v549
        %679 = vmatpush.bf16.msra.mxu0 %v548
        %680 = vmatmul.bf16.gmra.mxu0 %v358
        %v681 = vpop.f32.mrf.mxu0
        %v682 = vadd.f32 %v644, %v681
        %v683 = vpop.f32.mrf.mxu0
        %v684 = vadd.f32 %v646, %v683
        %685 = vmatmul.bf16.gmra.mxu0 %v362
        %v686 = vpop.f32.mrf.mxu0
        %v687 = vadd.f32 %v649, %v686
        %v688 = vpop.f32.mrf.mxu0
        %v689 = vadd.f32 %v651, %v688
        %690 = vmatmul.bf16.gmra.mxu0 %v366
        %v691 = vpop.f32.mrf.mxu0
        %v692 = vadd.f32 %v654, %v691
        %v693 = vpop.f32.mrf.mxu0
        %v694 = vadd.f32 %v656, %v693
        %695 = vmatmul.bf16.gmra.mxu0 %v370
        %v696 = vpop.f32.mrf.mxu0
        %v697 = vadd.f32 %v659, %v696
        %v698 = vpop.f32.mrf.mxu0
        %v699 = vadd.f32 %v661, %v698
        %700 = vmatmul.bf16.gmra.mxu0 %v374
        %v701 = vpop.f32.mrf.mxu0
        %v702 = vadd.f32 %v664, %v701
        %v703 = vpop.f32.mrf.mxu0
        %v704 = vadd.f32 %v666, %v703
        %705 = vmatmul.bf16.gmra.mxu0 %v378
        %v706 = vpop.f32.mrf.mxu0
        %v707 = vadd.f32 %v669, %v706
        %v708 = vpop.f32.mrf.mxu0
        %709 = vdwg.mxu0
        %710 = vmatpush.bf16.msra.mxu0 %v563
        %711 = vmatpush.bf16.msra.mxu0 %v562
        %712 = vmatpush.bf16.msra.mxu0 %v561
        %713 = vmatpush.bf16.msra.mxu0 %v560
        %714 = vmatpush.bf16.msra.mxu0 %v559
        %715 = vmatpush.bf16.msra.mxu0 %v558
        %716 = vmatpush.bf16.msra.mxu0 %v557
        %717 = vmatpush.bf16.msra.mxu0 %v556
        %718 = vmatmul.bf16.gmra.mxu0 %v359
        %v719 = vpop.f32.mrf.mxu0
        %v720 = vadd.f32 %v682, %v719
        %v721 = vpop.f32.mrf.mxu0
        %v722 = vadd.f32 %v684, %v721
        %723 = vmatmul.bf16.gmra.mxu0 %v363
        %v724 = vpop.f32.mrf.mxu0
        %v725 = vadd.f32 %v687, %v724
        %v726 = vpop.f32.mrf.mxu0
        %v727 = vadd.f32 %v689, %v726
        %728 = vmatmul.bf16.gmra.mxu0 %v367
        %v729 = vpop.f32.mrf.mxu0
        %v730 = vadd.f32 %v692, %v729
        %v731 = vpop.f32.mrf.mxu0
        %v732 = vadd.f32 %v694, %v731
        %733 = vmatmul.bf16.gmra.mxu0 %v371
        %v734 = vpop.f32.mrf.mxu0
        %v735 = vadd.f32 %v697, %v734
        %v736 = vpop.f32.mrf.mxu0
        %v737 = vadd.f32 %v699, %v736
        %738 = vmatmul.bf16.gmra.mxu0 %v375
        %v739 = vpop.f32.mrf.mxu0
        %v740 = vadd.f32 %v702, %v739
        %v741 = vpop.f32.mrf.mxu0
        %v742 = vadd.f32 %v704, %v741
        %743 = vmatmul.bf16.gmra.mxu0 %v379
        %v744 = vpop.f32.mrf.mxu0
        %v745 = vadd.f32 %v707, %v744
        %v746 = vpop.f32.mrf.mxu0
        %747 = vdwg.mxu0
        %v748 = vmin.f32 %v720, 20.0
        %v749 = vmin.f32 %v722, 20.0
        %v750 = vmin.f32 %v725, 20.0
        %v751 = vmin.f32 %v727, 20.0
        %v752 = vmin.f32 %v730, 20.0
        %v753 = vmin.f32 %v732, 20.0
        %v754 = vmin.f32 %v735, 20.0
        %v755 = vmin.f32 %v737, 20.0
        %v756 = vmin.f32 %v740, 20.0
        %v757 = vmin.f32 %v742, 20.0
        %v758 = vmin.f32 %v745, 20.0
        %v759 = vmul.f32 %v748, 1.442695
        %v760 = vpow.pop %v759
        %v761 = vmul.f32 %v749, 1.442695
        %v762 = vpow.pop %v761
        %v763 = vmul.f32 %v750, 1.442695
        %v764 = vpow.pop %v763
        %v765 = vmul.f32 %v751, 1.442695
        %v766 = vpow.pop %v765
        %v767 = vmul.f32 %v752, 1.442695
        %v768 = vpow.pop %v767
        %v769 = vmul.f32 %v753, 1.442695
        %v770 = vpow.pop %v769
        %v771 = vmul.f32 %v754, 1.442695
        %v772 = vpow.pop %v771
        %v773 = vmul.f32 %v755, 1.442695
        %v774 = vpow.pop %v773
        %v775 = vmul.f32 %v756, 1.442695
        %v776 = vpow.pop %v775
        %v777 = vmul.f32 %v757, 1.442695
        %v778 = vpow.pop %v777
        %v779 = vmul.f32 %v758, 1.442695
        %v780 = vpow.pop %v779
        %v781 = vadd.f32 %v760, 2.0
        %v782 = vadd.f32 %v762, 2.0
        %v783 = vadd.f32 %v764, 2.0
        %v784 = vadd.f32 %v766, 2.0
        %v785 = vadd.f32 %v768, 2.0
        %v786 = vadd.f32 %v770, 2.0
        %v787 = vadd.f32 %v772, 2.0
        %v788 = vadd.f32 %v774, 2.0
        %v789 = vadd.f32 %v776, 2.0
        %v790 = vadd.f32 %v778, 2.0
        %v791 = vadd.f32 %v780, 2.0
        %v792 = vmul.f32 %v760, %v781
        %v793 = vmul.f32 %v762, %v782
        %v794 = vmul.f32 %v764, %v783
        %v795 = vmul.f32 %v766, %v784
        %v796 = vmul.f32 %v768, %v785
        %v797 = vmul.f32 %v770, %v786
        %v798 = vmul.f32 %v772, %v787
        %v799 = vmul.f32 %v774, %v788
        %v800 = vmul.f32 %v776, %v789
        %v801 = vmul.f32 %v778, %v790
        %v802 = vmul.f32 %v780, %v791
        %v803 = vmul.f32 %v720, %v792
        %v804 = vmul.f32 %v722, %v793
        %v805 = vmul.f32 %v725, %v794
        %v806 = vmul.f32 %v727, %v795
        %v807 = vmul.f32 %v730, %v796
        %v808 = vmul.f32 %v732, %v797
        %v809 = vmul.f32 %v735, %v798
        %v810 = vmul.f32 %v737, %v799
        %v811 = vmul.f32 %v740, %v800
        %v812 = vmul.f32 %v742, %v801
        %v813 = vmul.f32 %v745, %v802
        %v814 = vadd.f32 %v792, 2.0
        %v815 = vadd.f32 %v793, 2.0
        %v816 = vadd.f32 %v794, 2.0
        %v817 = vadd.f32 %v795, 2.0
        %v818 = vadd.f32 %v796, 2.0
        %v819 = vadd.f32 %v797, 2.0
        %v820 = vadd.f32 %v798, 2.0
        %v821 = vadd.f32 %v799, 2.0
        %v822 = vadd.f32 %v800, 2.0
        %v823 = vadd.f32 %v801, 2.0
        %v824 = vadd.f32 %v802, 2.0
        %v825 = vrcp.pop %v814
        %v826 = vrcp.pop %v815
        %v827 = vrcp.pop %v816
        %v828 = vrcp.pop %v817
        %v829 = vrcp.pop %v818
        %v830 = vrcp.pop %v819
        %v831 = vrcp.pop %v820
        %v832 = vrcp.pop %v821
        %v833 = vrcp.pop %v822
        %v834 = vrcp.pop %v823
        %v835 = vrcp.pop %v824
        %v836 = vmul.f32 %v803, %v825
        %v837 = vmul.f32 %v804, %v826
        %v838 = vmul.f32 %v805, %v827
        %v839 = vmul.f32 %v806, %v828
        %v840 = vmul.f32 %v807, %v829
        %v841 = vmul.f32 %v808, %v830
        %v842 = vmul.f32 %v809, %v831
        %v843 = vmul.f32 %v810, %v832
        %v844 = vmul.f32 %v811, %v833
        %v845 = vmul.f32 %v812, %v834
        %v846 = vmul.f32 %v813, %v835
        %v847 = vpack.c.bf16 %v836, %v836
        %v848 = vpack.c.bf16 %v837, %v837
        %v849 = vpack.c.bf16 %v838, %v838
        %v850 = vpack.c.bf16 %v839, %v839
        %v851 = vpack.c.bf16 %v840, %v840
        %v852 = vpack.c.bf16 %v841, %v841
        %v853 = vpack.c.bf16 %v842, %v842
        %v854 = vpack.c.bf16 %v843, %v843
        %v855 = vpack.c.bf16 %v844, %v844
        %v856 = vpack.c.bf16 %v845, %v845
        %v857 = vpack.c.bf16 %v846, %v846
        %vm858 = vcmask 519168
        %859 = vst.msk [vmem:[%s177] sm:$0xf] %vm858, %v847
        %860 = vst.msk [vmem:[%s177 + $0x4] sm:$0xf] %vm858, %v848
        %861 = vst.msk [vmem:[%s177 + $0x8] sm:$0xf] %vm858, %v849
        %862 = vst.msk [vmem:[%s177 + $0xc] sm:$0xf] %vm858, %v850
        %863 = vst.msk [vmem:[%s177 + $0x10] sm:$0xf] %vm858, %v851
        %864 = vst.msk [vmem:[%s177 + $0x14] sm:$0xf] %vm858, %v852
        %865 = vst.msk [vmem:[%s177 + $0x18] sm:$0xf] %vm858, %v853
        %866 = vst.msk [vmem:[%s177 + $0x1c] sm:$0xf] %vm858, %v854
        %867 = vst.msk [vmem:[%s177 + $0x20] sm:$0xf] %vm858, %v855
        %868 = vst.msk [vmem:[%s177 + $0x24] sm:$0xf] %vm858, %v856
        %869 = vst.msk [vmem:[%s177 + $0x28] sm:$0xf] %vm858, %v857
        %s870 = sand.u32 %s90, 1
        %s871 = sand.u32 %s90, 1
        %s872 = smul.addr %s871, 44
        %s873 = scalar_lea.vmem [#allocation2], %s872
        // Predicated region
        $region33: #{value_network_forward.5} parent=31 // pred_check
          %p874 = pneg %p100
        $region34: #{value_network_forward.5} parent=31 // pred_check_branch
          %876 = sbr.rel (%p874) target = $region36
        $region35: #{value_network_forward.5} parent=31 // pred_region
          %s877 = smul.u32 11, %s14
          %s878 = ssub.s32 21, %s877
          %p879 = scmp.lt.s32.totalorder %s878, 11
          %s880 = scalar_select %p879, %s878, 11
          %s881 = smul.u32 4, %s880
          %p882 = scmp.ne.s32.totalorder 0, %s881
          %s883 = smul.addr %s877, 4
          %s884 = scalar_lea.vmem %s3, %s883
          // Predicated region
          $region37: #{value_network_forward.5} parent=35 // pred_check
            %p885 = pneg %p882
          $region38: #{value_network_forward.5} parent=35 // pred_check_branch
            %887 = sbr.rel (%p885) target = $region40
          $region39: #{value_network_forward.5} parent=35 // pred_region
            // Predicated region
            $region41: #{value_network_forward.5} parent=39 // pred_check
              _
            $region42: #{value_network_forward.5} parent=39 // pred_check_branch
              %889 = sbr.rel target = $region44
            $region43: #{value_network_forward.5} parent=39 // pred_region
              // Predicated region
              $region63: #{value_network_forward.5} parent=43 // pred_check
                _
              $region64: #{value_network_forward.5} parent=43 // pred_check_branch
                %960 = sbr.rel (0) target = $region66
              $region65: #{value_network_forward.5} parent=43 // pred_region
                %s962 = ssub.s32 16, 1
                %s963 = sdiv.u32.pop %s880, 11
                %s964 = srem.u32.pop %s880, 11
                // While loop
                $region67: #{value_network_forward.5} parent=65 // loop_pre_header
                  _
                $region68: #{value_network_forward.5} parent=65 // loop_header
                  %s966 = sphi 0, %s968
                  %p967 = scmp.ge.s32.totalorder %s966, %s963
                  %s971 = sphi 0, %s998
                  %s972 = sphi %s873, %s1001
                  %s973 = sphi %s884, %s1002
                $region69: #{value_network_forward.5} parent=65 // loop_header_branch
                  %970 = sbr.rel (%p967) target = $region73
                $region70: #{value_network_forward.5} parent=65 // loop_body
                  %v974 = vld [vmem:[%s972] sm:%s962]
                  %975 = vst [vmem:[%s973] sm:%s962] %v974
                  %v976 = vld [vmem:[%s972 + $0x4] sm:%s962]
                  %977 = vst [vmem:[%s973 + $0x4] sm:%s962] %v976
                  %v978 = vld [vmem:[%s972 + $0x8] sm:%s962]
                  %979 = vst [vmem:[%s973 + $0x8] sm:%s962] %v978
                  %v980 = vld [vmem:[%s972 + $0xc] sm:%s962]
                  %981 = vst [vmem:[%s973 + $0xc] sm:%s962] %v980
                  %v982 = vld [vmem:[%s972 + $0x10] sm:%s962]
                  %983 = vst [vmem:[%s973 + $0x10] sm:%s962] %v982
                  %v984 = vld [vmem:[%s972 + $0x14] sm:%s962]
                  %985 = vst [vmem:[%s973 + $0x14] sm:%s962] %v984
                  %v986 = vld [vmem:[%s972 + $0x18] sm:%s962]
                  %987 = vst [vmem:[%s973 + $0x18] sm:%s962] %v986
                  %v988 = vld [vmem:[%s972 + $0x1c] sm:%s962]
                  %989 = vst [vmem:[%s973 + $0x1c] sm:%s962] %v988
                  %v990 = vld [vmem:[%s972 + $0x20] sm:%s962]
                  %991 = vst [vmem:[%s973 + $0x20] sm:%s962] %v990
                  %v992 = vld [vmem:[%s972 + $0x24] sm:%s962]
                  %993 = vst [vmem:[%s973 + $0x24] sm:%s962] %v992
                  %v994 = vld [vmem:[%s972 + $0x28] sm:%s962]
                  %995 = vst [vmem:[%s973 + $0x28] sm:%s962] %v994
                  %s996 = sadd.s32 1, %s971
                  %p997 = scmp.ge.s32.totalorder %s996, %s963
                  %s998 = scalar_select %p997, 0, %s996
                  %s999 = smul.u32 %s998, 44
                  %s1000 = smul.u32 %s998, 44
                  %s1001 = scalar_lea.vmem %s873, %s999 [#allocation2]
                  %s1002 = scalar_lea.vmem %s884, %s1000
                $region71: #{value_network_forward.5} parent=65 // loop_footer
                  %s968 = sadd.s32 %s966, 1
                $region72: #{value_network_forward.5} parent=65 // loop_footer_branch
                  %965 = sbr.rel target = $region68
                $region73: #{value_network_forward.5} parent=65 // loop_exit
                  _
                %s1003 = sdiv.u32.pop %s880, 11
                %s1004 = srem.u32.pop %s880, 11
                %s1005 = smul.u32 %s1003, 11
                %s1006 = smul.u32 4, %s1005
                %s1007 = scalar_lea.vmem %s873, %s1006 [#allocation2]
                %s1008 = smul.u32 4, %s1005
                %s1009 = scalar_lea.vmem %s884, %s1008
                // While loop
                $region74: #{value_network_forward.5} parent=65 // loop_pre_header
                  _
                $region75: #{value_network_forward.5} parent=65 // loop_header
                  %s1011 = sphi 0, %s1013
                  %p1012 = scmp.ge.s32.totalorder %s1011, %s1004
                  %s1016 = sphi 0, %s1023
                  %s1017 = sphi %s1007, %s1026
                  %s1018 = sphi %s1009, %s1027
                $region76: #{value_network_forward.5} parent=65 // loop_header_branch
                  %1015 = sbr.rel (%p1012) target = $region80
                $region77: #{value_network_forward.5} parent=65 // loop_body
                  %v1019 = vld [vmem:[%s1017] sm:%s962]
                  %1020 = vst [vmem:[%s1018] sm:%s962] %v1019
                  %s1021 = sadd.s32 1, %s1016
                  %p1022 = scmp.ge.s32.totalorder %s1021, %s1004
                  %s1023 = scalar_select %p1022, 0, %s1021
                  %s1024 = smul.u32 %s1023, 4
                  %s1025 = smul.u32 %s1023, 4
                  %s1026 = scalar_lea.vmem %s1007, %s1024 [#allocation2]
                  %s1027 = scalar_lea.vmem %s1009, %s1025
                $region78: #{value_network_forward.5} parent=65 // loop_footer
                  %s1013 = sadd.s32 %s1011, 1
                $region79: #{value_network_forward.5} parent=65 // loop_footer_branch
                  %1010 = sbr.rel target = $region75
                $region80: #{value_network_forward.5} parent=65 // loop_exit
                  _
              $region66: #{value_network_forward.5} parent=43 // pred_fallthru
                _
            $region44: #{value_network_forward.5} parent=39 // pred_fallthru
              _
            // Predicated region
            $region45: #{value_network_forward.5} parent=39 // pred_check
              _
            $region46: #{value_network_forward.5} parent=39 // pred_check_branch
              %891 = sbr.rel (0) target = $region48
            $region47: #{value_network_forward.5} parent=39 // pred_region
              %s893 = ssub.s32 16, 1
              %s894 = sdiv.u32.pop %s880, 11
              %s895 = srem.u32.pop %s880, 11
              // While loop
              $region49: #{value_network_forward.5} parent=47 // loop_pre_header
                _
              $region50: #{value_network_forward.5} parent=47 // loop_header
                %s897 = sphi 0, %s899
                %p898 = scmp.ge.s32.totalorder %s897, %s894
                %s902 = sphi 0, %s929
                %s903 = sphi %s873, %s932
                %s904 = sphi %s884, %s933
              $region51: #{value_network_forward.5} parent=47 // loop_header_branch
                %901 = sbr.rel (%p898) target = $region55
              $region52: #{value_network_forward.5} parent=47 // loop_body
                %v905 = vld [vmem:[%s903] sm:%s893]
                %906 = vst [vmem:[%s904] sm:%s893] %v905
                %v907 = vld [vmem:[%s903 + $0x4] sm:%s893]
                %908 = vst [vmem:[%s904 + $0x4] sm:%s893] %v907
                %v909 = vld [vmem:[%s903 + $0x8] sm:%s893]
                %910 = vst [vmem:[%s904 + $0x8] sm:%s893] %v909
                %v911 = vld [vmem:[%s903 + $0xc] sm:%s893]
                %912 = vst [vmem:[%s904 + $0xc] sm:%s893] %v911
                %v913 = vld [vmem:[%s903 + $0x10] sm:%s893]
                %914 = vst [vmem:[%s904 + $0x10] sm:%s893] %v913
                %v915 = vld [vmem:[%s903 + $0x14] sm:%s893]
                %916 = vst [vmem:[%s904 + $0x14] sm:%s893] %v915
                %v917 = vld [vmem:[%s903 + $0x18] sm:%s893]
                %918 = vst [vmem:[%s904 + $0x18] sm:%s893] %v917
                %v919 = vld [vmem:[%s903 + $0x1c] sm:%s893]
                %920 = vst [vmem:[%s904 + $0x1c] sm:%s893] %v919
                %v921 = vld [vmem:[%s903 + $0x20] sm:%s893]
                %922 = vst [vmem:[%s904 + $0x20] sm:%s893] %v921
                %v923 = vld [vmem:[%s903 + $0x24] sm:%s893]
                %924 = vst [vmem:[%s904 + $0x24] sm:%s893] %v923
                %v925 = vld [vmem:[%s903 + $0x28] sm:%s893]
                %926 = vst [vmem:[%s904 + $0x28] sm:%s893] %v925
                %s927 = sadd.s32 1, %s902
                %p928 = scmp.ge.s32.totalorder %s927, %s894
                %s929 = scalar_select %p928, 0, %s927
                %s930 = smul.u32 %s929, 44
                %s931 = smul.u32 %s929, 44
                %s932 = scalar_lea.vmem %s873, %s930 [#allocation2]
                %s933 = scalar_lea.vmem %s884, %s931
              $region53: #{value_network_forward.5} parent=47 // loop_footer
                %s899 = sadd.s32 %s897, 1
              $region54: #{value_network_forward.5} parent=47 // loop_footer_branch
                %896 = sbr.rel target = $region50
              $region55: #{value_network_forward.5} parent=47 // loop_exit
                _
              %s934 = sdiv.u32.pop %s880, 11
              %s935 = srem.u32.pop %s880, 11
              %s936 = smul.u32 %s934, 11
              %s937 = smul.u32 4, %s936
              %s938 = scalar_lea.vmem %s873, %s937 [#allocation2]
              %s939 = smul.u32 4, %s936
              %s940 = scalar_lea.vmem %s884, %s939
              // While loop
              $region56: #{value_network_forward.5} parent=47 // loop_pre_header
                _
              $region57: #{value_network_forward.5} parent=47 // loop_header
                %s942 = sphi 0, %s944
                %p943 = scmp.ge.s32.totalorder %s942, %s935
                %s947 = sphi 0, %s954
                %s948 = sphi %s938, %s957
                %s949 = sphi %s940, %s958
              $region58: #{value_network_forward.5} parent=47 // loop_header_branch
                %946 = sbr.rel (%p943) target = $region62
              $region59: #{value_network_forward.5} parent=47 // loop_body
                %v950 = vld [vmem:[%s948] sm:%s893]
                %951 = vst [vmem:[%s949] sm:%s893] %v950
                %s952 = sadd.s32 1, %s947
                %p953 = scmp.ge.s32.totalorder %s952, %s935
                %s954 = scalar_select %p953, 0, %s952
                %s955 = smul.u32 %s954, 4
                %s956 = smul.u32 %s954, 4
                %s957 = scalar_lea.vmem %s938, %s955 [#allocation2]
                %s958 = scalar_lea.vmem %s940, %s956
              $region60: #{value_network_forward.5} parent=47 // loop_footer
                %s944 = sadd.s32 %s942, 1
              $region61: #{value_network_forward.5} parent=47 // loop_footer_branch
                %941 = sbr.rel target = $region57
              $region62: #{value_network_forward.5} parent=47 // loop_exit
                _
            $region48: #{value_network_forward.5} parent=39 // pred_fallthru
              _
          $region40: #{value_network_forward.5} parent=35 // pred_fallthru
            _
          %1028 = vnop
        $region36: #{value_network_forward.5} parent=31 // pred_fallthru
          _
      $region32: #{value_network_forward.5} parent=5 // pred_fallthru
        _
      %p1029 = scmp.le.s32.totalorder 2, %s9
      // Predicated region
      $region81: #{value_network_forward.5} parent=5 // pred_check
        %p1030 = pneg %p1029
      $region82: #{value_network_forward.5} parent=5 // pred_check_branch
        %1032 = sbr.rel (%p1030) target = $region84
      $region83: #{value_network_forward.5} parent=5 // pred_region
        %s1033 = ssub.s32 %s9, 2
        // Predicated region
        $region85: #{value_network_forward.5} parent=83 // pred_check
          %p1034 = pneg %p106
        $region86: #{value_network_forward.5} parent=83 // pred_check_branch
          %1036 = sbr.rel (%p1034) target = $region88
        $region87: #{value_network_forward.5} parent=83 // pred_region
          %s1037 = sand.u32 %s91, 1
          %s1038 = sand.u32 %s91, 1
          %s1039 = smul.addr %s1038, 44
          %s1040 = scalar_lea.vmem [#allocation2], %s1039
        $region88: #{value_network_forward.5} parent=83 // pred_fallthru
          _
      $region84: #{value_network_forward.5} parent=5 // pred_fallthru
        _
    $region6: #{value_network_forward.5} parent=1 // loop_footer
      %s13 = sadd.s32 1, %s9
    $region7: #{value_network_forward.5} parent=1 // loop_footer_branch
      %8 = sbr.rel target = $region3
    $region8: #{value_network_forward.5} parent=1 // loop_exit
      _

// kernel: value_network_forward.6
$region0: #{value_network_forward.6}
  #allocation0 [shape = 'u32[]', space=smem, size = 0x4, offset = 0x4, fixed_abs, tag = 'smem constant byte address 0x4 - core index']
  #allocation1 [shape = 'u32[72,128]{1,0:T(1,128)}', space=vmem, size = 0x9000, scoped, tag = 'internal scratch']
  %s0 = inlined_call_operand.vmem [shape: bf16[98,576], index: 0, kind: input, shape index: {}]
  %s1 = inlined_call_operand.vmem [shape: bf16[576,64], index: 1, kind: input, shape index: {}]
  %s2 = inlined_call_operand.vmem [shape: f32[1,64], index: 2, kind: input, shape index: {}]
  %s3 = inlined_call_operand.vmem [shape: bf16[98,64], index: 3, kind: output, shape index: {}]
  %s4 = sld [smem:[#allocation0]]
  $region89: #{value_network_forward.6} parent=0
    _
  %s6 = ssub.s32 1, %s4
  %s7 = scalar_select 0, %s6, %s4
  $region1: #{value_network_forward.6} parent=0
    #allocation2 [shape = 'u8[28672]{0}', space=vmem, size = 0x7000, scoped, tag = 'output window, operand 0']
    loop: start=0, step=1, limit=4
    $region2: #{value_network_forward.6} parent=1 // loop_pre_header
      _
    $region3: #{value_network_forward.6} parent=1 // loop_header
      %s9 = sphi 0, %s13
      %p10 = scmp.ge.s32.totalorder %s9, 4
      %s19 = sphi 0, %s21
      %s22 = sphi 0, %s19
      %s23 = sphi 0, %s22
      %s39 = sphi 0, %s23
      %s43 = sphi 0, %s43
      %s45 = sphi 0, %s43
      %s46 = sphi 0, %s45
      %s60 = sphi 0, %s46
      %s64 = sphi 0, %s64
      %s66 = sphi 0, %s64
      %s67 = sphi 0, %s66
      %s81 = sphi 0, %s67
      %s87 = sphi 0, %s89
      %s90 = sphi 0, %s87
      %s91 = sphi 0, %s90
      %s107 = sphi 0, %s91
    $region4: #{value_network_forward.6} parent=1 // loop_header_branch
      %12 = sbr.rel (%p10) target = $region8
    $region5: #{value_network_forward.6} parent=1 // loop_body
      %s14 = ssub.s32 %s9, 1
      %s15 = ssub.s32 %s9, 2
      %s16 = sadd.s32 %s9, 1
      %s17 = ssub.s32 %s9, %s16
      %p18 = scmp.eq.s32.totalorder %s17, 0
      %s20 = sadd.s32 %s19, 1
      %s21 = scalar_select %p18, %s19, %s20
      %p24 = pneg %p18
      %p25 = scmp.eq.s32.totalorder %s9, 1
      %p26 = por %p24, %p25
      %p27 = scmp.ne.s32.totalorder %s19, %s22
      %p28 = scmp.eq.s32.totalorder %s9, 0
      %p29 = por %p27, %p28
      %p30 = scmp.ne.s32.totalorder %s19, %s22
      %p31 = scmp.eq.s32.totalorder %s14, 1
      %p32 = por %p30, %p31
      %p33 = scmp.ne.s32.totalorder %s22, %s23
      %p34 = scmp.eq.s32.totalorder %s14, 0
      %p35 = por %p33, %p34
      %p36 = scmp.ne.s32.totalorder %s22, %s23
      %p37 = scmp.eq.s32.totalorder %s15, 1
      %p38 = por %p36, %p37
      %p40 = scmp.ne.s32.totalorder %s23, %s39
      %p41 = scmp.eq.s32.totalorder %s15, 0
      %p42 = por %p40, %p41
      %s44 = sadd.s32 %s43, 1
      %p47 = scmp.eq.s32.totalorder %s9, 1
      %p48 = scmp.ne.s32.totalorder %s43, %s45
      %p49 = scmp.eq.s32.totalorder %s9, 0
      %p50 = por %p48, %p49
      %p51 = scmp.ne.s32.totalorder %s43, %s45
      %p52 = scmp.eq.s32.totalorder %s14, 1
      %p53 = por %p51, %p52
      %p54 = scmp.ne.s32.totalorder %s45, %s46
      %p55 = scmp.eq.s32.totalorder %s14, 0
      %p56 = por %p54, %p55
      %p57 = scmp.ne.s32.totalorder %s45, %s46
      %p58 = scmp.eq.s32.totalorder %s15, 1
      %p59 = por %p57, %p58
      %p61 = scmp.ne.s32.totalorder %s46, %s60
      %p62 = scmp.eq.s32.totalorder %s15, 0
      %p63 = por %p61, %p62
      %s65 = sadd.s32 %s64, 1
      %p68 = scmp.eq.s32.totalorder %s9, 1
      %p69 = scmp.ne.s32.totalorder %s64, %s66
      %p70 = scmp.eq.s32.totalorder %s9, 0
      %p71 = por %p69, %p70
      %p72 = scmp.ne.s32.totalorder %s64, %s66
      %p73 = scmp.eq.s32.totalorder %s14, 1
      %p74 = por %p72, %p73
      %p75 = scmp.ne.s32.totalorder %s66, %s67
      %p76 = scmp.eq.s32.totalorder %s14, 0
      %p77 = por %p75, %p76
      %p78 = scmp.ne.s32.totalorder %s66, %s67
      %p79 = scmp.eq.s32.totalorder %s15, 1
      %p80 = por %p78, %p79
      %p82 = scmp.ne.s32.totalorder %s67, %s81
      %p83 = scmp.eq.s32.totalorder %s15, 0
      %p84 = por %p82, %p83
      %s85 = ssub.s32 %s9, %s16
      %p86 = scmp.eq.s32.totalorder %s85, 0
      %s88 = sadd.s32 %s87, 1
      %s89 = scalar_select %p86, %s87, %s88
      %p92 = pneg %p86
      %p93 = scmp.eq.s32.totalorder %s9, 1
      %p94 = por %p92, %p93
      %p95 = scmp.ne.s32.totalorder %s87, %s90
      %p96 = scmp.eq.s32.totalorder %s9, 0
      %p97 = por %p95, %p96
      %p98 = scmp.ne.s32.totalorder %s87, %s90
      %p99 = scmp.eq.s32.totalorder %s14, 1
      %p100 = por %p98, %p99
      %p101 = scmp.ne.s32.totalorder %s90, %s91
      %p102 = scmp.eq.s32.totalorder %s14, 0
      %p103 = por %p101, %p102
      %p104 = scmp.ne.s32.totalorder %s90, %s91
      %p105 = scmp.eq.s32.totalorder %s15, 1
      %p106 = por %p104, %p105
      %p108 = scmp.ne.s32.totalorder %s91, %s107
      %p109 = scmp.eq.s32.totalorder %s15, 0
      %p110 = por %p108, %p109
      %p111 = scmp.le.s32.totalorder 1, %s9
      %p112 = scmp.lt.s32.totalorder %s9, 3
      %p113 = pnand %p111, %p112
      %p114 = pneg %p113
      // Predicated region
      $region9: #{value_network_forward.6} parent=5 // pred_check
        _
      $region10: #{value_network_forward.6} parent=5 // pred_check_branch
        %116 = sbr.rel (%p113) target = $region12
      $region11: #{value_network_forward.6} parent=5 // pred_region
        %s117 = ssub.s32 %s9, 1
        // Predicated region
        $region13: #{value_network_forward.6} parent=11 // pred_check
          %p118 = pneg %p56
        $region14: #{value_network_forward.6} parent=11 // pred_check_branch
          %120 = sbr.rel (%p118) target = $region16
        $region15: #{value_network_forward.6} parent=11 // pred_region
          _
        $region16: #{value_network_forward.6} parent=11 // pred_fallthru
          _
        // Predicated region
        $region17: #{value_network_forward.6} parent=11 // pred_check
          %p121 = pneg %p77
        $region18: #{value_network_forward.6} parent=11 // pred_check_branch
          %123 = sbr.rel (%p121) target = $region20
        $region19: #{value_network_forward.6} parent=11 // pred_region
          _
        $region20: #{value_network_forward.6} parent=11 // pred_fallthru
          _
      $region12: #{value_network_forward.6} parent=5 // pred_fallthru
        _
      %p124 = scmp.lt.s32.totalorder %s9, 2
      // Predicated region
      $region21: #{value_network_forward.6} parent=5 // pred_check
        %p125 = pneg %p124
      $region22: #{value_network_forward.6} parent=5 // pred_check_branch
        %127 = sbr.rel (%p125) target = $region24
      $region23: #{value_network_forward.6} parent=5 // pred_region
        // Predicated region
        $region25: #{value_network_forward.6} parent=23 // pred_check
          %p128 = pneg %p29
        $region26: #{value_network_forward.6} parent=23 // pred_check_branch
          %130 = sbr.rel (%p128) target = $region28
        $region27: #{value_network_forward.6} parent=23 // pred_region
          %s131 = smul.u32 7, %s9
          %s132 = ssub.s32 13, %s131
          %p133 = scmp.lt.s32.totalorder %s132, 7
          %s134 = scalar_select %p133, %s132, 7
          %s135 = smul.u32 4, %s134
          %s136 = smul.u32 %s135, 5
          %p137 = scmp.lt.s32.totalorder %s131, 12
          %s138 = scalar_select %p137, %s131, 12
          %s139 = smul.addr %s138, 5
          %s140 = smul.addr %s139, 4
          %s141 = scalar_lea.vmem %s0, %s140
          %s142 = smul.u32 7, %s9
          %s143 = ssub.s32 13, %s142
          %p144 = scmp.lt.s32.totalorder %s143, 7
          %s145 = scalar_select %p144, %s143, 7
          %s146 = smul.u32 4, %s145
          %s147 = smul.u32 %s146, 5
        $region28: #{value_network_forward.6} parent=23 // pred_fallthru
          _
      $region24: #{value_network_forward.6} parent=5 // pred_fallthru
        _
      %p148 = scmp.le.s32.totalorder 1, %s9
      %p149 = scmp.lt.s32.totalorder %s9, 3
      %p150 = pnand %p148, %p149
      %p151 = pneg %p150
      // Predicated region
      $region29: #{value_network_forward.6} parent=5 // pred_check
        _
      $region30: #{value_network_forward.6} parent=5 // pred_check_branch
        %153 = sbr.rel (%p150) target = $region32
      $region31: #{value_network_forward.6} parent=5 // pred_region
        %s154 = ssub.s32 %s9, 1
        %s155 = smul.u32 7, %s14
        %s156 = ssub.s32 13, %s155
        %p157 = scmp.lt.s32.totalorder %s156, 7
        %s158 = scalar_select %p157, %s156, 7
        %s159 = smul.u32 4, %s158
        %s160 = smul.u32 %s159, 5
        %p161 = scmp.lt.s32.totalorder %s155, 12
        %s162 = scalar_select %p161, %s155, 12
        %s163 = smul.addr %s162, 5
        %s164 = smul.addr %s163, 4
        %s165 = scalar_lea.vmem %s0, %s164
        %p166 = pneg %p35
        %p167 = pneg %p32
        %p168 = pneg %p56
        %p169 = pneg %p53
        %p170 = pneg %p77
        %p171 = pneg %p74
        %p172 = pneg %p103
        %p173 = pneg %p100
        %s174 = sand.u32 %s90, 1
        %s175 = sand.u32 %s90, 1
        %s176 = smul.addr %s175, 28
        %s177 = scalar_lea.vmem [#allocation2], %s176
        %s178 = smul.u32 7, %s14
        %s179 = ssub.s32 13, %s178
        %p180 = scmp.lt.s32.totalorder %s179, 7
        %s181 = scalar_select %p180, %s179, 7
        %s182 = smul.u32 4, %s181
        %s183 = smul.u32 %s182, 5
        %p184 = scmp.lt.s32.totalorder %s178, 12
        %s185 = scalar_select %p184, %s178, 12
        %s186 = smul.addr %s185, 5
        %s187 = smul.addr %s186, 4
        %s188 = scalar_lea.vmem %s0, %s187
        %s189 = smul.u32 7, %s14
        %s190 = ssub.s32 13, %s189
        %p191 = scmp.lt.s32.totalorder %s190, 7
        %s192 = scalar_select %p191, %s190, 7
        %s193 = smul.u32 4, %s192
        %s194 = smul.u32 %s193, 5
        %s195 = smul.u32 7, %s14
        %s196 = ssub.s32 13, %s195
        %p197 = scmp.lt.s32.totalorder %s196, 7
        %s198 = scalar_select %p197, %s196, 7
        %s199 = smul.u32 4, %s198
        %v201 = vld [vmem:[%s188] sm:$0xff]
        %v202 = vld [vmem:[%s188 + $0x8] sm:$0xff]
        %v203 = vld [vmem:[%s188 + $0x10] sm:$0xf]
        %v204 = vld [vmem:[%s188 + $0x14] sm:$0xff]
        %v205 = vld [vmem:[%s188 + $0x1c] sm:$0xff]
        %v206 = vld [vmem:[%s188 + $0x24] sm:$0xf]
        %v207 = vld [vmem:[%s188 + $0x28] sm:$0xff]
        %v208 = vld [vmem:[%s188 + $0x30] sm:$0xff]
        %v209 = vld [vmem:[%s188 + $0x38] sm:$0xf]
        %v210 = vld [vmem:[%s188 + $0x3c] sm:$0xff]
        %v211 = vld [vmem:[%s188 + $0x44] sm:$0xff]
        %v212 = vld [vmem:[%s188 + $0x4c] sm:$0xf]
        %v213 = vld [vmem:[%s188 + $0x50] sm:$0xff]
        %v214 = vld [vmem:[%s188 + $0x58] sm:$0xff]
        %v215 = vld [vmem:[%s188 + $0x60] sm:$0xf]
        %v216 = vld [vmem:[%s188 + $0x64] sm:$0xff]
        %v217 = vld [vmem:[%s188 + $0x6c] sm:$0xff]
        %v218 = vld [vmem:[%s188 + $0x74] sm:$0xf]
        %v219 = vld [vmem:[%s188 + $0x78] sm:$0xff]
        %v220 = vld [vmem:[%s188 + $0x80] sm:$0xff]
        %v221 = vld [vmem:[%s188 + $0x88] sm:$0xf]
        %v222 = vld [vmem:[%s1] sm:$0xf]
        %v223 = vld [vmem:[%s1 + $0x4] sm:$0xf]
        %v224 = vld [vmem:[%s1 + $0x8] sm:$0xf]
        %v225 = vld [vmem:[%s1 + $0xc] sm:$0xf]
        %v226 = vld [vmem:[%s1 + $0x10] sm:$0xf]
        %v227 = vld [vmem:[%s1 + $0x14] sm:$0xf]
        %v228 = vld [vmem:[%s1 + $0x18] sm:$0xf]
        %v229 = vld [vmem:[%s1 + $0x1c] sm:$0xf]
        %v230 = vld [vmem:[%s1 + $0x20] sm:$0xf]
        %v231 = vld [vmem:[%s1 + $0x24] sm:$0xf]
        %v232 = vld [vmem:[%s1 + $0x28] sm:$0xf]
        %v233 = vld [vmem:[%s1 + $0x2c] sm:$0xf]
        %v234 = vld [vmem:[%s1 + $0x30] sm:$0xf]
        %v235 = vld [vmem:[%s1 + $0x34] sm:$0xf]
        %v236 = vld [vmem:[%s1 + $0x38] sm:$0xf]
        %v237 = vld [vmem:[%s1 + $0x3c] sm:$0xf]
        %v238 = vld [vmem:[%s1 + $0x40] sm:$0xf]
        %v239 = vld [vmem:[%s1 + $0x44] sm:$0xf]
        %v240 = vld [vmem:[%s1 + $0x48] sm:$0xf]
        %v241 = vld [vmem:[%s1 + $0x4c] sm:$0xf]
        %v242 = vld [vmem:[%s1 + $0x50] sm:$0xf]
        %v243 = vld [vmem:[%s1 + $0x54] sm:$0xf]
        %v244 = vld [vmem:[%s1 + $0x58] sm:$0xf]
        %v245 = vld [vmem:[%s1 + $0x5c] sm:$0xf]
        %v246 = vld [vmem:[%s1 + $0x60] sm:$0xf]
        %v247 = vld [vmem:[%s1 + $0x64] sm:$0xf]
        %v248 = vld [vmem:[%s1 + $0x68] sm:$0xf]
        %v249 = vld [vmem:[%s1 + $0x6c] sm:$0xf]
        %v250 = vld [vmem:[%s1 + $0x70] sm:$0xf]
        %v251 = vld [vmem:[%s1 + $0x74] sm:$0xf]
        %v252 = vld [vmem:[%s1 + $0x78] sm:$0xf]
        %v253 = vld [vmem:[%s1 + $0x7c] sm:$0xf]
        %v254 = vld [vmem:[%s1 + $0x80] sm:$0xf]
        %v255 = vld [vmem:[%s1 + $0x84] sm:$0xf]
        %v256 = vld [vmem:[%s1 + $0x88] sm:$0xf]
        %v257 = vld [vmem:[%s1 + $0x8c] sm:$0xf]
        %v258 = vld [vmem:[%s1 + $0x90] sm:$0xf]
        %v259 = vld [vmem:[%s1 + $0x94] sm:$0xf]
        %v260 = vld [vmem:[%s1 + $0x98] sm:$0xf]
        %v261 = vld [vmem:[%s1 + $0x9c] sm:$0xf]
        %v262 = vld [vmem:[%s1 + $0xa0] sm:$0xf]
        %v263 = vld [vmem:[%s1 + $0xa4] sm:$0xf]
        %v264 = vld [vmem:[%s1 + $0xa8] sm:$0xf]
        %v265 = vld [vmem:[%s1 + $0xac] sm:$0xf]
        %v266 = vld [vmem:[%s1 + $0xb0] sm:$0xf]
        %v267 = vld [vmem:[%s1 + $0xb4] sm:$0xf]
        %v268 = vld [vmem:[%s1 + $0xb8] sm:$0xf]
        %v269 = vld [vmem:[%s1 + $0xbc] sm:$0xf]
        %v270 = vld [vmem:[%s1 + $0xc0] sm:$0xf]
        %v271 = vld [vmem:[%s1 + $0xc4] sm:$0xf]
        %v272 = vld [vmem:[%s1 + $0xc8] sm:$0xf]
        %v273 = vld [vmem:[%s1 + $0xcc] sm:$0xf]
        %v274 = vld [vmem:[%s1 + $0xd0] sm:$0xf]
        %v275 = vld [vmem:[%s1 + $0xd4] sm:$0xf]
        %v276 = vld [vmem:[%s1 + $0xd8] sm:$0xf]
        %v277 = vld [vmem:[%s1 + $0xdc] sm:$0xf]
        %v278 = vld [vmem:[%s1 + $0xe0] sm:$0xf]
        %v279 = vld [vmem:[%s1 + $0xe4] sm:$0xf]
        %v280 = vld [vmem:[%s1 + $0xe8] sm:$0xf]
        %v281 = vld [vmem:[%s1 + $0xec] sm:$0xf]
        %v282 = vld [vmem:[%s1 + $0xf0] sm:$0xf]
        %v283 = vld [vmem:[%s1 + $0xf4] sm:$0xf]
        %v284 = vld [vmem:[%s1 + $0xf8] sm:$0xf]
        %v285 = vld [vmem:[%s1 + $0xfc] sm:$0xf]
        %v286 = vld [vmem:[%s1 + $0x100] sm:$0xf]
        %v287 = vld [vmem:[%s1 + $0x104] sm:$0xf]
        %v288 = vld [vmem:[%s1 + $0x108] sm:$0xf]
        %v289 = vld [vmem:[%s1 + $0x10c] sm:$0xf]
        %v290 = vld [vmem:[%s1 + $0x110] sm:$0xf]
        %v291 = vld [vmem:[%s1 + $0x114] sm:$0xf]
        %v292 = vld [vmem:[%s1 + $0x118] sm:$0xf]
        %v293 = vld [vmem:[%s1 + $0x11c] sm:$0xf]
        %v294 = vld [vmem:[%s2] sm:$0x1]
        %v296 = vperm.slane %v294, 0
        %v319 = vunpack.c.l.b16 %v201
        %v320 = vunpack.c.h.b16 %v201
        %v321 = vunpack.c.l.b16 %v202
        %v322 = vunpack.c.h.b16 %v202
        %v323 = vunpack.c.l.b16 %v203
        %v324 = vunpack.c.l.b16 %v204
        %v325 = vunpack.c.h.b16 %v204
        %v326 = vunpack.c.l.b16 %v205
        %v327 = vunpack.c.h.b16 %v205
        %v328 = vunpack.c.l.b16 %v206
        %v329 = vunpack.c.l.b16 %v207
        %v330 = vunpack.c.h.b16 %v207
        %v331 = vunpack.c.l.b16 %v208
        %v332 = vunpack.c.h.b16 %v208
        %v333 = vunpack.c.l.b16 %v209
        %v334 = vunpack.c.l.b16 %v210
        %v335 = vunpack.c.h.b16 %v210
        %v336 = vunpack.c.l.b16 %v211
        %v337 = vunpack.c.h.b16 %v211
        %v338 = vunpack.c.l.b16 %v212
        %v339 = vunpack.c.l.b16 %v213
        %v340 = vunpack.c.h.b16 %v213
        %v341 = vunpack.c.l.b16 %v214
        %v342 = vunpack.c.h.b16 %v214
        %v343 = vunpack.c.l.b16 %v215
        %v344 = vunpack.c.l.b16 %v216
        %v345 = vunpack.c.h.b16 %v216
        %v346 = vunpack.c.l.b16 %v217
        %v347 = vunpack.c.h.b16 %v217
        %v348 = vunpack.c.l.b16 %v218
        %v349 = vunpack.c.l.b16 %v219
        %v350 = vunpack.c.h.b16 %v219
        %v351 = vunpack.c.l.b16 %v220
        %v352 = vunpack.c.h.b16 %v220
        %v353 = vunpack.c.l.b16 %v221
        %v354 = vpack.c.b16 %v324, %v319
        %v355 = vpack.c.b16 %v325, %v320
        %v356 = vpack.c.b16 %v326, %v321
        %v357 = vpack.c.b16 %v327, %v322
        %v358 = vpack.c.b16 %v328, %v323
        %v359 = vpack.c.b16 %v334, %v329
        %v360 = vpack.c.b16 %v335, %v330
        %v361 = vpack.c.b16 %v336, %v331
        %v362 = vpack.c.b16 %v337, %v332
        %v363 = vpack.c.b16 %v338, %v333
        %v364 = vpack.c.b16 %v344, %v339
        %v365 = vpack.c.b16 %v345, %v340
        %v366 = vpack.c.b16 %v346, %v341
        %v367 = vpack.c.b16 %v347, %v342
        %v368 = vpack.c.b16 %v348, %v343
        %v369 = vpack.c.b16 %v349, %v349
        %v370 = vpack.c.b16 %v350, %v350
        %v371 = vpack.c.b16 %v351, %v351
        %v372 = vpack.c.b16 %v352, %v352
        %v373 = vpack.c.b16 %v353, %v353
        %v462 = vunpack.c.l.b16 %v222
        %v463 = vunpack.c.l.b16 %v223
        %v464 = vunpack.c.l.b16 %v224
        %v465 = vunpack.c.l.b16 %v225
        %v466 = vunpack.c.l.b16 %v226
        %v467 = vunpack.c.l.b16 %v227
        %v468 = vunpack.c.l.b16 %v228
        %v469 = vunpack.c.l.b16 %v229
        %v470 = vunpack.c.l.b16 %v230
        %v471 = vunpack.c.l.b16 %v231
        %v472 = vunpack.c.l.b16 %v232
        %v473 = vunpack.c.l.b16 %v233
        %v474 = vunpack.c.l.b16 %v234
        %v475 = vunpack.c.l.b16 %v235
        %v476 = vunpack.c.l.b16 %v236
        %v477 = vunpack.c.l.b16 %v237
        %v478 = vunpack.c.l.b16 %v238
        %v479 = vunpack.c.l.b16 %v239
        %v480 = vunpack.c.l.b16 %v240
        %v481 = vunpack.c.l.b16 %v241
        %v482 = vunpack.c.l.b16 %v242
        %v483 = vunpack.c.l.b16 %v243
        %v484 = vunpack.c.l.b16 %v244
        %v485 = vunpack.c.l.b16 %v245
        %v486 = vunpack.c.l.b16 %v246
        %v487 = vunpack.c.l.b16 %v247
        %v488 = vunpack.c.l.b16 %v248
        %v489 = vunpack.c.l.b16 %v249
        %v490 = vunpack.c.l.b16 %v250
        %v491 = vunpack.c.l.b16 %v251
        %v492 = vunpack.c.l.b16 %v252
        %v493 = vunpack.c.l.b16 %v253
        %v494 = vunpack.c.l.b16 %v254
        %v495 = vunpack.c.l.b16 %v255
        %v496 = vunpack.c.l.b16 %v256
        %v497 = vunpack.c.l.b16 %v257
        %v498 = vunpack.c.l.b16 %v258
        %v499 = vunpack.c.l.b16 %v259
        %v500 = vunpack.c.l.b16 %v260
        %v501 = vunpack.c.l.b16 %v261
        %v502 = vunpack.c.l.b16 %v262
        %v503 = vunpack.c.l.b16 %v263
        %v504 = vunpack.c.l.b16 %v264
        %v505 = vunpack.c.l.b16 %v265
        %v506 = vunpack.c.l.b16 %v266
        %v507 = vunpack.c.l.b16 %v267
        %v508 = vunpack.c.l.b16 %v268
        %v509 = vunpack.c.l.b16 %v269
        %v510 = vunpack.c.l.b16 %v270
        %v511 = vunpack.c.l.b16 %v271
        %v512 = vunpack.c.l.b16 %v272
        %v513 = vunpack.c.l.b16 %v273
        %v514 = vunpack.c.l.b16 %v274
        %v515 = vunpack.c.l.b16 %v275
        %v516 = vunpack.c.l.b16 %v276
        %v517 = vunpack.c.l.b16 %v277
        %v518 = vunpack.c.l.b16 %v278
        %v519 = vunpack.c.l.b16 %v279
        %v520 = vunpack.c.l.b16 %v280
        %v521 = vunpack.c.l.b16 %v281
        %v522 = vunpack.c.l.b16 %v282
        %v523 = vunpack.c.l.b16 %v283
        %v524 = vunpack.c.l.b16 %v284
        %v525 = vunpack.c.l.b16 %v285
        %v526 = vunpack.c.l.b16 %v286
        %v527 = vunpack.c.l.b16 %v287
        %v528 = vunpack.c.l.b16 %v288
        %v529 = vunpack.c.l.b16 %v289
        %v530 = vunpack.c.l.b16 %v290
        %v531 = vunpack.c.l.b16 %v291
        %v532 = vunpack.c.l.b16 %v292
        %v533 = vunpack.c.l.b16 %v293
        %v534 = vpack.c.b16 %v463, %v462
        %v535 = vpack.c.b16 %v465, %v464
        %v536 = vpack.c.b16 %v467, %v466
        %v537 = vpack.c.b16 %v469, %v468
        %v538 = vpack.c.b16 %v471, %v470
        %v539 = vpack.c.b16 %v473, %v472
        %v540 = vpack.c.b16 %v475, %v474
        %v541 = vpack.c.b16 %v477, %v476
        %v542 = vpack.c.b16 %v479, %v478
        %v543 = vpack.c.b16 %v481, %v480
        %v544 = vpack.c.b16 %v483, %v482
        %v545 = vpack.c.b16 %v485, %v484
        %v546 = vpack.c.b16 %v487, %v486
        %v547 = vpack.c.b16 %v489, %v488
        %v548 = vpack.c.b16 %v491, %v490
        %v549 = vpack.c.b16 %v493, %v492
        %v550 = vpack.c.b16 %v495, %v494
        %v551 = vpack.c.b16 %v497, %v496
        %v552 = vpack.c.b16 %v499, %v498
        %v553 = vpack.c.b16 %v501, %v500
        %v554 = vpack.c.b16 %v503, %v502
        %v555 = vpack.c.b16 %v505, %v504
        %v556 = vpack.c.b16 %v507, %v506
        %v557 = vpack.c.b16 %v509, %v508
        %v558 = vpack.c.b16 %v511, %v510
        %v559 = vpack.c.b16 %v513, %v512
        %v560 = vpack.c.b16 %v515, %v514
        %v561 = vpack.c.b16 %v517, %v516
        %v562 = vpack.c.b16 %v519, %v518
        %v563 = vpack.c.b16 %v521, %v520
        %v564 = vpack.c.b16 %v523, %v522
        %v565 = vpack.c.b16 %v525, %v524
        %v566 = vpack.c.b16 %v527, %v526
        %v567 = vpack.c.b16 %v529, %v528
        %v568 = vpack.c.b16 %v531, %v530
        %v569 = vpack.c.b16 %v533, %v532
        %vm606 = vcmask 523264
        %v608 = vsel %vm606, %v358, 0
        %v611 = vsel %vm606, %v363, 0
        %v614 = vsel %vm606, %v368, 0
        %v617 = vsel %vm606, %v373, 0
        %619 = vmatpush.bf16.msra.mxu0 %v541
        %620 = vmatpush.bf16.msra.mxu0 %v540
        %621 = vmatpush.bf16.msra.mxu0 %v539
        %622 = vmatpush.bf16.msra.mxu0 %v538
        %623 = vmatpush.bf16.msra.mxu0 %v537
        %624 = vmatpush.bf16.msra.mxu0 %v536
        %625 = vmatpush.bf16.msra.mxu0 %v535
        %626 = vmatpush.bf16.msra.mxu0 %v534
        %627 = vmatmul.bf16.gmra.mxu0 %v354
        %v628 = vpop.f32.mrf.mxu0
        %v629 = vadd.f32 %v296, %v628
        %v630 = vpop.f32.mrf.mxu0
        %v631 = vadd.f32 %v296, %v630
        %632 = vmatmul.bf16.gmra.mxu0 %v359
        %v633 = vpop.f32.mrf.mxu0
        %v634 = vadd.f32 %v296, %v633
        %v635 = vpop.f32.mrf.mxu0
        %v636 = vadd.f32 %v296, %v635
        %637 = vmatmul.bf16.gmra.mxu0 %v364
        %v638 = vpop.f32.mrf.mxu0
        %v639 = vadd.f32 %v296, %v638
        %v640 = vpop.f32.mrf.mxu0
        %v641 = vadd.f32 %v296, %v640
        %642 = vmatmul.bf16.gmra.mxu0 %v369
        %v643 = vpop.f32.mrf.mxu0
        %v644 = vadd.f32 %v296, %v643
        %v645 = vpop.f32.mrf.mxu0
        %646 = vdwg.mxu0
        %647 = vmatpush.bf16.msra.mxu0 %v549
        %648 = vmatpush.bf16.msra.mxu0 %v548
        %649 = vmatpush.bf16.msra.mxu0 %v547
        %650 = vmatpush.bf16.msra.mxu0 %v546
        %651 = vmatpush.bf16.msra.mxu0 %v545
        %652 = vmatpush.bf16.msra.mxu0 %v544
        %653 = vmatpush.bf16.msra.mxu0 %v543
        %654 = vmatpush.bf16.msra.mxu0 %v542
        %655 = vmatmul.bf16.gmra.mxu0 %v355
        %v656 = vpop.f32.mrf.mxu0
        %v657 = vadd.f32 %v629, %v656
        %v658 = vpop.f32.mrf.mxu0
        %v659 = vadd.f32 %v631, %v658
        %660 = vmatmul.bf16.gmra.mxu0 %v360
        %v661 = vpop.f32.mrf.mxu0
        %v662 = vadd.f32 %v634, %v661
        %v663 = vpop.f32.mrf.mxu0
        %v664 = vadd.f32 %v636, %v663
        %665 = vmatmul.bf16.gmra.mxu0 %v365
        %v666 = vpop.f32.mrf.mxu0
        %v667 = vadd.f32 %v639, %v666
        %v668 = vpop.f32.mrf.mxu0
        %v669 = vadd.f32 %v641, %v668
        %670 = vmatmul.bf16.gmra.mxu0 %v370
        %v671 = vpop.f32.mrf.mxu0
        %v672 = vadd.f32 %v644, %v671
        %v673 = vpop.f32.mrf.mxu0
        %674 = vdwg.mxu0
        %675 = vmatpush.bf16.msra.mxu0 %v557
        %676 = vmatpush.bf16.msra.mxu0 %v556
        %677 = vmatpush.bf16.msra.mxu0 %v555
        %678 = vmatpush.bf16.msra.mxu0 %v554
        %679 = vmatpush.bf16.msra.mxu0 %v553
        %680 = vmatpush.bf16.msra.mxu0 %v552
        %681 = vmatpush.bf16.msra.mxu0 %v551
        %682 = vmatpush.bf16.msra.mxu0 %v550
        %683 = vmatmul.bf16.gmra.mxu0 %v356
        %v684 = vpop.f32.mrf.mxu0
        %v685 = vadd.f32 %v657, %v684
        %v686 = vpop.f32.mrf.mxu0
        %v687 = vadd.f32 %v659, %v686
        %688 = vmatmul.bf16.gmra.mxu0 %v361
        %v689 = vpop.f32.mrf.mxu0
        %v690 = vadd.f32 %v662, %v689
        %v691 = vpop.f32.mrf.mxu0
        %v692 = vadd.f32 %v664, %v691
        %693 = vmatmul.bf16.gmra.mxu0 %v366
        %v694 = vpop.f32.mrf.mxu0
        %v695 = vadd.f32 %v667, %v694
        %v696 = vpop.f32.mrf.mxu0
        %v697 = vadd.f32 %v669, %v696
        %698 = vmatmul.bf16.gmra.mxu0 %v371
        %v699 = vpop.f32.mrf.mxu0
        %v700 = vadd.f32 %v672, %v699
        %v701 = vpop.f32.mrf.mxu0
        %702 = vdwg.mxu0
        %703 = vmatpush.bf16.msra.mxu0 %v565
        %704 = vmatpush.bf16.msra.mxu0 %v564
        %705 = vmatpush.bf16.msra.mxu0 %v563
        %706 = vmatpush.bf16.msra.mxu0 %v562
        %707 = vmatpush.bf16.msra.mxu0 %v561
        %708 = vmatpush.bf16.msra.mxu0 %v560
        %709 = vmatpush.bf16.msra.mxu0 %v559
        %710 = vmatpush.bf16.msra.mxu0 %v558
        %711 = vmatmul.bf16.gmra.mxu0 %v357
        %v712 = vpop.f32.mrf.mxu0
        %v713 = vadd.f32 %v685, %v712
        %v714 = vpop.f32.mrf.mxu0
        %v715 = vadd.f32 %v687, %v714
        %716 = vmatmul.bf16.gmra.mxu0 %v362
        %v717 = vpop.f32.mrf.mxu0
        %v718 = vadd.f32 %v690, %v717
        %v719 = vpop.f32.mrf.mxu0
        %v720 = vadd.f32 %v692, %v719
        %721 = vmatmul.bf16.gmra.mxu0 %v367
        %v722 = vpop.f32.mrf.mxu0
        %v723 = vadd.f32 %v695, %v722
        %v724 = vpop.f32.mrf.mxu0
        %v725 = vadd.f32 %v697, %v724
        %726 = vmatmul.bf16.gmra.mxu0 %v372
        %v727 = vpop.f32.mrf.mxu0
        %v728 = vadd.f32 %v700, %v727
        %v729 = vpop.f32.mrf.mxu0
        %730 = vdwg.mxu0
        %731 = vmatpush.bf16.msra.mxu0 0
        %732 = vmatpush.bf16.msra.mxu0 0
        %733 = vmatpush.bf16.msra.mxu0 0
        %734 = vmatpush.bf16.msra.mxu0 0
        %735 = vmatpush.bf16.msra.mxu0 %v569
        %736 = vmatpush.bf16.msra.mxu0 %v568
        %737 = vmatpush.bf16.msra.mxu0 %v567
        %738 = vmatpush.bf16.msra.mxu0 %v566
        %739 = vmatmul.bf16.gmra.mxu0 %v608
        %v740 = vpop.f32.mrf.mxu0
        %v741 = vadd.f32 %v713, %v740
        %v742 = vpop.f32.mrf.mxu0
        %v743 = vadd.f32 %v715, %v742
        %744 = vmatmul.bf16.gmra.mxu0 %v611
        %v745 = vpop.f32.mrf.mxu0
        %v746 = vadd.f32 %v718, %v745
        %v747 = vpop.f32.mrf.mxu0
        %v748 = vadd.f32 %v720, %v747
        %749 = vmatmul.bf16.gmra.mxu0 %v614
        %v750 = vpop.f32.mrf.mxu0
        %v751 = vadd.f32 %v723, %v750
        %v752 = vpop.f32.mrf.mxu0
        %v753 = vadd.f32 %v725, %v752
        %754 = vmatmul.bf16.gmra.mxu0 %v617
        %v755 = vpop.f32.mrf.mxu0
        %v756 = vadd.f32 %v728, %v755
        %v757 = vpop.f32.mrf.mxu0
        %758 = vdwg.mxu0
        %v759 = vmin.f32 %v741, 20.0
        %v760 = vmin.f32 %v743, 20.0
        %v761 = vmin.f32 %v746, 20.0
        %v762 = vmin.f32 %v748, 20.0
        %v763 = vmin.f32 %v751, 20.0
        %v764 = vmin.f32 %v753, 20.0
        %v765 = vmin.f32 %v756, 20.0
        %v766 = vmul.f32 %v759, 1.442695
        %v767 = vpow.pop %v766
        %v768 = vmul.f32 %v760, 1.442695
        %v769 = vpow.pop %v768
        %v770 = vmul.f32 %v761, 1.442695
        %v771 = vpow.pop %v770
        %v772 = vmul.f32 %v762, 1.442695
        %v773 = vpow.pop %v772
        %v774 = vmul.f32 %v763, 1.442695
        %v775 = vpow.pop %v774
        %v776 = vmul.f32 %v764, 1.442695
        %v777 = vpow.pop %v776
        %v778 = vmul.f32 %v765, 1.442695
        %v779 = vpow.pop %v778
        %v780 = vadd.f32 %v767, 2.0
        %v781 = vadd.f32 %v769, 2.0
        %v782 = vadd.f32 %v771, 2.0
        %v783 = vadd.f32 %v773, 2.0
        %v784 = vadd.f32 %v775, 2.0
        %v785 = vadd.f32 %v777, 2.0
        %v786 = vadd.f32 %v779, 2.0
        %v787 = vmul.f32 %v767, %v780
        %v788 = vmul.f32 %v769, %v781
        %v789 = vmul.f32 %v771, %v782
        %v790 = vmul.f32 %v773, %v783
        %v791 = vmul.f32 %v775, %v784
        %v792 = vmul.f32 %v777, %v785
        %v793 = vmul.f32 %v779, %v786
        %v794 = vmul.f32 %v741, %v787
        %v795 = vmul.f32 %v743, %v788
        %v796 = vmul.f32 %v746, %v789
        %v797 = vmul.f32 %v748, %v790
        %v798 = vmul.f32 %v751, %v791
        %v799 = vmul.f32 %v753, %v792
        %v800 = vmul.f32 %v756, %v793
        %v801 = vadd.f32 %v787, 2.0
        %v802 = vadd.f32 %v788, 2.0
        %v803 = vadd.f32 %v789, 2.0
        %v804 = vadd.f32 %v790, 2.0
        %v805 = vadd.f32 %v791, 2.0
        %v806 = vadd.f32 %v792, 2.0
        %v807 = vadd.f32 %v793, 2.0
        %v808 = vrcp.pop %v801
        %v809 = vrcp.pop %v802
        %v810 = vrcp.pop %v803
        %v811 = vrcp.pop %v804
        %v812 = vrcp.pop %v805
        %v813 = vrcp.pop %v806
        %v814 = vrcp.pop %v807
        %v815 = vmul.f32 %v794, %v808
        %v816 = vmul.f32 %v795, %v809
        %v817 = vmul.f32 %v796, %v810
        %v818 = vmul.f32 %v797, %v811
        %v819 = vmul.f32 %v798, %v812
        %v820 = vmul.f32 %v799, %v813
        %v821 = vmul.f32 %v800, %v814
        %v822 = vpack.c.bf16 %v815, %v815
        %v823 = vpack.c.bf16 %v816, %v816
        %v824 = vpack.c.bf16 %v817, %v817
        %v825 = vpack.c.bf16 %v818, %v818
        %v826 = vpack.c.bf16 %v819, %v819
        %v827 = vpack.c.bf16 %v820, %v820
        %v828 = vpack.c.bf16 %v821, %v821
        %vm829 = vcmask 519168
        %830 = vst.msk [vmem:[%s177] sm:$0xf] %vm829, %v822
        %831 = vst.msk [vmem:[%s177 + $0x4] sm:$0xf] %vm829, %v823
        %832 = vst.msk [vmem:[%s177 + $0x8] sm:$0xf] %vm829, %v824
        %833 = vst.msk [vmem:[%s177 + $0xc] sm:$0xf] %vm829, %v825
        %834 = vst.msk [vmem:[%s177 + $0x10] sm:$0xf] %vm829, %v826
        %835 = vst.msk [vmem:[%s177 + $0x14] sm:$0xf] %vm829, %v827
        %836 = vst.msk [vmem:[%s177 + $0x18] sm:$0xf] %vm829, %v828
        %s837 = sand.u32 %s90, 1
        %s838 = sand.u32 %s90, 1
        %s839 = smul.addr %s838, 28
        %s840 = scalar_lea.vmem [#allocation2], %s839
        // Predicated region
        $region33: #{value_network_forward.6} parent=31 // pred_check
          %p841 = pneg %p100
        $region34: #{value_network_forward.6} parent=31 // pred_check_branch
          %843 = sbr.rel (%p841) target = $region36
        $region35: #{value_network_forward.6} parent=31 // pred_region
          %s844 = smul.u32 7, %s14
          %s845 = ssub.s32 13, %s844
          %p846 = scmp.lt.s32.totalorder %s845, 7
          %s847 = scalar_select %p846, %s845, 7
          %s848 = smul.u32 4, %s847
          %p849 = scmp.ne.s32.totalorder 0, %s848
          %s850 = smul.addr %s844, 4
          %s851 = scalar_lea.vmem %s3, %s850
          // Predicated region
          $region37: #{value_network_forward.6} parent=35 // pred_check
            %p852 = pneg %p849
          $region38: #{value_network_forward.6} parent=35 // pred_check_branch
            %854 = sbr.rel (%p852) target = $region40
          $region39: #{value_network_forward.6} parent=35 // pred_region
            // Predicated region
            $region41: #{value_network_forward.6} parent=39 // pred_check
              _
            $region42: #{value_network_forward.6} parent=39 // pred_check_branch
              %856 = sbr.rel target = $region44
            $region43: #{value_network_forward.6} parent=39 // pred_region
              // Predicated region
              $region63: #{value_network_forward.6} parent=43 // pred_check
                _
              $region64: #{value_network_forward.6} parent=43 // pred_check_branch
                %919 = sbr.rel (0) target = $region66
              $region65: #{value_network_forward.6} parent=43 // pred_region
                %s921 = ssub.s32 16, 1
                %s922 = sdiv.u32.pop %s847, 7
                %s923 = srem.u32.pop %s847, 7
                // While loop
                $region67: #{value_network_forward.6} parent=65 // loop_pre_header
                  _
                $region68: #{value_network_forward.6} parent=65 // loop_header
                  %s925 = sphi 0, %s927
                  %p926 = scmp.ge.s32.totalorder %s925, %s922
                  %s930 = sphi 0, %s949
                  %s931 = sphi %s840, %s952
                  %s932 = sphi %s851, %s953
                $region69: #{value_network_forward.6} parent=65 // loop_header_branch
                  %929 = sbr.rel (%p926) target = $region73
                $region70: #{value_network_forward.6} parent=65 // loop_body
                  %v933 = vld [vmem:[%s931] sm:%s921]
                  %934 = vst [vmem:[%s932] sm:%s921] %v933
                  %v935 = vld [vmem:[%s931 + $0x4] sm:%s921]
                  %936 = vst [vmem:[%s932 + $0x4] sm:%s921] %v935
                  %v937 = vld [vmem:[%s931 + $0x8] sm:%s921]
                  %938 = vst [vmem:[%s932 + $0x8] sm:%s921] %v937
                  %v939 = vld [vmem:[%s931 + $0xc] sm:%s921]
                  %940 = vst [vmem:[%s932 + $0xc] sm:%s921] %v939
                  %v941 = vld [vmem:[%s931 + $0x10] sm:%s921]
                  %942 = vst [vmem:[%s932 + $0x10] sm:%s921] %v941
                  %v943 = vld [vmem:[%s931 + $0x14] sm:%s921]
                  %944 = vst [vmem:[%s932 + $0x14] sm:%s921] %v943
                  %v945 = vld [vmem:[%s931 + $0x18] sm:%s921]
                  %946 = vst [vmem:[%s932 + $0x18] sm:%s921] %v945
                  %s947 = sadd.s32 1, %s930
                  %p948 = scmp.ge.s32.totalorder %s947, %s922
                  %s949 = scalar_select %p948, 0, %s947
                  %s950 = smul.u32 %s949, 28
                  %s951 = smul.u32 %s949, 28
                  %s952 = scalar_lea.vmem %s840, %s950 [#allocation2]
                  %s953 = scalar_lea.vmem %s851, %s951
                $region71: #{value_network_forward.6} parent=65 // loop_footer
                  %s927 = sadd.s32 %s925, 1
                $region72: #{value_network_forward.6} parent=65 // loop_footer_branch
                  %924 = sbr.rel target = $region68
                $region73: #{value_network_forward.6} parent=65 // loop_exit
                  _
                %s954 = sdiv.u32.pop %s847, 7
                %s955 = srem.u32.pop %s847, 7
                %s956 = smul.u32 %s954, 7
                %s957 = smul.u32 4, %s956
                %s958 = scalar_lea.vmem %s840, %s957 [#allocation2]
                %s959 = smul.u32 4, %s956
                %s960 = scalar_lea.vmem %s851, %s959
                // While loop
                $region74: #{value_network_forward.6} parent=65 // loop_pre_header
                  _
                $region75: #{value_network_forward.6} parent=65 // loop_header
                  %s962 = sphi 0, %s964
                  %p963 = scmp.ge.s32.totalorder %s962, %s955
                  %s967 = sphi 0, %s974
                  %s968 = sphi %s958, %s977
                  %s969 = sphi %s960, %s978
                $region76: #{value_network_forward.6} parent=65 // loop_header_branch
                  %966 = sbr.rel (%p963) target = $region80
                $region77: #{value_network_forward.6} parent=65 // loop_body
                  %v970 = vld [vmem:[%s968] sm:%s921]
                  %971 = vst [vmem:[%s969] sm:%s921] %v970
                  %s972 = sadd.s32 1, %s967
                  %p973 = scmp.ge.s32.totalorder %s972, %s955
                  %s974 = scalar_select %p973, 0, %s972
                  %s975 = smul.u32 %s974, 4
                  %s976 = smul.u32 %s974, 4
                  %s977 = scalar_lea.vmem %s958, %s975 [#allocation2]
                  %s978 = scalar_lea.vmem %s960, %s976
                $region78: #{value_network_forward.6} parent=65 // loop_footer
                  %s964 = sadd.s32 %s962, 1
                $region79: #{value_network_forward.6} parent=65 // loop_footer_branch
                  %961 = sbr.rel target = $region75
                $region80: #{value_network_forward.6} parent=65 // loop_exit
                  _
              $region66: #{value_network_forward.6} parent=43 // pred_fallthru
                _
            $region44: #{value_network_forward.6} parent=39 // pred_fallthru
              _
            // Predicated region
            $region45: #{value_network_forward.6} parent=39 // pred_check
              _
            $region46: #{value_network_forward.6} parent=39 // pred_check_branch
              %858 = sbr.rel (0) target = $region48
            $region47: #{value_network_forward.6} parent=39 // pred_region
              %s860 = ssub.s32 16, 1
              %s861 = sdiv.u32.pop %s847, 7
              %s862 = srem.u32.pop %s847, 7
              // While loop
              $region49: #{value_network_forward.6} parent=47 // loop_pre_header
                _
              $region50: #{value_network_forward.6} parent=47 // loop_header
                %s864 = sphi 0, %s866
                %p865 = scmp.ge.s32.totalorder %s864, %s861
                %s869 = sphi 0, %s888
                %s870 = sphi %s840, %s891
                %s871 = sphi %s851, %s892
              $region51: #{value_network_forward.6} parent=47 // loop_header_branch
                %868 = sbr.rel (%p865) target = $region55
              $region52: #{value_network_forward.6} parent=47 // loop_body
                %v872 = vld [vmem:[%s870] sm:%s860]
                %873 = vst [vmem:[%s871] sm:%s860] %v872
                %v874 = vld [vmem:[%s870 + $0x4] sm:%s860]
                %875 = vst [vmem:[%s871 + $0x4] sm:%s860] %v874
                %v876 = vld [vmem:[%s870 + $0x8] sm:%s860]
                %877 = vst [vmem:[%s871 + $0x8] sm:%s860] %v876
                %v878 = vld [vmem:[%s870 + $0xc] sm:%s860]
                %879 = vst [vmem:[%s871 + $0xc] sm:%s860] %v878
                %v880 = vld [vmem:[%s870 + $0x10] sm:%s860]
                %881 = vst [vmem:[%s871 + $0x10] sm:%s860] %v880
                %v882 = vld [vmem:[%s870 + $0x14] sm:%s860]
                %883 = vst [vmem:[%s871 + $0x14] sm:%s860] %v882
                %v884 = vld [vmem:[%s870 + $0x18] sm:%s860]
                %885 = vst [vmem:[%s871 + $0x18] sm:%s860] %v884
                %s886 = sadd.s32 1, %s869
                %p887 = scmp.ge.s32.totalorder %s886, %s861
                %s888 = scalar_select %p887, 0, %s886
                %s889 = smul.u32 %s888, 28
                %s890 = smul.u32 %s888, 28
                %s891 = scalar_lea.vmem %s840, %s889 [#allocation2]
                %s892 = scalar_lea.vmem %s851, %s890
              $region53: #{value_network_forward.6} parent=47 // loop_footer
                %s866 = sadd.s32 %s864, 1
              $region54: #{value_network_forward.6} parent=47 // loop_footer_branch
                %863 = sbr.rel target = $region50
              $region55: #{value_network_forward.6} parent=47 // loop_exit
                _
              %s893 = sdiv.u32.pop %s847, 7
              %s894 = srem.u32.pop %s847, 7
              %s895 = smul.u32 %s893, 7
              %s896 = smul.u32 4, %s895
              %s897 = scalar_lea.vmem %s840, %s896 [#allocation2]
              %s898 = smul.u32 4, %s895
              %s899 = scalar_lea.vmem %s851, %s898
              // While loop
              $region56: #{value_network_forward.6} parent=47 // loop_pre_header
                _
              $region57: #{value_network_forward.6} parent=47 // loop_header
                %s901 = sphi 0, %s903
                %p902 = scmp.ge.s32.totalorder %s901, %s894
                %s906 = sphi 0, %s913
                %s907 = sphi %s897, %s916
                %s908 = sphi %s899, %s917
              $region58: #{value_network_forward.6} parent=47 // loop_header_branch
                %905 = sbr.rel (%p902) target = $region62
              $region59: #{value_network_forward.6} parent=47 // loop_body
                %v909 = vld [vmem:[%s907] sm:%s860]
                %910 = vst [vmem:[%s908] sm:%s860] %v909
                %s911 = sadd.s32 1, %s906
                %p912 = scmp.ge.s32.totalorder %s911, %s894
                %s913 = scalar_select %p912, 0, %s911
                %s914 = smul.u32 %s913, 4
                %s915 = smul.u32 %s913, 4
                %s916 = scalar_lea.vmem %s897, %s914 [#allocation2]
                %s917 = scalar_lea.vmem %s899, %s915
              $region60: #{value_network_forward.6} parent=47 // loop_footer
                %s903 = sadd.s32 %s901, 1
              $region61: #{value_network_forward.6} parent=47 // loop_footer_branch
                %900 = sbr.rel target = $region57
              $region62: #{value_network_forward.6} parent=47 // loop_exit
                _
            $region48: #{value_network_forward.6} parent=39 // pred_fallthru
              _
          $region40: #{value_network_forward.6} parent=35 // pred_fallthru
            _
          %979 = vnop
        $region36: #{value_network_forward.6} parent=31 // pred_fallthru
          _
      $region32: #{value_network_forward.6} parent=5 // pred_fallthru
        _
      %p980 = scmp.le.s32.totalorder 2, %s9
      // Predicated region
      $region81: #{value_network_forward.6} parent=5 // pred_check
        %p981 = pneg %p980
      $region82: #{value_network_forward.6} parent=5 // pred_check_branch
        %983 = sbr.rel (%p981) target = $region84
      $region83: #{value_network_forward.6} parent=5 // pred_region
        %s984 = ssub.s32 %s9, 2
        // Predicated region
        $region85: #{value_network_forward.6} parent=83 // pred_check
          %p985 = pneg %p106
        $region86: #{value_network_forward.6} parent=83 // pred_check_branch
          %987 = sbr.rel (%p985) target = $region88
        $region87: #{value_network_forward.6} parent=83 // pred_region
          %s988 = sand.u32 %s91, 1
          %s989 = sand.u32 %s91, 1
          %s990 = smul.addr %s989, 28
          %s991 = scalar_lea.vmem [#allocation2], %s990
        $region88: #{value_network_forward.6} parent=83 // pred_fallthru
          _
      $region84: #{value_network_forward.6} parent=5 // pred_fallthru
        _
    $region6: #{value_network_forward.6} parent=1 // loop_footer
      %s13 = sadd.s32 1, %s9
    $region7: #{value_network_forward.6} parent=1 // loop_footer_branch
      %8 = sbr.rel target = $region3
    $region8: #{value_network_forward.6} parent=1 // loop_exit
      _

// kernel: value_network_forward.7
$region0: #{value_network_forward.7}
  #allocation0 [shape = 'u32[]', space=smem, size = 0x4, offset = 0x4, fixed_abs, tag = 'smem constant byte address 0x4 - core index']
  #allocation1 [shape = 'u32[72,128]{1,0:T(1,128)}', space=vmem, size = 0x9000, scoped, tag = 'internal scratch']
  %s0 = inlined_call_operand.vmem [shape: bf16[8,3136], index: 0, kind: input, shape index: {}]
  %s1 = inlined_call_operand.vmem [shape: bf16[3136,512], index: 1, kind: input, shape index: {}]
  %s2 = inlined_call_operand.vmem [shape: f32[1,512], index: 2, kind: input, shape index: {}]
  %s3 = inlined_call_operand.vmem [shape: bf16[512,128], index: 3, kind: input, shape index: {}]
  %s4 = inlined_call_operand.vmem [shape: f32[1,128], index: 4, kind: input, shape index: {}]
  %s5 = inlined_call_operand.vmem [shape: f32[8,128], index: 5, kind: output, shape index: {}]
  %s6 = sld [smem:[#allocation0]]
  $region30: #{value_network_forward.7} parent=0
    _
  %s8 = ssub.s32 1, %s6
  %s9 = scalar_select 0, %s8, %s6
  // Predicated region
  $region2: #{value_network_forward.7} parent=0 // pred_check
    _
  $region3: #{value_network_forward.7} parent=0 // pred_check_branch
    %11 = sbr.rel (0) target = $region5
  $region4: #{value_network_forward.7} parent=0 // pred_region
    _
  $region5: #{value_network_forward.7} parent=0 // pred_fallthru
    _
  // Predicated region
  $region6: #{value_network_forward.7} parent=0 // pred_check
    _
  $region7: #{value_network_forward.7} parent=0 // pred_check_branch
    %13 = sbr.rel (0) target = $region9
  $region8: #{value_network_forward.7} parent=0 // pred_region
    _
  $region9: #{value_network_forward.7} parent=0 // pred_fallthru
    _
  // Predicated region
  $region10: #{value_network_forward.7} parent=0 // pred_check
    _
  $region11: #{value_network_forward.7} parent=0 // pred_check_branch
    %15 = sbr.rel (0) target = $region13
  $region12: #{value_network_forward.7} parent=0 // pred_region
    _
  $region13: #{value_network_forward.7} parent=0 // pred_fallthru
    _
  // Predicated region
  $region14: #{value_network_forward.7} parent=0 // pred_check
    _
  $region15: #{value_network_forward.7} parent=0 // pred_check_branch
    %17 = sbr.rel (0) target = $region17
  $region16: #{value_network_forward.7} parent=0 // pred_region
    _
  $region17: #{value_network_forward.7} parent=0 // pred_fallthru
    _
  // Predicated region
  $region18: #{value_network_forward.7} parent=0 // pred_check
    _
  $region19: #{value_network_forward.7} parent=0 // pred_check_branch
    %19 = sbr.rel (0) target = $region21
  $region20: #{value_network_forward.7} parent=0 // pred_region
    _
  $region21: #{value_network_forward.7} parent=0 // pred_fallthru
    _
  %v21 = vld [vmem:[%s0] sm:$0xff]
  %v22 = vld [vmem:[%s0 + $0x8] sm:$0xff]
  %v23 = vld [vmem:[%s0 + $0x10] sm:$0xff]
  %v24 = vld [vmem:[%s0 + $0x18] sm:$0xff]
  %v25 = vld [vmem:[%s0 + $0x20] sm:$0xff]
  %v26 = vld [vmem:[%s0 + $0x28] sm:$0xff]
  %v27 = vld [vmem:[%s0 + $0x30] sm:$0xff]
  %v28 = vld [vmem:[%s0 + $0x38] sm:$0xff]
  %v29 = vld [vmem:[%s0 + $0x40] sm:$0xff]
  %v30 = vld [vmem:[%s0 + $0x48] sm:$0xff]
  %v31 = vld [vmem:[%s0 + $0x50] sm:$0xff]
  %v32 = vld [vmem:[%s0 + $0x58] sm:$0xff]
  %v33 = vld [vmem:[%s0 + $0x60] sm:$0xf]
  %v34 = vld [vmem:[%s1] sm:$0xff]
  %v35 = vld [vmem:[%s1 + $0x8] sm:$0xff]
  %v36 = vld [vmem:[%s1 + $0x10] sm:$0xff]
  %v37 = vld [vmem:[%s1 + $0x18] sm:$0xff]
  %v38 = vld [vmem:[%s1 + $0x20] sm:$0xff]
  %v39 = vld [vmem:[%s1 + $0x28] sm:$0xff]
  %v40 = vld [vmem:[%s1 + $0x30] sm:$0xff]
  %v41 = vld [vmem:[%s1 + $0x38] sm:$0xff]
  %v42 = vld [vmem:[%s1 + $0x40] sm:$0xff]
  %v43 = vld [vmem:[%s1 + $0x48] sm:$0xff]
  %v44 = vld [vmem:[%s1 + $0x50] sm:$0xff]
  %v45 = vld [vmem:[%s1 + $0x58] sm:$0xff]
  %v46 = vld [vmem:[%s1 + $0x60] sm:$0xff]
  %v47 = vld [vmem:[%s1 + $0x68] sm:$0xff]
  %v48 = vld [vmem:[%s1 + $0x70] sm:$0xff]
  %v49 = vld [vmem:[%s1 + $0x78] sm:$0xff]
  %v50 = vld [vmem:[%s1 + $0x80] sm:$0xff]
  %v51 = vld [vmem:[%s1 + $0x88] sm:$0xff]
  %v52 = vld [vmem:[%s1 + $0x90] sm:$0xff]
  %v53 = vld [vmem:[%s1 + $0x98] sm:$0xff]
  %v54 = vld [vmem:[%s1 + $0xa0] sm:$0xff]
  %v55 = vld [vmem:[%s1 + $0xa8] sm:$0xff]
  %v56 = vld [vmem:[%s1 + $0xb0] sm:$0xff]
  %v57 = vld [vmem:[%s1 + $0xb8] sm:$0xff]
  %v58 = vld [vmem:[%s1 + $0xc0] sm:$0xff]
  %v59 = vld [vmem:[%s1 + $0xc8] sm:$0xff]
  %v60 = vld [vmem:[%s1 + $0xd0] sm:$0xff]
  %v61 = vld [vmem:[%s1 + $0xd8] sm:$0xff]
  %v62 = vld [vmem:[%s1 + $0xe0] sm:$0xff]
  %v63 = vld [vmem:[%s1 + $0xe8] sm:$0xff]
  %v64 = vld [vmem:[%s1 + $0xf0] sm:$0xff]
  %v65 = vld [vmem:[%s1 + $0xf8] sm:$0xff]
  %v66 = vld [vmem:[%s1 + $0x100] sm:$0xff]
  %v67 = vld [vmem:[%s1 + $0x108] sm:$0xff]
  %v68 = vld [vmem:[%s1 + $0x110] sm:$0xff]
  %v69 = vld [vmem:[%s1 + $0x118] sm:$0xff]
  %v70 = vld [vmem:[%s1 + $0x120] sm:$0xff]
  %v71 = vld [vmem:[%s1 + $0x128] sm:$0xff]
  %v72 = vld [vmem:[%s1 + $0x130] sm:$0xff]
  %v73 = vld [vmem:[%s1 + $0x138] sm:$0xff]
  %v74 = vld [vmem:[%s1 + $0x140] sm:$0xff]
  %v75 = vld [vmem:[%s1 + $0x148] sm:$0xff]
  %v76 = vld [vmem:[%s1 + $0x150] sm:$0xff]
  %v77 = vld [vmem:[%s1 + $0x158] sm:$0xff]
  %v78 = vld [vmem:[%s1 + $0x160] sm:$0xff]
  %v79 = vld [vmem:[%s1 + $0x168] sm:$0xff]
  %v80 = vld [vmem:[%s1 + $0x170] sm:$0xff]
  %v81 = vld [vmem:[%s1 + $0x178] sm:$0xff]
  %v82 = vld [vmem:[%s1 + $0x180] sm:$0xff]
  %v83 = vld [vmem:[%s1 + $0x188] sm:$0xff]
  %v84 = vld [vmem:[%s1 + $0x190] sm:$0xff]
  %v85 = vld [vmem:[%s1 + $0x198] sm:$0xff]
  %v86 = vld [vmem:[%s1 + $0x1a0] sm:$0xff]
  %v87 = vld [vmem:[%s1 + $0x1a8] sm:$0xff]
  %v88 = vld [vmem:[%s1 + $0x1b0] sm:$0xff]
  %v89 = vld [vmem:[%s1 + $0x1b8] sm:$0xff]
  %v90 = vld [vmem:[%s1 + $0x1c0] sm:$0xff]
  %v91 = vld [vmem:[%s1 + $0x1c8] sm:$0xff]
  %v92 = vld [vmem:[%s1 + $0x1d0] sm:$0xff]
  %v93 = vld [vmem:[%s1 + $0x1d8] sm:$0xff]
  %v94 = vld [vmem:[%s1 + $0x1e0] sm:$0xff]
  %v95 = vld [vmem:[%s1 + $0x1e8] sm:$0xff]
  %v96 = vld [vmem:[%s1 + $0x1f0] sm:$0xff]
  %v97 = vld [vmem:[%s1 + $0x1f8] sm:$0xff]
  %v98 = vld [vmem:[%s1 + $0x200] sm:$0xff]
  %v99 = vld [vmem:[%s1 + $0x208] sm:$0xff]
  %v100 = vld [vmem:[%s1 + $0x210] sm:$0xff]
  %v101 = vld [vmem:[%s1 + $0x218] sm:$0xff]
  %v102 = vld [vmem:[%s1 + $0x220] sm:$0xff]
  %v103 = vld [vmem:[%s1 + $0x228] sm:$0xff]
  %v104 = vld [vmem:[%s1 + $0x230] sm:$0xff]
  %v105 = vld [vmem:[%s1 + $0x238] sm:$0xff]
  %v106 = vld [vmem:[%s1 + $0x240] sm:$0xff]
  %v107 = vld [vmem:[%s1 + $0x248] sm:$0xff]
  %v108 = vld [vmem:[%s1 + $0x250] sm:$0xff]
  %v109 = vld [vmem:[%s1 + $0x258] sm:$0xff]
  %v110 = vld [vmem:[%s1 + $0x260] sm:$0xff]
  %v111 = vld [vmem:[%s1 + $0x268] sm:$0xff]
  %v112 = vld [vmem:[%s1 + $0x270] sm:$0xff]
  %v113 = vld [vmem:[%s1 + $0x278] sm:$0xff]
  %v114 = vld [vmem:[%s1 + $0x280] sm:$0xff]
  %v115 = vld [vmem:[%s1 + $0x288] sm:$0xff]
  %v116 = vld [vmem:[%s1 + $0x290] sm:$0xff]
  %v117 = vld [vmem:[%s1 + $0x298] sm:$0xff]
  %v118 = vld [vmem:[%s1 + $0x2a0] sm:$0xff]
  %v119 = vld [vmem:[%s1 + $0x2a8] sm:$0xff]
  %v120 = vld [vmem:[%s1 + $0x2b0] sm:$0xff]
  %v121 = vld [vmem:[%s1 + $0x2b8] sm:$0xff]
  %v122 = vld [vmem:[%s1 + $0x2c0] sm:$0xff]
  %v123 = vld [vmem:[%s1 + $0x2c8] sm:$0xff]
  %v124 = vld [vmem:[%s1 + $0x2d0] sm:$0xff]
  %v125 = vld [vmem:[%s1 + $0x2d8] sm:$0xff]
  %v126 = vld [vmem:[%s1 + $0x2e0] sm:$0xff]
  %v127 = vld [vmem:[%s1 + $0x2e8] sm:$0xff]
  %v128 = vld [vmem:[%s1 + $0x2f0] sm:$0xff]
  %v129 = vld [vmem:[%s1 + $0x2f8] sm:$0xff]
  %v130 = vld [vmem:[%s1 + $0x300] sm:$0xff]
  %v131 = vld [vmem:[%s1 + $0x308] sm:$0xff]
  %v132 = vld [vmem:[%s1 + $0x310] sm:$0xff]
  %v133 = vld [vmem:[%s1 + $0x318] sm:$0xff]
  %v134 = vld [vmem:[%s1 + $0x320] sm:$0xff]
  %v135 = vld [vmem:[%s1 + $0x328] sm:$0xff]
  %v136 = vld [vmem:[%s1 + $0x330] sm:$0xff]
  %v137 = vld [vmem:[%s1 + $0x338] sm:$0xff]
  %v138 = vld [vmem:[%s1 + $0x340] sm:$0xff]
  %v139 = vld [vmem:[%s1 + $0x348] sm:$0xff]
  %v140 = vld [vmem:[%s1 + $0x350] sm:$0xff]
  %v141 = vld [vmem:[%s1 + $0x358] sm:$0xff]
  %v142 = vld [vmem:[%s1 + $0x360] sm:$0xff]
  %v143 = vld [vmem:[%s1 + $0x368] sm:$0xff]
  %v144 = vld [vmem:[%s1 + $0x370] sm:$0xff]
  %v145 = vld [vmem:[%s1 + $0x378] sm:$0xff]
  %v146 = vld [vmem:[%s1 + $0x380] sm:$0xff]
  %v147 = vld [vmem:[%s1 + $0x388] sm:$0xff]
  %v148 = vld [vmem:[%s1 + $0x390] sm:$0xff]
  %v149 = vld [vmem:[%s1 + $0x398] sm:$0xff]
  %v150 = vld [vmem:[%s1 + $0x3a0] sm:$0xff]
  %v151 = vld [vmem:[%s1 + $0x3a8] sm:$0xff]
  %v152 = vld [vmem:[%s1 + $0x3b0] sm:$0xff]
  %v153 = vld [vmem:[%s1 + $0x3b8] sm:$0xff]
  %v154 = vld [vmem:[%s1 + $0x3c0] sm:$0xff]
  %v155 = vld [vmem:[%s1 + $0x3c8] sm:$0xff]
  %v156 = vld [vmem:[%s1 + $0x3d0] sm:$0xff]
  %v157 = vld [vmem:[%s1 + $0x3d8] sm:$0xff]
  %v158 = vld [vmem:[%s1 + $0x3e0] sm:$0xff]
  %v159 = vld [vmem:[%s1 + $0x3e8] sm:$0xff]
  %v160 = vld [vmem:[%s1 + $0x3f0] sm:$0xff]
  %v161 = vld [vmem:[%s1 + $0x3f8] sm:$0xff]
  %v162 = vld [vmem:[%s1 + $0x400] sm:$0xff]
  %v163 = vld [vmem:[%s1 + $0x408] sm:$0xff]
  %v164 = vld [vmem:[%s1 + $0x410] sm:$0xff]
  %v165 = vld [vmem:[%s1 + $0x418] sm:$0xff]
  %v166 = vld [vmem:[%s1 + $0x420] sm:$0xff]
  %v167 = vld [vmem:[%s1 + $0x428] sm:$0xff]
  %v168 = vld [vmem:[%s1 + $0x430] sm:$0xff]
  %v169 = vld [vmem:[%s1 + $0x438] sm:$0xff]
  %v170 = vld [vmem:[%s1 + $0x440] sm:$0xff]
  %v171 = vld [vmem:[%s1 + $0x448] sm:$0xff]
  %v172 = vld [vmem:[%s1 + $0x450] sm:$0xff]
  %v173 = vld [vmem:[%s1 + $0x458] sm:$0xff]
  %v174 = vld [vmem:[%s1 + $0x460] sm:$0xff]
  %v175 = vld [vmem:[%s1 + $0x468] sm:$0xff]
  %v176 = vld [vmem:[%s1 + $0x470] sm:$0xff]
  %v177 = vld [vmem:[%s1 + $0x478] sm:$0xff]
  %v178 = vld [vmem:[%s1 + $0x480] sm:$0xff]
  %v179 = vld [vmem:[%s1 + $0x488] sm:$0xff]
  %v180 = vld [vmem:[%s1 + $0x490] sm:$0xff]
  %v181 = vld [vmem:[%s1 + $0x498] sm:$0xff]
  %v182 = vld [vmem:[%s1 + $0x4a0] sm:$0xff]
  %v183 = vld [vmem:[%s1 + $0x4a8] sm:$0xff]
  %v184 = vld [vmem:[%s1 + $0x4b0] sm:$0xff]
  %v185 = vld [vmem:[%s1 + $0x4b8] sm:$0xff]
  %v186 = vld [vmem:[%s1 + $0x4c0] sm:$0xff]
  %v187 = vld [vmem:[%s1 + $0x4c8] sm:$0xff]
  %v188 = vld [vmem:[%s1 + $0x4d0] sm:$0xff]
  %v189 = vld [vmem:[%s1 + $0x4d8] sm:$0xff]
  %v190 = vld [vmem:[%s1 + $0x4e0] sm:$0xff]
  %v191 = vld [vmem:[%s1 + $0x4e8] sm:$0xff]
  %v192 = vld [vmem:[%s1 + $0x4f0] sm:$0xff]
  %v193 = vld [vmem:[%s1 + $0x4f8] sm:$0xff]
  %v194 = vld [vmem:[%s1 + $0x500] sm:$0xff]
  %v195 = vld [vmem:[%s1 + $0x508] sm:$0xff]
  %v196 = vld [vmem:[%s1 + $0x510] sm:$0xff]
  %v197 = vld [vmem:[%s1 + $0x518] sm:$0xff]
  %v198 = vld [vmem:[%s1 + $0x520] sm:$0xff]
  %v199 = vld [vmem:[%s1 + $0x528] sm:$0xff]
  %v200 = vld [vmem:[%s1 + $0x530] sm:$0xff]
  %v201 = vld [vmem:[%s1 + $0x538] sm:$0xff]
  %v202 = vld [vmem:[%s1 + $0x540] sm:$0xff]
  %v203 = vld [vmem:[%s1 + $0x548] sm:$0xff]
  %v204 = vld [vmem:[%s1 + $0x550] sm:$0xff]
  %v205 = vld [vmem:[%s1 + $0x558] sm:$0xff]
  %v206 = vld [vmem:[%s1 + $0x560] sm:$0xff]
  %v207 = vld [vmem:[%s1 + $0x568] sm:$0xff]
  %v208 = vld [vmem:[%s1 + $0x570] sm:$0xff]
  %v209 = vld [vmem:[%s1 + $0x578] sm:$0xff]
  %v210 = vld [vmem:[%s1 + $0x580] sm:$0xff]
  %v211 = vld [vmem:[%s1 + $0x588] sm:$0xff]
  %v212 = vld [vmem:[%s1 + $0x590] sm:$0xff]
  %v213 = vld [vmem:[%s1 + $0x598] sm:$0xff]
  %v214 = vld [vmem:[%s1 + $0x5a0] sm:$0xff]
  %v215 = vld [vmem:[%s1 + $0x5a8] sm:$0xff]
  %v216 = vld [vmem:[%s1 + $0x5b0] sm:$0xff]
  %v217 = vld [vmem:[%s1 + $0x5b8] sm:$0xff]
  %v218 = vld [vmem:[%s1 + $0x5c0] sm:$0xff]
  %v219 = vld [vmem:[%s1 + $0x5c8] sm:$0xff]
  %v220 = vld [vmem:[%s1 + $0x5d0] sm:$0xff]
  %v221 = vld [vmem:[%s1 + $0x5d8] sm:$0xff]
  %v222 = vld [vmem:[%s1 + $0x5e0] sm:$0xff]
  %v223 = vld [vmem:[%s1 + $0x5e8] sm:$0xff]
  %v224 = vld [vmem:[%s1 + $0x5f0] sm:$0xff]
  %v225 = vld [vmem:[%s1 + $0x5f8] sm:$0xff]
  %v226 = vld [vmem:[%s1 + $0x600] sm:$0xff]
  %v227 = vld [vmem:[%s1 + $0x608] sm:$0xff]
  %v228 = vld [vmem:[%s1 + $0x610] sm:$0xff]
  %v229 = vld [vmem:[%s1 + $0x618] sm:$0xff]
  %v230 = vld [vmem:[%s1 + $0x620] sm:$0xff]
  %v231 = vld [vmem:[%s1 + $0x628] sm:$0xff]
  %v232 = vld [vmem:[%s1 + $0x630] sm:$0xff]
  %v233 = vld [vmem:[%s1 + $0x638] sm:$0xff]
  %v234 = vld [vmem:[%s1 + $0x640] sm:$0xff]
  %v235 = vld [vmem:[%s1 + $0x648] sm:$0xff]
  %v236 = vld [vmem:[%s1 + $0x650] sm:$0xff]
  %v237 = vld [vmem:[%s1 + $0x658] sm:$0xff]
  %v238 = vld [vmem:[%s1 + $0x660] sm:$0xff]
  %v239 = vld [vmem:[%s1 + $0x668] sm:$0xff]
  %v240 = vld [vmem:[%s1 + $0x670] sm:$0xff]
  %v241 = vld [vmem:[%s1 + $0x678] sm:$0xff]
  %v242 = vld [vmem:[%s1 + $0x680] sm:$0xff]
  %v243 = vld [vmem:[%s1 + $0x688] sm:$0xff]
  %v244 = vld [vmem:[%s1 + $0x690] sm:$0xff]
  %v245 = vld [vmem:[%s1 + $0x698] sm:$0xff]
  %v246 = vld [vmem:[%s1 + $0x6a0] sm:$0xff]
  %v247 = vld [vmem:[%s1 + $0x6a8] sm:$0xff]
  %v248 = vld [vmem:[%s1 + $0x6b0] sm:$0xff]
  %v249 = vld [vmem:[%s1 + $0x6b8] sm:$0xff]
  %v250 = vld [vmem:[%s1 + $0x6c0] sm:$0xff]
  %v251 = vld [vmem:[%s1 + $0x6c8] sm:$0xff]
  %v252 = vld [vmem:[%s1 + $0x6d0] sm:$0xff]
  %v253 = vld [vmem:[%s1 + $0x6d8] sm:$0xff]
  %v254 = vld [vmem:[%s1 + $0x6e0] sm:$0xff]
  %v255 = vld [vmem:[%s1 + $0x6e8] sm:$0xff]
  %v256 = vld [vmem:[%s1 + $0x6f0] sm:$0xff]
  %v257 = vld [vmem:[%s1 + $0x6f8] sm:$0xff]
  %v258 = vld [vmem:[%s1 + $0x700] sm:$0xff]
  %v259 = vld [vmem:[%s1 + $0x708] sm:$0xff]
  %v260 = vld [vmem:[%s1 + $0x710] sm:$0xff]
  %v261 = vld [vmem:[%s1 + $0x718] sm:$0xff]
  %v262 = vld [vmem:[%s1 + $0x720] sm:$0xff]
  %v263 = vld [vmem:[%s1 + $0x728] sm:$0xff]
  %v264 = vld [vmem:[%s1 + $0x730] sm:$0xff]
  %v265 = vld [vmem:[%s1 + $0x738] sm:$0xff]
  %v266 = vld [vmem:[%s1 + $0x740] sm:$0xff]
  %v267 = vld [vmem:[%s1 + $0x748] sm:$0xff]
  %v268 = vld [vmem:[%s1 + $0x750] sm:$0xff]
  %v269 = vld [vmem:[%s1 + $0x758] sm:$0xff]
  %v270 = vld [vmem:[%s1 + $0x760] sm:$0xff]
  %v271 = vld [vmem:[%s1 + $0x768] sm:$0xff]
  %v272 = vld [vmem:[%s1 + $0x770] sm:$0xff]
  %v273 = vld [vmem:[%s1 + $0x778] sm:$0xff]
  %v274 = vld [vmem:[%s1 + $0x780] sm:$0xff]
  %v275 = vld [vmem:[%s1 + $0x788] sm:$0xff]
  %v276 = vld [vmem:[%s1 + $0x790] sm:$0xff]
  %v277 = vld [vmem:[%s1 + $0x798] sm:$0xff]
  %v278 = vld [vmem:[%s1 + $0x7a0] sm:$0xff]
  %v279 = vld [vmem:[%s1 + $0x7a8] sm:$0xff]
  %v280 = vld [vmem:[%s1 + $0x7b0] sm:$0xff]
  %v281 = vld [vmem:[%s1 + $0x7b8] sm:$0xff]
  %v282 = vld [vmem:[%s1 + $0x7c0] sm:$0xff]
  %v283 = vld [vmem:[%s1 + $0x7c8] sm:$0xff]
  %v284 = vld [vmem:[%s1 + $0x7d0] sm:$0xff]
  %v285 = vld [vmem:[%s1 + $0x7d8] sm:$0xff]
  %v286 = vld [vmem:[%s1 + $0x7e0] sm:$0xff]
  %v287 = vld [vmem:[%s1 + $0x7e8] sm:$0xff]
  %v288 = vld [vmem:[%s1 + $0x7f0] sm:$0xff]
  %v289 = vld [vmem:[%s1 + $0x7f8] sm:$0xff]
  %v290 = vld [vmem:[%s1 + $0x800] sm:$0xff]
  %v291 = vld [vmem:[%s1 + $0x808] sm:$0xff]
  %v292 = vld [vmem:[%s1 + $0x810] sm:$0xff]
  %v293 = vld [vmem:[%s1 + $0x818] sm:$0xff]
  %v294 = vld [vmem:[%s1 + $0x820] sm:$0xff]
  %v295 = vld [vmem:[%s1 + $0x828] sm:$0xff]
  %v296 = vld [vmem:[%s1 + $0x830] sm:$0xff]
  %v297 = vld [vmem:[%s1 + $0x838] sm:$0xff]
  %v298 = vld [vmem:[%s1 + $0x840] sm:$0xff]
  %v299 = vld [vmem:[%s1 + $0x848] sm:$0xff]
  %v300 = vld [vmem:[%s1 + $0x850] sm:$0xff]
  %v301 = vld [vmem:[%s1 + $0x858] sm:$0xff]
  %v302 = vld [vmem:[%s1 + $0x860] sm:$0xff]
  %v303 = vld [vmem:[%s1 + $0x868] sm:$0xff]
  %v304 = vld [vmem:[%s1 + $0x870] sm:$0xff]
  %v305 = vld [vmem:[%s1 + $0x878] sm:$0xff]
  %v306 = vld [vmem:[%s1 + $0x880] sm:$0xff]
  %v307 = vld [vmem:[%s1 + $0x888] sm:$0xff]
  %v308 = vld [vmem:[%s1 + $0x890] sm:$0xff]
  %v309 = vld [vmem:[%s1 + $0x898] sm:$0xff]
  %v310 = vld [vmem:[%s1 + $0x8a0] sm:$0xff]
  %v311 = vld [vmem:[%s1 + $0x8a8] sm:$0xff]
  %v312 = vld [vmem:[%s1 + $0x8b0] sm:$0xff]
  %v313 = vld [vmem:[%s1 + $0x8b8] sm:$0xff]
  %v314 = vld [vmem:[%s1 + $0x8c0] sm:$0xff]
  %v315 = vld [vmem:[%s1 + $0x8c8] sm:$0xff]
  %v316 = vld [vmem:[%s1 + $0x8d0] sm:$0xff]
  %v317 = vld [vmem:[%s1 + $0x8d8] sm:$0xff]
  %v318 = vld [vmem:[%s1 + $0x8e0] sm:$0xff]
  %v319 = vld [vmem:[%s1 + $0x8e8] sm:$0xff]
  %v320 = vld [vmem:[%s1 + $0x8f0] sm:$0xff]
  %v321 = vld [vmem:[%s1 + $0x8f8] sm:$0xff]
  %v322 = vld [vmem:[%s1 + $0x900] sm:$0xff]
  %v323 = vld [vmem:[%s1 + $0x908] sm:$0xff]
  %v324 = vld [vmem:[%s1 + $0x910] sm:$0xff]
  %v325 = vld [vmem:[%s1 + $0x918] sm:$0xff]
  %v326 = vld [vmem:[%s1 + $0x920] sm:$0xff]
  %v327 = vld [vmem:[%s1 + $0x928] sm:$0xff]
  %v328 = vld [vmem:[%s1 + $0x930] sm:$0xff]
  %v329 = vld [vmem:[%s1 + $0x938] sm:$0xff]
  %v330 = vld [vmem:[%s1 + $0x940] sm:$0xff]
  %v331 = vld [vmem:[%s1 + $0x948] sm:$0xff]
  %v332 = vld [vmem:[%s1 + $0x950] sm:$0xff]
  %v333 = vld [vmem:[%s1 + $0x958] sm:$0xff]
  %v334 = vld [vmem:[%s1 + $0x960] sm:$0xff]
  %v335 = vld [vmem:[%s1 + $0x968] sm:$0xff]
  %v336 = vld [vmem:[%s1 + $0x970] sm:$0xff]
  %v337 = vld [vmem:[%s1 + $0x978] sm:$0xff]
  %v338 = vld [vmem:[%s1 + $0x980] sm:$0xff]
  %v339 = vld [vmem:[%s1 + $0x988] sm:$0xff]
  %v340 = vld [vmem:[%s1 + $0x990] sm:$0xff]
  %v341 = vld [vmem:[%s1 + $0x998] sm:$0xff]
  %v342 = vld [vmem:[%s1 + $0x9a0] sm:$0xff]
  %v343 = vld [vmem:[%s1 + $0x9a8] sm:$0xff]
  %v344 = vld [vmem:[%s1 + $0x9b0] sm:$0xff]
  %v345 = vld [vmem:[%s1 + $0x9b8] sm:$0xff]
  %v346 = vld [vmem:[%s1 + $0x9c0] sm:$0xff]
  %v347 = vld [vmem:[%s1 + $0x9c8] sm:$0xff]
  %v348 = vld [vmem:[%s1 + $0x9d0] sm:$0xff]
  %v349 = vld [vmem:[%s1 + $0x9d8] sm:$0xff]
  %v350 = vld [vmem:[%s1 + $0x9e0] sm:$0xff]
  %v351 = vld [vmem:[%s1 + $0x9e8] sm:$0xff]
  %v352 = vld [vmem:[%s1 + $0x9f0] sm:$0xff]
  %v353 = vld [vmem:[%s1 + $0x9f8] sm:$0xff]
  %v354 = vld [vmem:[%s1 + $0xa00] sm:$0xff]
  %v355 = vld [vmem:[%s1 + $0xa08] sm:$0xff]
  %v356 = vld [vmem:[%s1 + $0xa10] sm:$0xff]
  %v357 = vld [vmem:[%s1 + $0xa18] sm:$0xff]
  %v358 = vld [vmem:[%s1 + $0xa20] sm:$0xff]
  %v359 = vld [vmem:[%s1 + $0xa28] sm:$0xff]
  %v360 = vld [vmem:[%s1 + $0xa30] sm:$0xff]
  %v361 = vld [vmem:[%s1 + $0xa38] sm:$0xff]
  %v362 = vld [vmem:[%s1 + $0xa40] sm:$0xff]
  %v363 = vld [vmem:[%s1 + $0xa48] sm:$0xff]
  %v364 = vld [vmem:[%s1 + $0xa50] sm:$0xff]
  %v365 = vld [vmem:[%s1 + $0xa58] sm:$0xff]
  %v366 = vld [vmem:[%s1 + $0xa60] sm:$0xff]
  %v367 = vld [vmem:[%s1 + $0xa68] sm:$0xff]
  %v368 = vld [vmem:[%s1 + $0xa70] sm:$0xff]
  %v369 = vld [vmem:[%s1 + $0xa78] sm:$0xff]
  %v370 = vld [vmem:[%s1 + $0xa80] sm:$0xff]
  %v371 = vld [vmem:[%s1 + $0xa88] sm:$0xff]
  %v372 = vld [vmem:[%s1 + $0xa90] sm:$0xff]
  %v373 = vld [vmem:[%s1 + $0xa98] sm:$0xff]
  %v374 = vld [vmem:[%s1 + $0xaa0] sm:$0xff]
  %v375 = vld [vmem:[%s1 + $0xaa8] sm:$0xff]
  %v376 = vld [vmem:[%s1 + $0xab0] sm:$0xff]
  %v377 = vld [vmem:[%s1 + $0xab8] sm:$0xff]
  %v378 = vld [vmem:[%s1 + $0xac0] sm:$0xff]
  %v379 = vld [vmem:[%s1 + $0xac8] sm:$0xff]
  %v380 = vld [vmem:[%s1 + $0xad0] sm:$0xff]
  %v381 = vld [vmem:[%s1 + $0xad8] sm:$0xff]
  %v382 = vld [vmem:[%s1 + $0xae0] sm:$0xff]
  %v383 = vld [vmem:[%s1 + $0xae8] sm:$0xff]
  %v384 = vld [vmem:[%s1 + $0xaf0] sm:$0xff]
  %v385 = vld [vmem:[%s1 + $0xaf8] sm:$0xff]
  %v386 = vld [vmem:[%s1 + $0xb00] sm:$0xff]
  %v387 = vld [vmem:[%s1 + $0xb08] sm:$0xff]
  %v388 = vld [vmem:[%s1 + $0xb10] sm:$0xff]
  %v389 = vld [vmem:[%s1 + $0xb18] sm:$0xff]
  %v390 = vld [vmem:[%s1 + $0xb20] sm:$0xff]
  %v391 = vld [vmem:[%s1 + $0xb28] sm:$0xff]
  %v392 = vld [vmem:[%s1 + $0xb30] sm:$0xff]
  %v393 = vld [vmem:[%s1 + $0xb38] sm:$0xff]
  %v394 = vld [vmem:[%s1 + $0xb40] sm:$0xff]
  %v395 = vld [vmem:[%s1 + $0xb48] sm:$0xff]
  %v396 = vld [vmem:[%s1 + $0xb50] sm:$0xff]
  %v397 = vld [vmem:[%s1 + $0xb58] sm:$0xff]
  %v398 = vld [vmem:[%s1 + $0xb60] sm:$0xff]
  %v399 = vld [vmem:[%s1 + $0xb68] sm:$0xff]
  %v400 = vld [vmem:[%s1 + $0xb70] sm:$0xff]
  %v401 = vld [vmem:[%s1 + $0xb78] sm:$0xff]
  %v402 = vld [vmem:[%s1 + $0xb80] sm:$0xff]
  %v403 = vld [vmem:[%s1 + $0xb88] sm:$0xff]
  %v404 = vld [vmem:[%s1 + $0xb90] sm:$0xff]
  %v405 = vld [vmem:[%s1 + $0xb98] sm:$0xff]
  %v406 = vld [vmem:[%s1 + $0xba0] sm:$0xff]
  %v407 = vld [vmem:[%s1 + $0xba8] sm:$0xff]
  %v408 = vld [vmem:[%s1 + $0xbb0] sm:$0xff]
  %v409 = vld [vmem:[%s1 + $0xbb8] sm:$0xff]
  %v410 = vld [vmem:[%s1 + $0xbc0] sm:$0xff]
  %v411 = vld [vmem:[%s1 + $0xbc8] sm:$0xff]
  %v412 = vld [vmem:[%s1 + $0xbd0] sm:$0xff]
  %v413 = vld [vmem:[%s1 + $0xbd8] sm:$0xff]
  %v414 = vld [vmem:[%s1 + $0xbe0] sm:$0xff]
  %v415 = vld [vmem:[%s1 + $0xbe8] sm:$0xff]
  %v416 = vld [vmem:[%s1 + $0xbf0] sm:$0xff]
  %v417 = vld [vmem:[%s1 + $0xbf8] sm:$0xff]
  %v418 = vld [vmem:[%s1 + $0xc00] sm:$0xff]
  %v419 = vld [vmem:[%s1 + $0xc08] sm:$0xff]
  %v420 = vld [vmem:[%s1 + $0xc10] sm:$0xff]
  %v421 = vld [vmem:[%s1 + $0xc18] sm:$0xff]
  %v422 = vld [vmem:[%s1 + $0xc20] sm:$0xff]
  %v423 = vld [vmem:[%s1 + $0xc28] sm:$0xff]
  %v424 = vld [vmem:[%s1 + $0xc30] sm:$0xff]
  %v425 = vld [vmem:[%s1 + $0xc38] sm:$0xff]
  %v426 = vld [vmem:[%s1 + $0xc40] sm:$0xff]
  %v427 = vld [vmem:[%s1 + $0xc48] sm:$0xff]
  %v428 = vld [vmem:[%s1 + $0xc50] sm:$0xff]
  %v429 = vld [vmem:[%s1 + $0xc58] sm:$0xff]
  %v430 = vld [vmem:[%s1 + $0xc60] sm:$0xff]
  %v431 = vld [vmem:[%s1 + $0xc68] sm:$0xff]
  %v432 = vld [vmem:[%s1 + $0xc70] sm:$0xff]
  %v433 = vld [vmem:[%s1 + $0xc78] sm:$0xff]
  %v434 = vld [vmem:[%s1 + $0xc80] sm:$0xff]
  %v435 = vld [vmem:[%s1 + $0xc88] sm:$0xff]
  %v436 = vld [vmem:[%s1 + $0xc90] sm:$0xff]
  %v437 = vld [vmem:[%s1 + $0xc98] sm:$0xff]
  %v438 = vld [vmem:[%s1 + $0xca0] sm:$0xff]
  %v439 = vld [vmem:[%s1 + $0xca8] sm:$0xff]
  %v440 = vld [vmem:[%s1 + $0xcb0] sm:$0xff]
  %v441 = vld [vmem:[%s1 + $0xcb8] sm:$0xff]
  %v442 = vld [vmem:[%s1 + $0xcc0] sm:$0xff]
  %v443 = vld [vmem:[%s1 + $0xcc8] sm:$0xff]
  %v444 = vld [vmem:[%s1 + $0xcd0] sm:$0xff]
  %v445 = vld [vmem:[%s1 + $0xcd8] sm:$0xff]
  %v446 = vld [vmem:[%s1 + $0xce0] sm:$0xff]
  %v447 = vld [vmem:[%s1 + $0xce8] sm:$0xff]
  %v448 = vld [vmem:[%s1 + $0xcf0] sm:$0xff]
  %v449 = vld [vmem:[%s1 + $0xcf8] sm:$0xff]
  %v450 = vld [vmem:[%s1 + $0xd00] sm:$0xff]
  %v451 = vld [vmem:[%s1 + $0xd08] sm:$0xff]
  %v452 = vld [vmem:[%s1 + $0xd10] sm:$0xff]
  %v453 = vld [vmem:[%s1 + $0xd18] sm:$0xff]
  %v454 = vld [vmem:[%s1 + $0xd20] sm:$0xff]
  %v455 = vld [vmem:[%s1 + $0xd28] sm:$0xff]
  %v456 = vld [vmem:[%s1 + $0xd30] sm:$0xff]
  %v457 = vld [vmem:[%s1 + $0xd38] sm:$0xff]
  %v458 = vld [vmem:[%s1 + $0xd40] sm:$0xff]
  %v459 = vld [vmem:[%s1 + $0xd48] sm:$0xff]
  %v460 = vld [vmem:[%s1 + $0xd50] sm:$0xff]
  %v461 = vld [vmem:[%s1 + $0xd58] sm:$0xff]
  %v462 = vld [vmem:[%s1 + $0xd60] sm:$0xff]
  %v463 = vld [vmem:[%s1 + $0xd68] sm:$0xff]
  %v464 = vld [vmem:[%s1 + $0xd70] sm:$0xff]
  %v465 = vld [vmem:[%s1 + $0xd78] sm:$0xff]
  %v466 = vld [vmem:[%s1 + $0xd80] sm:$0xff]
  %v467 = vld [vmem:[%s1 + $0xd88] sm:$0xff]
  %v468 = vld [vmem:[%s1 + $0xd90] sm:$0xff]
  %v469 = vld [vmem:[%s1 + $0xd98] sm:$0xff]
  %v470 = vld [vmem:[%s1 + $0xda0] sm:$0xff]
  %v471 = vld [vmem:[%s1 + $0xda8] sm:$0xff]
  %v472 = vld [vmem:[%s1 + $0xdb0] sm:$0xff]
  %v473 = vld [vmem:[%s1 + $0xdb8] sm:$0xff]
  %v474 = vld [vmem:[%s1 + $0xdc0] sm:$0xff]
  %v475 = vld [vmem:[%s1 + $0xdc8] sm:$0xff]
  %v476 = vld [vmem:[%s1 + $0xdd0] sm:$0xff]
  %v477 = vld [vmem:[%s1 + $0xdd8] sm:$0xff]
  %v478 = vld [vmem:[%s1 + $0xde0] sm:$0xff]
  %v479 = vld [vmem:[%s1 + $0xde8] sm:$0xff]
  %v480 = vld [vmem:[%s1 + $0xdf0] sm:$0xff]
  %v481 = vld [vmem:[%s1 + $0xdf8] sm:$0xff]
  %v482 = vld [vmem:[%s1 + $0xe00] sm:$0xff]
  %v483 = vld [vmem:[%s1 + $0xe08] sm:$0xff]
  %v484 = vld [vmem:[%s1 + $0xe10] sm:$0xff]
  %v485 = vld [vmem:[%s1 + $0xe18] sm:$0xff]
  %v486 = vld [vmem:[%s1 + $0xe20] sm:$0xff]
  %v487 = vld [vmem:[%s1 + $0xe28] sm:$0xff]
  %v488 = vld [vmem:[%s1 + $0xe30] sm:$0xff]
  %v489 = vld [vmem:[%s1 + $0xe38] sm:$0xff]
  %v490 = vld [vmem:[%s1 + $0xe40] sm:$0xff]
  %v491 = vld [vmem:[%s1 + $0xe48] sm:$0xff]
  %v492 = vld [vmem:[%s1 + $0xe50] sm:$0xff]
  %v493 = vld [vmem:[%s1 + $0xe58] sm:$0xff]
  %v494 = vld [vmem:[%s1 + $0xe60] sm:$0xff]
  %v495 = vld [vmem:[%s1 + $0xe68] sm:$0xff]
  %v496 = vld [vmem:[%s1 + $0xe70] sm:$0xff]
  %v497 = vld [vmem:[%s1 + $0xe78] sm:$0xff]
  %v498 = vld [vmem:[%s1 + $0xe80] sm:$0xff]
  %v499 = vld [vmem:[%s1 + $0xe88] sm:$0xff]
  %v500 = vld [vmem:[%s1 + $0xe90] sm:$0xff]
  %v501 = vld [vmem:[%s1 + $0xe98] sm:$0xff]
  %v502 = vld [vmem:[%s1 + $0xea0] sm:$0xff]
  %v503 = vld [vmem:[%s1 + $0xea8] sm:$0xff]
  %v504 = vld [vmem:[%s1 + $0xeb0] sm:$0xff]
  %v505 = vld [vmem:[%s1 + $0xeb8] sm:$0xff]
  %v506 = vld [vmem:[%s1 + $0xec0] sm:$0xff]
  %v507 = vld [vmem:[%s1 + $0xec8] sm:$0xff]
  %v508 = vld [vmem:[%s1 + $0xed0] sm:$0xff]
  %v509 = vld [vmem:[%s1 + $0xed8] sm:$0xff]
  %v510 = vld [vmem:[%s1 + $0xee0] sm:$0xff]
  %v511 = vld [vmem:[%s1 + $0xee8] sm:$0xff]
  %v512 = vld [vmem:[%s1 + $0xef0] sm:$0xff]
  %v513 = vld [vmem:[%s1 + $0xef8] sm:$0xff]
  %v514 = vld [vmem:[%s1 + $0xf00] sm:$0xff]
  %v515 = vld [vmem:[%s1 + $0xf08] sm:$0xff]
  %v516 = vld [vmem:[%s1 + $0xf10] sm:$0xff]
  %v517 = vld [vmem:[%s1 + $0xf18] sm:$0xff]
  %v518 = vld [vmem:[%s1 + $0xf20] sm:$0xff]
  %v519 = vld [vmem:[%s1 + $0xf28] sm:$0xff]
  %v520 = vld [vmem:[%s1 + $0xf30] sm:$0xff]
  %v521 = vld [vmem:[%s1 + $0xf38] sm:$0xff]
  %v522 = vld [vmem:[%s1 + $0xf40] sm:$0xff]
  %v523 = vld [vmem:[%s1 + $0xf48] sm:$0xff]
  %v524 = vld [vmem:[%s1 + $0xf50] sm:$0xff]
  %v525 = vld [vmem:[%s1 + $0xf58] sm:$0xff]
  %v526 = vld [vmem:[%s1 + $0xf60] sm:$0xff]
  %v527 = vld [vmem:[%s1 + $0xf68] sm:$0xff]
  %v528 = vld [vmem:[%s1 + $0xf70] sm:$0xff]
  %v529 = vld [vmem:[%s1 + $0xf78] sm:$0xff]
  %v530 = vld [vmem:[%s1 + $0xf80] sm:$0xff]
  %v531 = vld [vmem:[%s1 + $0xf88] sm:$0xff]
  %v532 = vld [vmem:[%s1 + $0xf90] sm:$0xff]
  %v533 = vld [vmem:[%s1 + $0xf98] sm:$0xff]
  %v534 = vld [vmem:[%s1 + $0xfa0] sm:$0xff]
  %v535 = vld [vmem:[%s1 + $0xfa8] sm:$0xff]
  %v536 = vld [vmem:[%s1 + $0xfb0] sm:$0xff]
  %v537 = vld [vmem:[%s1 + $0xfb8] sm:$0xff]
  %v538 = vld [vmem:[%s1 + $0xfc0] sm:$0xff]
  %v539 = vld [vmem:[%s1 + $0xfc8] sm:$0xff]
  %v540 = vld [vmem:[%s1 + $0xfd0] sm:$0xff]
  %v541 = vld [vmem:[%s1 + $0xfd8] sm:$0xff]
  %v542 = vld [vmem:[%s1 + $0xfe0] sm:$0xff]
  %v543 = vld [vmem:[%s1 + $0xfe8] sm:$0xff]
  %v544 = vld [vmem:[%s1 + $0xff0] sm:$0xff]
  %v545 = vld [vmem:[%s1 + $0xff8] sm:$0xff]
  %v546 = vld [vmem:[%s1 + $0x1000] sm:$0xff]
  %v547 = vld [vmem:[%s1 + $0x1008] sm:$0xff]
  %v548 = vld [vmem:[%s1 + $0x1010] sm:$0xff]
  %v549 = vld [vmem:[%s1 + $0x1018] sm:$0xff]
  %v550 = vld [vmem:[%s1 + $0x1020] sm:$0xff]
  %v551 = vld [vmem:[%s1 + $0x1028] sm:$0xff]
  %v552 = vld [vmem:[%s1 + $0x1030] sm:$0xff]
  %v553 = vld [vmem:[%s1 + $0x1038] sm:$0xff]
  %v554 = vld [vmem:[%s1 + $0x1040] sm:$0xff]
  %v555 = vld [vmem:[%s1 + $0x1048] sm:$0xff]
  %v556 = vld [vmem:[%s1 + $0x1050] sm:$0xff]
  %v557 = vld [vmem:[%s1 + $0x1058] sm:$0xff]
  %v558 = vld [vmem:[%s1 + $0x1060] sm:$0xff]
  %v559 = vld [vmem:[%s1 + $0x1068] sm:$0xff]
  %v560 = vld [vmem:[%s1 + $0x1070] sm:$0xff]
  %v561 = vld [vmem:[%s1 + $0x1078] sm:$0xff]
  %v562 = vld [vmem:[%s1 + $0x1080] sm:$0xff]
  %v563 = vld [vmem:[%s1 + $0x1088] sm:$0xff]
  %v564 = vld [vmem:[%s1 + $0x1090] sm:$0xff]
  %v565 = vld [vmem:[%s1 + $0x1098] sm:$0xff]
  %v566 = vld [vmem:[%s1 + $0x10a0] sm:$0xff]
  %v567 = vld [vmem:[%s1 + $0x10a8] sm:$0xff]
  %v568 = vld [vmem:[%s1 + $0x10b0] sm:$0xff]
  %v569 = vld [vmem:[%s1 + $0x10b8] sm:$0xff]
  %v570 = vld [vmem:[%s1 + $0x10c0] sm:$0xff]
  %v571 = vld [vmem:[%s1 + $0x10c8] sm:$0xff]
  %v572 = vld [vmem:[%s1 + $0x10d0] sm:$0xff]
  %v573 = vld [vmem:[%s1 + $0x10d8] sm:$0xff]
  %v574 = vld [vmem:[%s1 + $0x10e0] sm:$0xff]
  %v575 = vld [vmem:[%s1 + $0x10e8] sm:$0xff]
  %v576 = vld [vmem:[%s1 + $0x10f0] sm:$0xff]
  %v577 = vld [vmem:[%s1 + $0x10f8] sm:$0xff]
  %v578 = vld [vmem:[%s1 + $0x1100] sm:$0xff]
  %v579 = vld [vmem:[%s1 + $0x1108] sm:$0xff]
  %v580 = vld [vmem:[%s1 + $0x1110] sm:$0xff]
  %v581 = vld [vmem:[%s1 + $0x1118] sm:$0xff]
  %v582 = vld [vmem:[%s1 + $0x1120] sm:$0xff]
  %v583 = vld [vmem:[%s1 + $0x1128] sm:$0xff]
  %v584 = vld [vmem:[%s1 + $0x1130] sm:$0xff]
  %v585 = vld [vmem:[%s1 + $0x1138] sm:$0xff]
  %v586 = vld [vmem:[%s1 + $0x1140] sm:$0xff]
  %v587 = vld [vmem:[%s1 + $0x1148] sm:$0xff]
  %v588 = vld [vmem:[%s1 + $0x1150] sm:$0xff]
  %v589 = vld [vmem:[%s1 + $0x1158] sm:$0xff]
  %v590 = vld [vmem:[%s1 + $0x1160] sm:$0xff]
  %v591 = vld [vmem:[%s1 + $0x1168] sm:$0xff]
  %v592 = vld [vmem:[%s1 + $0x1170] sm:$0xff]
  %v593 = vld [vmem:[%s1 + $0x1178] sm:$0xff]
  %v594 = vld [vmem:[%s1 + $0x1180] sm:$0xff]
  %v595 = vld [vmem:[%s1 + $0x1188] sm:$0xff]
  %v596 = vld [vmem:[%s1 + $0x1190] sm:$0xff]
  %v597 = vld [vmem:[%s1 + $0x1198] sm:$0xff]
  %v598 = vld [vmem:[%s1 + $0x11a0] sm:$0xff]
  %v599 = vld [vmem:[%s1 + $0x11a8] sm:$0xff]
  %v600 = vld [vmem:[%s1 + $0x11b0] sm:$0xff]
  %v601 = vld [vmem:[%s1 + $0x11b8] sm:$0xff]
  %v602 = vld [vmem:[%s1 + $0x11c0] sm:$0xff]
  %v603 = vld [vmem:[%s1 + $0x11c8] sm:$0xff]
  %v604 = vld [vmem:[%s1 + $0x11d0] sm:$0xff]
  %v605 = vld [vmem:[%s1 + $0x11d8] sm:$0xff]
  %v606 = vld [vmem:[%s1 + $0x11e0] sm:$0xff]
  %v607 = vld [vmem:[%s1 + $0x11e8] sm:$0xff]
  %v608 = vld [vmem:[%s1 + $0x11f0] sm:$0xff]
  %v609 = vld [vmem:[%s1 + $0x11f8] sm:$0xff]
  %v610 = vld [vmem:[%s1 + $0x1200] sm:$0xff]
  %v611 = vld [vmem:[%s1 + $0x1208] sm:$0xff]
  %v612 = vld [vmem:[%s1 + $0x1210] sm:$0xff]
  %v613 = vld [vmem:[%s1 + $0x1218] sm:$0xff]
  %v614 = vld [vmem:[%s1 + $0x1220] sm:$0xff]
  %v615 = vld [vmem:[%s1 + $0x1228] sm:$0xff]
  %v616 = vld [vmem:[%s1 + $0x1230] sm:$0xff]
  %v617 = vld [vmem:[%s1 + $0x1238] sm:$0xff]
  %v618 = vld [vmem:[%s1 + $0x1240] sm:$0xff]
  %v619 = vld [vmem:[%s1 + $0x1248] sm:$0xff]
  %v620 = vld [vmem:[%s1 + $0x1250] sm:$0xff]
  %v621 = vld [vmem:[%s1 + $0x1258] sm:$0xff]
  %v622 = vld [vmem:[%s1 + $0x1260] sm:$0xff]
  %v623 = vld [vmem:[%s1 + $0x1268] sm:$0xff]
  %v624 = vld [vmem:[%s1 + $0x1270] sm:$0xff]
  %v625 = vld [vmem:[%s1 + $0x1278] sm:$0xff]
  %v626 = vld [vmem:[%s1 + $0x1280] sm:$0xff]
  %v627 = vld [vmem:[%s1 + $0x1288] sm:$0xff]
  %v628 = vld [vmem:[%s1 + $0x1290] sm:$0xff]
  %v629 = vld [vmem:[%s1 + $0x1298] sm:$0xff]
  %v630 = vld [vmem:[%s1 + $0x12a0] sm:$0xff]
  %v631 = vld [vmem:[%s1 + $0x12a8] sm:$0xff]
  %v632 = vld [vmem:[%s1 + $0x12b0] sm:$0xff]
  %v633 = vld [vmem:[%s1 + $0x12b8] sm:$0xff]
  %v634 = vld [vmem:[%s1 + $0x12c0] sm:$0xff]
  %v635 = vld [vmem:[%s1 + $0x12c8] sm:$0xff]
  %v636 = vld [vmem:[%s1 + $0x12d0] sm:$0xff]
  %v637 = vld [vmem:[%s1 + $0x12d8] sm:$0xff]
  %v638 = vld [vmem:[%s1 + $0x12e0] sm:$0xff]
  %v639 = vld [vmem:[%s1 + $0x12e8] sm:$0xff]
  %v640 = vld [vmem:[%s1 + $0x12f0] sm:$0xff]
  %v641 = vld [vmem:[%s1 + $0x12f8] sm:$0xff]
  %v642 = vld [vmem:[%s1 + $0x1300] sm:$0xff]
  %v643 = vld [vmem:[%s1 + $0x1308] sm:$0xff]
  %v644 = vld [vmem:[%s1 + $0x1310] sm:$0xff]
  %v645 = vld [vmem:[%s1 + $0x1318] sm:$0xff]
  %v646 = vld [vmem:[%s1 + $0x1320] sm:$0xff]
  %v647 = vld [vmem:[%s1 + $0x1328] sm:$0xff]
  %v648 = vld [vmem:[%s1 + $0x1330] sm:$0xff]
  %v649 = vld [vmem:[%s1 + $0x1338] sm:$0xff]
  %v650 = vld [vmem:[%s1 + $0x1340] sm:$0xff]
  %v651 = vld [vmem:[%s1 + $0x1348] sm:$0xff]
  %v652 = vld [vmem:[%s1 + $0x1350] sm:$0xff]
  %v653 = vld [vmem:[%s1 + $0x1358] sm:$0xff]
  %v654 = vld [vmem:[%s1 + $0x1360] sm:$0xff]
  %v655 = vld [vmem:[%s1 + $0x1368] sm:$0xff]
  %v656 = vld [vmem:[%s1 + $0x1370] sm:$0xff]
  %v657 = vld [vmem:[%s1 + $0x1378] sm:$0xff]
  %v658 = vld [vmem:[%s1 + $0x1380] sm:$0xff]
  %v659 = vld [vmem:[%s1 + $0x1388] sm:$0xff]
  %v660 = vld [vmem:[%s1 + $0x1390] sm:$0xff]
  %v661 = vld [vmem:[%s1 + $0x1398] sm:$0xff]
  %v662 = vld [vmem:[%s1 + $0x13a0] sm:$0xff]
  %v663 = vld [vmem:[%s1 + $0x13a8] sm:$0xff]
  %v664 = vld [vmem:[%s1 + $0x13b0] sm:$0xff]
  %v665 = vld [vmem:[%s1 + $0x13b8] sm:$0xff]
  %v666 = vld [vmem:[%s1 + $0x13c0] sm:$0xff]
  %v667 = vld [vmem:[%s1 + $0x13c8] sm:$0xff]
  %v668 = vld [vmem:[%s1 + $0x13d0] sm:$0xff]
  %v669 = vld [vmem:[%s1 + $0x13d8] sm:$0xff]
  %v670 = vld [vmem:[%s1 + $0x13e0] sm:$0xff]
  %v671 = vld [vmem:[%s1 + $0x13e8] sm:$0xff]
  %v672 = vld [vmem:[%s1 + $0x13f0] sm:$0xff]
  %v673 = vld [vmem:[%s1 + $0x13f8] sm:$0xff]
  %v674 = vld [vmem:[%s1 + $0x1400] sm:$0xff]
  %v675 = vld [vmem:[%s1 + $0x1408] sm:$0xff]
  %v676 = vld [vmem:[%s1 + $0x1410] sm:$0xff]
  %v677 = vld [vmem:[%s1 + $0x1418] sm:$0xff]
  %v678 = vld [vmem:[%s1 + $0x1420] sm:$0xff]
  %v679 = vld [vmem:[%s1 + $0x1428] sm:$0xff]
  %v680 = vld [vmem:[%s1 + $0x1430] sm:$0xff]
  %v681 = vld [vmem:[%s1 + $0x1438] sm:$0xff]
  %v682 = vld [vmem:[%s1 + $0x1440] sm:$0xff]
  %v683 = vld [vmem:[%s1 + $0x1448] sm:$0xff]
  %v684 = vld [vmem:[%s1 + $0x1450] sm:$0xff]
  %v685 = vld [vmem:[%s1 + $0x1458] sm:$0xff]
  %v686 = vld [vmem:[%s1 + $0x1460] sm:$0xff]
  %v687 = vld [vmem:[%s1 + $0x1468] sm:$0xff]
  %v688 = vld [vmem:[%s1 + $0x1470] sm:$0xff]
  %v689 = vld [vmem:[%s1 + $0x1478] sm:$0xff]
  %v690 = vld [vmem:[%s1 + $0x1480] sm:$0xff]
  %v691 = vld [vmem:[%s1 + $0x1488] sm:$0xff]
  %v692 = vld [vmem:[%s1 + $0x1490] sm:$0xff]
  %v693 = vld [vmem:[%s1 + $0x1498] sm:$0xff]
  %v694 = vld [vmem:[%s1 + $0x14a0] sm:$0xff]
  %v695 = vld [vmem:[%s1 + $0x14a8] sm:$0xff]
  %v696 = vld [vmem:[%s1 + $0x14b0] sm:$0xff]
  %v697 = vld [vmem:[%s1 + $0x14b8] sm:$0xff]
  %v698 = vld [vmem:[%s1 + $0x14c0] sm:$0xff]
  %v699 = vld [vmem:[%s1 + $0x14c8] sm:$0xff]
  %v700 = vld [vmem:[%s1 + $0x14d0] sm:$0xff]
  %v701 = vld [vmem:[%s1 + $0x14d8] sm:$0xff]
  %v702 = vld [vmem:[%s1 + $0x14e0] sm:$0xff]
  %v703 = vld [vmem:[%s1 + $0x14e8] sm:$0xff]
  %v704 = vld [vmem:[%s1 + $0x14f0] sm:$0xff]
  %v705 = vld [vmem:[%s1 + $0x14f8] sm:$0xff]
  %v706 = vld [vmem:[%s1 + $0x1500] sm:$0xff]
  %v707 = vld [vmem:[%s1 + $0x1508] sm:$0xff]
  %v708 = vld [vmem:[%s1 + $0x1510] sm:$0xff]
  %v709 = vld [vmem:[%s1 + $0x1518] sm:$0xff]
  %v710 = vld [vmem:[%s1 + $0x1520] sm:$0xff]
  %v711 = vld [vmem:[%s1 + $0x1528] sm:$0xff]
  %v712 = vld [vmem:[%s1 + $0x1530] sm:$0xff]
  %v713 = vld [vmem:[%s1 + $0x1538] sm:$0xff]
  %v714 = vld [vmem:[%s1 + $0x1540] sm:$0xff]
  %v715 = vld [vmem:[%s1 + $0x1548] sm:$0xff]
  %v716 = vld [vmem:[%s1 + $0x1550] sm:$0xff]
  %v717 = vld [vmem:[%s1 + $0x1558] sm:$0xff]
  %v718 = vld [vmem:[%s1 + $0x1560] sm:$0xff]
  %v719 = vld [vmem:[%s1 + $0x1568] sm:$0xff]
  %v720 = vld [vmem:[%s1 + $0x1570] sm:$0xff]
  %v721 = vld [vmem:[%s1 + $0x1578] sm:$0xff]
  %v722 = vld [vmem:[%s1 + $0x1580] sm:$0xff]
  %v723 = vld [vmem:[%s1 + $0x1588] sm:$0xff]
  %v724 = vld [vmem:[%s1 + $0x1590] sm:$0xff]
  %v725 = vld [vmem:[%s1 + $0x1598] sm:$0xff]
  %v726 = vld [vmem:[%s1 + $0x15a0] sm:$0xff]
  %v727 = vld [vmem:[%s1 + $0x15a8] sm:$0xff]
  %v728 = vld [vmem:[%s1 + $0x15b0] sm:$0xff]
  %v729 = vld [vmem:[%s1 + $0x15b8] sm:$0xff]
  %v730 = vld [vmem:[%s1 + $0x15c0] sm:$0xff]
  %v731 = vld [vmem:[%s1 + $0x15c8] sm:$0xff]
  %v732 = vld [vmem:[%s1 + $0x15d0] sm:$0xff]
  %v733 = vld [vmem:[%s1 + $0x15d8] sm:$0xff]
  %v734 = vld [vmem:[%s1 + $0x15e0] sm:$0xff]
  %v735 = vld [vmem:[%s1 + $0x15e8] sm:$0xff]
  %v736 = vld [vmem:[%s1 + $0x15f0] sm:$0xff]
  %v737 = vld [vmem:[%s1 + $0x15f8] sm:$0xff]
  %v738 = vld [vmem:[%s1 + $0x1600] sm:$0xff]
  %v739 = vld [vmem:[%s1 + $0x1608] sm:$0xff]
  %v740 = vld [vmem:[%s1 + $0x1610] sm:$0xff]
  %v741 = vld [vmem:[%s1 + $0x1618] sm:$0xff]
  %v742 = vld [vmem:[%s1 + $0x1620] sm:$0xff]
  %v743 = vld [vmem:[%s1 + $0x1628] sm:$0xff]
  %v744 = vld [vmem:[%s1 + $0x1630] sm:$0xff]
  %v745 = vld [vmem:[%s1 + $0x1638] sm:$0xff]
  %v746 = vld [vmem:[%s1 + $0x1640] sm:$0xff]
  %v747 = vld [vmem:[%s1 + $0x1648] sm:$0xff]
  %v748 = vld [vmem:[%s1 + $0x1650] sm:$0xff]
  %v749 = vld [vmem:[%s1 + $0x1658] sm:$0xff]
  %v750 = vld [vmem:[%s1 + $0x1660] sm:$0xff]
  %v751 = vld [vmem:[%s1 + $0x1668] sm:$0xff]
  %v752 = vld [vmem:[%s1 + $0x1670] sm:$0xff]
  %v753 = vld [vmem:[%s1 + $0x1678] sm:$0xff]
  %v754 = vld [vmem:[%s1 + $0x1680] sm:$0xff]
  %v755 = vld [vmem:[%s1 + $0x1688] sm:$0xff]
  %v756 = vld [vmem:[%s1 + $0x1690] sm:$0xff]
  %v757 = vld [vmem:[%s1 + $0x1698] sm:$0xff]
  %v758 = vld [vmem:[%s1 + $0x16a0] sm:$0xff]
  %v759 = vld [vmem:[%s1 + $0x16a8] sm:$0xff]
  %v760 = vld [vmem:[%s1 + $0x16b0] sm:$0xff]
  %v761 = vld [vmem:[%s1 + $0x16b8] sm:$0xff]
  %v762 = vld [vmem:[%s1 + $0x16c0] sm:$0xff]
  %v763 = vld [vmem:[%s1 + $0x16c8] sm:$0xff]
  %v764 = vld [vmem:[%s1 + $0x16d0] sm:$0xff]
  %v765 = vld [vmem:[%s1 + $0x16d8] sm:$0xff]
  %v766 = vld [vmem:[%s1 + $0x16e0] sm:$0xff]
  %v767 = vld [vmem:[%s1 + $0x16e8] sm:$0xff]
  %v768 = vld [vmem:[%s1 + $0x16f0] sm:$0xff]
  %v769 = vld [vmem:[%s1 + $0x16f8] sm:$0xff]
  %v770 = vld [vmem:[%s1 + $0x1700] sm:$0xff]
  %v771 = vld [vmem:[%s1 + $0x1708] sm:$0xff]
  %v772 = vld [vmem:[%s1 + $0x1710] sm:$0xff]
  %v773 = vld [vmem:[%s1 + $0x1718] sm:$0xff]
  %v774 = vld [vmem:[%s1 + $0x1720] sm:$0xff]
  %v775 = vld [vmem:[%s1 + $0x1728] sm:$0xff]
  %v776 = vld [vmem:[%s1 + $0x1730] sm:$0xff]
  %v777 = vld [vmem:[%s1 + $0x1738] sm:$0xff]
  %v778 = vld [vmem:[%s1 + $0x1740] sm:$0xff]
  %v779 = vld [vmem:[%s1 + $0x1748] sm:$0xff]
  %v780 = vld [vmem:[%s1 + $0x1750] sm:$0xff]
  %v781 = vld [vmem:[%s1 + $0x1758] sm:$0xff]
  %v782 = vld [vmem:[%s1 + $0x1760] sm:$0xff]
  %v783 = vld [vmem:[%s1 + $0x1768] sm:$0xff]
  %v784 = vld [vmem:[%s1 + $0x1770] sm:$0xff]
  %v785 = vld [vmem:[%s1 + $0x1778] sm:$0xff]
  %v786 = vld [vmem:[%s1 + $0x1780] sm:$0xff]
  %v787 = vld [vmem:[%s1 + $0x1788] sm:$0xff]
  %v788 = vld [vmem:[%s1 + $0x1790] sm:$0xff]
  %v789 = vld [vmem:[%s1 + $0x1798] sm:$0xff]
  %v790 = vld [vmem:[%s1 + $0x17a0] sm:$0xff]
  %v791 = vld [vmem:[%s1 + $0x17a8] sm:$0xff]
  %v792 = vld [vmem:[%s1 + $0x17b0] sm:$0xff]
  %v793 = vld [vmem:[%s1 + $0x17b8] sm:$0xff]
  %v794 = vld [vmem:[%s1 + $0x17c0] sm:$0xff]
  %v795 = vld [vmem:[%s1 + $0x17c8] sm:$0xff]
  %v796 = vld [vmem:[%s1 + $0x17d0] sm:$0xff]
  %v797 = vld [vmem:[%s1 + $0x17d8] sm:$0xff]
  %v798 = vld [vmem:[%s1 + $0x17e0] sm:$0xff]
  %v799 = vld [vmem:[%s1 + $0x17e8] sm:$0xff]
  %v800 = vld [vmem:[%s1 + $0x17f0] sm:$0xff]
  %v801 = vld [vmem:[%s1 + $0x17f8] sm:$0xff]
  %v802 = vld [vmem:[%s1 + $0x1800] sm:$0xff]
  %v803 = vld [vmem:[%s1 + $0x1808] sm:$0xff]
  %v804 = vld [vmem:[%s1 + $0x1810] sm:$0xff]
  %v805 = vld [vmem:[%s1 + $0x1818] sm:$0xff]
  %v806 = vld [vmem:[%s1 + $0x1820] sm:$0xff]
  %v807 = vld [vmem:[%s1 + $0x1828] sm:$0xff]
  %v808 = vld [vmem:[%s1 + $0x1830] sm:$0xff]
  %v809 = vld [vmem:[%s1 + $0x1838] sm:$0xff]
  %v810 = vld [vmem:[%s1 + $0x1840] sm:$0xff]
  %v811 = vld [vmem:[%s1 + $0x1848] sm:$0xff]
  %v812 = vld [vmem:[%s1 + $0x1850] sm:$0xff]
  %v813 = vld [vmem:[%s1 + $0x1858] sm:$0xff]
  %v814 = vld [vmem:[%s1 + $0x1860] sm:$0xff]
  %v815 = vld [vmem:[%s1 + $0x1868] sm:$0xff]
  %v816 = vld [vmem:[%s1 + $0x1870] sm:$0xff]
  %v817 = vld [vmem:[%s1 + $0x1878] sm:$0xff]
  %v818 = vld [vmem:[%s2] sm:$0xf]
  %v820 = vperm.slane %v818, 0
  %v821 = vperm.slane %v818, 1
  %v822 = vperm.slane %v818, 2
  %v823 = vperm.slane %v818, 3
  %v841 = vunpack.c.l.b16 %v21
  %v842 = vunpack.c.h.b16 %v21
  %v843 = vunpack.c.l.b16 %v22
  %v844 = vunpack.c.h.b16 %v22
  %v845 = vunpack.c.l.b16 %v23
  %v846 = vunpack.c.h.b16 %v23
  %v847 = vunpack.c.l.b16 %v24
  %v848 = vunpack.c.h.b16 %v24
  %v849 = vunpack.c.l.b16 %v25
  %v850 = vunpack.c.h.b16 %v25
  %v851 = vunpack.c.l.b16 %v26
  %v852 = vunpack.c.h.b16 %v26
  %v853 = vunpack.c.l.b16 %v27
  %v854 = vunpack.c.h.b16 %v27
  %v855 = vunpack.c.l.b16 %v28
  %v856 = vunpack.c.h.b16 %v28
  %v857 = vunpack.c.l.b16 %v29
  %v858 = vunpack.c.h.b16 %v29
  %v859 = vunpack.c.l.b16 %v30
  %v860 = vunpack.c.h.b16 %v30
  %v861 = vunpack.c.l.b16 %v31
  %v862 = vunpack.c.h.b16 %v31
  %v863 = vunpack.c.l.b16 %v32
  %v864 = vunpack.c.h.b16 %v32
  %v865 = vunpack.c.l.b16 %v33
  %v866 = vpack.c.b16 %v841, %v841
  %v867 = vpack.c.b16 %v842, %v842
  %v868 = vpack.c.b16 %v843, %v843
  %v869 = vpack.c.b16 %v844, %v844
  %v870 = vpack.c.b16 %v845, %v845
  %v871 = vpack.c.b16 %v846, %v846
  %v872 = vpack.c.b16 %v847, %v847
  %v873 = vpack.c.b16 %v848, %v848
  %v874 = vpack.c.b16 %v849, %v849
  %v875 = vpack.c.b16 %v850, %v850
  %v876 = vpack.c.b16 %v851, %v851
  %v877 = vpack.c.b16 %v852, %v852
  %v878 = vpack.c.b16 %v853, %v853
  %v879 = vpack.c.b16 %v854, %v854
  %v880 = vpack.c.b16 %v855, %v855
  %v881 = vpack.c.b16 %v856, %v856
  %v882 = vpack.c.b16 %v857, %v857
  %v883 = vpack.c.b16 %v858, %v858
  %v884 = vpack.c.b16 %v859, %v859
  %v885 = vpack.c.b16 %v860, %v860
  %v886 = vpack.c.b16 %v861, %v861
  %v887 = vpack.c.b16 %v862, %v862
  %v888 = vpack.c.b16 %v863, %v863
  %v889 = vpack.c.b16 %v864, %v864
  %v890 = vpack.c.b16 %v865, %v865
  %v1699 = vunpack.c.l.b16 %v34
  %v1700 = vunpack.c.h.b16 %v34
  %v1701 = vunpack.c.l.b16 %v35
  %v1702 = vunpack.c.h.b16 %v35
  %v1703 = vunpack.c.l.b16 %v36
  %v1704 = vunpack.c.h.b16 %v36
  %v1705 = vunpack.c.l.b16 %v37
  %v1706 = vunpack.c.h.b16 %v37
  %v1707 = vunpack.c.l.b16 %v38
  %v1708 = vunpack.c.h.b16 %v38
  %v1709 = vunpack.c.l.b16 %v39
  %v1710 = vunpack.c.h.b16 %v39
  %v1711 = vunpack.c.l.b16 %v40
  %v1712 = vunpack.c.h.b16 %v40
  %v1713 = vunpack.c.l.b16 %v41
  %v1714 = vunpack.c.h.b16 %v41
  %v1715 = vunpack.c.l.b16 %v42
  %v1716 = vunpack.c.h.b16 %v42
  %v1717 = vunpack.c.l.b16 %v43
  %v1718 = vunpack.c.h.b16 %v43
  %v1719 = vunpack.c.l.b16 %v44
  %v1720 = vunpack.c.h.b16 %v44
  %v1721 = vunpack.c.l.b16 %v45
  %v1722 = vunpack.c.h.b16 %v45
  %v1723 = vunpack.c.l.b16 %v46
  %v1724 = vunpack.c.h.b16 %v46
  %v1725 = vunpack.c.l.b16 %v47
  %v1726 = vunpack.c.h.b16 %v47
  %v1727 = vunpack.c.l.b16 %v48
  %v1728 = vunpack.c.h.b16 %v48
  %v1729 = vunpack.c.l.b16 %v49
  %v1730 = vunpack.c.h.b16 %v49
  %v1731 = vunpack.c.l.b16 %v50
  %v1732 = vunpack.c.h.b16 %v50
  %v1733 = vunpack.c.l.b16 %v51
  %v1734 = vunpack.c.h.b16 %v51
  %v1735 = vunpack.c.l.b16 %v52
  %v1736 = vunpack.c.h.b16 %v52
  %v1737 = vunpack.c.l.b16 %v53
  %v1738 = vunpack.c.h.b16 %v53
  %v1739 = vunpack.c.l.b16 %v54
  %v1740 = vunpack.c.h.b16 %v54
  %v1741 = vunpack.c.l.b16 %v55
  %v1742 = vunpack.c.h.b16 %v55
  %v1743 = vunpack.c.l.b16 %v56
  %v1744 = vunpack.c.h.b16 %v56
  %v1745 = vunpack.c.l.b16 %v57
  %v1746 = vunpack.c.h.b16 %v57
  %v1747 = vunpack.c.l.b16 %v58
  %v1748 = vunpack.c.h.b16 %v58
  %v1749 = vunpack.c.l.b16 %v59
  %v1750 = vunpack.c.h.b16 %v59
  %v1751 = vunpack.c.l.b16 %v60
  %v1752 = vunpack.c.h.b16 %v60
  %v1753 = vunpack.c.l.b16 %v61
  %v1754 = vunpack.c.h.b16 %v61
  %v1755 = vunpack.c.l.b16 %v62
  %v1756 = vunpack.c.h.b16 %v62
  %v1757 = vunpack.c.l.b16 %v63
  %v1758 = vunpack.c.h.b16 %v63
  %v1759 = vunpack.c.l.b16 %v64
  %v1760 = vunpack.c.h.b16 %v64
  %v1761 = vunpack.c.l.b16 %v65
  %v1762 = vunpack.c.h.b16 %v65
  %v1763 = vunpack.c.l.b16 %v66
  %v1764 = vunpack.c.h.b16 %v66
  %v1765 = vunpack.c.l.b16 %v67
  %v1766 = vunpack.c.h.b16 %v67
  %v1767 = vunpack.c.l.b16 %v68
  %v1768 = vunpack.c.h.b16 %v68
  %v1769 = vunpack.c.l.b16 %v69
  %v1770 = vunpack.c.h.b16 %v69
  %v1771 = vunpack.c.l.b16 %v70
  %v1772 = vunpack.c.h.b16 %v70
  %v1773 = vunpack.c.l.b16 %v71
  %v1774 = vunpack.c.h.b16 %v71
  %v1775 = vunpack.c.l.b16 %v72
  %v1776 = vunpack.c.h.b16 %v72
  %v1777 = vunpack.c.l.b16 %v73
  %v1778 = vunpack.c.h.b16 %v73
  %v1779 = vunpack.c.l.b16 %v74
  %v1780 = vunpack.c.h.b16 %v74
  %v1781 = vunpack.c.l.b16 %v75
  %v1782 = vunpack.c.h.b16 %v75
  %v1783 = vunpack.c.l.b16 %v76
  %v1784 = vunpack.c.h.b16 %v76
  %v1785 = vunpack.c.l.b16 %v77
  %v1786 = vunpack.c.h.b16 %v77
  %v1787 = vunpack.c.l.b16 %v78
  %v1788 = vunpack.c.h.b16 %v78
  %v1789 = vunpack.c.l.b16 %v79
  %v1790 = vunpack.c.h.b16 %v79
  %v1791 = vunpack.c.l.b16 %v80
  %v1792 = vunpack.c.h.b16 %v80
  %v1793 = vunpack.c.l.b16 %v81
  %v1794 = vunpack.c.h.b16 %v81
  %v1795 = vunpack.c.l.b16 %v82
  %v1796 = vunpack.c.h.b16 %v82
  %v1797 = vunpack.c.l.b16 %v83
  %v1798 = vunpack.c.h.b16 %v83
  %v1799 = vunpack.c.l.b16 %v84
  %v1800 = vunpack.c.h.b16 %v84
  %v1801 = vunpack.c.l.b16 %v85
  %v1802 = vunpack.c.h.b16 %v85
  %v1803 = vunpack.c.l.b16 %v86
  %v1804 = vunpack.c.h.b16 %v86
  %v1805 = vunpack.c.l.b16 %v87
  %v1806 = vunpack.c.h.b16 %v87
  %v1807 = vunpack.c.l.b16 %v88
  %v1808 = vunpack.c.h.b16 %v88
  %v1809 = vunpack.c.l.b16 %v89
  %v1810 = vunpack.c.h.b16 %v89
  %v1811 = vunpack.c.l.b16 %v90
  %v1812 = vunpack.c.h.b16 %v90
  %v1813 = vunpack.c.l.b16 %v91
  %v1814 = vunpack.c.h.b16 %v91
  %v1815 = vunpack.c.l.b16 %v92
  %v1816 = vunpack.c.h.b16 %v92
  %v1817 = vunpack.c.l.b16 %v93
  %v1818 = vunpack.c.h.b16 %v93
  %v1819 = vunpack.c.l.b16 %v94
  %v1820 = vunpack.c.h.b16 %v94
  %v1821 = vunpack.c.l.b16 %v95
  %v1822 = vunpack.c.h.b16 %v95
  %v1823 = vunpack.c.l.b16 %v96
  %v1824 = vunpack.c.h.b16 %v96
  %v1825 = vunpack.c.l.b16 %v97
  %v1826 = vunpack.c.h.b16 %v97
  %v1827 = vunpack.c.l.b16 %v98
  %v1828 = vunpack.c.h.b16 %v98
  %v1829 = vunpack.c.l.b16 %v99
  %v1830 = vunpack.c.h.b16 %v99
  %v1831 = vunpack.c.l.b16 %v100
  %v1832 = vunpack.c.h.b16 %v100
  %v1833 = vunpack.c.l.b16 %v101
  %v1834 = vunpack.c.h.b16 %v101
  %v1835 = vunpack.c.l.b16 %v102
  %v1836 = vunpack.c.h.b16 %v102
  %v1837 = vunpack.c.l.b16 %v103
  %v1838 = vunpack.c.h.b16 %v103
  %v1839 = vunpack.c.l.b16 %v104
  %v1840 = vunpack.c.h.b16 %v104
  %v1841 = vunpack.c.l.b16 %v105
  %v1842 = vunpack.c.h.b16 %v105
  %v1843 = vunpack.c.l.b16 %v106
  %v1844 = vunpack.c.h.b16 %v106
  %v1845 = vunpack.c.l.b16 %v107
  %v1846 = vunpack.c.h.b16 %v107
  %v1847 = vunpack.c.l.b16 %v108
  %v1848 = vunpack.c.h.b16 %v108
  %v1849 = vunpack.c.l.b16 %v109
  %v1850 = vunpack.c.h.b16 %v109
  %v1851 = vunpack.c.l.b16 %v110
  %v1852 = vunpack.c.h.b16 %v110
  %v1853 = vunpack.c.l.b16 %v111
  %v1854 = vunpack.c.h.b16 %v111
  %v1855 = vunpack.c.l.b16 %v112
  %v1856 = vunpack.c.h.b16 %v112
  %v1857 = vunpack.c.l.b16 %v113
  %v1858 = vunpack.c.h.b16 %v113
  %v1859 = vunpack.c.l.b16 %v114
  %v1860 = vunpack.c.h.b16 %v114
  %v1861 = vunpack.c.l.b16 %v115
  %v1862 = vunpack.c.h.b16 %v115
  %v1863 = vunpack.c.l.b16 %v116
  %v1864 = vunpack.c.h.b16 %v116
  %v1865 = vunpack.c.l.b16 %v117
  %v1866 = vunpack.c.h.b16 %v117
  %v1867 = vunpack.c.l.b16 %v118
  %v1868 = vunpack.c.h.b16 %v118
  %v1869 = vunpack.c.l.b16 %v119
  %v1870 = vunpack.c.h.b16 %v119
  %v1871 = vunpack.c.l.b16 %v120
  %v1872 = vunpack.c.h.b16 %v120
  %v1873 = vunpack.c.l.b16 %v121
  %v1874 = vunpack.c.h.b16 %v121
  %v1875 = vunpack.c.l.b16 %v122
  %v1876 = vunpack.c.h.b16 %v122
  %v1877 = vunpack.c.l.b16 %v123
  %v1878 = vunpack.c.h.b16 %v123
  %v1879 = vunpack.c.l.b16 %v124
  %v1880 = vunpack.c.h.b16 %v124
  %v1881 = vunpack.c.l.b16 %v125
  %v1882 = vunpack.c.h.b16 %v125
  %v1883 = vunpack.c.l.b16 %v126
  %v1884 = vunpack.c.h.b16 %v126
  %v1885 = vunpack.c.l.b16 %v127
  %v1886 = vunpack.c.h.b16 %v127
  %v1887 = vunpack.c.l.b16 %v128
  %v1888 = vunpack.c.h.b16 %v128
  %v1889 = vunpack.c.l.b16 %v129
  %v1890 = vunpack.c.h.b16 %v129
  %v1891 = vunpack.c.l.b16 %v130
  %v1892 = vunpack.c.h.b16 %v130
  %v1893 = vunpack.c.l.b16 %v131
  %v1894 = vunpack.c.h.b16 %v131
  %v1895 = vunpack.c.l.b16 %v132
  %v1896 = vunpack.c.h.b16 %v132
  %v1897 = vunpack.c.l.b16 %v133
  %v1898 = vunpack.c.h.b16 %v133
  %v1899 = vunpack.c.l.b16 %v134
  %v1900 = vunpack.c.h.b16 %v134
  %v1901 = vunpack.c.l.b16 %v135
  %v1902 = vunpack.c.h.b16 %v135
  %v1903 = vunpack.c.l.b16 %v136
  %v1904 = vunpack.c.h.b16 %v136
  %v1905 = vunpack.c.l.b16 %v137
  %v1906 = vunpack.c.h.b16 %v137
  %v1907 = vunpack.c.l.b16 %v138
  %v1908 = vunpack.c.h.b16 %v138
  %v1909 = vunpack.c.l.b16 %v139
  %v1910 = vunpack.c.h.b16 %v139
  %v1911 = vunpack.c.l.b16 %v140
  %v1912 = vunpack.c.h.b16 %v140
  %v1913 = vunpack.c.l.b16 %v141
  %v1914 = vunpack.c.h.b16 %v141
  %v1915 = vunpack.c.l.b16 %v142
  %v1916 = vunpack.c.h.b16 %v142
  %v1917 = vunpack.c.l.b16 %v143
  %v1918 = vunpack.c.h.b16 %v143
  %v1919 = vunpack.c.l.b16 %v144
  %v1920 = vunpack.c.h.b16 %v144
  %v1921 = vunpack.c.l.b16 %v145
  %v1922 = vunpack.c.h.b16 %v145
  %v1923 = vunpack.c.l.b16 %v146
  %v1924 = vunpack.c.h.b16 %v146
  %v1925 = vunpack.c.l.b16 %v147
  %v1926 = vunpack.c.h.b16 %v147
  %v1927 = vunpack.c.l.b16 %v148
  %v1928 = vunpack.c.h.b16 %v148
  %v1929 = vunpack.c.l.b16 %v149
  %v1930 = vunpack.c.h.b16 %v149
  %v1931 = vunpack.c.l.b16 %v150
  %v1932 = vunpack.c.h.b16 %v150
  %v1933 = vunpack.c.l.b16 %v151
  %v1934 = vunpack.c.h.b16 %v151
  %v1935 = vunpack.c.l.b16 %v152
  %v1936 = vunpack.c.h.b16 %v152
  %v1937 = vunpack.c.l.b16 %v153
  %v1938 = vunpack.c.h.b16 %v153
  %v1939 = vunpack.c.l.b16 %v154
  %v1940 = vunpack.c.h.b16 %v154
  %v1941 = vunpack.c.l.b16 %v155
  %v1942 = vunpack.c.h.b16 %v155
  %v1943 = vunpack.c.l.b16 %v156
  %v1944 = vunpack.c.h.b16 %v156
  %v1945 = vunpack.c.l.b16 %v157
  %v1946 = vunpack.c.h.b16 %v157
  %v1947 = vunpack.c.l.b16 %v158
  %v1948 = vunpack.c.h.b16 %v158
  %v1949 = vunpack.c.l.b16 %v159
  %v1950 = vunpack.c.h.b16 %v159
  %v1951 = vunpack.c.l.b16 %v160
  %v1952 = vunpack.c.h.b16 %v160
  %v1953 = vunpack.c.l.b16 %v161
  %v1954 = vunpack.c.h.b16 %v161
  %v1955 = vunpack.c.l.b16 %v162
  %v1956 = vunpack.c.h.b16 %v162
  %v1957 = vunpack.c.l.b16 %v163
  %v1958 = vunpack.c.h.b16 %v163
  %v1959 = vunpack.c.l.b16 %v164
  %v1960 = vunpack.c.h.b16 %v164
  %v1961 = vunpack.c.l.b16 %v165
  %v1962 = vunpack.c.h.b16 %v165
  %v1963 = vunpack.c.l.b16 %v166
  %v1964 = vunpack.c.h.b16 %v166
  %v1965 = vunpack.c.l.b16 %v167
  %v1966 = vunpack.c.h.b16 %v167
  %v1967 = vunpack.c.l.b16 %v168
  %v1968 = vunpack.c.h.b16 %v168
  %v1969 = vunpack.c.l.b16 %v169
  %v1970 = vunpack.c.h.b16 %v169
  %v1971 = vunpack.c.l.b16 %v170
  %v1972 = vunpack.c.h.b16 %v170
  %v1973 = vunpack.c.l.b16 %v171
  %v1974 = vunpack.c.h.b16 %v171
  %v1975 = vunpack.c.l.b16 %v172
  %v1976 = vunpack.c.h.b16 %v172
  %v1977 = vunpack.c.l.b16 %v173
  %v1978 = vunpack.c.h.b16 %v173
  %v1979 = vunpack.c.l.b16 %v174
  %v1980 = vunpack.c.h.b16 %v174
  %v1981 = vunpack.c.l.b16 %v175
  %v1982 = vunpack.c.h.b16 %v175
  %v1983 = vunpack.c.l.b16 %v176
  %v1984 = vunpack.c.h.b16 %v176
  %v1985 = vunpack.c.l.b16 %v177
  %v1986 = vunpack.c.h.b16 %v177
  %v1987 = vunpack.c.l.b16 %v178
  %v1988 = vunpack.c.h.b16 %v178
  %v1989 = vunpack.c.l.b16 %v179
  %v1990 = vunpack.c.h.b16 %v179
  %v1991 = vunpack.c.l.b16 %v180
  %v1992 = vunpack.c.h.b16 %v180
  %v1993 = vunpack.c.l.b16 %v181
  %v1994 = vunpack.c.h.b16 %v181
  %v1995 = vunpack.c.l.b16 %v182
  %v1996 = vunpack.c.h.b16 %v182
  %v1997 = vunpack.c.l.b16 %v183
  %v1998 = vunpack.c.h.b16 %v183
  %v1999 = vunpack.c.l.b16 %v184
  %v2000 = vunpack.c.h.b16 %v184
  %v2001 = vunpack.c.l.b16 %v185
  %v2002 = vunpack.c.h.b16 %v185
  %v2003 = vunpack.c.l.b16 %v186
  %v2004 = vunpack.c.h.b16 %v186
  %v2005 = vunpack.c.l.b16 %v187
  %v2006 = vunpack.c.h.b16 %v187
  %v2007 = vunpack.c.l.b16 %v188
  %v2008 = vunpack.c.h.b16 %v188
  %v2009 = vunpack.c.l.b16 %v189
  %v2010 = vunpack.c.h.b16 %v189
  %v2011 = vunpack.c.l.b16 %v190
  %v2012 = vunpack.c.h.b16 %v190
  %v2013 = vunpack.c.l.b16 %v191
  %v2014 = vunpack.c.h.b16 %v191
  %v2015 = vunpack.c.l.b16 %v192
  %v2016 = vunpack.c.h.b16 %v192
  %v2017 = vunpack.c.l.b16 %v193
  %v2018 = vunpack.c.h.b16 %v193
  %v2019 = vunpack.c.l.b16 %v194
  %v2020 = vunpack.c.h.b16 %v194
  %v2021 = vunpack.c.l.b16 %v195
  %v2022 = vunpack.c.h.b16 %v195
  %v2023 = vunpack.c.l.b16 %v196
  %v2024 = vunpack.c.h.b16 %v196
  %v2025 = vunpack.c.l.b16 %v197
  %v2026 = vunpack.c.h.b16 %v197
  %v2027 = vunpack.c.l.b16 %v198
  %v2028 = vunpack.c.h.b16 %v198
  %v2029 = vunpack.c.l.b16 %v199
  %v2030 = vunpack.c.h.b16 %v199
  %v2031 = vunpack.c.l.b16 %v200
  %v2032 = vunpack.c.h.b16 %v200
  %v2033 = vunpack.c.l.b16 %v201
  %v2034 = vunpack.c.h.b16 %v201
  %v2035 = vunpack.c.l.b16 %v202
  %v2036 = vunpack.c.h.b16 %v202
  %v2037 = vunpack.c.l.b16 %v203
  %v2038 = vunpack.c.h.b16 %v203
  %v2039 = vunpack.c.l.b16 %v204
  %v2040 = vunpack.c.h.b16 %v204
  %v2041 = vunpack.c.l.b16 %v205
  %v2042 = vunpack.c.h.b16 %v205
  %v2043 = vunpack.c.l.b16 %v206
  %v2044 = vunpack.c.h.b16 %v206
  %v2045 = vunpack.c.l.b16 %v207
  %v2046 = vunpack.c.h.b16 %v207
  %v2047 = vunpack.c.l.b16 %v208
  %v2048 = vunpack.c.h.b16 %v208
  %v2049 = vunpack.c.l.b16 %v209
  %v2050 = vunpack.c.h.b16 %v209
  %v2051 = vunpack.c.l.b16 %v210
  %v2052 = vunpack.c.h.b16 %v210
  %v2053 = vunpack.c.l.b16 %v211
  %v2054 = vunpack.c.h.b16 %v211
  %v2055 = vunpack.c.l.b16 %v212
  %v2056 = vunpack.c.h.b16 %v212
  %v2057 = vunpack.c.l.b16 %v213
  %v2058 = vunpack.c.h.b16 %v213
  %v2059 = vunpack.c.l.b16 %v214
  %v2060 = vunpack.c.h.b16 %v214
  %v2061 = vunpack.c.l.b16 %v215
  %v2062 = vunpack.c.h.b16 %v215
  %v2063 = vunpack.c.l.b16 %v216
  %v2064 = vunpack.c.h.b16 %v216
  %v2065 = vunpack.c.l.b16 %v217
  %v2066 = vunpack.c.h.b16 %v217
  %v2067 = vunpack.c.l.b16 %v218
  %v2068 = vunpack.c.h.b16 %v218
  %v2069 = vunpack.c.l.b16 %v219
  %v2070 = vunpack.c.h.b16 %v219
  %v2071 = vunpack.c.l.b16 %v220
  %v2072 = vunpack.c.h.b16 %v220
  %v2073 = vunpack.c.l.b16 %v221
  %v2074 = vunpack.c.h.b16 %v221
  %v2075 = vunpack.c.l.b16 %v222
  %v2076 = vunpack.c.h.b16 %v222
  %v2077 = vunpack.c.l.b16 %v223
  %v2078 = vunpack.c.h.b16 %v223
  %v2079 = vunpack.c.l.b16 %v224
  %v2080 = vunpack.c.h.b16 %v224
  %v2081 = vunpack.c.l.b16 %v225
  %v2082 = vunpack.c.h.b16 %v225
  %v2083 = vunpack.c.l.b16 %v226
  %v2084 = vunpack.c.h.b16 %v226
  %v2085 = vunpack.c.l.b16 %v227
  %v2086 = vunpack.c.h.b16 %v227
  %v2087 = vunpack.c.l.b16 %v228
  %v2088 = vunpack.c.h.b16 %v228
  %v2089 = vunpack.c.l.b16 %v229
  %v2090 = vunpack.c.h.b16 %v229
  %v2091 = vunpack.c.l.b16 %v230
  %v2092 = vunpack.c.h.b16 %v230
  %v2093 = vunpack.c.l.b16 %v231
  %v2094 = vunpack.c.h.b16 %v231
  %v2095 = vunpack.c.l.b16 %v232
  %v2096 = vunpack.c.h.b16 %v232
  %v2097 = vunpack.c.l.b16 %v233
  %v2098 = vunpack.c.h.b16 %v233
  %v2099 = vunpack.c.l.b16 %v234
  %v2100 = vunpack.c.h.b16 %v234
  %v2101 = vunpack.c.l.b16 %v235
  %v2102 = vunpack.c.h.b16 %v235
  %v2103 = vunpack.c.l.b16 %v236
  %v2104 = vunpack.c.h.b16 %v236
  %v2105 = vunpack.c.l.b16 %v237
  %v2106 = vunpack.c.h.b16 %v237
  %v2107 = vunpack.c.l.b16 %v238
  %v2108 = vunpack.c.h.b16 %v238
  %v2109 = vunpack.c.l.b16 %v239
  %v2110 = vunpack.c.h.b16 %v239
  %v2111 = vunpack.c.l.b16 %v240
  %v2112 = vunpack.c.h.b16 %v240
  %v2113 = vunpack.c.l.b16 %v241
  %v2114 = vunpack.c.h.b16 %v241
  %v2115 = vunpack.c.l.b16 %v242
  %v2116 = vunpack.c.h.b16 %v242
  %v2117 = vunpack.c.l.b16 %v243
  %v2118 = vunpack.c.h.b16 %v243
  %v2119 = vunpack.c.l.b16 %v244
  %v2120 = vunpack.c.h.b16 %v244
  %v2121 = vunpack.c.l.b16 %v245
  %v2122 = vunpack.c.h.b16 %v245
  %v2123 = vunpack.c.l.b16 %v246
  %v2124 = vunpack.c.h.b16 %v246
  %v2125 = vunpack.c.l.b16 %v247
  %v2126 = vunpack.c.h.b16 %v247
  %v2127 = vunpack.c.l.b16 %v248
  %v2128 = vunpack.c.h.b16 %v248
  %v2129 = vunpack.c.l.b16 %v249
  %v2130 = vunpack.c.h.b16 %v249
  %v2131 = vunpack.c.l.b16 %v250
  %v2132 = vunpack.c.h.b16 %v250
  %v2133 = vunpack.c.l.b16 %v251
  %v2134 = vunpack.c.h.b16 %v251
  %v2135 = vunpack.c.l.b16 %v252
  %v2136 = vunpack.c.h.b16 %v252
  %v2137 = vunpack.c.l.b16 %v253
  %v2138 = vunpack.c.h.b16 %v253
  %v2139 = vunpack.c.l.b16 %v254
  %v2140 = vunpack.c.h.b16 %v254
  %v2141 = vunpack.c.l.b16 %v255
  %v2142 = vunpack.c.h.b16 %v255
  %v2143 = vunpack.c.l.b16 %v256
  %v2144 = vunpack.c.h.b16 %v256
  %v2145 = vunpack.c.l.b16 %v257
  %v2146 = vunpack.c.h.b16 %v257
  %v2147 = vunpack.c.l.b16 %v258
  %v2148 = vunpack.c.h.b16 %v258
  %v2149 = vunpack.c.l.b16 %v259
  %v2150 = vunpack.c.h.b16 %v259
  %v2151 = vunpack.c.l.b16 %v260
  %v2152 = vunpack.c.h.b16 %v260
  %v2153 = vunpack.c.l.b16 %v261
  %v2154 = vunpack.c.h.b16 %v261
  %v2155 = vunpack.c.l.b16 %v262
  %v2156 = vunpack.c.h.b16 %v262
  %v2157 = vunpack.c.l.b16 %v263
  %v2158 = vunpack.c.h.b16 %v263
  %v2159 = vunpack.c.l.b16 %v264
  %v2160 = vunpack.c.h.b16 %v264
  %v2161 = vunpack.c.l.b16 %v265
  %v2162 = vunpack.c.h.b16 %v265
  %v2163 = vunpack.c.l.b16 %v266
  %v2164 = vunpack.c.h.b16 %v266
  %v2165 = vunpack.c.l.b16 %v267
  %v2166 = vunpack.c.h.b16 %v267
  %v2167 = vunpack.c.l.b16 %v268
  %v2168 = vunpack.c.h.b16 %v268
  %v2169 = vunpack.c.l.b16 %v269
  %v2170 = vunpack.c.h.b16 %v269
  %v2171 = vunpack.c.l.b16 %v270
  %v2172 = vunpack.c.h.b16 %v270
  %v2173 = vunpack.c.l.b16 %v271
  %v2174 = vunpack.c.h.b16 %v271
  %v2175 = vunpack.c.l.b16 %v272
  %v2176 = vunpack.c.h.b16 %v272
  %v2177 = vunpack.c.l.b16 %v273
  %v2178 = vunpack.c.h.b16 %v273
  %v2179 = vunpack.c.l.b16 %v274
  %v2180 = vunpack.c.h.b16 %v274
  %v2181 = vunpack.c.l.b16 %v275
  %v2182 = vunpack.c.h.b16 %v275
  %v2183 = vunpack.c.l.b16 %v276
  %v2184 = vunpack.c.h.b16 %v276
  %v2185 = vunpack.c.l.b16 %v277
  %v2186 = vunpack.c.h.b16 %v277
  %v2187 = vunpack.c.l.b16 %v278
  %v2188 = vunpack.c.h.b16 %v278
  %v2189 = vunpack.c.l.b16 %v279
  %v2190 = vunpack.c.h.b16 %v279
  %v2191 = vunpack.c.l.b16 %v280
  %v2192 = vunpack.c.h.b16 %v280
  %v2193 = vunpack.c.l.b16 %v281
  %v2194 = vunpack.c.h.b16 %v281
  %v2195 = vunpack.c.l.b16 %v282
  %v2196 = vunpack.c.h.b16 %v282
  %v2197 = vunpack.c.l.b16 %v283
  %v2198 = vunpack.c.h.b16 %v283
  %v2199 = vunpack.c.l.b16 %v284
  %v2200 = vunpack.c.h.b16 %v284
  %v2201 = vunpack.c.l.b16 %v285
  %v2202 = vunpack.c.h.b16 %v285
  %v2203 = vunpack.c.l.b16 %v286
  %v2204 = vunpack.c.h.b16 %v286
  %v2205 = vunpack.c.l.b16 %v287
  %v2206 = vunpack.c.h.b16 %v287
  %v2207 = vunpack.c.l.b16 %v288
  %v2208 = vunpack.c.h.b16 %v288
  %v2209 = vunpack.c.l.b16 %v289
  %v2210 = vunpack.c.h.b16 %v289
  %v2211 = vunpack.c.l.b16 %v290
  %v2212 = vunpack.c.h.b16 %v290
  %v2213 = vunpack.c.l.b16 %v291
  %v2214 = vunpack.c.h.b16 %v291
  %v2215 = vunpack.c.l.b16 %v292
  %v2216 = vunpack.c.h.b16 %v292
  %v2217 = vunpack.c.l.b16 %v293
  %v2218 = vunpack.c.h.b16 %v293
  %v2219 = vunpack.c.l.b16 %v294
  %v2220 = vunpack.c.h.b16 %v294
  %v2221 = vunpack.c.l.b16 %v295
  %v2222 = vunpack.c.h.b16 %v295
  %v2223 = vunpack.c.l.b16 %v296
  %v2224 = vunpack.c.h.b16 %v296
  %v2225 = vunpack.c.l.b16 %v297
  %v2226 = vunpack.c.h.b16 %v297
  %v2227 = vunpack.c.l.b16 %v298
  %v2228 = vunpack.c.h.b16 %v298
  %v2229 = vunpack.c.l.b16 %v299
  %v2230 = vunpack.c.h.b16 %v299
  %v2231 = vunpack.c.l.b16 %v300
  %v2232 = vunpack.c.h.b16 %v300
  %v2233 = vunpack.c.l.b16 %v301
  %v2234 = vunpack.c.h.b16 %v301
  %v2235 = vunpack.c.l.b16 %v302
  %v2236 = vunpack.c.h.b16 %v302
  %v2237 = vunpack.c.l.b16 %v303
  %v2238 = vunpack.c.h.b16 %v303
  %v2239 = vunpack.c.l.b16 %v304
  %v2240 = vunpack.c.h.b16 %v304
  %v2241 = vunpack.c.l.b16 %v305
  %v2242 = vunpack.c.h.b16 %v305
  %v2243 = vunpack.c.l.b16 %v306
  %v2244 = vunpack.c.h.b16 %v306
  %v2245 = vunpack.c.l.b16 %v307
  %v2246 = vunpack.c.h.b16 %v307
  %v2247 = vunpack.c.l.b16 %v308
  %v2248 = vunpack.c.h.b16 %v308
  %v2249 = vunpack.c.l.b16 %v309
  %v2250 = vunpack.c.h.b16 %v309
  %v2251 = vunpack.c.l.b16 %v310
  %v2252 = vunpack.c.h.b16 %v310
  %v2253 = vunpack.c.l.b16 %v311
  %v2254 = vunpack.c.h.b16 %v311
  %v2255 = vunpack.c.l.b16 %v312
  %v2256 = vunpack.c.h.b16 %v312
  %v2257 = vunpack.c.l.b16 %v313
  %v2258 = vunpack.c.h.b16 %v313
  %v2259 = vunpack.c.l.b16 %v314
  %v2260 = vunpack.c.h.b16 %v314
  %v2261 = vunpack.c.l.b16 %v315
  %v2262 = vunpack.c.h.b16 %v315
  %v2263 = vunpack.c.l.b16 %v316
  %v2264 = vunpack.c.h.b16 %v316
  %v2265 = vunpack.c.l.b16 %v317
  %v2266 = vunpack.c.h.b16 %v317
  %v2267 = vunpack.c.l.b16 %v318
  %v2268 = vunpack.c.h.b16 %v318
  %v2269 = vunpack.c.l.b16 %v319
  %v2270 = vunpack.c.h.b16 %v319
  %v2271 = vunpack.c.l.b16 %v320
  %v2272 = vunpack.c.h.b16 %v320
  %v2273 = vunpack.c.l.b16 %v321
  %v2274 = vunpack.c.h.b16 %v321
  %v2275 = vunpack.c.l.b16 %v322
  %v2276 = vunpack.c.h.b16 %v322
  %v2277 = vunpack.c.l.b16 %v323
  %v2278 = vunpack.c.h.b16 %v323
  %v2279 = vunpack.c.l.b16 %v324
  %v2280 = vunpack.c.h.b16 %v324
  %v2281 = vunpack.c.l.b16 %v325
  %v2282 = vunpack.c.h.b16 %v325
  %v2283 = vunpack.c.l.b16 %v326
  %v2284 = vunpack.c.h.b16 %v326
  %v2285 = vunpack.c.l.b16 %v327
  %v2286 = vunpack.c.h.b16 %v327
  %v2287 = vunpack.c.l.b16 %v328
  %v2288 = vunpack.c.h.b16 %v328
  %v2289 = vunpack.c.l.b16 %v329
  %v2290 = vunpack.c.h.b16 %v329
  %v2291 = vunpack.c.l.b16 %v330
  %v2292 = vunpack.c.h.b16 %v330
  %v2293 = vunpack.c.l.b16 %v331
  %v2294 = vunpack.c.h.b16 %v331
  %v2295 = vunpack.c.l.b16 %v332
  %v2296 = vunpack.c.h.b16 %v332
  %v2297 = vunpack.c.l.b16 %v333
  %v2298 = vunpack.c.h.b16 %v333
  %v2299 = vunpack.c.l.b16 %v334
  %v2300 = vunpack.c.h.b16 %v334
  %v2301 = vunpack.c.l.b16 %v335
  %v2302 = vunpack.c.h.b16 %v335
  %v2303 = vunpack.c.l.b16 %v336
  %v2304 = vunpack.c.h.b16 %v336
  %v2305 = vunpack.c.l.b16 %v337
  %v2306 = vunpack.c.h.b16 %v337
  %v2307 = vunpack.c.l.b16 %v338
  %v2308 = vunpack.c.h.b16 %v338
  %v2309 = vunpack.c.l.b16 %v339
  %v2310 = vunpack.c.h.b16 %v339
  %v2311 = vunpack.c.l.b16 %v340
  %v2312 = vunpack.c.h.b16 %v340
  %v2313 = vunpack.c.l.b16 %v341
  %v2314 = vunpack.c.h.b16 %v341
  %v2315 = vunpack.c.l.b16 %v342
  %v2316 = vunpack.c.h.b16 %v342
  %v2317 = vunpack.c.l.b16 %v343
  %v2318 = vunpack.c.h.b16 %v343
  %v2319 = vunpack.c.l.b16 %v344
  %v2320 = vunpack.c.h.b16 %v344
  %v2321 = vunpack.c.l.b16 %v345
  %v2322 = vunpack.c.h.b16 %v345
  %v2323 = vunpack.c.l.b16 %v346
  %v2324 = vunpack.c.h.b16 %v346
  %v2325 = vunpack.c.l.b16 %v347
  %v2326 = vunpack.c.h.b16 %v347
  %v2327 = vunpack.c.l.b16 %v348
  %v2328 = vunpack.c.h.b16 %v348
  %v2329 = vunpack.c.l.b16 %v349
  %v2330 = vunpack.c.h.b16 %v349
  %v2331 = vunpack.c.l.b16 %v350
  %v2332 = vunpack.c.h.b16 %v350
  %v2333 = vunpack.c.l.b16 %v351
  %v2334 = vunpack.c.h.b16 %v351
  %v2335 = vunpack.c.l.b16 %v352
  %v2336 = vunpack.c.h.b16 %v352
  %v2337 = vunpack.c.l.b16 %v353
  %v2338 = vunpack.c.h.b16 %v353
  %v2339 = vunpack.c.l.b16 %v354
  %v2340 = vunpack.c.h.b16 %v354
  %v2341 = vunpack.c.l.b16 %v355
  %v2342 = vunpack.c.h.b16 %v355
  %v2343 = vunpack.c.l.b16 %v356
  %v2344 = vunpack.c.h.b16 %v356
  %v2345 = vunpack.c.l.b16 %v357
  %v2346 = vunpack.c.h.b16 %v357
  %v2347 = vunpack.c.l.b16 %v358
  %v2348 = vunpack.c.h.b16 %v358
  %v2349 = vunpack.c.l.b16 %v359
  %v2350 = vunpack.c.h.b16 %v359
  %v2351 = vunpack.c.l.b16 %v360
  %v2352 = vunpack.c.h.b16 %v360
  %v2353 = vunpack.c.l.b16 %v361
  %v2354 = vunpack.c.h.b16 %v361
  %v2355 = vunpack.c.l.b16 %v362
  %v2356 = vunpack.c.h.b16 %v362
  %v2357 = vunpack.c.l.b16 %v363
  %v2358 = vunpack.c.h.b16 %v363
  %v2359 = vunpack.c.l.b16 %v364
  %v2360 = vunpack.c.h.b16 %v364
  %v2361 = vunpack.c.l.b16 %v365
  %v2362 = vunpack.c.h.b16 %v365
  %v2363 = vunpack.c.l.b16 %v366
  %v2364 = vunpack.c.h.b16 %v366
  %v2365 = vunpack.c.l.b16 %v367
  %v2366 = vunpack.c.h.b16 %v367
  %v2367 = vunpack.c.l.b16 %v368
  %v2368 = vunpack.c.h.b16 %v368
  %v2369 = vunpack.c.l.b16 %v369
  %v2370 = vunpack.c.h.b16 %v369
  %v2371 = vunpack.c.l.b16 %v370
  %v2372 = vunpack.c.h.b16 %v370
  %v2373 = vunpack.c.l.b16 %v371
  %v2374 = vunpack.c.h.b16 %v371
  %v2375 = vunpack.c.l.b16 %v372
  %v2376 = vunpack.c.h.b16 %v372
  %v2377 = vunpack.c.l.b16 %v373
  %v2378 = vunpack.c.h.b16 %v373
  %v2379 = vunpack.c.l.b16 %v374
  %v2380 = vunpack.c.h.b16 %v374
  %v2381 = vunpack.c.l.b16 %v375
  %v2382 = vunpack.c.h.b16 %v375
  %v2383 = vunpack.c.l.b16 %v376
  %v2384 = vunpack.c.h.b16 %v376
  %v2385 = vunpack.c.l.b16 %v377
  %v2386 = vunpack.c.h.b16 %v377
  %v2387 = vunpack.c.l.b16 %v378
  %v2388 = vunpack.c.h.b16 %v378
  %v2389 = vunpack.c.l.b16 %v379
  %v2390 = vunpack.c.h.b16 %v379
  %v2391 = vunpack.c.l.b16 %v380
  %v2392 = vunpack.c.h.b16 %v380
  %v2393 = vunpack.c.l.b16 %v381
  %v2394 = vunpack.c.h.b16 %v381
  %v2395 = vunpack.c.l.b16 %v382
  %v2396 = vunpack.c.h.b16 %v382
  %v2397 = vunpack.c.l.b16 %v383
  %v2398 = vunpack.c.h.b16 %v383
  %v2399 = vunpack.c.l.b16 %v384
  %v2400 = vunpack.c.h.b16 %v384
  %v2401 = vunpack.c.l.b16 %v385
  %v2402 = vunpack.c.h.b16 %v385
  %v2403 = vunpack.c.l.b16 %v386
  %v2404 = vunpack.c.h.b16 %v386
  %v2405 = vunpack.c.l.b16 %v387
  %v2406 = vunpack.c.h.b16 %v387
  %v2407 = vunpack.c.l.b16 %v388
  %v2408 = vunpack.c.h.b16 %v388
  %v2409 = vunpack.c.l.b16 %v389
  %v2410 = vunpack.c.h.b16 %v389
  %v2411 = vunpack.c.l.b16 %v390
  %v2412 = vunpack.c.h.b16 %v390
  %v2413 = vunpack.c.l.b16 %v391
  %v2414 = vunpack.c.h.b16 %v391
  %v2415 = vunpack.c.l.b16 %v392
  %v2416 = vunpack.c.h.b16 %v392
  %v2417 = vunpack.c.l.b16 %v393
  %v2418 = vunpack.c.h.b16 %v393
  %v2419 = vunpack.c.l.b16 %v394
  %v2420 = vunpack.c.h.b16 %v394
  %v2421 = vunpack.c.l.b16 %v395
  %v2422 = vunpack.c.h.b16 %v395
  %v2423 = vunpack.c.l.b16 %v396
  %v2424 = vunpack.c.h.b16 %v396
  %v2425 = vunpack.c.l.b16 %v397
  %v2426 = vunpack.c.h.b16 %v397
  %v2427 = vunpack.c.l.b16 %v398
  %v2428 = vunpack.c.h.b16 %v398
  %v2429 = vunpack.c.l.b16 %v399
  %v2430 = vunpack.c.h.b16 %v399
  %v2431 = vunpack.c.l.b16 %v400
  %v2432 = vunpack.c.h.b16 %v400
  %v2433 = vunpack.c.l.b16 %v401
  %v2434 = vunpack.c.h.b16 %v401
  %v2435 = vunpack.c.l.b16 %v402
  %v2436 = vunpack.c.h.b16 %v402
  %v2437 = vunpack.c.l.b16 %v403
  %v2438 = vunpack.c.h.b16 %v403
  %v2439 = vunpack.c.l.b16 %v404
  %v2440 = vunpack.c.h.b16 %v404
  %v2441 = vunpack.c.l.b16 %v405
  %v2442 = vunpack.c.h.b16 %v405
  %v2443 = vunpack.c.l.b16 %v406
  %v2444 = vunpack.c.h.b16 %v406
  %v2445 = vunpack.c.l.b16 %v407
  %v2446 = vunpack.c.h.b16 %v407
  %v2447 = vunpack.c.l.b16 %v408
  %v2448 = vunpack.c.h.b16 %v408
  %v2449 = vunpack.c.l.b16 %v409
  %v2450 = vunpack.c.h.b16 %v409
  %v2451 = vunpack.c.l.b16 %v410
  %v2452 = vunpack.c.h.b16 %v410
  %v2453 = vunpack.c.l.b16 %v411
  %v2454 = vunpack.c.h.b16 %v411
  %v2455 = vunpack.c.l.b16 %v412
  %v2456 = vunpack.c.h.b16 %v412
  %v2457 = vunpack.c.l.b16 %v413
  %v2458 = vunpack.c.h.b16 %v413
  %v2459 = vunpack.c.l.b16 %v414
  %v2460 = vunpack.c.h.b16 %v414
  %v2461 = vunpack.c.l.b16 %v415
  %v2462 = vunpack.c.h.b16 %v415
  %v2463 = vunpack.c.l.b16 %v416
  %v2464 = vunpack.c.h.b16 %v416
  %v2465 = vunpack.c.l.b16 %v417
  %v2466 = vunpack.c.h.b16 %v417
  %v2467 = vunpack.c.l.b16 %v418
  %v2468 = vunpack.c.h.b16 %v418
  %v2469 = vunpack.c.l.b16 %v419
  %v2470 = vunpack.c.h.b16 %v419
  %v2471 = vunpack.c.l.b16 %v420
  %v2472 = vunpack.c.h.b16 %v420
  %v2473 = vunpack.c.l.b16 %v421
  %v2474 = vunpack.c.h.b16 %v421
  %v2475 = vunpack.c.l.b16 %v422
  %v2476 = vunpack.c.h.b16 %v422
  %v2477 = vunpack.c.l.b16 %v423
  %v2478 = vunpack.c.h.b16 %v423
  %v2479 = vunpack.c.l.b16 %v424
  %v2480 = vunpack.c.h.b16 %v424
  %v2481 = vunpack.c.l.b16 %v425
  %v2482 = vunpack.c.h.b16 %v425
  %v2483 = vunpack.c.l.b16 %v426
  %v2484 = vunpack.c.h.b16 %v426
  %v2485 = vunpack.c.l.b16 %v427
  %v2486 = vunpack.c.h.b16 %v427
  %v2487 = vunpack.c.l.b16 %v428
  %v2488 = vunpack.c.h.b16 %v428
  %v2489 = vunpack.c.l.b16 %v429
  %v2490 = vunpack.c.h.b16 %v429
  %v2491 = vunpack.c.l.b16 %v430
  %v2492 = vunpack.c.h.b16 %v430
  %v2493 = vunpack.c.l.b16 %v431
  %v2494 = vunpack.c.h.b16 %v431
  %v2495 = vunpack.c.l.b16 %v432
  %v2496 = vunpack.c.h.b16 %v432
  %v2497 = vunpack.c.l.b16 %v433
  %v2498 = vunpack.c.h.b16 %v433
  %v2499 = vunpack.c.l.b16 %v434
  %v2500 = vunpack.c.h.b16 %v434
  %v2501 = vunpack.c.l.b16 %v435
  %v2502 = vunpack.c.h.b16 %v435
  %v2503 = vunpack.c.l.b16 %v436
  %v2504 = vunpack.c.h.b16 %v436
  %v2505 = vunpack.c.l.b16 %v437
  %v2506 = vunpack.c.h.b16 %v437
  %v2507 = vunpack.c.l.b16 %v438
  %v2508 = vunpack.c.h.b16 %v438
  %v2509 = vunpack.c.l.b16 %v439
  %v2510 = vunpack.c.h.b16 %v439
  %v2511 = vunpack.c.l.b16 %v440
  %v2512 = vunpack.c.h.b16 %v440
  %v2513 = vunpack.c.l.b16 %v441
  %v2514 = vunpack.c.h.b16 %v441
  %v2515 = vunpack.c.l.b16 %v442
  %v2516 = vunpack.c.h.b16 %v442
  %v2517 = vunpack.c.l.b16 %v443
  %v2518 = vunpack.c.h.b16 %v443
  %v2519 = vunpack.c.l.b16 %v444
  %v2520 = vunpack.c.h.b16 %v444
  %v2521 = vunpack.c.l.b16 %v445
  %v2522 = vunpack.c.h.b16 %v445
  %v2523 = vunpack.c.l.b16 %v446
  %v2524 = vunpack.c.h.b16 %v446
  %v2525 = vunpack.c.l.b16 %v447
  %v2526 = vunpack.c.h.b16 %v447
  %v2527 = vunpack.c.l.b16 %v448
  %v2528 = vunpack.c.h.b16 %v448
  %v2529 = vunpack.c.l.b16 %v449
  %v2530 = vunpack.c.h.b16 %v449
  %v2531 = vunpack.c.l.b16 %v450
  %v2532 = vunpack.c.h.b16 %v450
  %v2533 = vunpack.c.l.b16 %v451
  %v2534 = vunpack.c.h.b16 %v451
  %v2535 = vunpack.c.l.b16 %v452
  %v2536 = vunpack.c.h.b16 %v452
  %v2537 = vunpack.c.l.b16 %v453
  %v2538 = vunpack.c.h.b16 %v453
  %v2539 = vunpack.c.l.b16 %v454
  %v2540 = vunpack.c.h.b16 %v454
  %v2541 = vunpack.c.l.b16 %v455
  %v2542 = vunpack.c.h.b16 %v455
  %v2543 = vunpack.c.l.b16 %v456
  %v2544 = vunpack.c.h.b16 %v456
  %v2545 = vunpack.c.l.b16 %v457
  %v2546 = vunpack.c.h.b16 %v457
  %v2547 = vunpack.c.l.b16 %v458
  %v2548 = vunpack.c.h.b16 %v458
  %v2549 = vunpack.c.l.b16 %v459
  %v2550 = vunpack.c.h.b16 %v459
  %v2551 = vunpack.c.l.b16 %v460
  %v2552 = vunpack.c.h.b16 %v460
  %v2553 = vunpack.c.l.b16 %v461
  %v2554 = vunpack.c.h.b16 %v461
  %v2555 = vunpack.c.l.b16 %v462
  %v2556 = vunpack.c.h.b16 %v462
  %v2557 = vunpack.c.l.b16 %v463
  %v2558 = vunpack.c.h.b16 %v463
  %v2559 = vunpack.c.l.b16 %v464
  %v2560 = vunpack.c.h.b16 %v464
  %v2561 = vunpack.c.l.b16 %v465
  %v2562 = vunpack.c.h.b16 %v465
  %v2563 = vunpack.c.l.b16 %v466
  %v2564 = vunpack.c.h.b16 %v466
  %v2565 = vunpack.c.l.b16 %v467
  %v2566 = vunpack.c.h.b16 %v467
  %v2567 = vunpack.c.l.b16 %v468
  %v2568 = vunpack.c.h.b16 %v468
  %v2569 = vunpack.c.l.b16 %v469
  %v2570 = vunpack.c.h.b16 %v469
  %v2571 = vunpack.c.l.b16 %v470
  %v2572 = vunpack.c.h.b16 %v470
  %v2573 = vunpack.c.l.b16 %v471
  %v2574 = vunpack.c.h.b16 %v471
  %v2575 = vunpack.c.l.b16 %v472
  %v2576 = vunpack.c.h.b16 %v472
  %v2577 = vunpack.c.l.b16 %v473
  %v2578 = vunpack.c.h.b16 %v473
  %v2579 = vunpack.c.l.b16 %v474
  %v2580 = vunpack.c.h.b16 %v474
  %v2581 = vunpack.c.l.b16 %v475
  %v2582 = vunpack.c.h.b16 %v475
  %v2583 = vunpack.c.l.b16 %v476
  %v2584 = vunpack.c.h.b16 %v476
  %v2585 = vunpack.c.l.b16 %v477
  %v2586 = vunpack.c.h.b16 %v477
  %v2587 = vunpack.c.l.b16 %v478
  %v2588 = vunpack.c.h.b16 %v478
  %v2589 = vunpack.c.l.b16 %v479
  %v2590 = vunpack.c.h.b16 %v479
  %v2591 = vunpack.c.l.b16 %v480
  %v2592 = vunpack.c.h.b16 %v480
  %v2593 = vunpack.c.l.b16 %v481
  %v2594 = vunpack.c.h.b16 %v481
  %v2595 = vunpack.c.l.b16 %v482
  %v2596 = vunpack.c.h.b16 %v482
  %v2597 = vunpack.c.l.b16 %v483
  %v2598 = vunpack.c.h.b16 %v483
  %v2599 = vunpack.c.l.b16 %v484
  %v2600 = vunpack.c.h.b16 %v484
  %v2601 = vunpack.c.l.b16 %v485
  %v2602 = vunpack.c.h.b16 %v485
  %v2603 = vunpack.c.l.b16 %v486
  %v2604 = vunpack.c.h.b16 %v486
  %v2605 = vunpack.c.l.b16 %v487
  %v2606 = vunpack.c.h.b16 %v487
  %v2607 = vunpack.c.l.b16 %v488
  %v2608 = vunpack.c.h.b16 %v488
  %v2609 = vunpack.c.l.b16 %v489
  %v2610 = vunpack.c.h.b16 %v489
  %v2611 = vunpack.c.l.b16 %v490
  %v2612 = vunpack.c.h.b16 %v490
  %v2613 = vunpack.c.l.b16 %v491
  %v2614 = vunpack.c.h.b16 %v491
  %v2615 = vunpack.c.l.b16 %v492
  %v2616 = vunpack.c.h.b16 %v492
  %v2617 = vunpack.c.l.b16 %v493
  %v2618 = vunpack.c.h.b16 %v493
  %v2619 = vunpack.c.l.b16 %v494
  %v2620 = vunpack.c.h.b16 %v494
  %v2621 = vunpack.c.l.b16 %v495
  %v2622 = vunpack.c.h.b16 %v495
  %v2623 = vunpack.c.l.b16 %v496
  %v2624 = vunpack.c.h.b16 %v496
  %v2625 = vunpack.c.l.b16 %v497
  %v2626 = vunpack.c.h.b16 %v497
  %v2627 = vunpack.c.l.b16 %v498
  %v2628 = vunpack.c.h.b16 %v498
  %v2629 = vunpack.c.l.b16 %v499
  %v2630 = vunpack.c.h.b16 %v499
  %v2631 = vunpack.c.l.b16 %v500
  %v2632 = vunpack.c.h.b16 %v500
  %v2633 = vunpack.c.l.b16 %v501
  %v2634 = vunpack.c.h.b16 %v501
  %v2635 = vunpack.c.l.b16 %v502
  %v2636 = vunpack.c.h.b16 %v502
  %v2637 = vunpack.c.l.b16 %v503
  %v2638 = vunpack.c.h.b16 %v503
  %v2639 = vunpack.c.l.b16 %v504
  %v2640 = vunpack.c.h.b16 %v504
  %v2641 = vunpack.c.l.b16 %v505
  %v2642 = vunpack.c.h.b16 %v505
  %v2643 = vunpack.c.l.b16 %v506
  %v2644 = vunpack.c.h.b16 %v506
  %v2645 = vunpack.c.l.b16 %v507
  %v2646 = vunpack.c.h.b16 %v507
  %v2647 = vunpack.c.l.b16 %v508
  %v2648 = vunpack.c.h.b16 %v508
  %v2649 = vunpack.c.l.b16 %v509
  %v2650 = vunpack.c.h.b16 %v509
  %v2651 = vunpack.c.l.b16 %v510
  %v2652 = vunpack.c.h.b16 %v510
  %v2653 = vunpack.c.l.b16 %v511
  %v2654 = vunpack.c.h.b16 %v511
  %v2655 = vunpack.c.l.b16 %v512
  %v2656 = vunpack.c.h.b16 %v512
  %v2657 = vunpack.c.l.b16 %v513
  %v2658 = vunpack.c.h.b16 %v513
  %v2659 = vunpack.c.l.b16 %v514
  %v2660 = vunpack.c.h.b16 %v514
  %v2661 = vunpack.c.l.b16 %v515
  %v2662 = vunpack.c.h.b16 %v515
  %v2663 = vunpack.c.l.b16 %v516
  %v2664 = vunpack.c.h.b16 %v516
  %v2665 = vunpack.c.l.b16 %v517
  %v2666 = vunpack.c.h.b16 %v517
  %v2667 = vunpack.c.l.b16 %v518
  %v2668 = vunpack.c.h.b16 %v518
  %v2669 = vunpack.c.l.b16 %v519
  %v2670 = vunpack.c.h.b16 %v519
  %v2671 = vunpack.c.l.b16 %v520
  %v2672 = vunpack.c.h.b16 %v520
  %v2673 = vunpack.c.l.b16 %v521
  %v2674 = vunpack.c.h.b16 %v521
  %v2675 = vunpack.c.l.b16 %v522
  %v2676 = vunpack.c.h.b16 %v522
  %v2677 = vunpack.c.l.b16 %v523
  %v2678 = vunpack.c.h.b16 %v523
  %v2679 = vunpack.c.l.b16 %v524
  %v2680 = vunpack.c.h.b16 %v524
  %v2681 = vunpack.c.l.b16 %v525
  %v2682 = vunpack.c.h.b16 %v525
  %v2683 = vunpack.c.l.b16 %v526
  %v2684 = vunpack.c.h.b16 %v526
  %v2685 = vunpack.c.l.b16 %v527
  %v2686 = vunpack.c.h.b16 %v527
  %v2687 = vunpack.c.l.b16 %v528
  %v2688 = vunpack.c.h.b16 %v528
  %v2689 = vunpack.c.l.b16 %v529
  %v2690 = vunpack.c.h.b16 %v529
  %v2691 = vunpack.c.l.b16 %v530
  %v2692 = vunpack.c.h.b16 %v530
  %v2693 = vunpack.c.l.b16 %v531
  %v2694 = vunpack.c.h.b16 %v531
  %v2695 = vunpack.c.l.b16 %v532
  %v2696 = vunpack.c.h.b16 %v532
  %v2697 = vunpack.c.l.b16 %v533
  %v2698 = vunpack.c.h.b16 %v533
  %v2699 = vunpack.c.l.b16 %v534
  %v2700 = vunpack.c.h.b16 %v534
  %v2701 = vunpack.c.l.b16 %v535
  %v2702 = vunpack.c.h.b16 %v535
  %v2703 = vunpack.c.l.b16 %v536
  %v2704 = vunpack.c.h.b16 %v536
  %v2705 = vunpack.c.l.b16 %v537
  %v2706 = vunpack.c.h.b16 %v537
  %v2707 = vunpack.c.l.b16 %v538
  %v2708 = vunpack.c.h.b16 %v538
  %v2709 = vunpack.c.l.b16 %v539
  %v2710 = vunpack.c.h.b16 %v539
  %v2711 = vunpack.c.l.b16 %v540
  %v2712 = vunpack.c.h.b16 %v540
  %v2713 = vunpack.c.l.b16 %v541
  %v2714 = vunpack.c.h.b16 %v541
  %v2715 = vunpack.c.l.b16 %v542
  %v2716 = vunpack.c.h.b16 %v542
  %v2717 = vunpack.c.l.b16 %v543
  %v2718 = vunpack.c.h.b16 %v543
  %v2719 = vunpack.c.l.b16 %v544
  %v2720 = vunpack.c.h.b16 %v544
  %v2721 = vunpack.c.l.b16 %v545
  %v2722 = vunpack.c.h.b16 %v545
  %v2723 = vunpack.c.l.b16 %v546
  %v2724 = vunpack.c.h.b16 %v546
  %v2725 = vunpack.c.l.b16 %v547
  %v2726 = vunpack.c.h.b16 %v547
  %v2727 = vunpack.c.l.b16 %v548
  %v2728 = vunpack.c.h.b16 %v548
  %v2729 = vunpack.c.l.b16 %v549
  %v2730 = vunpack.c.h.b16 %v549
  %v2731 = vunpack.c.l.b16 %v550
  %v2732 = vunpack.c.h.b16 %v550
  %v2733 = vunpack.c.l.b16 %v551
  %v2734 = vunpack.c.h.b16 %v551
  %v2735 = vunpack.c.l.b16 %v552
  %v2736 = vunpack.c.h.b16 %v552
  %v2737 = vunpack.c.l.b16 %v553
  %v2738 = vunpack.c.h.b16 %v553
  %v2739 = vunpack.c.l.b16 %v554
  %v2740 = vunpack.c.h.b16 %v554
  %v2741 = vunpack.c.l.b16 %v555
  %v2742 = vunpack.c.h.b16 %v555
  %v2743 = vunpack.c.l.b16 %v556
  %v2744 = vunpack.c.h.b16 %v556
  %v2745 = vunpack.c.l.b16 %v557
  %v2746 = vunpack.c.h.b16 %v557
  %v2747 = vunpack.c.l.b16 %v558
  %v2748 = vunpack.c.h.b16 %v558
  %v2749 = vunpack.c.l.b16 %v559
  %v2750 = vunpack.c.h.b16 %v559
  %v2751 = vunpack.c.l.b16 %v560
  %v2752 = vunpack.c.h.b16 %v560
  %v2753 = vunpack.c.l.b16 %v561
  %v2754 = vunpack.c.h.b16 %v561
  %v2755 = vunpack.c.l.b16 %v562
  %v2756 = vunpack.c.h.b16 %v562
  %v2757 = vunpack.c.l.b16 %v563
  %v2758 = vunpack.c.h.b16 %v563
  %v2759 = vunpack.c.l.b16 %v564
  %v2760 = vunpack.c.h.b16 %v564
  %v2761 = vunpack.c.l.b16 %v565
  %v2762 = vunpack.c.h.b16 %v565
  %v2763 = vunpack.c.l.b16 %v566
  %v2764 = vunpack.c.h.b16 %v566
  %v2765 = vunpack.c.l.b16 %v567
  %v2766 = vunpack.c.h.b16 %v567
  %v2767 = vunpack.c.l.b16 %v568
  %v2768 = vunpack.c.h.b16 %v568
  %v2769 = vunpack.c.l.b16 %v569
  %v2770 = vunpack.c.h.b16 %v569
  %v2771 = vunpack.c.l.b16 %v570
  %v2772 = vunpack.c.h.b16 %v570
  %v2773 = vunpack.c.l.b16 %v571
  %v2774 = vunpack.c.h.b16 %v571
  %v2775 = vunpack.c.l.b16 %v572
  %v2776 = vunpack.c.h.b16 %v572
  %v2777 = vunpack.c.l.b16 %v573
  %v2778 = vunpack.c.h.b16 %v573
  %v2779 = vunpack.c.l.b16 %v574
  %v2780 = vunpack.c.h.b16 %v574
  %v2781 = vunpack.c.l.b16 %v575
  %v2782 = vunpack.c.h.b16 %v575
  %v2783 = vunpack.c.l.b16 %v576
  %v2784 = vunpack.c.h.b16 %v576
  %v2785 = vunpack.c.l.b16 %v577
  %v2786 = vunpack.c.h.b16 %v577
  %v2787 = vunpack.c.l.b16 %v578
  %v2788 = vunpack.c.h.b16 %v578
  %v2789 = vunpack.c.l.b16 %v579
  %v2790 = vunpack.c.h.b16 %v579
  %v2791 = vunpack.c.l.b16 %v580
  %v2792 = vunpack.c.h.b16 %v580
  %v2793 = vunpack.c.l.b16 %v581
  %v2794 = vunpack.c.h.b16 %v581
  %v2795 = vunpack.c.l.b16 %v582
  %v2796 = vunpack.c.h.b16 %v582
  %v2797 = vunpack.c.l.b16 %v583
  %v2798 = vunpack.c.h.b16 %v583
  %v2799 = vunpack.c.l.b16 %v584
  %v2800 = vunpack.c.h.b16 %v584
  %v2801 = vunpack.c.l.b16 %v585
  %v2802 = vunpack.c.h.b16 %v585
  %v2803 = vunpack.c.l.b16 %v586
  %v2804 = vunpack.c.h.b16 %v586
  %v2805 = vunpack.c.l.b16 %v587
  %v2806 = vunpack.c.h.b16 %v587
  %v2807 = vunpack.c.l.b16 %v588
  %v2808 = vunpack.c.h.b16 %v588
  %v2809 = vunpack.c.l.b16 %v589
  %v2810 = vunpack.c.h.b16 %v589
  %v2811 = vunpack.c.l.b16 %v590
  %v2812 = vunpack.c.h.b16 %v590
  %v2813 = vunpack.c.l.b16 %v591
  %v2814 = vunpack.c.h.b16 %v591
  %v2815 = vunpack.c.l.b16 %v592
  %v2816 = vunpack.c.h.b16 %v592
  %v2817 = vunpack.c.l.b16 %v593
  %v2818 = vunpack.c.h.b16 %v593
  %v2819 = vunpack.c.l.b16 %v594
  %v2820 = vunpack.c.h.b16 %v594
  %v2821 = vunpack.c.l.b16 %v595
  %v2822 = vunpack.c.h.b16 %v595
  %v2823 = vunpack.c.l.b16 %v596
  %v2824 = vunpack.c.h.b16 %v596
  %v2825 = vunpack.c.l.b16 %v597
  %v2826 = vunpack.c.h.b16 %v597
  %v2827 = vunpack.c.l.b16 %v598
  %v2828 = vunpack.c.h.b16 %v598
  %v2829 = vunpack.c.l.b16 %v599
  %v2830 = vunpack.c.h.b16 %v599
  %v2831 = vunpack.c.l.b16 %v600
  %v2832 = vunpack.c.h.b16 %v600
  %v2833 = vunpack.c.l.b16 %v601
  %v2834 = vunpack.c.h.b16 %v601
  %v2835 = vunpack.c.l.b16 %v602
  %v2836 = vunpack.c.h.b16 %v602
  %v2837 = vunpack.c.l.b16 %v603
  %v2838 = vunpack.c.h.b16 %v603
  %v2839 = vunpack.c.l.b16 %v604
  %v2840 = vunpack.c.h.b16 %v604
  %v2841 = vunpack.c.l.b16 %v605
  %v2842 = vunpack.c.h.b16 %v605
  %v2843 = vunpack.c.l.b16 %v606
  %v2844 = vunpack.c.h.b16 %v606
  %v2845 = vunpack.c.l.b16 %v607
  %v2846 = vunpack.c.h.b16 %v607
  %v2847 = vunpack.c.l.b16 %v608
  %v2848 = vunpack.c.h.b16 %v608
  %v2849 = vunpack.c.l.b16 %v609
  %v2850 = vunpack.c.h.b16 %v609
  %v2851 = vunpack.c.l.b16 %v610
  %v2852 = vunpack.c.h.b16 %v610
  %v2853 = vunpack.c.l.b16 %v611
  %v2854 = vunpack.c.h.b16 %v611
  %v2855 = vunpack.c.l.b16 %v612
  %v2856 = vunpack.c.h.b16 %v612
  %v2857 = vunpack.c.l.b16 %v613
  %v2858 = vunpack.c.h.b16 %v613
  %v2859 = vunpack.c.l.b16 %v614
  %v2860 = vunpack.c.h.b16 %v614
  %v2861 = vunpack.c.l.b16 %v615
  %v2862 = vunpack.c.h.b16 %v615
  %v2863 = vunpack.c.l.b16 %v616
  %v2864 = vunpack.c.h.b16 %v616
  %v2865 = vunpack.c.l.b16 %v617
  %v2866 = vunpack.c.h.b16 %v617
  %v2867 = vunpack.c.l.b16 %v618
  %v2868 = vunpack.c.h.b16 %v618
  %v2869 = vunpack.c.l.b16 %v619
  %v2870 = vunpack.c.h.b16 %v619
  %v2871 = vunpack.c.l.b16 %v620
  %v2872 = vunpack.c.h.b16 %v620
  %v2873 = vunpack.c.l.b16 %v621
  %v2874 = vunpack.c.h.b16 %v621
  %v2875 = vunpack.c.l.b16 %v622
  %v2876 = vunpack.c.h.b16 %v622
  %v2877 = vunpack.c.l.b16 %v623
  %v2878 = vunpack.c.h.b16 %v623
  %v2879 = vunpack.c.l.b16 %v624
  %v2880 = vunpack.c.h.b16 %v624
  %v2881 = vunpack.c.l.b16 %v625
  %v2882 = vunpack.c.h.b16 %v625
  %v2883 = vunpack.c.l.b16 %v626
  %v2884 = vunpack.c.h.b16 %v626
  %v2885 = vunpack.c.l.b16 %v627
  %v2886 = vunpack.c.h.b16 %v627
  %v2887 = vunpack.c.l.b16 %v628
  %v2888 = vunpack.c.h.b16 %v628
  %v2889 = vunpack.c.l.b16 %v629
  %v2890 = vunpack.c.h.b16 %v629
  %v2891 = vunpack.c.l.b16 %v630
  %v2892 = vunpack.c.h.b16 %v630
  %v2893 = vunpack.c.l.b16 %v631
  %v2894 = vunpack.c.h.b16 %v631
  %v2895 = vunpack.c.l.b16 %v632
  %v2896 = vunpack.c.h.b16 %v632
  %v2897 = vunpack.c.l.b16 %v633
  %v2898 = vunpack.c.h.b16 %v633
  %v2899 = vunpack.c.l.b16 %v634
  %v2900 = vunpack.c.h.b16 %v634
  %v2901 = vunpack.c.l.b16 %v635
  %v2902 = vunpack.c.h.b16 %v635
  %v2903 = vunpack.c.l.b16 %v636
  %v2904 = vunpack.c.h.b16 %v636
  %v2905 = vunpack.c.l.b16 %v637
  %v2906 = vunpack.c.h.b16 %v637
  %v2907 = vunpack.c.l.b16 %v638
  %v2908 = vunpack.c.h.b16 %v638
  %v2909 = vunpack.c.l.b16 %v639
  %v2910 = vunpack.c.h.b16 %v639
  %v2911 = vunpack.c.l.b16 %v640
  %v2912 = vunpack.c.h.b16 %v640
  %v2913 = vunpack.c.l.b16 %v641
  %v2914 = vunpack.c.h.b16 %v641
  %v2915 = vunpack.c.l.b16 %v642
  %v2916 = vunpack.c.h.b16 %v642
  %v2917 = vunpack.c.l.b16 %v643
  %v2918 = vunpack.c.h.b16 %v643
  %v2919 = vunpack.c.l.b16 %v644
  %v2920 = vunpack.c.h.b16 %v644
  %v2921 = vunpack.c.l.b16 %v645
  %v2922 = vunpack.c.h.b16 %v645
  %v2923 = vunpack.c.l.b16 %v646
  %v2924 = vunpack.c.h.b16 %v646
  %v2925 = vunpack.c.l.b16 %v647
  %v2926 = vunpack.c.h.b16 %v647
  %v2927 = vunpack.c.l.b16 %v648
  %v2928 = vunpack.c.h.b16 %v648
  %v2929 = vunpack.c.l.b16 %v649
  %v2930 = vunpack.c.h.b16 %v649
  %v2931 = vunpack.c.l.b16 %v650
  %v2932 = vunpack.c.h.b16 %v650
  %v2933 = vunpack.c.l.b16 %v651
  %v2934 = vunpack.c.h.b16 %v651
  %v2935 = vunpack.c.l.b16 %v652
  %v2936 = vunpack.c.h.b16 %v652
  %v2937 = vunpack.c.l.b16 %v653
  %v2938 = vunpack.c.h.b16 %v653
  %v2939 = vunpack.c.l.b16 %v654
  %v2940 = vunpack.c.h.b16 %v654
  %v2941 = vunpack.c.l.b16 %v655
  %v2942 = vunpack.c.h.b16 %v655
  %v2943 = vunpack.c.l.b16 %v656
  %v2944 = vunpack.c.h.b16 %v656
  %v2945 = vunpack.c.l.b16 %v657
  %v2946 = vunpack.c.h.b16 %v657
  %v2947 = vunpack.c.l.b16 %v658
  %v2948 = vunpack.c.h.b16 %v658
  %v2949 = vunpack.c.l.b16 %v659
  %v2950 = vunpack.c.h.b16 %v659
  %v2951 = vunpack.c.l.b16 %v660
  %v2952 = vunpack.c.h.b16 %v660
  %v2953 = vunpack.c.l.b16 %v661
  %v2954 = vunpack.c.h.b16 %v661
  %v2955 = vunpack.c.l.b16 %v662
  %v2956 = vunpack.c.h.b16 %v662
  %v2957 = vunpack.c.l.b16 %v663
  %v2958 = vunpack.c.h.b16 %v663
  %v2959 = vunpack.c.l.b16 %v664
  %v2960 = vunpack.c.h.b16 %v664
  %v2961 = vunpack.c.l.b16 %v665
  %v2962 = vunpack.c.h.b16 %v665
  %v2963 = vunpack.c.l.b16 %v666
  %v2964 = vunpack.c.h.b16 %v666
  %v2965 = vunpack.c.l.b16 %v667
  %v2966 = vunpack.c.h.b16 %v667
  %v2967 = vunpack.c.l.b16 %v668
  %v2968 = vunpack.c.h.b16 %v668
  %v2969 = vunpack.c.l.b16 %v669
  %v2970 = vunpack.c.h.b16 %v669
  %v2971 = vunpack.c.l.b16 %v670
  %v2972 = vunpack.c.h.b16 %v670
  %v2973 = vunpack.c.l.b16 %v671
  %v2974 = vunpack.c.h.b16 %v671
  %v2975 = vunpack.c.l.b16 %v672
  %v2976 = vunpack.c.h.b16 %v672
  %v2977 = vunpack.c.l.b16 %v673
  %v2978 = vunpack.c.h.b16 %v673
  %v2979 = vunpack.c.l.b16 %v674
  %v2980 = vunpack.c.h.b16 %v674
  %v2981 = vunpack.c.l.b16 %v675
  %v2982 = vunpack.c.h.b16 %v675
  %v2983 = vunpack.c.l.b16 %v676
  %v2984 = vunpack.c.h.b16 %v676
  %v2985 = vunpack.c.l.b16 %v677
  %v2986 = vunpack.c.h.b16 %v677
  %v2987 = vunpack.c.l.b16 %v678
  %v2988 = vunpack.c.h.b16 %v678
  %v2989 = vunpack.c.l.b16 %v679
  %v2990 = vunpack.c.h.b16 %v679
  %v2991 = vunpack.c.l.b16 %v680
  %v2992 = vunpack.c.h.b16 %v680
  %v2993 = vunpack.c.l.b16 %v681
  %v2994 = vunpack.c.h.b16 %v681
  %v2995 = vunpack.c.l.b16 %v682
  %v2996 = vunpack.c.h.b16 %v682
  %v2997 = vunpack.c.l.b16 %v683
  %v2998 = vunpack.c.h.b16 %v683
  %v2999 = vunpack.c.l.b16 %v684
  %v3000 = vunpack.c.h.b16 %v684
  %v3001 = vunpack.c.l.b16 %v685
  %v3002 = vunpack.c.h.b16 %v685
  %v3003 = vunpack.c.l.b16 %v686
  %v3004 = vunpack.c.h.b16 %v686
  %v3005 = vunpack.c.l.b16 %v687
  %v3006 = vunpack.c.h.b16 %v687
  %v3007 = vunpack.c.l.b16 %v688
  %v3008 = vunpack.c.h.b16 %v688
  %v3009 = vunpack.c.l.b16 %v689
  %v3010 = vunpack.c.h.b16 %v689
  %v3011 = vunpack.c.l.b16 %v690
  %v3012 = vunpack.c.h.b16 %v690
  %v3013 = vunpack.c.l.b16 %v691
  %v3014 = vunpack.c.h.b16 %v691
  %v3015 = vunpack.c.l.b16 %v692
  %v3016 = vunpack.c.h.b16 %v692
  %v3017 = vunpack.c.l.b16 %v693
  %v3018 = vunpack.c.h.b16 %v693
  %v3019 = vunpack.c.l.b16 %v694
  %v3020 = vunpack.c.h.b16 %v694
  %v3021 = vunpack.c.l.b16 %v695
  %v3022 = vunpack.c.h.b16 %v695
  %v3023 = vunpack.c.l.b16 %v696
  %v3024 = vunpack.c.h.b16 %v696
  %v3025 = vunpack.c.l.b16 %v697
  %v3026 = vunpack.c.h.b16 %v697
  %v3027 = vunpack.c.l.b16 %v698
  %v3028 = vunpack.c.h.b16 %v698
  %v3029 = vunpack.c.l.b16 %v699
  %v3030 = vunpack.c.h.b16 %v699
  %v3031 = vunpack.c.l.b16 %v700
  %v3032 = vunpack.c.h.b16 %v700
  %v3033 = vunpack.c.l.b16 %v701
  %v3034 = vunpack.c.h.b16 %v701
  %v3035 = vunpack.c.l.b16 %v702
  %v3036 = vunpack.c.h.b16 %v702
  %v3037 = vunpack.c.l.b16 %v703
  %v3038 = vunpack.c.h.b16 %v703
  %v3039 = vunpack.c.l.b16 %v704
  %v3040 = vunpack.c.h.b16 %v704
  %v3041 = vunpack.c.l.b16 %v705
  %v3042 = vunpack.c.h.b16 %v705
  %v3043 = vunpack.c.l.b16 %v706
  %v3044 = vunpack.c.h.b16 %v706
  %v3045 = vunpack.c.l.b16 %v707
  %v3046 = vunpack.c.h.b16 %v707
  %v3047 = vunpack.c.l.b16 %v708
  %v3048 = vunpack.c.h.b16 %v708
  %v3049 = vunpack.c.l.b16 %v709
  %v3050 = vunpack.c.h.b16 %v709
  %v3051 = vunpack.c.l.b16 %v710
  %v3052 = vunpack.c.h.b16 %v710
  %v3053 = vunpack.c.l.b16 %v711
  %v3054 = vunpack.c.h.b16 %v711
  %v3055 = vunpack.c.l.b16 %v712
  %v3056 = vunpack.c.h.b16 %v712
  %v3057 = vunpack.c.l.b16 %v713
  %v3058 = vunpack.c.h.b16 %v713
  %v3059 = vunpack.c.l.b16 %v714
  %v3060 = vunpack.c.h.b16 %v714
  %v3061 = vunpack.c.l.b16 %v715
  %v3062 = vunpack.c.h.b16 %v715
  %v3063 = vunpack.c.l.b16 %v716
  %v3064 = vunpack.c.h.b16 %v716
  %v3065 = vunpack.c.l.b16 %v717
  %v3066 = vunpack.c.h.b16 %v717
  %v3067 = vunpack.c.l.b16 %v718
  %v3068 = vunpack.c.h.b16 %v718
  %v3069 = vunpack.c.l.b16 %v719
  %v3070 = vunpack.c.h.b16 %v719
  %v3071 = vunpack.c.l.b16 %v720
  %v3072 = vunpack.c.h.b16 %v720
  %v3073 = vunpack.c.l.b16 %v721
  %v3074 = vunpack.c.h.b16 %v721
  %v3075 = vunpack.c.l.b16 %v722
  %v3076 = vunpack.c.h.b16 %v722
  %v3077 = vunpack.c.l.b16 %v723
  %v3078 = vunpack.c.h.b16 %v723
  %v3079 = vunpack.c.l.b16 %v724
  %v3080 = vunpack.c.h.b16 %v724
  %v3081 = vunpack.c.l.b16 %v725
  %v3082 = vunpack.c.h.b16 %v725
  %v3083 = vunpack.c.l.b16 %v726
  %v3084 = vunpack.c.h.b16 %v726
  %v3085 = vunpack.c.l.b16 %v727
  %v3086 = vunpack.c.h.b16 %v727
  %v3087 = vunpack.c.l.b16 %v728
  %v3088 = vunpack.c.h.b16 %v728
  %v3089 = vunpack.c.l.b16 %v729
  %v3090 = vunpack.c.h.b16 %v729
  %v3091 = vunpack.c.l.b16 %v730
  %v3092 = vunpack.c.h.b16 %v730
  %v3093 = vunpack.c.l.b16 %v731
  %v3094 = vunpack.c.h.b16 %v731
  %v3095 = vunpack.c.l.b16 %v732
  %v3096 = vunpack.c.h.b16 %v732
  %v3097 = vunpack.c.l.b16 %v733
  %v3098 = vunpack.c.h.b16 %v733
  %v3099 = vunpack.c.l.b16 %v734
  %v3100 = vunpack.c.h.b16 %v734
  %v3101 = vunpack.c.l.b16 %v735
  %v3102 = vunpack.c.h.b16 %v735
  %v3103 = vunpack.c.l.b16 %v736
  %v3104 = vunpack.c.h.b16 %v736
  %v3105 = vunpack.c.l.b16 %v737
  %v3106 = vunpack.c.h.b16 %v737
  %v3107 = vunpack.c.l.b16 %v738
  %v3108 = vunpack.c.h.b16 %v738
  %v3109 = vunpack.c.l.b16 %v739
  %v3110 = vunpack.c.h.b16 %v739
  %v3111 = vunpack.c.l.b16 %v740
  %v3112 = vunpack.c.h.b16 %v740
  %v3113 = vunpack.c.l.b16 %v741
  %v3114 = vunpack.c.h.b16 %v741
  %v3115 = vunpack.c.l.b16 %v742
  %v3116 = vunpack.c.h.b16 %v742
  %v3117 = vunpack.c.l.b16 %v743
  %v3118 = vunpack.c.h.b16 %v743
  %v3119 = vunpack.c.l.b16 %v744
  %v3120 = vunpack.c.h.b16 %v744
  %v3121 = vunpack.c.l.b16 %v745
  %v3122 = vunpack.c.h.b16 %v745
  %v3123 = vunpack.c.l.b16 %v746
  %v3124 = vunpack.c.h.b16 %v746
  %v3125 = vunpack.c.l.b16 %v747
  %v3126 = vunpack.c.h.b16 %v747
  %v3127 = vunpack.c.l.b16 %v748
  %v3128 = vunpack.c.h.b16 %v748
  %v3129 = vunpack.c.l.b16 %v749
  %v3130 = vunpack.c.h.b16 %v749
  %v3131 = vunpack.c.l.b16 %v750
  %v3132 = vunpack.c.h.b16 %v750
  %v3133 = vunpack.c.l.b16 %v751
  %v3134 = vunpack.c.h.b16 %v751
  %v3135 = vunpack.c.l.b16 %v752
  %v3136 = vunpack.c.h.b16 %v752
  %v3137 = vunpack.c.l.b16 %v753
  %v3138 = vunpack.c.h.b16 %v753
  %v3139 = vunpack.c.l.b16 %v754
  %v3140 = vunpack.c.h.b16 %v754
  %v3141 = vunpack.c.l.b16 %v755
  %v3142 = vunpack.c.h.b16 %v755
  %v3143 = vunpack.c.l.b16 %v756
  %v3144 = vunpack.c.h.b16 %v756
  %v3145 = vunpack.c.l.b16 %v757
  %v3146 = vunpack.c.h.b16 %v757
  %v3147 = vunpack.c.l.b16 %v758
  %v3148 = vunpack.c.h.b16 %v758
  %v3149 = vunpack.c.l.b16 %v759
  %v3150 = vunpack.c.h.b16 %v759
  %v3151 = vunpack.c.l.b16 %v760
  %v3152 = vunpack.c.h.b16 %v760
  %v3153 = vunpack.c.l.b16 %v761
  %v3154 = vunpack.c.h.b16 %v761
  %v3155 = vunpack.c.l.b16 %v762
  %v3156 = vunpack.c.h.b16 %v762
  %v3157 = vunpack.c.l.b16 %v763
  %v3158 = vunpack.c.h.b16 %v763
  %v3159 = vunpack.c.l.b16 %v764
  %v3160 = vunpack.c.h.b16 %v764
  %v3161 = vunpack.c.l.b16 %v765
  %v3162 = vunpack.c.h.b16 %v765
  %v3163 = vunpack.c.l.b16 %v766
  %v3164 = vunpack.c.h.b16 %v766
  %v3165 = vunpack.c.l.b16 %v767
  %v3166 = vunpack.c.h.b16 %v767
  %v3167 = vunpack.c.l.b16 %v768
  %v3168 = vunpack.c.h.b16 %v768
  %v3169 = vunpack.c.l.b16 %v769
  %v3170 = vunpack.c.h.b16 %v769
  %v3171 = vunpack.c.l.b16 %v770
  %v3172 = vunpack.c.h.b16 %v770
  %v3173 = vunpack.c.l.b16 %v771
  %v3174 = vunpack.c.h.b16 %v771
  %v3175 = vunpack.c.l.b16 %v772
  %v3176 = vunpack.c.h.b16 %v772
  %v3177 = vunpack.c.l.b16 %v773
  %v3178 = vunpack.c.h.b16 %v773
  %v3179 = vunpack.c.l.b16 %v774
  %v3180 = vunpack.c.h.b16 %v774
  %v3181 = vunpack.c.l.b16 %v775
  %v3182 = vunpack.c.h.b16 %v775
  %v3183 = vunpack.c.l.b16 %v776
  %v3184 = vunpack.c.h.b16 %v776
  %v3185 = vunpack.c.l.b16 %v777
  %v3186 = vunpack.c.h.b16 %v777
  %v3187 = vunpack.c.l.b16 %v778
  %v3188 = vunpack.c.h.b16 %v778
  %v3189 = vunpack.c.l.b16 %v779
  %v3190 = vunpack.c.h.b16 %v779
  %v3191 = vunpack.c.l.b16 %v780
  %v3192 = vunpack.c.h.b16 %v780
  %v3193 = vunpack.c.l.b16 %v781
  %v3194 = vunpack.c.h.b16 %v781
  %v3195 = vunpack.c.l.b16 %v782
  %v3196 = vunpack.c.h.b16 %v782
  %v3197 = vunpack.c.l.b16 %v783
  %v3198 = vunpack.c.h.b16 %v783
  %v3199 = vunpack.c.l.b16 %v784
  %v3200 = vunpack.c.h.b16 %v784
  %v3201 = vunpack.c.l.b16 %v785
  %v3202 = vunpack.c.h.b16 %v785
  %v3203 = vunpack.c.l.b16 %v786
  %v3204 = vunpack.c.h.b16 %v786
  %v3205 = vunpack.c.l.b16 %v787
  %v3206 = vunpack.c.h.b16 %v787
  %v3207 = vunpack.c.l.b16 %v788
  %v3208 = vunpack.c.h.b16 %v788
  %v3209 = vunpack.c.l.b16 %v789
  %v3210 = vunpack.c.h.b16 %v789
  %v3211 = vunpack.c.l.b16 %v790
  %v3212 = vunpack.c.h.b16 %v790
  %v3213 = vunpack.c.l.b16 %v791
  %v3214 = vunpack.c.h.b16 %v791
  %v3215 = vunpack.c.l.b16 %v792
  %v3216 = vunpack.c.h.b16 %v792
  %v3217 = vunpack.c.l.b16 %v793
  %v3218 = vunpack.c.h.b16 %v793
  %v3219 = vunpack.c.l.b16 %v794
  %v3220 = vunpack.c.h.b16 %v794
  %v3221 = vunpack.c.l.b16 %v795
  %v3222 = vunpack.c.h.b16 %v795
  %v3223 = vunpack.c.l.b16 %v796
  %v3224 = vunpack.c.h.b16 %v796
  %v3225 = vunpack.c.l.b16 %v797
  %v3226 = vunpack.c.h.b16 %v797
  %v3227 = vunpack.c.l.b16 %v798
  %v3228 = vunpack.c.h.b16 %v798
  %v3229 = vunpack.c.l.b16 %v799
  %v3230 = vunpack.c.h.b16 %v799
  %v3231 = vunpack.c.l.b16 %v800
  %v3232 = vunpack.c.h.b16 %v800
  %v3233 = vunpack.c.l.b16 %v801
  %v3234 = vunpack.c.h.b16 %v801
  %v3235 = vunpack.c.l.b16 %v802
  %v3236 = vunpack.c.h.b16 %v802
  %v3237 = vunpack.c.l.b16 %v803
  %v3238 = vunpack.c.h.b16 %v803
  %v3239 = vunpack.c.l.b16 %v804
  %v3240 = vunpack.c.h.b16 %v804
  %v3241 = vunpack.c.l.b16 %v805
  %v3242 = vunpack.c.h.b16 %v805
  %v3243 = vunpack.c.l.b16 %v806
  %v3244 = vunpack.c.h.b16 %v806
  %v3245 = vunpack.c.l.b16 %v807
  %v3246 = vunpack.c.h.b16 %v807
  %v3247 = vunpack.c.l.b16 %v808
  %v3248 = vunpack.c.h.b16 %v808
  %v3249 = vunpack.c.l.b16 %v809
  %v3250 = vunpack.c.h.b16 %v809
  %v3251 = vunpack.c.l.b16 %v810
  %v3252 = vunpack.c.h.b16 %v810
  %v3253 = vunpack.c.l.b16 %v811
  %v3254 = vunpack.c.h.b16 %v811
  %v3255 = vunpack.c.l.b16 %v812
  %v3256 = vunpack.c.h.b16 %v812
  %v3257 = vunpack.c.l.b16 %v813
  %v3258 = vunpack.c.h.b16 %v813
  %v3259 = vunpack.c.l.b16 %v814
  %v3260 = vunpack.c.h.b16 %v814
  %v3261 = vunpack.c.l.b16 %v815
  %v3262 = vunpack.c.h.b16 %v815
  %v3263 = vunpack.c.l.b16 %v816
  %v3264 = vunpack.c.h.b16 %v816
  %v3265 = vunpack.c.l.b16 %v817
  %v3266 = vunpack.c.h.b16 %v817
  %v3267 = vpack.c.b16 %v1703, %v1699
  %v3268 = vpack.c.b16 %v1704, %v1700
  %v3269 = vpack.c.b16 %v1705, %v1701
  %v3270 = vpack.c.b16 %v1706, %v1702
  %v3271 = vpack.c.b16 %v1711, %v1707
  %v3272 = vpack.c.b16 %v1712, %v1708
  %v3273 = vpack.c.b16 %v1713, %v1709
  %v3274 = vpack.c.b16 %v1714, %v1710
  %v3275 = vpack.c.b16 %v1719, %v1715
  %v3276 = vpack.c.b16 %v1720, %v1716
  %v3277 = vpack.c.b16 %v1721, %v1717
  %v3278 = vpack.c.b16 %v1722, %v1718
  %v3279 = vpack.c.b16 %v1727, %v1723
  %v3280 = vpack.c.b16 %v1728, %v1724
  %v3281 = vpack.c.b16 %v1729, %v1725
  %v3282 = vpack.c.b16 %v1730, %v1726
  %v3283 = vpack.c.b16 %v1735, %v1731
  %v3284 = vpack.c.b16 %v1736, %v1732
  %v3285 = vpack.c.b16 %v1737, %v1733
  %v3286 = vpack.c.b16 %v1738, %v1734
  %v3287 = vpack.c.b16 %v1743, %v1739
  %v3288 = vpack.c.b16 %v1744, %v1740
  %v3289 = vpack.c.b16 %v1745, %v1741
  %v3290 = vpack.c.b16 %v1746, %v1742
  %v3291 = vpack.c.b16 %v1751, %v1747
  %v3292 = vpack.c.b16 %v1752, %v1748
  %v3293 = vpack.c.b16 %v1753, %v1749
  %v3294 = vpack.c.b16 %v1754, %v1750
  %v3295 = vpack.c.b16 %v1759, %v1755
  %v3296 = vpack.c.b16 %v1760, %v1756
  %v3297 = vpack.c.b16 %v1761, %v1757
  %v3298 = vpack.c.b16 %v1762, %v1758
  %v3299 = vpack.c.b16 %v1767, %v1763
  %v3300 = vpack.c.b16 %v1768, %v1764
  %v3301 = vpack.c.b16 %v1769, %v1765
  %v3302 = vpack.c.b16 %v1770, %v1766
  %v3303 = vpack.c.b16 %v1775, %v1771
  %v3304 = vpack.c.b16 %v1776, %v1772
  %v3305 = vpack.c.b16 %v1777, %v1773
  %v3306 = vpack.c.b16 %v1778, %v1774
  %v3307 = vpack.c.b16 %v1783, %v1779
  %v3308 = vpack.c.b16 %v1784, %v1780
  %v3309 = vpack.c.b16 %v1785, %v1781
  %v3310 = vpack.c.b16 %v1786, %v1782
  %v3311 = vpack.c.b16 %v1791, %v1787
  %v3312 = vpack.c.b16 %v1792, %v1788
  %v3313 = vpack.c.b16 %v1793, %v1789
  %v3314 = vpack.c.b16 %v1794, %v1790
  %v3315 = vpack.c.b16 %v1799, %v1795
  %v3316 = vpack.c.b16 %v1800, %v1796
  %v3317 = vpack.c.b16 %v1801, %v1797
  %v3318 = vpack.c.b16 %v1802, %v1798
  %v3319 = vpack.c.b16 %v1807, %v1803
  %v3320 = vpack.c.b16 %v1808, %v1804
  %v3321 = vpack.c.b16 %v1809, %v1805
  %v3322 = vpack.c.b16 %v1810, %v1806
  %v3323 = vpack.c.b16 %v1815, %v1811
  %v3324 = vpack.c.b16 %v1816, %v1812
  %v3325 = vpack.c.b16 %v1817, %v1813
  %v3326 = vpack.c.b16 %v1818, %v1814
  %v3327 = vpack.c.b16 %v1823, %v1819
  %v3328 = vpack.c.b16 %v1824, %v1820
  %v3329 = vpack.c.b16 %v1825, %v1821
  %v3330 = vpack.c.b16 %v1826, %v1822
  %v3331 = vpack.c.b16 %v1831, %v1827
  %v3332 = vpack.c.b16 %v1832, %v1828
  %v3333 = vpack.c.b16 %v1833, %v1829
  %v3334 = vpack.c.b16 %v1834, %v1830
  %v3335 = vpack.c.b16 %v1839, %v1835
  %v3336 = vpack.c.b16 %v1840, %v1836
  %v3337 = vpack.c.b16 %v1841, %v1837
  %v3338 = vpack.c.b16 %v1842, %v1838
  %v3339 = vpack.c.b16 %v1847, %v1843
  %v3340 = vpack.c.b16 %v1848, %v1844
  %v3341 = vpack.c.b16 %v1849, %v1845
  %v3342 = vpack.c.b16 %v1850, %v1846
  %v3343 = vpack.c.b16 %v1855, %v1851
  %v3344 = vpack.c.b16 %v1856, %v1852
  %v3345 = vpack.c.b16 %v1857, %v1853
  %v3346 = vpack.c.b16 %v1858, %v1854
  %v3347 = vpack.c.b16 %v1863, %v1859
  %v3348 = vpack.c.b16 %v1864, %v1860
  %v3349 = vpack.c.b16 %v1865, %v1861
  %v3350 = vpack.c.b16 %v1866, %v1862
  %v3351 = vpack.c.b16 %v1871, %v1867
  %v3352 = vpack.c.b16 %v1872, %v1868
  %v3353 = vpack.c.b16 %v1873, %v1869
  %v3354 = vpack.c.b16 %v1874, %v1870
  %v3355 = vpack.c.b16 %v1879, %v1875
  %v3356 = vpack.c.b16 %v1880, %v1876
  %v3357 = vpack.c.b16 %v1881, %v1877
  %v3358 = vpack.c.b16 %v1882, %v1878
  %v3359 = vpack.c.b16 %v1887, %v1883
  %v3360 = vpack.c.b16 %v1888, %v1884
  %v3361 = vpack.c.b16 %v1889, %v1885
  %v3362 = vpack.c.b16 %v1890, %v1886
  %v3363 = vpack.c.b16 %v1895, %v1891
  %v3364 = vpack.c.b16 %v1896, %v1892
  %v3365 = vpack.c.b16 %v1897, %v1893
  %v3366 = vpack.c.b16 %v1898, %v1894
  %v3367 = vpack.c.b16 %v1903, %v1899
  %v3368 = vpack.c.b16 %v1904, %v1900
  %v3369 = vpack.c.b16 %v1905, %v1901
  %v3370 = vpack.c.b16 %v1906, %v1902
  %v3371 = vpack.c.b16 %v1911, %v1907
  %v3372 = vpack.c.b16 %v1912, %v1908
  %v3373 = vpack.c.b16 %v1913, %v1909
  %v3374 = vpack.c.b16 %v1914, %v1910
  %v3375 = vpack.c.b16 %v1919, %v1915
  %v3376 = vpack.c.b16 %v1920, %v1916
  %v3377 = vpack.c.b16 %v1921, %v1917
  %v3378 = vpack.c.b16 %v1922, %v1918
  %v3379 = vpack.c.b16 %v1927, %v1923
  %v3380 = vpack.c.b16 %v1928, %v1924
  %v3381 = vpack.c.b16 %v1929, %v1925
  %v3382 = vpack.c.b16 %v1930, %v1926
  %v3383 = vpack.c.b16 %v1935, %v1931
  %v3384 = vpack.c.b16 %v1936, %v1932
  %v3385 = vpack.c.b16 %v1937, %v1933
  %v3386 = vpack.c.b16 %v1938, %v1934
  %v3387 = vpack.c.b16 %v1943, %v1939
  %v3388 = vpack.c.b16 %v1944, %v1940
  %v3389 = vpack.c.b16 %v1945, %v1941
  %v3390 = vpack.c.b16 %v1946, %v1942
  %v3391 = vpack.c.b16 %v1951, %v1947
  %v3392 = vpack.c.b16 %v1952, %v1948
  %v3393 = vpack.c.b16 %v1953, %v1949
  %v3394 = vpack.c.b16 %v1954, %v1950
  %v3395 = vpack.c.b16 %v1959, %v1955
  %v3396 = vpack.c.b16 %v1960, %v1956
  %v3397 = vpack.c.b16 %v1961, %v1957
  %v3398 = vpack.c.b16 %v1962, %v1958
  %v3399 = vpack.c.b16 %v1967, %v1963
  %v3400 = vpack.c.b16 %v1968, %v1964
  %v3401 = vpack.c.b16 %v1969, %v1965
  %v3402 = vpack.c.b16 %v1970, %v1966
  %v3403 = vpack.c.b16 %v1975, %v1971
  %v3404 = vpack.c.b16 %v1976, %v1972
  %v3405 = vpack.c.b16 %v1977, %v1973
  %v3406 = vpack.c.b16 %v1978, %v1974
  %v3407 = vpack.c.b16 %v1983, %v1979
  %v3408 = vpack.c.b16 %v1984, %v1980
  %v3409 = vpack.c.b16 %v1985, %v1981
  %v3410 = vpack.c.b16 %v1986, %v1982
  %v3411 = vpack.c.b16 %v1991, %v1987
  %v3412 = vpack.c.b16 %v1992, %v1988
  %v3413 = vpack.c.b16 %v1993, %v1989
  %v3414 = vpack.c.b16 %v1994, %v1990
  %v3415 = vpack.c.b16 %v1999, %v1995
  %v3416 = vpack.c.b16 %v2000, %v1996
  %v3417 = vpack.c.b16 %v2001, %v1997
  %v3418 = vpack.c.b16 %v2002, %v1998
  %v3419 = vpack.c.b16 %v2007, %v2003
  %v3420 = vpack.c.b16 %v2008, %v2004
  %v3421 = vpack.c.b16 %v2009, %v2005
  %v3422 = vpack.c.b16 %v2010, %v2006
  %v3423 = vpack.c.b16 %v2015, %v2011
  %v3424 = vpack.c.b16 %v2016, %v2012
  %v3425 = vpack.c.b16 %v2017, %v2013
  %v3426 = vpack.c.b16 %v2018, %v2014
  %v3427 = vpack.c.b16 %v2023, %v2019
  %v3428 = vpack.c.b16 %v2024, %v2020
  %v3429 = vpack.c.b16 %v2025, %v2021
  %v3430 = vpack.c.b16 %v2026, %v2022
  %v3431 = vpack.c.b16 %v2031, %v2027
  %v3432 = vpack.c.b16 %v2032, %v2028
  %v3433 = vpack.c.b16 %v2033, %v2029
  %v3434 = vpack.c.b16 %v2034, %v2030
  %v3435 = vpack.c.b16 %v2039, %v2035
  %v3436 = vpack.c.b16 %v2040, %v2036
  %v3437 = vpack.c.b16 %v2041, %v2037
  %v3438 = vpack.c.b16 %v2042, %v2038
  %v3439 = vpack.c.b16 %v2047, %v2043
  %v3440 = vpack.c.b16 %v2048, %v2044
  %v3441 = vpack.c.b16 %v2049, %v2045
  %v3442 = vpack.c.b16 %v2050, %v2046
  %v3443 = vpack.c.b16 %v2055, %v2051
  %v3444 = vpack.c.b16 %v2056, %v2052
  %v3445 = vpack.c.b16 %v2057, %v2053
  %v3446 = vpack.c.b16 %v2058, %v2054
  %v3447 = vpack.c.b16 %v2063, %v2059
  %v3448 = vpack.c.b16 %v2064, %v2060
  %v3449 = vpack.c.b16 %v2065, %v2061
  %v3450 = vpack.c.b16 %v2066, %v2062
  %v3451 = vpack.c.b16 %v2071, %v2067
  %v3452 = vpack.c.b16 %v2072, %v2068
  %v3453 = vpack.c.b16 %v2073, %v2069
  %v3454 = vpack.c.b16 %v2074, %v2070
  %v3455 = vpack.c.b16 %v2079, %v2075
  %v3456 = vpack.c.b16 %v2080, %v2076
  %v3457 = vpack.c.b16 %v2081, %v2077
  %v3458 = vpack.c.b16 %v2082, %v2078
  %v3459 = vpack.c.b16 %v2087, %v2083
  %v3460 = vpack.c.b16 %v2088, %v2084
  %v3461 = vpack.c.b16 %v2089, %v2085
  %v3462 = vpack.c.b16 %v2090, %v2086
  %v3463 = vpack.c.b16 %v2095, %v2091
  %v3464 = vpack.c.b16 %v2096, %v2092
  %v3465 = vpack.c.b16 %v2097, %v2093
  %v3466 = vpack.c.b16 %v2098, %v2094
  %v3467 = vpack.c.b16 %v2103, %v2099
  %v3468 = vpack.c.b16 %v2104, %v2100
  %v3469 = vpack.c.b16 %v2105, %v2101
  %v3470 = vpack.c.b16 %v2106, %v2102
  %v3471 = vpack.c.b16 %v2111, %v2107
  %v3472 = vpack.c.b16 %v2112, %v2108
  %v3473 = vpack.c.b16 %v2113, %v2109
  %v3474 = vpack.c.b16 %v2114, %v2110
  %v3475 = vpack.c.b16 %v2119, %v2115
  %v3476 = vpack.c.b16 %v2120, %v2116
  %v3477 = vpack.c.b16 %v2121, %v2117
  %v3478 = vpack.c.b16 %v2122, %v2118
  %v3479 = vpack.c.b16 %v2127, %v2123
  %v3480 = vpack.c.b16 %v2128, %v2124
  %v3481 = vpack.c.b16 %v2129, %v2125
  %v3482 = vpack.c.b16 %v2130, %v2126
  %v3483 = vpack.c.b16 %v2135, %v2131
  %v3484 = vpack.c.b16 %v2136, %v2132
  %v3485 = vpack.c.b16 %v2137, %v2133
  %v3486 = vpack.c.b16 %v2138, %v2134
  %v3487 = vpack.c.b16 %v2143, %v2139
  %v3488 = vpack.c.b16 %v2144, %v2140
  %v3489 = vpack.c.b16 %v2145, %v2141
  %v3490 = vpack.c.b16 %v2146, %v2142
  %v3491 = vpack.c.b16 %v2151, %v2147
  %v3492 = vpack.c.b16 %v2152, %v2148
  %v3493 = vpack.c.b16 %v2153, %v2149
  %v3494 = vpack.c.b16 %v2154, %v2150
  %v3495 = vpack.c.b16 %v2159, %v2155
  %v3496 = vpack.c.b16 %v2160, %v2156
  %v3497 = vpack.c.b16 %v2161, %v2157
  %v3498 = vpack.c.b16 %v2162, %v2158
  %v3499 = vpack.c.b16 %v2167, %v2163
  %v3500 = vpack.c.b16 %v2168, %v2164
  %v3501 = vpack.c.b16 %v2169, %v2165
  %v3502 = vpack.c.b16 %v2170, %v2166
  %v3503 = vpack.c.b16 %v2175, %v2171
  %v3504 = vpack.c.b16 %v2176, %v2172
  %v3505 = vpack.c.b16 %v2177, %v2173
  %v3506 = vpack.c.b16 %v2178, %v2174
  %v3507 = vpack.c.b16 %v2183, %v2179
  %v3508 = vpack.c.b16 %v2184, %v2180
  %v3509 = vpack.c.b16 %v2185, %v2181
  %v3510 = vpack.c.b16 %v2186, %v2182
  %v3511 = vpack.c.b16 %v2191, %v2187
  %v3512 = vpack.c.b16 %v2192, %v2188
  %v3513 = vpack.c.b16 %v2193, %v2189
  %v3514 = vpack.c.b16 %v2194, %v2190
  %v3515 = vpack.c.b16 %v2199, %v2195
  %v3516 = vpack.c.b16 %v2200, %v2196
  %v3517 = vpack.c.b16 %v2201, %v2197
  %v3518 = vpack.c.b16 %v2202, %v2198
  %v3519 = vpack.c.b16 %v2207, %v2203
  %v3520 = vpack.c.b16 %v2208, %v2204
  %v3521 = vpack.c.b16 %v2209, %v2205
  %v3522 = vpack.c.b16 %v2210, %v2206
  %v3523 = vpack.c.b16 %v2215, %v2211
  %v3524 = vpack.c.b16 %v2216, %v2212
  %v3525 = vpack.c.b16 %v2217, %v2213
  %v3526 = vpack.c.b16 %v2218, %v2214
  %v3527 = vpack.c.b16 %v2223, %v2219
  %v3528 = vpack.c.b16 %v2224, %v2220
  %v3529 = vpack.c.b16 %v2225, %v2221
  %v3530 = vpack.c.b16 %v2226, %v2222
  %v3531 = vpack.c.b16 %v2231, %v2227
  %v3532 = vpack.c.b16 %v2232, %v2228
  %v3533 = vpack.c.b16 %v2233, %v2229
  %v3534 = vpack.c.b16 %v2234, %v2230
  %v3535 = vpack.c.b16 %v2239, %v2235
  %v3536 = vpack.c.b16 %v2240, %v2236
  %v3537 = vpack.c.b16 %v2241, %v2237
  %v3538 = vpack.c.b16 %v2242, %v2238
  %v3539 = vpack.c.b16 %v2247, %v2243
  %v3540 = vpack.c.b16 %v2248, %v2244
  %v3541 = vpack.c.b16 %v2249, %v2245
  %v3542 = vpack.c.b16 %v2250, %v2246
  %v3543 = vpack.c.b16 %v2255, %v2251
  %v3544 = vpack.c.b16 %v2256, %v2252
  %v3545 = vpack.c.b16 %v2257, %v2253
  %v3546 = vpack.c.b16 %v2258, %v2254
  %v3547 = vpack.c.b16 %v2263, %v2259
  %v3548 = vpack.c.b16 %v2264, %v2260
  %v3549 = vpack.c.b16 %v2265, %v2261
  %v3550 = vpack.c.b16 %v2266, %v2262
  %v3551 = vpack.c.b16 %v2271, %v2267
  %v3552 = vpack.c.b16 %v2272, %v2268
  %v3553 = vpack.c.b16 %v2273, %v2269
  %v3554 = vpack.c.b16 %v2274, %v2270
  %v3555 = vpack.c.b16 %v2279, %v2275
  %v3556 = vpack.c.b16 %v2280, %v2276
  %v3557 = vpack.c.b16 %v2281, %v2277
  %v3558 = vpack.c.b16 %v2282, %v2278
  %v3559 = vpack.c.b16 %v2287, %v2283
  %v3560 = vpack.c.b16 %v2288, %v2284
  %v3561 = vpack.c.b16 %v2289, %v2285
  %v3562 = vpack.c.b16 %v2290, %v2286
  %v3563 = vpack.c.b16 %v2295, %v2291
  %v3564 = vpack.c.b16 %v2296, %v2292
  %v3565 = vpack.c.b16 %v2297, %v2293
  %v3566 = vpack.c.b16 %v2298, %v2294
  %v3567 = vpack.c.b16 %v2303, %v2299
  %v3568 = vpack.c.b16 %v2304, %v2300
  %v3569 = vpack.c.b16 %v2305, %v2301
  %v3570 = vpack.c.b16 %v2306, %v2302
  %v3571 = vpack.c.b16 %v2311, %v2307
  %v3572 = vpack.c.b16 %v2312, %v2308
  %v3573 = vpack.c.b16 %v2313, %v2309
  %v3574 = vpack.c.b16 %v2314, %v2310
  %v3575 = vpack.c.b16 %v2319, %v2315
  %v3576 = vpack.c.b16 %v2320, %v2316
  %v3577 = vpack.c.b16 %v2321, %v2317
  %v3578 = vpack.c.b16 %v2322, %v2318
  %v3579 = vpack.c.b16 %v2327, %v2323
  %v3580 = vpack.c.b16 %v2328, %v2324
  %v3581 = vpack.c.b16 %v2329, %v2325
  %v3582 = vpack.c.b16 %v2330, %v2326
  %v3583 = vpack.c.b16 %v2335, %v2331
  %v3584 = vpack.c.b16 %v2336, %v2332
  %v3585 = vpack.c.b16 %v2337, %v2333
  %v3586 = vpack.c.b16 %v2338, %v2334
  %v3587 = vpack.c.b16 %v2343, %v2339
  %v3588 = vpack.c.b16 %v2344, %v2340
  %v3589 = vpack.c.b16 %v2345, %v2341
  %v3590 = vpack.c.b16 %v2346, %v2342
  %v3591 = vpack.c.b16 %v2351, %v2347
  %v3592 = vpack.c.b16 %v2352, %v2348
  %v3593 = vpack.c.b16 %v2353, %v2349
  %v3594 = vpack.c.b16 %v2354, %v2350
  %v3595 = vpack.c.b16 %v2359, %v2355
  %v3596 = vpack.c.b16 %v2360, %v2356
  %v3597 = vpack.c.b16 %v2361, %v2357
  %v3598 = vpack.c.b16 %v2362, %v2358
  %v3599 = vpack.c.b16 %v2367, %v2363
  %v3600 = vpack.c.b16 %v2368, %v2364
  %v3601 = vpack.c.b16 %v2369, %v2365
  %v3602 = vpack.c.b16 %v2370, %v2366
  %v3603 = vpack.c.b16 %v2375, %v2371
  %v3604 = vpack.c.b16 %v2376, %v2372
  %v3605 = vpack.c.b16 %v2377, %v2373
  %v3606 = vpack.c.b16 %v2378, %v2374
  %v3607 = vpack.c.b16 %v2383, %v2379
  %v3608 = vpack.c.b16 %v2384, %v2380
  %v3609 = vpack.c.b16 %v2385, %v2381
  %v3610 = vpack.c.b16 %v2386, %v2382
  %v3611 = vpack.c.b16 %v2391, %v2387
  %v3612 = vpack.c.b16 %v2392, %v2388
  %v3613 = vpack.c.b16 %v2393, %v2389
  %v3614 = vpack.c.b16 %v2394, %v2390
  %v3615 = vpack.c.b16 %v2399, %v2395
  %v3616 = vpack.c.b16 %v2400, %v2396
  %v3617 = vpack.c.b16 %v2401, %v2397
  %v3618 = vpack.c.b16 %v2402, %v2398
  %v3619 = vpack.c.b16 %v2407, %v2403
  %v3620 = vpack.c.b16 %v2408, %v2404
  %v3621 = vpack.c.b16 %v2409, %v2405
  %v3622 = vpack.c.b16 %v2410, %v2406
  %v3623 = vpack.c.b16 %v2415, %v2411
  %v3624 = vpack.c.b16 %v2416, %v2412
  %v3625 = vpack.c.b16 %v2417, %v2413
  %v3626 = vpack.c.b16 %v2418, %v2414
  %v3627 = vpack.c.b16 %v2423, %v2419
  %v3628 = vpack.c.b16 %v2424, %v2420
  %v3629 = vpack.c.b16 %v2425, %v2421
  %v3630 = vpack.c.b16 %v2426, %v2422
  %v3631 = vpack.c.b16 %v2431, %v2427
  %v3632 = vpack.c.b16 %v2432, %v2428
  %v3633 = vpack.c.b16 %v2433, %v2429
  %v3634 = vpack.c.b16 %v2434, %v2430
  %v3635 = vpack.c.b16 %v2439, %v2435
  %v3636 = vpack.c.b16 %v2440, %v2436
  %v3637 = vpack.c.b16 %v2441, %v2437
  %v3638 = vpack.c.b16 %v2442, %v2438
  %v3639 = vpack.c.b16 %v2447, %v2443
  %v3640 = vpack.c.b16 %v2448, %v2444
  %v3641 = vpack.c.b16 %v2449, %v2445
  %v3642 = vpack.c.b16 %v2450, %v2446
  %v3643 = vpack.c.b16 %v2455, %v2451
  %v3644 = vpack.c.b16 %v2456, %v2452
  %v3645 = vpack.c.b16 %v2457, %v2453
  %v3646 = vpack.c.b16 %v2458, %v2454
  %v3647 = vpack.c.b16 %v2463, %v2459
  %v3648 = vpack.c.b16 %v2464, %v2460
  %v3649 = vpack.c.b16 %v2465, %v2461
  %v3650 = vpack.c.b16 %v2466, %v2462
  %v3651 = vpack.c.b16 %v2471, %v2467
  %v3652 = vpack.c.b16 %v2472, %v2468
  %v3653 = vpack.c.b16 %v2473, %v2469
  %v3654 = vpack.c.b16 %v2474, %v2470
  %v3655 = vpack.c.b16 %v2479, %v2475
  %v3656 = vpack.c.b16 %v2480, %v2476
  %v3657 = vpack.c.b16 %v2481, %v2477
  %v3658 = vpack.c.b16 %v2482, %v2478
  %v3659 = vpack.c.b16 %v2487, %v2483
  %v3660 = vpack.c.b16 %v2488, %v2484
  %v3661 = vpack.c.b16 %v2489, %v2485
  %v3662 = vpack.c.b16 %v2490, %v2486
  %v3663 = vpack.c.b16 %v2495, %v2491
  %v3664 = vpack.c.b16 %v2496, %v2492
  %v3665 = vpack.c.b16 %v2497, %v2493
  %v3666 = vpack.c.b16 %v2498, %v2494
  %v3667 = vpack.c.b16 %v2503, %v2499
  %v3668 = vpack.c.b16 %v2504, %v2500
  %v3669 = vpack.c.b16 %v2505, %v2501
  %v3670 = vpack.c.b16 %v2506, %v2502
  %v3671 = vpack.c.b16 %v2511, %v2507
  %v3672 = vpack.c.b16 %v2512, %v2508
  %v3673 = vpack.c.b16 %v2513, %v2509
  %v3674 = vpack.c.b16 %v2514, %v2510
  %v3675 = vpack.c.b16 %v2519, %v2515
  %v3676 = vpack.c.b16 %v2520, %v2516
  %v3677 = vpack.c.b16 %v2521, %v2517
  %v3678 = vpack.c.b16 %v2522, %v2518
  %v3679 = vpack.c.b16 %v2527, %v2523
  %v3680 = vpack.c.b16 %v2528, %v2524
  %v3681 = vpack.c.b16 %v2529, %v2525
  %v3682 = vpack.c.b16 %v2530, %v2526
  %v3683 = vpack.c.b16 %v2535, %v2531
  %v3684 = vpack.c.b16 %v2536, %v2532
  %v3685 = vpack.c.b16 %v2537, %v2533
  %v3686 = vpack.c.b16 %v2538, %v2534
  %v3687 = vpack.c.b16 %v2543, %v2539
  %v3688 = vpack.c.b16 %v2544, %v2540
  %v3689 = vpack.c.b16 %v2545, %v2541
  %v3690 = vpack.c.b16 %v2546, %v2542
  %v3691 = vpack.c.b16 %v2551, %v2547
  %v3692 = vpack.c.b16 %v2552, %v2548
  %v3693 = vpack.c.b16 %v2553, %v2549
  %v3694 = vpack.c.b16 %v2554, %v2550
  %v3695 = vpack.c.b16 %v2559, %v2555
  %v3696 = vpack.c.b16 %v2560, %v2556
  %v3697 = vpack.c.b16 %v2561, %v2557
  %v3698 = vpack.c.b16 %v2562, %v2558
  %v3699 = vpack.c.b16 %v2567, %v2563
  %v3700 = vpack.c.b16 %v2568, %v2564
  %v3701 = vpack.c.b16 %v2569, %v2565
  %v3702 = vpack.c.b16 %v2570, %v2566
  %v3703 = vpack.c.b16 %v2575, %v2571
  %v3704 = vpack.c.b16 %v2576, %v2572
  %v3705 = vpack.c.b16 %v2577, %v2573
  %v3706 = vpack.c.b16 %v2578, %v2574
  %v3707 = vpack.c.b16 %v2583, %v2579
  %v3708 = vpack.c.b16 %v2584, %v2580
  %v3709 = vpack.c.b16 %v2585, %v2581
  %v3710 = vpack.c.b16 %v2586, %v2582
  %v3711 = vpack.c.b16 %v2591, %v2587
  %v3712 = vpack.c.b16 %v2592, %v2588
  %v3713 = vpack.c.b16 %v2593, %v2589
  %v3714 = vpack.c.b16 %v2594, %v2590
  %v3715 = vpack.c.b16 %v2599, %v2595
  %v3716 = vpack.c.b16 %v2600, %v2596
  %v3717 = vpack.c.b16 %v2601, %v2597
  %v3718 = vpack.c.b16 %v2602, %v2598
  %v3719 = vpack.c.b16 %v2607, %v2603
  %v3720 = vpack.c.b16 %v2608, %v2604
  %v3721 = vpack.c.b16 %v2609, %v2605
  %v3722 = vpack.c.b16 %v2610, %v2606
  %v3723 = vpack.c.b16 %v2615, %v2611
  %v3724 = vpack.c.b16 %v2616, %v2612
  %v3725 = vpack.c.b16 %v2617, %v2613
  %v3726 = vpack.c.b16 %v2618, %v2614
  %v3727 = vpack.c.b16 %v2623, %v2619
  %v3728 = vpack.c.b16 %v2624, %v2620
  %v3729 = vpack.c.b16 %v2625, %v2621
  %v3730 = vpack.c.b16 %v2626, %v2622
  %v3731 = vpack.c.b16 %v2631, %v2627
  %v3732 = vpack.c.b16 %v2632, %v2628
  %v3733 = vpack.c.b16 %v2633, %v2629
  %v3734 = vpack.c.b16 %v2634, %v2630
  %v3735 = vpack.c.b16 %v2639, %v2635
  %v3736 = vpack.c.b16 %v2640, %v2636
  %v3737 = vpack.c.b16 %v2641, %v2637
  %v3738 = vpack.c.b16 %v2642, %v2638
  %v3739 = vpack.c.b16 %v2647, %v2643
  %v3740 = vpack.c.b16 %v2648, %v2644
  %v3741 = vpack.c.b16 %v2649, %v2645
  %v3742 = vpack.c.b16 %v2650, %v2646
  %v3743 = vpack.c.b16 %v2655, %v2651
  %v3744 = vpack.c.b16 %v2656, %v2652
  %v3745 = vpack.c.b16 %v2657, %v2653
  %v3746 = vpack.c.b16 %v2658, %v2654
  %v3747 = vpack.c.b16 %v2663, %v2659
  %v3748 = vpack.c.b16 %v2664, %v2660
  %v3749 = vpack.c.b16 %v2665, %v2661
  %v3750 = vpack.c.b16 %v2666, %v2662
  %v3751 = vpack.c.b16 %v2671, %v2667
  %v3752 = vpack.c.b16 %v2672, %v2668
  %v3753 = vpack.c.b16 %v2673, %v2669
  %v3754 = vpack.c.b16 %v2674, %v2670
  %v3755 = vpack.c.b16 %v2679, %v2675
  %v3756 = vpack.c.b16 %v2680, %v2676
  %v3757 = vpack.c.b16 %v2681, %v2677
  %v3758 = vpack.c.b16 %v2682, %v2678
  %v3759 = vpack.c.b16 %v2687, %v2683
  %v3760 = vpack.c.b16 %v2688, %v2684
  %v3761 = vpack.c.b16 %v2689, %v2685
  %v3762 = vpack.c.b16 %v2690, %v2686
  %v3763 = vpack.c.b16 %v2695, %v2691
  %v3764 = vpack.c.b16 %v2696, %v2692
  %v3765 = vpack.c.b16 %v2697, %v2693
  %v3766 = vpack.c.b16 %v2698, %v2694
  %v3767 = vpack.c.b16 %v2703, %v2699
  %v3768 = vpack.c.b16 %v2704, %v2700
  %v3769 = vpack.c.b16 %v2705, %v2701
  %v3770 = vpack.c.b16 %v2706, %v2702
  %v3771 = vpack.c.b16 %v2711, %v2707
  %v3772 = vpack.c.b16 %v2712, %v2708
  %v3773 = vpack.c.b16 %v2713, %v2709
  %v3774 = vpack.c.b16 %v2714, %v2710
  %v3775 = vpack.c.b16 %v2719, %v2715
  %v3776 = vpack.c.b16 %v2720, %v2716
  %v3777 = vpack.c.b16 %v2721, %v2717
  %v3778 = vpack.c.b16 %v2722, %v2718
  %v3779 = vpack.c.b16 %v2727, %v2723
  %v3780 = vpack.c.b16 %v2728, %v2724
  %v3781 = vpack.c.b16 %v2729, %v2725
  %v3782 = vpack.c.b16 %v2730, %v2726
  %v3783 = vpack.c.b16 %v2735, %v2731
  %v3784 = vpack.c.b16 %v2736, %v2732
  %v3785 = vpack.c.b16 %v2737, %v2733
  %v3786 = vpack.c.b16 %v2738, %v2734
  %v3787 = vpack.c.b16 %v2743, %v2739
  %v3788 = vpack.c.b16 %v2744, %v2740
  %v3789 = vpack.c.b16 %v2745, %v2741
  %v3790 = vpack.c.b16 %v2746, %v2742
  %v3791 = vpack.c.b16 %v2751, %v2747
  %v3792 = vpack.c.b16 %v2752, %v2748
  %v3793 = vpack.c.b16 %v2753, %v2749
  %v3794 = vpack.c.b16 %v2754, %v2750
  %v3795 = vpack.c.b16 %v2759, %v2755
  %v3796 = vpack.c.b16 %v2760, %v2756
  %v3797 = vpack.c.b16 %v2761, %v2757
  %v3798 = vpack.c.b16 %v2762, %v2758
  %v3799 = vpack.c.b16 %v2767, %v2763
  %v3800 = vpack.c.b16 %v2768, %v2764
  %v3801 = vpack.c.b16 %v2769, %v2765
  %v3802 = vpack.c.b16 %v2770, %v2766
  %v3803 = vpack.c.b16 %v2775, %v2771
  %v3804 = vpack.c.b16 %v2776, %v2772
  %v3805 = vpack.c.b16 %v2777, %v2773
  %v3806 = vpack.c.b16 %v2778, %v2774
  %v3807 = vpack.c.b16 %v2783, %v2779
  %v3808 = vpack.c.b16 %v2784, %v2780
  %v3809 = vpack.c.b16 %v2785, %v2781
  %v3810 = vpack.c.b16 %v2786, %v2782
  %v3811 = vpack.c.b16 %v2791, %v2787
  %v3812 = vpack.c.b16 %v2792, %v2788
  %v3813 = vpack.c.b16 %v2793, %v2789
  %v3814 = vpack.c.b16 %v2794, %v2790
  %v3815 = vpack.c.b16 %v2799, %v2795
  %v3816 = vpack.c.b16 %v2800, %v2796
  %v3817 = vpack.c.b16 %v2801, %v2797
  %v3818 = vpack.c.b16 %v2802, %v2798
  %v3819 = vpack.c.b16 %v2807, %v2803
  %v3820 = vpack.c.b16 %v2808, %v2804
  %v3821 = vpack.c.b16 %v2809, %v2805
  %v3822 = vpack.c.b16 %v2810, %v2806
  %v3823 = vpack.c.b16 %v2815, %v2811
  %v3824 = vpack.c.b16 %v2816, %v2812
  %v3825 = vpack.c.b16 %v2817, %v2813
  %v3826 = vpack.c.b16 %v2818, %v2814
  %v3827 = vpack.c.b16 %v2823, %v2819
  %v3828 = vpack.c.b16 %v2824, %v2820
  %v3829 = vpack.c.b16 %v2825, %v2821
  %v3830 = vpack.c.b16 %v2826, %v2822
  %v3831 = vpack.c.b16 %v2831, %v2827
  %v3832 = vpack.c.b16 %v2832, %v2828
  %v3833 = vpack.c.b16 %v2833, %v2829
  %v3834 = vpack.c.b16 %v2834, %v2830
  %v3835 = vpack.c.b16 %v2839, %v2835
  %v3836 = vpack.c.b16 %v2840, %v2836
  %v3837 = vpack.c.b16 %v2841, %v2837
  %v3838 = vpack.c.b16 %v2842, %v2838
  %v3839 = vpack.c.b16 %v2847, %v2843
  %v3840 = vpack.c.b16 %v2848, %v2844
  %v3841 = vpack.c.b16 %v2849, %v2845
  %v3842 = vpack.c.b16 %v2850, %v2846
  %v3843 = vpack.c.b16 %v2855, %v2851
  %v3844 = vpack.c.b16 %v2856, %v2852
  %v3845 = vpack.c.b16 %v2857, %v2853
  %v3846 = vpack.c.b16 %v2858, %v2854
  %v3847 = vpack.c.b16 %v2863, %v2859
  %v3848 = vpack.c.b16 %v2864, %v2860
  %v3849 = vpack.c.b16 %v2865, %v2861
  %v3850 = vpack.c.b16 %v2866, %v2862
  %v3851 = vpack.c.b16 %v2871, %v2867
  %v3852 = vpack.c.b16 %v2872, %v2868
  %v3853 = vpack.c.b16 %v2873, %v2869
  %v3854 = vpack.c.b16 %v2874, %v2870
  %v3855 = vpack.c.b16 %v2879, %v2875
  %v3856 = vpack.c.b16 %v2880, %v2876
  %v3857 = vpack.c.b16 %v2881, %v2877
  %v3858 = vpack.c.b16 %v2882, %v2878
  %v3859 = vpack.c.b16 %v2887, %v2883
  %v3860 = vpack.c.b16 %v2888, %v2884
  %v3861 = vpack.c.b16 %v2889, %v2885
  %v3862 = vpack.c.b16 %v2890, %v2886
  %v3863 = vpack.c.b16 %v2895, %v2891
  %v3864 = vpack.c.b16 %v2896, %v2892
  %v3865 = vpack.c.b16 %v2897, %v2893
  %v3866 = vpack.c.b16 %v2898, %v2894
  %v3867 = vpack.c.b16 %v2903, %v2899
  %v3868 = vpack.c.b16 %v2904, %v2900
  %v3869 = vpack.c.b16 %v2905, %v2901
  %v3870 = vpack.c.b16 %v2906, %v2902
  %v3871 = vpack.c.b16 %v2911, %v2907
  %v3872 = vpack.c.b16 %v2912, %v2908
  %v3873 = vpack.c.b16 %v2913, %v2909
  %v3874 = vpack.c.b16 %v2914, %v2910
  %v3875 = vpack.c.b16 %v2919, %v2915
  %v3876 = vpack.c.b16 %v2920, %v2916
  %v3877 = vpack.c.b16 %v2921, %v2917
  %v3878 = vpack.c.b16 %v2922, %v2918
  %v3879 = vpack.c.b16 %v2927, %v2923
  %v3880 = vpack.c.b16 %v2928, %v2924
  %v3881 = vpack.c.b16 %v2929, %v2925
  %v3882 = vpack.c.b16 %v2930, %v2926
  %v3883 = vpack.c.b16 %v2935, %v2931
  %v3884 = vpack.c.b16 %v2936, %v2932
  %v3885 = vpack.c.b16 %v2937, %v2933
  %v3886 = vpack.c.b16 %v2938, %v2934
  %v3887 = vpack.c.b16 %v2943, %v2939
  %v3888 = vpack.c.b16 %v2944, %v2940
  %v3889 = vpack.c.b16 %v2945, %v2941
  %v3890 = vpack.c.b16 %v2946, %v2942
  %v3891 = vpack.c.b16 %v2951, %v2947
  %v3892 = vpack.c.b16 %v2952, %v2948
  %v3893 = vpack.c.b16 %v2953, %v2949
  %v3894 = vpack.c.b16 %v2954, %v2950
  %v3895 = vpack.c.b16 %v2959, %v2955
  %v3896 = vpack.c.b16 %v2960, %v2956
  %v3897 = vpack.c.b16 %v2961, %v2957
  %v3898 = vpack.c.b16 %v2962, %v2958
  %v3899 = vpack.c.b16 %v2967, %v2963
  %v3900 = vpack.c.b16 %v2968, %v2964
  %v3901 = vpack.c.b16 %v2969, %v2965
  %v3902 = vpack.c.b16 %v2970, %v2966
  %v3903 = vpack.c.b16 %v2975, %v2971
  %v3904 = vpack.c.b16 %v2976, %v2972
  %v3905 = vpack.c.b16 %v2977, %v2973
  %v3906 = vpack.c.b16 %v2978, %v2974
  %v3907 = vpack.c.b16 %v2983, %v2979
  %v3908 = vpack.c.b16 %v2984, %v2980
  %v3909 = vpack.c.b16 %v2985, %v2981
  %v3910 = vpack.c.b16 %v2986, %v2982
  %v3911 = vpack.c.b16 %v2991, %v2987
  %v3912 = vpack.c.b16 %v2992, %v2988
  %v3913 = vpack.c.b16 %v2993, %v2989
  %v3914 = vpack.c.b16 %v2994, %v2990
  %v3915 = vpack.c.b16 %v2999, %v2995
  %v3916 = vpack.c.b16 %v3000, %v2996
  %v3917 = vpack.c.b16 %v3001, %v2997
  %v3918 = vpack.c.b16 %v3002, %v2998
  %v3919 = vpack.c.b16 %v3007, %v3003
  %v3920 = vpack.c.b16 %v3008, %v3004
  %v3921 = vpack.c.b16 %v3009, %v3005
  %v3922 = vpack.c.b16 %v3010, %v3006
  %v3923 = vpack.c.b16 %v3015, %v3011
  %v3924 = vpack.c.b16 %v3016, %v3012
  %v3925 = vpack.c.b16 %v3017, %v3013
  %v3926 = vpack.c.b16 %v3018, %v3014
  %v3927 = vpack.c.b16 %v3023, %v3019
  %v3928 = vpack.c.b16 %v3024, %v3020
  %v3929 = vpack.c.b16 %v3025, %v3021
  %v3930 = vpack.c.b16 %v3026, %v3022
  %v3931 = vpack.c.b16 %v3031, %v3027
  %v3932 = vpack.c.b16 %v3032, %v3028
  %v3933 = vpack.c.b16 %v3033, %v3029
  %v3934 = vpack.c.b16 %v3034, %v3030
  %v3935 = vpack.c.b16 %v3039, %v3035
  %v3936 = vpack.c.b16 %v3040, %v3036
  %v3937 = vpack.c.b16 %v3041, %v3037
  %v3938 = vpack.c.b16 %v3042, %v3038
  %v3939 = vpack.c.b16 %v3047, %v3043
  %v3940 = vpack.c.b16 %v3048, %v3044
  %v3941 = vpack.c.b16 %v3049, %v3045
  %v3942 = vpack.c.b16 %v3050, %v3046
  %v3943 = vpack.c.b16 %v3055, %v3051
  %v3944 = vpack.c.b16 %v3056, %v3052
  %v3945 = vpack.c.b16 %v3057, %v3053
  %v3946 = vpack.c.b16 %v3058, %v3054
  %v3947 = vpack.c.b16 %v3063, %v3059
  %v3948 = vpack.c.b16 %v3064, %v3060
  %v3949 = vpack.c.b16 %v3065, %v3061
  %v3950 = vpack.c.b16 %v3066, %v3062
  %v3951 = vpack.c.b16 %v3071, %v3067
  %v3952 = vpack.c.b16 %v3072, %v3068
  %v3953 = vpack.c.b16 %v3073, %v3069
  %v3954 = vpack.c.b16 %v3074, %v3070
  %v3955 = vpack.c.b16 %v3079, %v3075
  %v3956 = vpack.c.b16 %v3080, %v3076
  %v3957 = vpack.c.b16 %v3081, %v3077
  %v3958 = vpack.c.b16 %v3082, %v3078
  %v3959 = vpack.c.b16 %v3087, %v3083
  %v3960 = vpack.c.b16 %v3088, %v3084
  %v3961 = vpack.c.b16 %v3089, %v3085
  %v3962 = vpack.c.b16 %v3090, %v3086
  %v3963 = vpack.c.b16 %v3095, %v3091
  %v3964 = vpack.c.b16 %v3096, %v3092
  %v3965 = vpack.c.b16 %v3097, %v3093
  %v3966 = vpack.c.b16 %v3098, %v3094
  %v3967 = vpack.c.b16 %v3103, %v3099
  %v3968 = vpack.c.b16 %v3104, %v3100
  %v3969 = vpack.c.b16 %v3105, %v3101
  %v3970 = vpack.c.b16 %v3106, %v3102
  %v3971 = vpack.c.b16 %v3111, %v3107
  %v3972 = vpack.c.b16 %v3112, %v3108
  %v3973 = vpack.c.b16 %v3113, %v3109
  %v3974 = vpack.c.b16 %v3114, %v3110
  %v3975 = vpack.c.b16 %v3119, %v3115
  %v3976 = vpack.c.b16 %v3120, %v3116
  %v3977 = vpack.c.b16 %v3121, %v3117
  %v3978 = vpack.c.b16 %v3122, %v3118
  %v3979 = vpack.c.b16 %v3127, %v3123
  %v3980 = vpack.c.b16 %v3128, %v3124
  %v3981 = vpack.c.b16 %v3129, %v3125
  %v3982 = vpack.c.b16 %v3130, %v3126
  %v3983 = vpack.c.b16 %v3135, %v3131
  %v3984 = vpack.c.b16 %v3136, %v3132
  %v3985 = vpack.c.b16 %v3137, %v3133
  %v3986 = vpack.c.b16 %v3138, %v3134
  %v3987 = vpack.c.b16 %v3143, %v3139
  %v3988 = vpack.c.b16 %v3144, %v3140
  %v3989 = vpack.c.b16 %v3145, %v3141
  %v3990 = vpack.c.b16 %v3146, %v3142
  %v3991 = vpack.c.b16 %v3151, %v3147
  %v3992 = vpack.c.b16 %v3152, %v3148
  %v3993 = vpack.c.b16 %v3153, %v3149
  %v3994 = vpack.c.b16 %v3154, %v3150
  %v3995 = vpack.c.b16 %v3159, %v3155
  %v3996 = vpack.c.b16 %v3160, %v3156
  %v3997 = vpack.c.b16 %v3161, %v3157
  %v3998 = vpack.c.b16 %v3162, %v3158
  %v3999 = vpack.c.b16 %v3167, %v3163
  %v4000 = vpack.c.b16 %v3168, %v3164
  %v4001 = vpack.c.b16 %v3169, %v3165
  %v4002 = vpack.c.b16 %v3170, %v3166
  %v4003 = vpack.c.b16 %v3175, %v3171
  %v4004 = vpack.c.b16 %v3176, %v3172
  %v4005 = vpack.c.b16 %v3177, %v3173
  %v4006 = vpack.c.b16 %v3178, %v3174
  %v4007 = vpack.c.b16 %v3183, %v3179
  %v4008 = vpack.c.b16 %v3184, %v3180
  %v4009 = vpack.c.b16 %v3185, %v3181
  %v4010 = vpack.c.b16 %v3186, %v3182
  %v4011 = vpack.c.b16 %v3191, %v3187
  %v4012 = vpack.c.b16 %v3192, %v3188
  %v4013 = vpack.c.b16 %v3193, %v3189
  %v4014 = vpack.c.b16 %v3194, %v3190
  %v4015 = vpack.c.b16 %v3199, %v3195
  %v4016 = vpack.c.b16 %v3200, %v3196
  %v4017 = vpack.c.b16 %v3201, %v3197
  %v4018 = vpack.c.b16 %v3202, %v3198
  %v4019 = vpack.c.b16 %v3207, %v3203
  %v4020 = vpack.c.b16 %v3208, %v3204
  %v4021 = vpack.c.b16 %v3209, %v3205
  %v4022 = vpack.c.b16 %v3210, %v3206
  %v4023 = vpack.c.b16 %v3215, %v3211
  %v4024 = vpack.c.b16 %v3216, %v3212
  %v4025 = vpack.c.b16 %v3217, %v3213
  %v4026 = vpack.c.b16 %v3218, %v3214
  %v4027 = vpack.c.b16 %v3223, %v3219
  %v4028 = vpack.c.b16 %v3224, %v3220
  %v4029 = vpack.c.b16 %v3225, %v3221
  %v4030 = vpack.c.b16 %v3226, %v3222
  %v4031 = vpack.c.b16 %v3231, %v3227
  %v4032 = vpack.c.b16 %v3232, %v3228
  %v4033 = vpack.c.b16 %v3233, %v3229
  %v4034 = vpack.c.b16 %v3234, %v3230
  %v4035 = vpack.c.b16 %v3239, %v3235
  %v4036 = vpack.c.b16 %v3240, %v3236
  %v4037 = vpack.c.b16 %v3241, %v3237
  %v4038 = vpack.c.b16 %v3242, %v3238
  %v4039 = vpack.c.b16 %v3247, %v3243
  %v4040 = vpack.c.b16 %v3248, %v3244
  %v4041 = vpack.c.b16 %v3249, %v3245
  %v4042 = vpack.c.b16 %v3250, %v3246
  %v4043 = vpack.c.b16 %v3255, %v3251
  %v4044 = vpack.c.b16 %v3256, %v3252
  %v4045 = vpack.c.b16 %v3257, %v3253
  %v4046 = vpack.c.b16 %v3258, %v3254
  %v4047 = vpack.c.b16 %v3263, %v3259
  %v4048 = vpack.c.b16 %v3264, %v3260
  %v4049 = vpack.c.b16 %v3265, %v3261
  %v4050 = vpack.c.b16 %v3266, %v3262
  %vm4835 = vcmask 523264
  %v4837 = vsel %vm4835, %v890, 0
  %4839 = vmatpush.bf16.msra.mxu0 %v3295
  %4840 = vmatpush.bf16.msra.mxu0 %v3291
  %4841 = vmatpush.bf16.msra.mxu0 %v3287
  %4842 = vmatpush.bf16.msra.mxu0 %v3283
  %4843 = vmatpush.bf16.msra.mxu0 %v3279
  %4844 = vmatpush.bf16.msra.mxu0 %v3275
  %4845 = vmatpush.bf16.msra.mxu0 %v3271
  %4846 = vmatpush.bf16.msra.mxu0 %v3267
  %4847 = vmatmul.bf16.gmra.mxu0 %v866
  %v4848 = vpop.f32.mrf.mxu0
  %v4849 = vadd.f32 %v820, %v4848
  %v4850 = vpop.f32.mrf.mxu0
  %4851 = vdwg.mxu0
  %4852 = vmatpush.bf16.msra.mxu0 %v3327
  %4853 = vmatpush.bf16.msra.mxu0 %v3323
  %4854 = vmatpush.bf16.msra.mxu0 %v3319
  %4855 = vmatpush.bf16.msra.mxu0 %v3315
  %4856 = vmatpush.bf16.msra.mxu0 %v3311
  %4857 = vmatpush.bf16.msra.mxu0 %v3307
  %4858 = vmatpush.bf16.msra.mxu0 %v3303
  %4859 = vmatpush.bf16.msra.mxu0 %v3299
  %4860 = vmatmul.bf16.gmra.mxu0 %v867
  %v4861 = vpop.f32.mrf.mxu0
  %v4862 = vadd.f32 %v4849, %v4861
  %v4863 = vpop.f32.mrf.mxu0
  %4864 = vdwg.mxu0
  %4865 = vmatpush.bf16.msra.mxu0 %v3359
  %4866 = vmatpush.bf16.msra.mxu0 %v3355
  %4867 = vmatpush.bf16.msra.mxu0 %v3351
  %4868 = vmatpush.bf16.msra.mxu0 %v3347
  %4869 = vmatpush.bf16.msra.mxu0 %v3343
  %4870 = vmatpush.bf16.msra.mxu0 %v3339
  %4871 = vmatpush.bf16.msra.mxu0 %v3335
  %4872 = vmatpush.bf16.msra.mxu0 %v3331
  %4873 = vmatmul.bf16.gmra.mxu0 %v868
  %v4874 = vpop.f32.mrf.mxu0
  %v4875 = vadd.f32 %v4862, %v4874
  %v4876 = vpop.f32.mrf.mxu0
  %4877 = vdwg.mxu0
  %4878 = vmatpush.bf16.msra.mxu0 %v3391
  %4879 = vmatpush.bf16.msra.mxu0 %v3387
  %4880 = vmatpush.bf16.msra.mxu0 %v3383
  %4881 = vmatpush.bf16.msra.mxu0 %v3379
  %4882 = vmatpush.bf16.msra.mxu0 %v3375
  %4883 = vmatpush.bf16.msra.mxu0 %v3371
  %4884 = vmatpush.bf16.msra.mxu0 %v3367
  %4885 = vmatpush.bf16.msra.mxu0 %v3363
  %4886 = vmatmul.bf16.gmra.mxu0 %v869
  %v4887 = vpop.f32.mrf.mxu0
  %v4888 = vadd.f32 %v4875, %v4887
  %v4889 = vpop.f32.mrf.mxu0
  %4890 = vdwg.mxu0
  %4891 = vmatpush.bf16.msra.mxu0 %v3423
  %4892 = vmatpush.bf16.msra.mxu0 %v3419
  %4893 = vmatpush.bf16.msra.mxu0 %v3415
  %4894 = vmatpush.bf16.msra.mxu0 %v3411
  %4895 = vmatpush.bf16.msra.mxu0 %v3407
  %4896 = vmatpush.bf16.msra.mxu0 %v3403
  %4897 = vmatpush.bf16.msra.mxu0 %v3399
  %4898 = vmatpush.bf16.msra.mxu0 %v3395
  %4899 = vmatmul.bf16.gmra.mxu0 %v870
  %v4900 = vpop.f32.mrf.mxu0
  %v4901 = vadd.f32 %v4888, %v4900
  %v4902 = vpop.f32.mrf.mxu0
  %4903 = vdwg.mxu0
  %4904 = vmatpush.bf16.msra.mxu0 %v3455
  %4905 = vmatpush.bf16.msra.mxu0 %v3451
  %4906 = vmatpush.bf16.msra.mxu0 %v3447
  %4907 = vmatpush.bf16.msra.mxu0 %v3443
  %4908 = vmatpush.bf16.msra.mxu0 %v3439
  %4909 = vmatpush.bf16.msra.mxu0 %v3435
  %4910 = vmatpush.bf16.msra.mxu0 %v3431
  %4911 = vmatpush.bf16.msra.mxu0 %v3427
  %4912 = vmatmul.bf16.gmra.mxu0 %v871
  %v4913 = vpop.f32.mrf.mxu0
  %v4914 = vadd.f32 %v4901, %v4913
  %v4915 = vpop.f32.mrf.mxu0
  %4916 = vdwg.mxu0
  %4917 = vmatpush.bf16.msra.mxu0 %v3487
  %4918 = vmatpush.bf16.msra.mxu0 %v3483
  %4919 = vmatpush.bf16.msra.mxu0 %v3479
  %4920 = vmatpush.bf16.msra.mxu0 %v3475
  %4921 = vmatpush.bf16.msra.mxu0 %v3471
  %4922 = vmatpush.bf16.msra.mxu0 %v3467
  %4923 = vmatpush.bf16.msra.mxu0 %v3463
  %4924 = vmatpush.bf16.msra.mxu0 %v3459
  %4925 = vmatmul.bf16.gmra.mxu0 %v872
  %v4926 = vpop.f32.mrf.mxu0
  %v4927 = vadd.f32 %v4914, %v4926
  %v4928 = vpop.f32.mrf.mxu0
  %4929 = vdwg.mxu0
  %4930 = vmatpush.bf16.msra.mxu0 %v3519
  %4931 = vmatpush.bf16.msra.mxu0 %v3515
  %4932 = vmatpush.bf16.msra.mxu0 %v3511
  %4933 = vmatpush.bf16.msra.mxu0 %v3507
  %4934 = vmatpush.bf16.msra.mxu0 %v3503
  %4935 = vmatpush.bf16.msra.mxu0 %v3499
  %4936 = vmatpush.bf16.msra.mxu0 %v3495
  %4937 = vmatpush.bf16.msra.mxu0 %v3491
  %4938 = vmatmul.bf16.gmra.mxu0 %v873
  %v4939 = vpop.f32.mrf.mxu0
  %v4940 = vadd.f32 %v4927, %v4939
  %v4941 = vpop.f32.mrf.mxu0
  %4942 = vdwg.mxu0
  %4943 = vmatpush.bf16.msra.mxu0 %v3551
  %4944 = vmatpush.bf16.msra.mxu0 %v3547
  %4945 = vmatpush.bf16.msra.mxu0 %v3543
  %4946 = vmatpush.bf16.msra.mxu0 %v3539
  %4947 = vmatpush.bf16.msra.mxu0 %v3535
  %4948 = vmatpush.bf16.msra.mxu0 %v3531
  %4949 = vmatpush.bf16.msra.mxu0 %v3527
  %4950 = vmatpush.bf16.msra.mxu0 %v3523
  %4951 = vmatmul.bf16.gmra.mxu0 %v874
  %v4952 = vpop.f32.mrf.mxu0
  %v4953 = vadd.f32 %v4940, %v4952
  %v4954 = vpop.f32.mrf.mxu0
  %4955 = vdwg.mxu0
  %4956 = vmatpush.bf16.msra.mxu0 %v3583
  %4957 = vmatpush.bf16.msra.mxu0 %v3579
  %4958 = vmatpush.bf16.msra.mxu0 %v3575
  %4959 = vmatpush.bf16.msra.mxu0 %v3571
  %4960 = vmatpush.bf16.msra.mxu0 %v3567
  %4961 = vmatpush.bf16.msra.mxu0 %v3563
  %4962 = vmatpush.bf16.msra.mxu0 %v3559
  %4963 = vmatpush.bf16.msra.mxu0 %v3555
  %4964 = vmatmul.bf16.gmra.mxu0 %v875
  %v4965 = vpop.f32.mrf.mxu0
  %v4966 = vadd.f32 %v4953, %v4965
  %v4967 = vpop.f32.mrf.mxu0
  %4968 = vdwg.mxu0
  %4969 = vmatpush.bf16.msra.mxu0 %v3615
  %4970 = vmatpush.bf16.msra.mxu0 %v3611
  %4971 = vmatpush.bf16.msra.mxu0 %v3607
  %4972 = vmatpush.bf16.msra.mxu0 %v3603
  %4973 = vmatpush.bf16.msra.mxu0 %v3599
  %4974 = vmatpush.bf16.msra.mxu0 %v3595
  %4975 = vmatpush.bf16.msra.mxu0 %v3591
  %4976 = vmatpush.bf16.msra.mxu0 %v3587
  %4977 = vmatmul.bf16.gmra.mxu0 %v876
  %v4978 = vpop.f32.mrf.mxu0
  %v4979 = vadd.f32 %v4966, %v4978
  %v4980 = vpop.f32.mrf.mxu0
  %4981 = vdwg.mxu0
  %4982 = vmatpush.bf16.msra.mxu0 %v3647
  %4983 = vmatpush.bf16.msra.mxu0 %v3643
  %4984 = vmatpush.bf16.msra.mxu0 %v3639
  %4985 = vmatpush.bf16.msra.mxu0 %v3635
  %4986 = vmatpush.bf16.msra.mxu0 %v3631
  %4987 = vmatpush.bf16.msra.mxu0 %v3627
  %4988 = vmatpush.bf16.msra.mxu0 %v3623
  %4989 = vmatpush.bf16.msra.mxu0 %v3619
  %4990 = vmatmul.bf16.gmra.mxu0 %v877
  %v4991 = vpop.f32.mrf.mxu0
  %v4992 = vadd.f32 %v4979, %v4991
  %v4993 = vpop.f32.mrf.mxu0
  %4994 = vdwg.mxu0
  %4995 = vmatpush.bf16.msra.mxu0 %v3679
  %4996 = vmatpush.bf16.msra.mxu0 %v3675
  %4997 = vmatpush.bf16.msra.mxu0 %v3671
  %4998 = vmatpush.bf16.msra.mxu0 %v3667
  %4999 = vmatpush.bf16.msra.mxu0 %v3663
  %5000 = vmatpush.bf16.msra.mxu0 %v3659
  %5001 = vmatpush.bf16.msra.mxu0 %v3655
  %5002 = vmatpush.bf16.msra.mxu0 %v3651
  %5003 = vmatmul.bf16.gmra.mxu0 %v878
  %v5004 = vpop.f32.mrf.mxu0
  %v5005 = vadd.f32 %v4992, %v5004
  %v5006 = vpop.f32.mrf.mxu0
  %5007 = vdwg.mxu0
  %5008 = vmatpush.bf16.msra.mxu0 %v3711
  %5009 = vmatpush.bf16.msra.mxu0 %v3707
  %5010 = vmatpush.bf16.msra.mxu0 %v3703
  %5011 = vmatpush.bf16.msra.mxu0 %v3699
  %5012 = vmatpush.bf16.msra.mxu0 %v3695
  %5013 = vmatpush.bf16.msra.mxu0 %v3691
  %5014 = vmatpush.bf16.msra.mxu0 %v3687
  %5015 = vmatpush.bf16.msra.mxu0 %v3683
  %5016 = vmatmul.bf16.gmra.mxu0 %v879
  %v5017 = vpop.f32.mrf.mxu0
  %v5018 = vadd.f32 %v5005, %v5017
  %v5019 = vpop.f32.mrf.mxu0
  %5020 = vdwg.mxu0
  %5021 = vmatpush.bf16.msra.mxu0 %v3743
  %5022 = vmatpush.bf16.msra.mxu0 %v3739
  %5023 = vmatpush.bf16.msra.mxu0 %v3735
  %5024 = vmatpush.bf16.msra.mxu0 %v3731
  %5025 = vmatpush.bf16.msra.mxu0 %v3727
  %5026 = vmatpush.bf16.msra.mxu0 %v3723
  %5027 = vmatpush.bf16.msra.mxu0 %v3719
  %5028 = vmatpush.bf16.msra.mxu0 %v3715
  %5029 = vmatmul.bf16.gmra.mxu0 %v880
  %v5030 = vpop.f32.mrf.mxu0
  %v5031 = vadd.f32 %v5018, %v5030
  %v5032 = vpop.f32.mrf.mxu0
  %5033 = vdwg.mxu0
  %5034 = vmatpush.bf16.msra.mxu0 %v3775
  %5035 = vmatpush.bf16.msra.mxu0 %v3771
  %5036 = vmatpush.bf16.msra.mxu0 %v3767
  %5037 = vmatpush.bf16.msra.mxu0 %v3763
  %5038 = vmatpush.bf16.msra.mxu0 %v3759
  %5039 = vmatpush.bf16.msra.mxu0 %v3755
  %5040 = vmatpush.bf16.msra.mxu0 %v3751
  %5041 = vmatpush.bf16.msra.mxu0 %v3747
  %5042 = vmatmul.bf16.gmra.mxu0 %v881
  %v5043 = vpop.f32.mrf.mxu0
  %v5044 = vadd.f32 %v5031, %v5043
  %v5045 = vpop.f32.mrf.mxu0
  %5046 = vdwg.mxu0
  %5047 = vmatpush.bf16.msra.mxu0 %v3807
  %5048 = vmatpush.bf16.msra.mxu0 %v3803
  %5049 = vmatpush.bf16.msra.mxu0 %v3799
  %5050 = vmatpush.bf16.msra.mxu0 %v3795
  %5051 = vmatpush.bf16.msra.mxu0 %v3791
  %5052 = vmatpush.bf16.msra.mxu0 %v3787
  %5053 = vmatpush.bf16.msra.mxu0 %v3783
  %5054 = vmatpush.bf16.msra.mxu0 %v3779
  %5055 = vmatmul.bf16.gmra.mxu0 %v882
  %v5056 = vpop.f32.mrf.mxu0
  %v5057 = vadd.f32 %v5044, %v5056
  %v5058 = vpop.f32.mrf.mxu0
  %5059 = vdwg.mxu0
  %5060 = vmatpush.bf16.msra.mxu0 %v3839
  %5061 = vmatpush.bf16.msra.mxu0 %v3835
  %5062 = vmatpush.bf16.msra.mxu0 %v3831
  %5063 = vmatpush.bf16.msra.mxu0 %v3827
  %5064 = vmatpush.bf16.msra.mxu0 %v3823
  %5065 = vmatpush.bf16.msra.mxu0 %v3819
  %5066 = vmatpush.bf16.msra.mxu0 %v3815
  %5067 = vmatpush.bf16.msra.mxu0 %v3811
  %5068 = vmatmul.bf16.gmra.mxu0 %v883
  %v5069 = vpop.f32.mrf.mxu0
  %v5070 = vadd.f32 %v5057, %v5069
  %v5071 = vpop.f32.mrf.mxu0
  %5072 = vdwg.mxu0
  %5073 = vmatpush.bf16.msra.mxu0 %v3871
  %5074 = vmatpush.bf16.msra.mxu0 %v3867
  %5075 = vmatpush.bf16.msra.mxu0 %v3863
  %5076 = vmatpush.bf16.msra.mxu0 %v3859
  %5077 = vmatpush.bf16.msra.mxu0 %v3855
  %5078 = vmatpush.bf16.msra.mxu0 %v3851
  %5079 = vmatpush.bf16.msra.mxu0 %v3847
  %5080 = vmatpush.bf16.msra.mxu0 %v3843
  %5081 = vmatmul.bf16.gmra.mxu0 %v884
  %v5082 = vpop.f32.mrf.mxu0
  %v5083 = vadd.f32 %v5070, %v5082
  %v5084 = vpop.f32.mrf.mxu0
  %5085 = vdwg.mxu0
  %5086 = vmatpush.bf16.msra.mxu0 %v3903
  %5087 = vmatpush.bf16.msra.mxu0 %v3899
  %5088 = vmatpush.bf16.msra.mxu0 %v3895
  %5089 = vmatpush.bf16.msra.mxu0 %v3891
  %5090 = vmatpush.bf16.msra.mxu0 %v3887
  %5091 = vmatpush.bf16.msra.mxu0 %v3883
  %5092 = vmatpush.bf16.msra.mxu0 %v3879
  %5093 = vmatpush.bf16.msra.mxu0 %v3875
  %5094 = vmatmul.bf16.gmra.mxu0 %v885
  %v5095 = vpop.f32.mrf.mxu0
  %v5096 = vadd.f32 %v5083, %v5095
  %v5097 = vpop.f32.mrf.mxu0
  %5098 = vdwg.mxu0
  %5099 = vmatpush.bf16.msra.mxu0 %v3935
  %5100 = vmatpush.bf16.msra.mxu0 %v3931
  %5101 = vmatpush.bf16.msra.mxu0 %v3927
  %5102 = vmatpush.bf16.msra.mxu0 %v3923
  %5103 = vmatpush.bf16.msra.mxu0 %v3919
  %5104 = vmatpush.bf16.msra.mxu0 %v3915
  %5105 = vmatpush.bf16.msra.mxu0 %v3911
  %5106 = vmatpush.bf16.msra.mxu0 %v3907
  %5107 = vmatmul.bf16.gmra.mxu0 %v886
  %v5108 = vpop.f32.mrf.mxu0
  %v5109 = vadd.f32 %v5096, %v5108
  %v5110 = vpop.f32.mrf.mxu0
  %5111 = vdwg.mxu0
  %5112 = vmatpush.bf16.msra.mxu0 %v3967
  %5113 = vmatpush.bf16.msra.mxu0 %v3963
  %5114 = vmatpush.bf16.msra.mxu0 %v3959
  %5115 = vmatpush.bf16.msra.mxu0 %v3955
  %5116 = vmatpush.bf16.msra.mxu0 %v3951
  %5117 = vmatpush.bf16.msra.mxu0 %v3947
  %5118 = vmatpush.bf16.msra.mxu0 %v3943
  %5119 = vmatpush.bf16.msra.mxu0 %v3939
  %5120 = vmatmul.bf16.gmra.mxu0 %v887
  %v5121 = vpop.f32.mrf.mxu0
  %v5122 = vadd.f32 %v5109, %v5121
  %v5123 = vpop.f32.mrf.mxu0
  %5124 = vdwg.mxu0
  %5125 = vmatpush.bf16.msra.mxu0 %v3999
  %5126 = vmatpush.bf16.msra.mxu0 %v3995
  %5127 = vmatpush.bf16.msra.mxu0 %v3991
  %5128 = vmatpush.bf16.msra.mxu0 %v3987
  %5129 = vmatpush.bf16.msra.mxu0 %v3983
  %5130 = vmatpush.bf16.msra.mxu0 %v3979
  %5131 = vmatpush.bf16.msra.mxu0 %v3975
  %5132 = vmatpush.bf16.msra.mxu0 %v3971
  %5133 = vmatmul.bf16.gmra.mxu0 %v888
  %v5134 = vpop.f32.mrf.mxu0
  %v5135 = vadd.f32 %v5122, %v5134
  %v5136 = vpop.f32.mrf.mxu0
  %5137 = vdwg.mxu0
  %5138 = vmatpush.bf16.msra.mxu0 %v4031
  %5139 = vmatpush.bf16.msra.mxu0 %v4027
  %5140 = vmatpush.bf16.msra.mxu0 %v4023
  %5141 = vmatpush.bf16.msra.mxu0 %v4019
  %5142 = vmatpush.bf16.msra.mxu0 %v4015
  %5143 = vmatpush.bf16.msra.mxu0 %v4011
  %5144 = vmatpush.bf16.msra.mxu0 %v4007
  %5145 = vmatpush.bf16.msra.mxu0 %v4003
  %5146 = vmatmul.bf16.gmra.mxu0 %v889
  %v5147 = vpop.f32.mrf.mxu0
  %v5148 = vadd.f32 %v5135, %v5147
  %v5149 = vpop.f32.mrf.mxu0
  %5150 = vdwg.mxu0
  %5151 = vmatpush.bf16.msra.mxu0 0
  %5152 = vmatpush.bf16.msra.mxu0 0
  %5153 = vmatpush.bf16.msra.mxu0 0
  %5154 = vmatpush.bf16.msra.mxu0 0
  %5155 = vmatpush.bf16.msra.mxu0 %v4047
  %5156 = vmatpush.bf16.msra.mxu0 %v4043
  %5157 = vmatpush.bf16.msra.mxu0 %v4039
  %5158 = vmatpush.bf16.msra.mxu0 %v4035
  %5159 = vmatmul.bf16.gmra.mxu0 %v4837
  %v5160 = vpop.f32.mrf.mxu0
  %v5161 = vadd.f32 %v5148, %v5160
  %v5162 = vpop.f32.mrf.mxu0
  %5163 = vdwg.mxu0
  %5164 = vmatpush.bf16.msra.mxu0 %v3296
  %5165 = vmatpush.bf16.msra.mxu0 %v3292
  %5166 = vmatpush.bf16.msra.mxu0 %v3288
  %5167 = vmatpush.bf16.msra.mxu0 %v3284
  %5168 = vmatpush.bf16.msra.mxu0 %v3280
  %5169 = vmatpush.bf16.msra.mxu0 %v3276
  %5170 = vmatpush.bf16.msra.mxu0 %v3272
  %5171 = vmatpush.bf16.msra.mxu0 %v3268
  %5172 = vmatmul.bf16.gmra.mxu0 %v866
  %v5173 = vpop.f32.mrf.mxu0
  %v5174 = vadd.f32 %v821, %v5173
  %v5175 = vpop.f32.mrf.mxu0
  %5176 = vdwg.mxu0
  %5177 = vmatpush.bf16.msra.mxu0 %v3328
  %5178 = vmatpush.bf16.msra.mxu0 %v3324
  %5179 = vmatpush.bf16.msra.mxu0 %v3320
  %5180 = vmatpush.bf16.msra.mxu0 %v3316
  %5181 = vmatpush.bf16.msra.mxu0 %v3312
  %5182 = vmatpush.bf16.msra.mxu0 %v3308
  %5183 = vmatpush.bf16.msra.mxu0 %v3304
  %5184 = vmatpush.bf16.msra.mxu0 %v3300
  %5185 = vmatmul.bf16.gmra.mxu0 %v867
  %v5186 = vpop.f32.mrf.mxu0
  %v5187 = vadd.f32 %v5174, %v5186
  %v5188 = vpop.f32.mrf.mxu0
  %5189 = vdwg.mxu0
  %5190 = vmatpush.bf16.msra.mxu0 %v3360
  %5191 = vmatpush.bf16.msra.mxu0 %v3356
  %5192 = vmatpush.bf16.msra.mxu0 %v3352
  %5193 = vmatpush.bf16.msra.mxu0 %v3348
  %5194 = vmatpush.bf16.msra.mxu0 %v3344
  %5195 = vmatpush.bf16.msra.mxu0 %v3340
  %5196 = vmatpush.bf16.msra.mxu0 %v3336
  %5197 = vmatpush.bf16.msra.mxu0 %v3332
  %5198 = vmatmul.bf16.gmra.mxu0 %v868
  %v5199 = vpop.f32.mrf.mxu0
  %v5200 = vadd.f32 %v5187, %v5199
  %v5201 = vpop.f32.mrf.mxu0
  %5202 = vdwg.mxu0
  %5203 = vmatpush.bf16.msra.mxu0 %v3392
  %5204 = vmatpush.bf16.msra.mxu0 %v3388
  %5205 = vmatpush.bf16.msra.mxu0 %v3384
  %5206 = vmatpush.bf16.msra.mxu0 %v3380
  %5207 = vmatpush.bf16.msra.mxu0 %v3376
  %5208 = vmatpush.bf16.msra.mxu0 %v3372
  %5209 = vmatpush.bf16.msra.mxu0 %v3368
  %5210 = vmatpush.bf16.msra.mxu0 %v3364
  %5211 = vmatmul.bf16.gmra.mxu0 %v869
  %v5212 = vpop.f32.mrf.mxu0
  %v5213 = vadd.f32 %v5200, %v5212
  %v5214 = vpop.f32.mrf.mxu0
  %5215 = vdwg.mxu0
  %5216 = vmatpush.bf16.msra.mxu0 %v3424
  %5217 = vmatpush.bf16.msra.mxu0 %v3420
  %5218 = vmatpush.bf16.msra.mxu0 %v3416
  %5219 = vmatpush.bf16.msra.mxu0 %v3412
  %5220 = vmatpush.bf16.msra.mxu0 %v3408
  %5221 = vmatpush.bf16.msra.mxu0 %v3404
  %5222 = vmatpush.bf16.msra.mxu0 %v3400
  %5223 = vmatpush.bf16.msra.mxu0 %v3396
  %5224 = vmatmul.bf16.gmra.mxu0 %v870
  %v5225 = vpop.f32.mrf.mxu0
  %v5226 = vadd.f32 %v5213, %v5225
  %v5227 = vpop.f32.mrf.mxu0
  %5228 = vdwg.mxu0
  %5229 = vmatpush.bf16.msra.mxu0 %v3456
  %5230 = vmatpush.bf16.msra.mxu0 %v3452
  %5231 = vmatpush.bf16.msra.mxu0 %v3448
  %5232 = vmatpush.bf16.msra.mxu0 %v3444
  %5233 = vmatpush.bf16.msra.mxu0 %v3440
  %5234 = vmatpush.bf16.msra.mxu0 %v3436
  %5235 = vmatpush.bf16.msra.mxu0 %v3432
  %5236 = vmatpush.bf16.msra.mxu0 %v3428
  %5237 = vmatmul.bf16.gmra.mxu0 %v871
  %v5238 = vpop.f32.mrf.mxu0
  %v5239 = vadd.f32 %v5226, %v5238
  %v5240 = vpop.f32.mrf.mxu0
  %5241 = vdwg.mxu0
  %5242 = vmatpush.bf16.msra.mxu0 %v3488
  %5243 = vmatpush.bf16.msra.mxu0 %v3484
  %5244 = vmatpush.bf16.msra.mxu0 %v3480
  %5245 = vmatpush.bf16.msra.mxu0 %v3476
  %5246 = vmatpush.bf16.msra.mxu0 %v3472
  %5247 = vmatpush.bf16.msra.mxu0 %v3468
  %5248 = vmatpush.bf16.msra.mxu0 %v3464
  %5249 = vmatpush.bf16.msra.mxu0 %v3460
  %5250 = vmatmul.bf16.gmra.mxu0 %v872
  %v5251 = vpop.f32.mrf.mxu0
  %v5252 = vadd.f32 %v5239, %v5251
  %v5253 = vpop.f32.mrf.mxu0
  %5254 = vdwg.mxu0
  %5255 = vmatpush.bf16.msra.mxu0 %v3520
  %5256 = vmatpush.bf16.msra.mxu0 %v3516
  %5257 = vmatpush.bf16.msra.mxu0 %v3512
  %5258 = vmatpush.bf16.msra.mxu0 %v3508
  %5259 = vmatpush.bf16.msra.mxu0 %v3504
  %5260 = vmatpush.bf16.msra.mxu0 %v3500
  %5261 = vmatpush.bf16.msra.mxu0 %v3496
  %5262 = vmatpush.bf16.msra.mxu0 %v3492
  %5263 = vmatmul.bf16.gmra.mxu0 %v873
  %v5264 = vpop.f32.mrf.mxu0
  %v5265 = vadd.f32 %v5252, %v5264
  %v5266 = vpop.f32.mrf.mxu0
  %5267 = vdwg.mxu0
  %5268 = vmatpush.bf16.msra.mxu0 %v3552
  %5269 = vmatpush.bf16.msra.mxu0 %v3548
  %5270 = vmatpush.bf16.msra.mxu0 %v3544
  %5271 = vmatpush.bf16.msra.mxu0 %v3540
  %5272 = vmatpush.bf16.msra.mxu0 %v3536
  %5273 = vmatpush.bf16.msra.mxu0 %v3532
  %5274 = vmatpush.bf16.msra.mxu0 %v3528
  %5275 = vmatpush.bf16.msra.mxu0 %v3524
  %5276 = vmatmul.bf16.gmra.mxu0 %v874
  %v5277 = vpop.f32.mrf.mxu0
  %v5278 = vadd.f32 %v5265, %v5277
  %v5279 = vpop.f32.mrf.mxu0
  %5280 = vdwg.mxu0
  %5281 = vmatpush.bf16.msra.mxu0 %v3584
  %5282 = vmatpush.bf16.msra.mxu0 %v3580
  %5283 = vmatpush.bf16.msra.mxu0 %v3576
  %5284 = vmatpush.bf16.msra.mxu0 %v3572
  %5285 = vmatpush.bf16.msra.mxu0 %v3568
  %5286 = vmatpush.bf16.msra.mxu0 %v3564
  %5287 = vmatpush.bf16.msra.mxu0 %v3560
  %5288 = vmatpush.bf16.msra.mxu0 %v3556
  %5289 = vmatmul.bf16.gmra.mxu0 %v875
  %v5290 = vpop.f32.mrf.mxu0
  %v5291 = vadd.f32 %v5278, %v5290
  %v5292 = vpop.f32.mrf.mxu0
  %5293 = vdwg.mxu0
  %5294 = vmatpush.bf16.msra.mxu0 %v3616
  %5295 = vmatpush.bf16.msra.mxu0 %v3612
  %5296 = vmatpush.bf16.msra.mxu0 %v3608
  %5297 = vmatpush.bf16.msra.mxu0 %v3604
  %5298 = vmatpush.bf16.msra.mxu0 %v3600
  %5299 = vmatpush.bf16.msra.mxu0 %v3596
  %5300 = vmatpush.bf16.msra.mxu0 %v3592
  %5301 = vmatpush.bf16.msra.mxu0 %v3588
  %5302 = vmatmul.bf16.gmra.mxu0 %v876
  %v5303 = vpop.f32.mrf.mxu0
  %v5304 = vadd.f32 %v5291, %v5303
  %v5305 = vpop.f32.mrf.mxu0
  %5306 = vdwg.mxu0
  %5307 = vmatpush.bf16.msra.mxu0 %v3648
  %5308 = vmatpush.bf16.msra.mxu0 %v3644
  %5309 = vmatpush.bf16.msra.mxu0 %v3640
  %5310 = vmatpush.bf16.msra.mxu0 %v3636
  %5311 = vmatpush.bf16.msra.mxu0 %v3632
  %5312 = vmatpush.bf16.msra.mxu0 %v3628
  %5313 = vmatpush.bf16.msra.mxu0 %v3624
  %5314 = vmatpush.bf16.msra.mxu0 %v3620
  %5315 = vmatmul.bf16.gmra.mxu0 %v877
  %v5316 = vpop.f32.mrf.mxu0
  %v5317 = vadd.f32 %v5304, %v5316
  %v5318 = vpop.f32.mrf.mxu0
  %5319 = vdwg.mxu0
  %5320 = vmatpush.bf16.msra.mxu0 %v3680
  %5321 = vmatpush.bf16.msra.mxu0 %v3676
  %5322 = vmatpush.bf16.msra.mxu0 %v3672
  %5323 = vmatpush.bf16.msra.mxu0 %v3668
  %5324 = vmatpush.bf16.msra.mxu0 %v3664
  %5325 = vmatpush.bf16.msra.mxu0 %v3660
  %5326 = vmatpush.bf16.msra.mxu0 %v3656
  %5327 = vmatpush.bf16.msra.mxu0 %v3652
  %5328 = vmatmul.bf16.gmra.mxu0 %v878
  %v5329 = vpop.f32.mrf.mxu0
  %v5330 = vadd.f32 %v5317, %v5329
  %v5331 = vpop.f32.mrf.mxu0
  %5332 = vdwg.mxu0
  %5333 = vmatpush.bf16.msra.mxu0 %v3712
  %5334 = vmatpush.bf16.msra.mxu0 %v3708
  %5335 = vmatpush.bf16.msra.mxu0 %v3704
  %5336 = vmatpush.bf16.msra.mxu0 %v3700
  %5337 = vmatpush.bf16.msra.mxu0 %v3696
  %5338 = vmatpush.bf16.msra.mxu0 %v3692
  %5339 = vmatpush.bf16.msra.mxu0 %v3688
  %5340 = vmatpush.bf16.msra.mxu0 %v3684
  %5341 = vmatmul.bf16.gmra.mxu0 %v879
  %v5342 = vpop.f32.mrf.mxu0
  %v5343 = vadd.f32 %v5330, %v5342
  %v5344 = vpop.f32.mrf.mxu0
  %5345 = vdwg.mxu0
  %5346 = vmatpush.bf16.msra.mxu0 %v3744
  %5347 = vmatpush.bf16.msra.mxu0 %v3740
  %5348 = vmatpush.bf16.msra.mxu0 %v3736
  %5349 = vmatpush.bf16.msra.mxu0 %v3732
  %5350 = vmatpush.bf16.msra.mxu0 %v3728
  %5351 = vmatpush.bf16.msra.mxu0 %v3724
  %5352 = vmatpush.bf16.msra.mxu0 %v3720
  %5353 = vmatpush.bf16.msra.mxu0 %v3716
  %5354 = vmatmul.bf16.gmra.mxu0 %v880
  %v5355 = vpop.f32.mrf.mxu0
  %v5356 = vadd.f32 %v5343, %v5355
  %v5357 = vpop.f32.mrf.mxu0
  %5358 = vdwg.mxu0
  %5359 = vmatpush.bf16.msra.mxu0 %v3776
  %5360 = vmatpush.bf16.msra.mxu0 %v3772
  %5361 = vmatpush.bf16.msra.mxu0 %v3768
  %5362 = vmatpush.bf16.msra.mxu0 %v3764
  %5363 = vmatpush.bf16.msra.mxu0 %v3760
  %5364 = vmatpush.bf16.msra.mxu0 %v3756
  %5365 = vmatpush.bf16.msra.mxu0 %v3752
  %5366 = vmatpush.bf16.msra.mxu0 %v3748
  %5367 = vmatmul.bf16.gmra.mxu0 %v881
  %v5368 = vpop.f32.mrf.mxu0
  %v5369 = vadd.f32 %v5356, %v5368
  %v5370 = vpop.f32.mrf.mxu0
  %5371 = vdwg.mxu0
  %5372 = vmatpush.bf16.msra.mxu0 %v3808
  %5373 = vmatpush.bf16.msra.mxu0 %v3804
  %5374 = vmatpush.bf16.msra.mxu0 %v3800
  %5375 = vmatpush.bf16.msra.mxu0 %v3796
  %5376 = vmatpush.bf16.msra.mxu0 %v3792
  %5377 = vmatpush.bf16.msra.mxu0 %v3788
  %5378 = vmatpush.bf16.msra.mxu0 %v3784
  %5379 = vmatpush.bf16.msra.mxu0 %v3780
  %5380 = vmatmul.bf16.gmra.mxu0 %v882
  %v5381 = vpop.f32.mrf.mxu0
  %v5382 = vadd.f32 %v5369, %v5381
  %v5383 = vpop.f32.mrf.mxu0
  %5384 = vdwg.mxu0
  %5385 = vmatpush.bf16.msra.mxu0 %v3840
  %5386 = vmatpush.bf16.msra.mxu0 %v3836
  %5387 = vmatpush.bf16.msra.mxu0 %v3832
  %5388 = vmatpush.bf16.msra.mxu0 %v3828
  %5389 = vmatpush.bf16.msra.mxu0 %v3824
  %5390 = vmatpush.bf16.msra.mxu0 %v3820
  %5391 = vmatpush.bf16.msra.mxu0 %v3816
  %5392 = vmatpush.bf16.msra.mxu0 %v3812
  %5393 = vmatmul.bf16.gmra.mxu0 %v883
  %v5394 = vpop.f32.mrf.mxu0
  %v5395 = vadd.f32 %v5382, %v5394
  %v5396 = vpop.f32.mrf.mxu0
  %5397 = vdwg.mxu0
  %5398 = vmatpush.bf16.msra.mxu0 %v3872
  %5399 = vmatpush.bf16.msra.mxu0 %v3868
  %5400 = vmatpush.bf16.msra.mxu0 %v3864
  %5401 = vmatpush.bf16.msra.mxu0 %v3860
  %5402 = vmatpush.bf16.msra.mxu0 %v3856
  %5403 = vmatpush.bf16.msra.mxu0 %v3852
  %5404 = vmatpush.bf16.msra.mxu0 %v3848
  %5405 = vmatpush.bf16.msra.mxu0 %v3844
  %5406 = vmatmul.bf16.gmra.mxu0 %v884
  %v5407 = vpop.f32.mrf.mxu0
  %v5408 = vadd.f32 %v5395, %v5407
  %v5409 = vpop.f32.mrf.mxu0
  %5410 = vdwg.mxu0
  %5411 = vmatpush.bf16.msra.mxu0 %v3904
  %5412 = vmatpush.bf16.msra.mxu0 %v3900
  %5413 = vmatpush.bf16.msra.mxu0 %v3896
  %5414 = vmatpush.bf16.msra.mxu0 %v3892
  %5415 = vmatpush.bf16.msra.mxu0 %v3888
  %5416 = vmatpush.bf16.msra.mxu0 %v3884
  %5417 = vmatpush.bf16.msra.mxu0 %v3880
  %5418 = vmatpush.bf16.msra.mxu0 %v3876
  %5419 = vmatmul.bf16.gmra.mxu0 %v885
  %v5420 = vpop.f32.mrf.mxu0
  %v5421 = vadd.f32 %v5408, %v5420
  %v5422 = vpop.f32.mrf.mxu0
  %5423 = vdwg.mxu0
  %5424 = vmatpush.bf16.msra.mxu0 %v3936
  %5425 = vmatpush.bf16.msra.mxu0 %v3932
  %5426 = vmatpush.bf16.msra.mxu0 %v3928
  %5427 = vmatpush.bf16.msra.mxu0 %v3924
  %5428 = vmatpush.bf16.msra.mxu0 %v3920
  %5429 = vmatpush.bf16.msra.mxu0 %v3916
  %5430 = vmatpush.bf16.msra.mxu0 %v3912
  %5431 = vmatpush.bf16.msra.mxu0 %v3908
  %5432 = vmatmul.bf16.gmra.mxu0 %v886
  %v5433 = vpop.f32.mrf.mxu0
  %v5434 = vadd.f32 %v5421, %v5433
  %v5435 = vpop.f32.mrf.mxu0
  %5436 = vdwg.mxu0
  %5437 = vmatpush.bf16.msra.mxu0 %v3968
  %5438 = vmatpush.bf16.msra.mxu0 %v3964
  %5439 = vmatpush.bf16.msra.mxu0 %v3960
  %5440 = vmatpush.bf16.msra.mxu0 %v3956
  %5441 = vmatpush.bf16.msra.mxu0 %v3952
  %5442 = vmatpush.bf16.msra.mxu0 %v3948
  %5443 = vmatpush.bf16.msra.mxu0 %v3944
  %5444 = vmatpush.bf16.msra.mxu0 %v3940
  %5445 = vmatmul.bf16.gmra.mxu0 %v887
  %v5446 = vpop.f32.mrf.mxu0
  %v5447 = vadd.f32 %v5434, %v5446
  %v5448 = vpop.f32.mrf.mxu0
  %5449 = vdwg.mxu0
  %5450 = vmatpush.bf16.msra.mxu0 %v4000
  %5451 = vmatpush.bf16.msra.mxu0 %v3996
  %5452 = vmatpush.bf16.msra.mxu0 %v3992
  %5453 = vmatpush.bf16.msra.mxu0 %v3988
  %5454 = vmatpush.bf16.msra.mxu0 %v3984
  %5455 = vmatpush.bf16.msra.mxu0 %v3980
  %5456 = vmatpush.bf16.msra.mxu0 %v3976
  %5457 = vmatpush.bf16.msra.mxu0 %v3972
  %5458 = vmatmul.bf16.gmra.mxu0 %v888
  %v5459 = vpop.f32.mrf.mxu0
  %v5460 = vadd.f32 %v5447, %v5459
  %v5461 = vpop.f32.mrf.mxu0
  %5462 = vdwg.mxu0
  %5463 = vmatpush.bf16.msra.mxu0 %v4032
  %5464 = vmatpush.bf16.msra.mxu0 %v4028
  %5465 = vmatpush.bf16.msra.mxu0 %v4024
  %5466 = vmatpush.bf16.msra.mxu0 %v4020
  %5467 = vmatpush.bf16.msra.mxu0 %v4016
  %5468 = vmatpush.bf16.msra.mxu0 %v4012
  %5469 = vmatpush.bf16.msra.mxu0 %v4008
  %5470 = vmatpush.bf16.msra.mxu0 %v4004
  %5471 = vmatmul.bf16.gmra.mxu0 %v889
  %v5472 = vpop.f32.mrf.mxu0
  %v5473 = vadd.f32 %v5460, %v5472
  %v5474 = vpop.f32.mrf.mxu0
  %5475 = vdwg.mxu0
  %5476 = vmatpush.bf16.msra.mxu0 0
  %5477 = vmatpush.bf16.msra.mxu0 0
  %5478 = vmatpush.bf16.msra.mxu0 0
  %5479 = vmatpush.bf16.msra.mxu0 0
  %5480 = vmatpush.bf16.msra.mxu0 %v4048
  %5481 = vmatpush.bf16.msra.mxu0 %v4044
  %5482 = vmatpush.bf16.msra.mxu0 %v4040
  %5483 = vmatpush.bf16.msra.mxu0 %v4036
  %5484 = vmatmul.bf16.gmra.mxu0 %v4837
  %v5485 = vpop.f32.mrf.mxu0
  %v5486 = vadd.f32 %v5473, %v5485
  %v5487 = vpop.f32.mrf.mxu0
  %5488 = vdwg.mxu0
  %5489 = vmatpush.bf16.msra.mxu0 %v3297
  %5490 = vmatpush.bf16.msra.mxu0 %v3293
  %5491 = vmatpush.bf16.msra.mxu0 %v3289
  %5492 = vmatpush.bf16.msra.mxu0 %v3285
  %5493 = vmatpush.bf16.msra.mxu0 %v3281
  %5494 = vmatpush.bf16.msra.mxu0 %v3277
  %5495 = vmatpush.bf16.msra.mxu0 %v3273
  %5496 = vmatpush.bf16.msra.mxu0 %v3269
  %5497 = vmatmul.bf16.gmra.mxu0 %v866
  %v5498 = vpop.f32.mrf.mxu0
  %v5499 = vadd.f32 %v822, %v5498
  %v5500 = vpop.f32.mrf.mxu0
  %5501 = vdwg.mxu0
  %5502 = vmatpush.bf16.msra.mxu0 %v3329
  %5503 = vmatpush.bf16.msra.mxu0 %v3325
  %5504 = vmatpush.bf16.msra.mxu0 %v3321
  %5505 = vmatpush.bf16.msra.mxu0 %v3317
  %5506 = vmatpush.bf16.msra.mxu0 %v3313
  %5507 = vmatpush.bf16.msra.mxu0 %v3309
  %5508 = vmatpush.bf16.msra.mxu0 %v3305
  %5509 = vmatpush.bf16.msra.mxu0 %v3301
  %5510 = vmatmul.bf16.gmra.mxu0 %v867
  %v5511 = vpop.f32.mrf.mxu0
  %v5512 = vadd.f32 %v5499, %v5511
  %v5513 = vpop.f32.mrf.mxu0
  %5514 = vdwg.mxu0
  %5515 = vmatpush.bf16.msra.mxu0 %v3361
  %5516 = vmatpush.bf16.msra.mxu0 %v3357
  %5517 = vmatpush.bf16.msra.mxu0 %v3353
  %5518 = vmatpush.bf16.msra.mxu0 %v3349
  %5519 = vmatpush.bf16.msra.mxu0 %v3345
  %5520 = vmatpush.bf16.msra.mxu0 %v3341
  %5521 = vmatpush.bf16.msra.mxu0 %v3337
  %5522 = vmatpush.bf16.msra.mxu0 %v3333
  %5523 = vmatmul.bf16.gmra.mxu0 %v868
  %v5524 = vpop.f32.mrf.mxu0
  %v5525 = vadd.f32 %v5512, %v5524
  %v5526 = vpop.f32.mrf.mxu0
  %5527 = vdwg.mxu0
  %5528 = vmatpush.bf16.msra.mxu0 %v3393
  %5529 = vmatpush.bf16.msra.mxu0 %v3389
  %5530 = vmatpush.bf16.msra.mxu0 %v3385
  %5531 = vmatpush.bf16.msra.mxu0 %v3381
  %5532 = vmatpush.bf16.msra.mxu0 %v3377
  %5533 = vmatpush.bf16.msra.mxu0 %v3373
  %5534 = vmatpush.bf16.msra.mxu0 %v3369
  %5535 = vmatpush.bf16.msra.mxu0 %v3365
  %5536 = vmatmul.bf16.gmra.mxu0 %v869
  %v5537 = vpop.f32.mrf.mxu0
  %v5538 = vadd.f32 %v5525, %v5537
  %v5539 = vpop.f32.mrf.mxu0
  %5540 = vdwg.mxu0
  %5541 = vmatpush.bf16.msra.mxu0 %v3425
  %5542 = vmatpush.bf16.msra.mxu0 %v3421
  %5543 = vmatpush.bf16.msra.mxu0 %v3417
  %5544 = vmatpush.bf16.msra.mxu0 %v3413
  %5545 = vmatpush.bf16.msra.mxu0 %v3409
  %5546 = vmatpush.bf16.msra.mxu0 %v3405
  %5547 = vmatpush.bf16.msra.mxu0 %v3401
  %5548 = vmatpush.bf16.msra.mxu0 %v3397
  %5549 = vmatmul.bf16.gmra.mxu0 %v870
  %v5550 = vpop.f32.mrf.mxu0
  %v5551 = vadd.f32 %v5538, %v5550
  %v5552 = vpop.f32.mrf.mxu0
  %5553 = vdwg.mxu0
  %5554 = vmatpush.bf16.msra.mxu0 %v3457
  %5555 = vmatpush.bf16.msra.mxu0 %v3453
  %5556 = vmatpush.bf16.msra.mxu0 %v3449
  %5557 = vmatpush.bf16.msra.mxu0 %v3445
  %5558 = vmatpush.bf16.msra.mxu0 %v3441
  %5559 = vmatpush.bf16.msra.mxu0 %v3437
  %5560 = vmatpush.bf16.msra.mxu0 %v3433
  %5561 = vmatpush.bf16.msra.mxu0 %v3429
  %5562 = vmatmul.bf16.gmra.mxu0 %v871
  %v5563 = vpop.f32.mrf.mxu0
  %v5564 = vadd.f32 %v5551, %v5563
  %v5565 = vpop.f32.mrf.mxu0
  %5566 = vdwg.mxu0
  %5567 = vmatpush.bf16.msra.mxu0 %v3489
  %5568 = vmatpush.bf16.msra.mxu0 %v3485
  %5569 = vmatpush.bf16.msra.mxu0 %v3481
  %5570 = vmatpush.bf16.msra.mxu0 %v3477
  %5571 = vmatpush.bf16.msra.mxu0 %v3473
  %5572 = vmatpush.bf16.msra.mxu0 %v3469
  %5573 = vmatpush.bf16.msra.mxu0 %v3465
  %5574 = vmatpush.bf16.msra.mxu0 %v3461
  %5575 = vmatmul.bf16.gmra.mxu0 %v872
  %v5576 = vpop.f32.mrf.mxu0
  %v5577 = vadd.f32 %v5564, %v5576
  %v5578 = vpop.f32.mrf.mxu0
  %5579 = vdwg.mxu0
  %5580 = vmatpush.bf16.msra.mxu0 %v3521
  %5581 = vmatpush.bf16.msra.mxu0 %v3517
  %5582 = vmatpush.bf16.msra.mxu0 %v3513
  %5583 = vmatpush.bf16.msra.mxu0 %v3509
  %5584 = vmatpush.bf16.msra.mxu0 %v3505
  %5585 = vmatpush.bf16.msra.mxu0 %v3501
  %5586 = vmatpush.bf16.msra.mxu0 %v3497
  %5587 = vmatpush.bf16.msra.mxu0 %v3493
  %5588 = vmatmul.bf16.gmra.mxu0 %v873
  %v5589 = vpop.f32.mrf.mxu0
  %v5590 = vadd.f32 %v5577, %v5589
  %v5591 = vpop.f32.mrf.mxu0
  %5592 = vdwg.mxu0
  %5593 = vmatpush.bf16.msra.mxu0 %v3553
  %5594 = vmatpush.bf16.msra.mxu0 %v3549
  %5595 = vmatpush.bf16.msra.mxu0 %v3545
  %5596 = vmatpush.bf16.msra.mxu0 %v3541
  %5597 = vmatpush.bf16.msra.mxu0 %v3537
  %5598 = vmatpush.bf16.msra.mxu0 %v3533
  %5599 = vmatpush.bf16.msra.mxu0 %v3529
  %5600 = vmatpush.bf16.msra.mxu0 %v3525
  %5601 = vmatmul.bf16.gmra.mxu0 %v874
  %v5602 = vpop.f32.mrf.mxu0
  %v5603 = vadd.f32 %v5590, %v5602
  %v5604 = vpop.f32.mrf.mxu0
  %5605 = vdwg.mxu0
  %5606 = vmatpush.bf16.msra.mxu0 %v3585
  %5607 = vmatpush.bf16.msra.mxu0 %v3581
  %5608 = vmatpush.bf16.msra.mxu0 %v3577
  %5609 = vmatpush.bf16.msra.mxu0 %v3573
  %5610 = vmatpush.bf16.msra.mxu0 %v3569
  %5611 = vmatpush.bf16.msra.mxu0 %v3565
  %5612 = vmatpush.bf16.msra.mxu0 %v3561
  %5613 = vmatpush.bf16.msra.mxu0 %v3557
  %5614 = vmatmul.bf16.gmra.mxu0 %v875
  %v5615 = vpop.f32.mrf.mxu0
  %v5616 = vadd.f32 %v5603, %v5615
  %v5617 = vpop.f32.mrf.mxu0
  %5618 = vdwg.mxu0
  %5619 = vmatpush.bf16.msra.mxu0 %v3617
  %5620 = vmatpush.bf16.msra.mxu0 %v3613
  %5621 = vmatpush.bf16.msra.mxu0 %v3609
  %5622 = vmatpush.bf16.msra.mxu0 %v3605
  %5623 = vmatpush.bf16.msra.mxu0 %v3601
  %5624 = vmatpush.bf16.msra.mxu0 %v3597
  %5625 = vmatpush.bf16.msra.mxu0 %v3593
  %5626 = vmatpush.bf16.msra.mxu0 %v3589
  %5627 = vmatmul.bf16.gmra.mxu0 %v876
  %v5628 = vpop.f32.mrf.mxu0
  %v5629 = vadd.f32 %v5616, %v5628
  %v5630 = vpop.f32.mrf.mxu0
  %5631 = vdwg.mxu0
  %5632 = vmatpush.bf16.msra.mxu0 %v3649
  %5633 = vmatpush.bf16.msra.mxu0 %v3645
  %5634 = vmatpush.bf16.msra.mxu0 %v3641
  %5635 = vmatpush.bf16.msra.mxu0 %v3637
  %5636 = vmatpush.bf16.msra.mxu0 %v3633
  %5637 = vmatpush.bf16.msra.mxu0 %v3629
  %5638 = vmatpush.bf16.msra.mxu0 %v3625
  %5639 = vmatpush.bf16.msra.mxu0 %v3621
  %5640 = vmatmul.bf16.gmra.mxu0 %v877
  %v5641 = vpop.f32.mrf.mxu0
  %v5642 = vadd.f32 %v5629, %v5641
  %v5643 = vpop.f32.mrf.mxu0
  %5644 = vdwg.mxu0
  %5645 = vmatpush.bf16.msra.mxu0 %v3681
  %5646 = vmatpush.bf16.msra.mxu0 %v3677
  %5647 = vmatpush.bf16.msra.mxu0 %v3673
  %5648 = vmatpush.bf16.msra.mxu0 %v3669
  %5649 = vmatpush.bf16.msra.mxu0 %v3665
  %5650 = vmatpush.bf16.msra.mxu0 %v3661
  %5651 = vmatpush.bf16.msra.mxu0 %v3657
  %5652 = vmatpush.bf16.msra.mxu0 %v3653
  %5653 = vmatmul.bf16.gmra.mxu0 %v878
  %v5654 = vpop.f32.mrf.mxu0
  %v5655 = vadd.f32 %v5642, %v5654
  %v5656 = vpop.f32.mrf.mxu0
  %5657 = vdwg.mxu0
  %5658 = vmatpush.bf16.msra.mxu0 %v3713
  %5659 = vmatpush.bf16.msra.mxu0 %v3709
  %5660 = vmatpush.bf16.msra.mxu0 %v3705
  %5661 = vmatpush.bf16.msra.mxu0 %v3701
  %5662 = vmatpush.bf16.msra.mxu0 %v3697
  %5663 = vmatpush.bf16.msra.mxu0 %v3693
  %5664 = vmatpush.bf16.msra.mxu0 %v3689
  %5665 = vmatpush.bf16.msra.mxu0 %v3685
  %5666 = vmatmul.bf16.gmra.mxu0 %v879
  %v5667 = vpop.f32.mrf.mxu0
  %v5668 = vadd.f32 %v5655, %v5667
  %v5669 = vpop.f32.mrf.mxu0
  %5670 = vdwg.mxu0
  %5671 = vmatpush.bf16.msra.mxu0 %v3745
  %5672 = vmatpush.bf16.msra.mxu0 %v3741
  %5673 = vmatpush.bf16.msra.mxu0 %v3737
  %5674 = vmatpush.bf16.msra.mxu0 %v3733
  %5675 = vmatpush.bf16.msra.mxu0 %v3729
  %5676 = vmatpush.bf16.msra.mxu0 %v3725
  %5677 = vmatpush.bf16.msra.mxu0 %v3721
  %5678 = vmatpush.bf16.msra.mxu0 %v3717
  %5679 = vmatmul.bf16.gmra.mxu0 %v880
  %v5680 = vpop.f32.mrf.mxu0
  %v5681 = vadd.f32 %v5668, %v5680
  %v5682 = vpop.f32.mrf.mxu0
  %5683 = vdwg.mxu0
  %5684 = vmatpush.bf16.msra.mxu0 %v3777
  %5685 = vmatpush.bf16.msra.mxu0 %v3773
  %5686 = vmatpush.bf16.msra.mxu0 %v3769
  %5687 = vmatpush.bf16.msra.mxu0 %v3765
  %5688 = vmatpush.bf16.msra.mxu0 %v3761
  %5689 = vmatpush.bf16.msra.mxu0 %v3757
  %5690 = vmatpush.bf16.msra.mxu0 %v3753
  %5691 = vmatpush.bf16.msra.mxu0 %v3749
  %5692 = vmatmul.bf16.gmra.mxu0 %v881
  %v5693 = vpop.f32.mrf.mxu0
  %v5694 = vadd.f32 %v5681, %v5693
  %v5695 = vpop.f32.mrf.mxu0
  %5696 = vdwg.mxu0
  %5697 = vmatpush.bf16.msra.mxu0 %v3809
  %5698 = vmatpush.bf16.msra.mxu0 %v3805
  %5699 = vmatpush.bf16.msra.mxu0 %v3801
  %5700 = vmatpush.bf16.msra.mxu0 %v3797
  %5701 = vmatpush.bf16.msra.mxu0 %v3793
  %5702 = vmatpush.bf16.msra.mxu0 %v3789
  %5703 = vmatpush.bf16.msra.mxu0 %v3785
  %5704 = vmatpush.bf16.msra.mxu0 %v3781
  %5705 = vmatmul.bf16.gmra.mxu0 %v882
  %v5706 = vpop.f32.mrf.mxu0
  %v5707 = vadd.f32 %v5694, %v5706
  %v5708 = vpop.f32.mrf.mxu0
  %5709 = vdwg.mxu0
  %5710 = vmatpush.bf16.msra.mxu0 %v3841
  %5711 = vmatpush.bf16.msra.mxu0 %v3837
  %5712 = vmatpush.bf16.msra.mxu0 %v3833
  %5713 = vmatpush.bf16.msra.mxu0 %v3829
  %5714 = vmatpush.bf16.msra.mxu0 %v3825
  %5715 = vmatpush.bf16.msra.mxu0 %v3821
  %5716 = vmatpush.bf16.msra.mxu0 %v3817
  %5717 = vmatpush.bf16.msra.mxu0 %v3813
  %5718 = vmatmul.bf16.gmra.mxu0 %v883
  %v5719 = vpop.f32.mrf.mxu0
  %v5720 = vadd.f32 %v5707, %v5719
  %v5721 = vpop.f32.mrf.mxu0
  %5722 = vdwg.mxu0
  %5723 = vmatpush.bf16.msra.mxu0 %v3873
  %5724 = vmatpush.bf16.msra.mxu0 %v3869
  %5725 = vmatpush.bf16.msra.mxu0 %v3865
  %5726 = vmatpush.bf16.msra.mxu0 %v3861
  %5727 = vmatpush.bf16.msra.mxu0 %v3857
  %5728 = vmatpush.bf16.msra.mxu0 %v3853
  %5729 = vmatpush.bf16.msra.mxu0 %v3849
  %5730 = vmatpush.bf16.msra.mxu0 %v3845
  %5731 = vmatmul.bf16.gmra.mxu0 %v884
  %v5732 = vpop.f32.mrf.mxu0
  %v5733 = vadd.f32 %v5720, %v5732
  %v5734 = vpop.f32.mrf.mxu0
  %5735 = vdwg.mxu0
  %5736 = vmatpush.bf16.msra.mxu0 %v3905
  %5737 = vmatpush.bf16.msra.mxu0 %v3901
  %5738 = vmatpush.bf16.msra.mxu0 %v3897
  %5739 = vmatpush.bf16.msra.mxu0 %v3893
  %5740 = vmatpush.bf16.msra.mxu0 %v3889
  %5741 = vmatpush.bf16.msra.mxu0 %v3885
  %5742 = vmatpush.bf16.msra.mxu0 %v3881
  %5743 = vmatpush.bf16.msra.mxu0 %v3877
  %5744 = vmatmul.bf16.gmra.mxu0 %v885
  %v5745 = vpop.f32.mrf.mxu0
  %v5746 = vadd.f32 %v5733, %v5745
  %v5747 = vpop.f32.mrf.mxu0
  %5748 = vdwg.mxu0
  %5749 = vmatpush.bf16.msra.mxu0 %v3937
  %5750 = vmatpush.bf16.msra.mxu0 %v3933
  %5751 = vmatpush.bf16.msra.mxu0 %v3929
  %5752 = vmatpush.bf16.msra.mxu0 %v3925
  %5753 = vmatpush.bf16.msra.mxu0 %v3921
  %5754 = vmatpush.bf16.msra.mxu0 %v3917
  %5755 = vmatpush.bf16.msra.mxu0 %v3913
  %5756 = vmatpush.bf16.msra.mxu0 %v3909
  %5757 = vmatmul.bf16.gmra.mxu0 %v886
  %v5758 = vpop.f32.mrf.mxu0
  %v5759 = vadd.f32 %v5746, %v5758
  %v5760 = vpop.f32.mrf.mxu0
  %5761 = vdwg.mxu0
  %5762 = vmatpush.bf16.msra.mxu0 %v3969
  %5763 = vmatpush.bf16.msra.mxu0 %v3965
  %5764 = vmatpush.bf16.msra.mxu0 %v3961
  %5765 = vmatpush.bf16.msra.mxu0 %v3957
  %5766 = vmatpush.bf16.msra.mxu0 %v3953
  %5767 = vmatpush.bf16.msra.mxu0 %v3949
  %5768 = vmatpush.bf16.msra.mxu0 %v3945
  %5769 = vmatpush.bf16.msra.mxu0 %v3941
  %5770 = vmatmul.bf16.gmra.mxu0 %v887
  %v5771 = vpop.f32.mrf.mxu0
  %v5772 = vadd.f32 %v5759, %v5771
  %v5773 = vpop.f32.mrf.mxu0
  %5774 = vdwg.mxu0
  %5775 = vmatpush.bf16.msra.mxu0 %v4001
  %5776 = vmatpush.bf16.msra.mxu0 %v3997
  %5777 = vmatpush.bf16.msra.mxu0 %v3993
  %5778 = vmatpush.bf16.msra.mxu0 %v3989
  %5779 = vmatpush.bf16.msra.mxu0 %v3985
  %5780 = vmatpush.bf16.msra.mxu0 %v3981
  %5781 = vmatpush.bf16.msra.mxu0 %v3977
  %5782 = vmatpush.bf16.msra.mxu0 %v3973
  %5783 = vmatmul.bf16.gmra.mxu0 %v888
  %v5784 = vpop.f32.mrf.mxu0
  %v5785 = vadd.f32 %v5772, %v5784
  %v5786 = vpop.f32.mrf.mxu0
  %5787 = vdwg.mxu0
  %5788 = vmatpush.bf16.msra.mxu0 %v4033
  %5789 = vmatpush.bf16.msra.mxu0 %v4029
  %5790 = vmatpush.bf16.msra.mxu0 %v4025
  %5791 = vmatpush.bf16.msra.mxu0 %v4021
  %5792 = vmatpush.bf16.msra.mxu0 %v4017
  %5793 = vmatpush.bf16.msra.mxu0 %v4013
  %5794 = vmatpush.bf16.msra.mxu0 %v4009
  %5795 = vmatpush.bf16.msra.mxu0 %v4005
  %5796 = vmatmul.bf16.gmra.mxu0 %v889
  %v5797 = vpop.f32.mrf.mxu0
  %v5798 = vadd.f32 %v5785, %v5797
  %v5799 = vpop.f32.mrf.mxu0
  %5800 = vdwg.mxu0
  %5801 = vmatpush.bf16.msra.mxu0 0
  %5802 = vmatpush.bf16.msra.mxu0 0
  %5803 = vmatpush.bf16.msra.mxu0 0
  %5804 = vmatpush.bf16.msra.mxu0 0
  %5805 = vmatpush.bf16.msra.mxu0 %v4049
  %5806 = vmatpush.bf16.msra.mxu0 %v4045
  %5807 = vmatpush.bf16.msra.mxu0 %v4041
  %5808 = vmatpush.bf16.msra.mxu0 %v4037
  %5809 = vmatmul.bf16.gmra.mxu0 %v4837
  %v5810 = vpop.f32.mrf.mxu0
  %v5811 = vadd.f32 %v5798, %v5810
  %v5812 = vpop.f32.mrf.mxu0
  %5813 = vdwg.mxu0
  %5814 = vmatpush.bf16.msra.mxu0 %v3298
  %5815 = vmatpush.bf16.msra.mxu0 %v3294
  %5816 = vmatpush.bf16.msra.mxu0 %v3290
  %5817 = vmatpush.bf16.msra.mxu0 %v3286
  %5818 = vmatpush.bf16.msra.mxu0 %v3282
  %5819 = vmatpush.bf16.msra.mxu0 %v3278
  %5820 = vmatpush.bf16.msra.mxu0 %v3274
  %5821 = vmatpush.bf16.msra.mxu0 %v3270
  %5822 = vmatmul.bf16.gmra.mxu0 %v866
  %v5823 = vpop.f32.mrf.mxu0
  %v5824 = vadd.f32 %v823, %v5823
  %v5825 = vpop.f32.mrf.mxu0
  %5826 = vdwg.mxu0
  %5827 = vmatpush.bf16.msra.mxu0 %v3330
  %5828 = vmatpush.bf16.msra.mxu0 %v3326
  %5829 = vmatpush.bf16.msra.mxu0 %v3322
  %5830 = vmatpush.bf16.msra.mxu0 %v3318
  %5831 = vmatpush.bf16.msra.mxu0 %v3314
  %5832 = vmatpush.bf16.msra.mxu0 %v3310
  %5833 = vmatpush.bf16.msra.mxu0 %v3306
  %5834 = vmatpush.bf16.msra.mxu0 %v3302
  %5835 = vmatmul.bf16.gmra.mxu0 %v867
  %v5836 = vpop.f32.mrf.mxu0
  %v5837 = vadd.f32 %v5824, %v5836
  %v5838 = vpop.f32.mrf.mxu0
  %5839 = vdwg.mxu0
  %5840 = vmatpush.bf16.msra.mxu0 %v3362
  %5841 = vmatpush.bf16.msra.mxu0 %v3358
  %5842 = vmatpush.bf16.msra.mxu0 %v3354
  %5843 = vmatpush.bf16.msra.mxu0 %v3350
  %5844 = vmatpush.bf16.msra.mxu0 %v3346
  %5845 = vmatpush.bf16.msra.mxu0 %v3342
  %5846 = vmatpush.bf16.msra.mxu0 %v3338
  %5847 = vmatpush.bf16.msra.mxu0 %v3334
  %5848 = vmatmul.bf16.gmra.mxu0 %v868
  %v5849 = vpop.f32.mrf.mxu0
  %v5850 = vadd.f32 %v5837, %v5849
  %v5851 = vpop.f32.mrf.mxu0
  %5852 = vdwg.mxu0
  %5853 = vmatpush.bf16.msra.mxu0 %v3394
  %5854 = vmatpush.bf16.msra.mxu0 %v3390
  %5855 = vmatpush.bf16.msra.mxu0 %v3386
  %5856 = vmatpush.bf16.msra.mxu0 %v3382
  %5857 = vmatpush.bf16.msra.mxu0 %v3378
  %5858 = vmatpush.bf16.msra.mxu0 %v3374
  %5859 = vmatpush.bf16.msra.mxu0 %v3370
  %5860 = vmatpush.bf16.msra.mxu0 %v3366
  %5861 = vmatmul.bf16.gmra.mxu0 %v869
  %v5862 = vpop.f32.mrf.mxu0
  %v5863 = vadd.f32 %v5850, %v5862
  %v5864 = vpop.f32.mrf.mxu0
  %5865 = vdwg.mxu0
  %5866 = vmatpush.bf16.msra.mxu0 %v3426
  %5867 = vmatpush.bf16.msra.mxu0 %v3422
  %5868 = vmatpush.bf16.msra.mxu0 %v3418
  %5869 = vmatpush.bf16.msra.mxu0 %v3414
  %5870 = vmatpush.bf16.msra.mxu0 %v3410
  %5871 = vmatpush.bf16.msra.mxu0 %v3406
  %5872 = vmatpush.bf16.msra.mxu0 %v3402
  %5873 = vmatpush.bf16.msra.mxu0 %v3398
  %5874 = vmatmul.bf16.gmra.mxu0 %v870
  %v5875 = vpop.f32.mrf.mxu0
  %v5876 = vadd.f32 %v5863, %v5875
  %v5877 = vpop.f32.mrf.mxu0
  %5878 = vdwg.mxu0
  %5879 = vmatpush.bf16.msra.mxu0 %v3458
  %5880 = vmatpush.bf16.msra.mxu0 %v3454
  %5881 = vmatpush.bf16.msra.mxu0 %v3450
  %5882 = vmatpush.bf16.msra.mxu0 %v3446
  %5883 = vmatpush.bf16.msra.mxu0 %v3442
  %5884 = vmatpush.bf16.msra.mxu0 %v3438
  %5885 = vmatpush.bf16.msra.mxu0 %v3434
  %5886 = vmatpush.bf16.msra.mxu0 %v3430
  %5887 = vmatmul.bf16.gmra.mxu0 %v871
  %v5888 = vpop.f32.mrf.mxu0
  %v5889 = vadd.f32 %v5876, %v5888
  %v5890 = vpop.f32.mrf.mxu0
  %5891 = vdwg.mxu0
  %5892 = vmatpush.bf16.msra.mxu0 %v3490
  %5893 = vmatpush.bf16.msra.mxu0 %v3486
  %5894 = vmatpush.bf16.msra.mxu0 %v3482
  %5895 = vmatpush.bf16.msra.mxu0 %v3478
  %5896 = vmatpush.bf16.msra.mxu0 %v3474
  %5897 = vmatpush.bf16.msra.mxu0 %v3470
  %5898 = vmatpush.bf16.msra.mxu0 %v3466
  %5899 = vmatpush.bf16.msra.mxu0 %v3462
  %5900 = vmatmul.bf16.gmra.mxu0 %v872
  %v5901 = vpop.f32.mrf.mxu0
  %v5902 = vadd.f32 %v5889, %v5901
  %v5903 = vpop.f32.mrf.mxu0
  %5904 = vdwg.mxu0
  %5905 = vmatpush.bf16.msra.mxu0 %v3522
  %5906 = vmatpush.bf16.msra.mxu0 %v3518
  %5907 = vmatpush.bf16.msra.mxu0 %v3514
  %5908 = vmatpush.bf16.msra.mxu0 %v3510
  %5909 = vmatpush.bf16.msra.mxu0 %v3506
  %5910 = vmatpush.bf16.msra.mxu0 %v3502
  %5911 = vmatpush.bf16.msra.mxu0 %v3498
  %5912 = vmatpush.bf16.msra.mxu0 %v3494
  %5913 = vmatmul.bf16.gmra.mxu0 %v873
  %v5914 = vpop.f32.mrf.mxu0
  %v5915 = vadd.f32 %v5902, %v5914
  %v5916 = vpop.f32.mrf.mxu0
  %5917 = vdwg.mxu0
  %5918 = vmatpush.bf16.msra.mxu0 %v3554
  %5919 = vmatpush.bf16.msra.mxu0 %v3550
  %5920 = vmatpush.bf16.msra.mxu0 %v3546
  %5921 = vmatpush.bf16.msra.mxu0 %v3542
  %5922 = vmatpush.bf16.msra.mxu0 %v3538
  %5923 = vmatpush.bf16.msra.mxu0 %v3534
  %5924 = vmatpush.bf16.msra.mxu0 %v3530
  %5925 = vmatpush.bf16.msra.mxu0 %v3526
  %5926 = vmatmul.bf16.gmra.mxu0 %v874
  %v5927 = vpop.f32.mrf.mxu0
  %v5928 = vadd.f32 %v5915, %v5927
  %v5929 = vpop.f32.mrf.mxu0
  %5930 = vdwg.mxu0
  %5931 = vmatpush.bf16.msra.mxu0 %v3586
  %5932 = vmatpush.bf16.msra.mxu0 %v3582
  %5933 = vmatpush.bf16.msra.mxu0 %v3578
  %5934 = vmatpush.bf16.msra.mxu0 %v3574
  %5935 = vmatpush.bf16.msra.mxu0 %v3570
  %5936 = vmatpush.bf16.msra.mxu0 %v3566
  %5937 = vmatpush.bf16.msra.mxu0 %v3562
  %5938 = vmatpush.bf16.msra.mxu0 %v3558
  %5939 = vmatmul.bf16.gmra.mxu0 %v875
  %v5940 = vpop.f32.mrf.mxu0
  %v5941 = vadd.f32 %v5928, %v5940
  %v5942 = vpop.f32.mrf.mxu0
  %5943 = vdwg.mxu0
  %5944 = vmatpush.bf16.msra.mxu0 %v3618
  %5945 = vmatpush.bf16.msra.mxu0 %v3614
  %5946 = vmatpush.bf16.msra.mxu0 %v3610
  %5947 = vmatpush.bf16.msra.mxu0 %v3606
  %5948 = vmatpush.bf16.msra.mxu0 %v3602
  %5949 = vmatpush.bf16.msra.mxu0 %v3598
  %5950 = vmatpush.bf16.msra.mxu0 %v3594
  %5951 = vmatpush.bf16.msra.mxu0 %v3590
  %5952 = vmatmul.bf16.gmra.mxu0 %v876
  %v5953 = vpop.f32.mrf.mxu0
  %v5954 = vadd.f32 %v5941, %v5953
  %v5955 = vpop.f32.mrf.mxu0
  %5956 = vdwg.mxu0
  %5957 = vmatpush.bf16.msra.mxu0 %v3650
  %5958 = vmatpush.bf16.msra.mxu0 %v3646
  %5959 = vmatpush.bf16.msra.mxu0 %v3642
  %5960 = vmatpush.bf16.msra.mxu0 %v3638
  %5961 = vmatpush.bf16.msra.mxu0 %v3634
  %5962 = vmatpush.bf16.msra.mxu0 %v3630
  %5963 = vmatpush.bf16.msra.mxu0 %v3626
  %5964 = vmatpush.bf16.msra.mxu0 %v3622
  %5965 = vmatmul.bf16.gmra.mxu0 %v877
  %v5966 = vpop.f32.mrf.mxu0
  %v5967 = vadd.f32 %v5954, %v5966
  %v5968 = vpop.f32.mrf.mxu0
  %5969 = vdwg.mxu0
  %5970 = vmatpush.bf16.msra.mxu0 %v3682
  %5971 = vmatpush.bf16.msra.mxu0 %v3678
  %5972 = vmatpush.bf16.msra.mxu0 %v3674
  %5973 = vmatpush.bf16.msra.mxu0 %v3670
  %5974 = vmatpush.bf16.msra.mxu0 %v3666
  %5975 = vmatpush.bf16.msra.mxu0 %v3662
  %5976 = vmatpush.bf16.msra.mxu0 %v3658
  %5977 = vmatpush.bf16.msra.mxu0 %v3654
  %5978 = vmatmul.bf16.gmra.mxu0 %v878
  %v5979 = vpop.f32.mrf.mxu0
  %v5980 = vadd.f32 %v5967, %v5979
  %v5981 = vpop.f32.mrf.mxu0
  %5982 = vdwg.mxu0
  %5983 = vmatpush.bf16.msra.mxu0 %v3714
  %5984 = vmatpush.bf16.msra.mxu0 %v3710
  %5985 = vmatpush.bf16.msra.mxu0 %v3706
  %5986 = vmatpush.bf16.msra.mxu0 %v3702
  %5987 = vmatpush.bf16.msra.mxu0 %v3698
  %5988 = vmatpush.bf16.msra.mxu0 %v3694
  %5989 = vmatpush.bf16.msra.mxu0 %v3690
  %5990 = vmatpush.bf16.msra.mxu0 %v3686
  %5991 = vmatmul.bf16.gmra.mxu0 %v879
  %v5992 = vpop.f32.mrf.mxu0
  %v5993 = vadd.f32 %v5980, %v5992
  %v5994 = vpop.f32.mrf.mxu0
  %5995 = vdwg.mxu0
  %5996 = vmatpush.bf16.msra.mxu0 %v3746
  %5997 = vmatpush.bf16.msra.mxu0 %v3742
  %5998 = vmatpush.bf16.msra.mxu0 %v3738
  %5999 = vmatpush.bf16.msra.mxu0 %v3734
  %6000 = vmatpush.bf16.msra.mxu0 %v3730
  %6001 = vmatpush.bf16.msra.mxu0 %v3726
  %6002 = vmatpush.bf16.msra.mxu0 %v3722
  %6003 = vmatpush.bf16.msra.mxu0 %v3718
  %6004 = vmatmul.bf16.gmra.mxu0 %v880
  %v6005 = vpop.f32.mrf.mxu0
  %v6006 = vadd.f32 %v5993, %v6005
  %v6007 = vpop.f32.mrf.mxu0
  %6008 = vdwg.mxu0
  %6009 = vmatpush.bf16.msra.mxu0 %v3778
  %6010 = vmatpush.bf16.msra.mxu0 %v3774
  %6011 = vmatpush.bf16.msra.mxu0 %v3770
  %6012 = vmatpush.bf16.msra.mxu0 %v3766
  %6013 = vmatpush.bf16.msra.mxu0 %v3762
  %6014 = vmatpush.bf16.msra.mxu0 %v3758
  %6015 = vmatpush.bf16.msra.mxu0 %v3754
  %6016 = vmatpush.bf16.msra.mxu0 %v3750
  %6017 = vmatmul.bf16.gmra.mxu0 %v881
  %v6018 = vpop.f32.mrf.mxu0
  %v6019 = vadd.f32 %v6006, %v6018
  %v6020 = vpop.f32.mrf.mxu0
  %6021 = vdwg.mxu0
  %6022 = vmatpush.bf16.msra.mxu0 %v3810
  %6023 = vmatpush.bf16.msra.mxu0 %v3806
  %6024 = vmatpush.bf16.msra.mxu0 %v3802
  %6025 = vmatpush.bf16.msra.mxu0 %v3798
  %6026 = vmatpush.bf16.msra.mxu0 %v3794
  %6027 = vmatpush.bf16.msra.mxu0 %v3790
  %6028 = vmatpush.bf16.msra.mxu0 %v3786
  %6029 = vmatpush.bf16.msra.mxu0 %v3782
  %6030 = vmatmul.bf16.gmra.mxu0 %v882
  %v6031 = vpop.f32.mrf.mxu0
  %v6032 = vadd.f32 %v6019, %v6031
  %v6033 = vpop.f32.mrf.mxu0
  %6034 = vdwg.mxu0
  %6035 = vmatpush.bf16.msra.mxu0 %v3842
  %6036 = vmatpush.bf16.msra.mxu0 %v3838
  %6037 = vmatpush.bf16.msra.mxu0 %v3834
  %6038 = vmatpush.bf16.msra.mxu0 %v3830
  %6039 = vmatpush.bf16.msra.mxu0 %v3826
  %6040 = vmatpush.bf16.msra.mxu0 %v3822
  %6041 = vmatpush.bf16.msra.mxu0 %v3818
  %6042 = vmatpush.bf16.msra.mxu0 %v3814
  %6043 = vmatmul.bf16.gmra.mxu0 %v883
  %v6044 = vpop.f32.mrf.mxu0
  %v6045 = vadd.f32 %v6032, %v6044
  %v6046 = vpop.f32.mrf.mxu0
  %6047 = vdwg.mxu0
  %6048 = vmatpush.bf16.msra.mxu0 %v3874
  %6049 = vmatpush.bf16.msra.mxu0 %v3870
  %6050 = vmatpush.bf16.msra.mxu0 %v3866
  %6051 = vmatpush.bf16.msra.mxu0 %v3862
  %6052 = vmatpush.bf16.msra.mxu0 %v3858
  %6053 = vmatpush.bf16.msra.mxu0 %v3854
  %6054 = vmatpush.bf16.msra.mxu0 %v3850
  %6055 = vmatpush.bf16.msra.mxu0 %v3846
  %6056 = vmatmul.bf16.gmra.mxu0 %v884
  %v6057 = vpop.f32.mrf.mxu0
  %v6058 = vadd.f32 %v6045, %v6057
  %v6059 = vpop.f32.mrf.mxu0
  %6060 = vdwg.mxu0
  %6061 = vmatpush.bf16.msra.mxu0 %v3906
  %6062 = vmatpush.bf16.msra.mxu0 %v3902
  %6063 = vmatpush.bf16.msra.mxu0 %v3898
  %6064 = vmatpush.bf16.msra.mxu0 %v3894
  %6065 = vmatpush.bf16.msra.mxu0 %v3890
  %6066 = vmatpush.bf16.msra.mxu0 %v3886
  %6067 = vmatpush.bf16.msra.mxu0 %v3882
  %6068 = vmatpush.bf16.msra.mxu0 %v3878
  %6069 = vmatmul.bf16.gmra.mxu0 %v885
  %v6070 = vpop.f32.mrf.mxu0
  %v6071 = vadd.f32 %v6058, %v6070
  %v6072 = vpop.f32.mrf.mxu0
  %6073 = vdwg.mxu0
  %6074 = vmatpush.bf16.msra.mxu0 %v3938
  %6075 = vmatpush.bf16.msra.mxu0 %v3934
  %6076 = vmatpush.bf16.msra.mxu0 %v3930
  %6077 = vmatpush.bf16.msra.mxu0 %v3926
  %6078 = vmatpush.bf16.msra.mxu0 %v3922
  %6079 = vmatpush.bf16.msra.mxu0 %v3918
  %6080 = vmatpush.bf16.msra.mxu0 %v3914
  %6081 = vmatpush.bf16.msra.mxu0 %v3910
  %6082 = vmatmul.bf16.gmra.mxu0 %v886
  %v6083 = vpop.f32.mrf.mxu0
  %v6084 = vadd.f32 %v6071, %v6083
  %v6085 = vpop.f32.mrf.mxu0
  %6086 = vdwg.mxu0
  %6087 = vmatpush.bf16.msra.mxu0 %v3970
  %6088 = vmatpush.bf16.msra.mxu0 %v3966
  %6089 = vmatpush.bf16.msra.mxu0 %v3962
  %6090 = vmatpush.bf16.msra.mxu0 %v3958
  %6091 = vmatpush.bf16.msra.mxu0 %v3954
  %6092 = vmatpush.bf16.msra.mxu0 %v3950
  %6093 = vmatpush.bf16.msra.mxu0 %v3946
  %6094 = vmatpush.bf16.msra.mxu0 %v3942
  %6095 = vmatmul.bf16.gmra.mxu0 %v887
  %v6096 = vpop.f32.mrf.mxu0
  %v6097 = vadd.f32 %v6084, %v6096
  %v6098 = vpop.f32.mrf.mxu0
  %6099 = vdwg.mxu0
  %6100 = vmatpush.bf16.msra.mxu0 %v4002
  %6101 = vmatpush.bf16.msra.mxu0 %v3998
  %6102 = vmatpush.bf16.msra.mxu0 %v3994
  %6103 = vmatpush.bf16.msra.mxu0 %v3990
  %6104 = vmatpush.bf16.msra.mxu0 %v3986
  %6105 = vmatpush.bf16.msra.mxu0 %v3982
  %6106 = vmatpush.bf16.msra.mxu0 %v3978
  %6107 = vmatpush.bf16.msra.mxu0 %v3974
  %6108 = vmatmul.bf16.gmra.mxu0 %v888
  %v6109 = vpop.f32.mrf.mxu0
  %v6110 = vadd.f32 %v6097, %v6109
  %v6111 = vpop.f32.mrf.mxu0
  %6112 = vdwg.mxu0
  %6113 = vmatpush.bf16.msra.mxu0 %v4034
  %6114 = vmatpush.bf16.msra.mxu0 %v4030
  %6115 = vmatpush.bf16.msra.mxu0 %v4026
  %6116 = vmatpush.bf16.msra.mxu0 %v4022
  %6117 = vmatpush.bf16.msra.mxu0 %v4018
  %6118 = vmatpush.bf16.msra.mxu0 %v4014
  %6119 = vmatpush.bf16.msra.mxu0 %v4010
  %6120 = vmatpush.bf16.msra.mxu0 %v4006
  %6121 = vmatmul.bf16.gmra.mxu0 %v889
  %v6122 = vpop.f32.mrf.mxu0
  %v6123 = vadd.f32 %v6110, %v6122
  %v6124 = vpop.f32.mrf.mxu0
  %6125 = vdwg.mxu0
  %6126 = vmatpush.bf16.msra.mxu0 0
  %6127 = vmatpush.bf16.msra.mxu0 0
  %6128 = vmatpush.bf16.msra.mxu0 0
  %6129 = vmatpush.bf16.msra.mxu0 0
  %6130 = vmatpush.bf16.msra.mxu0 %v4050
  %6131 = vmatpush.bf16.msra.mxu0 %v4046
  %6132 = vmatpush.bf16.msra.mxu0 %v4042
  %6133 = vmatpush.bf16.msra.mxu0 %v4038
  %6134 = vmatmul.bf16.gmra.mxu0 %v4837
  %v6135 = vpop.f32.mrf.mxu0
  %v6136 = vadd.f32 %v6123, %v6135
  %v6137 = vpop.f32.mrf.mxu0
  %6138 = vdwg.mxu0
  %v6139 = vmin.f32 %v5161, 20.0
  %v6140 = vmin.f32 %v5486, 20.0
  %v6141 = vmin.f32 %v5811, 20.0
  %v6142 = vmin.f32 %v6136, 20.0
  %v6143 = vmul.f32 %v6139, 1.442695
  %v6144 = vpow.pop %v6143
  %v6145 = vmul.f32 %v6140, 1.442695
  %v6146 = vpow.pop %v6145
  %v6147 = vmul.f32 %v6141, 1.442695
  %v6148 = vpow.pop %v6147
  %v6149 = vmul.f32 %v6142, 1.442695
  %v6150 = vpow.pop %v6149
  %v6151 = vadd.f32 %v6144, 2.0
  %v6152 = vadd.f32 %v6146, 2.0
  %v6153 = vadd.f32 %v6148, 2.0
  %v6154 = vadd.f32 %v6150, 2.0
  %v6155 = vmul.f32 %v6144, %v6151
  %v6156 = vmul.f32 %v6146, %v6152
  %v6157 = vmul.f32 %v6148, %v6153
  %v6158 = vmul.f32 %v6150, %v6154
  %v6159 = vmul.f32 %v5161, %v6155
  %v6160 = vmul.f32 %v5486, %v6156
  %v6161 = vmul.f32 %v5811, %v6157
  %v6162 = vmul.f32 %v6136, %v6158
  %v6163 = vadd.f32 %v6155, 2.0
  %v6164 = vadd.f32 %v6156, 2.0
  %v6165 = vadd.f32 %v6157, 2.0
  %v6166 = vadd.f32 %v6158, 2.0
  %v6167 = vrcp.pop %v6163
  %v6168 = vrcp.pop %v6164
  %v6169 = vrcp.pop %v6165
  %v6170 = vrcp.pop %v6166
  %v6171 = vmul.f32 %v6159, %v6167
  %v6172 = vmul.f32 %v6160, %v6168
  %v6173 = vmul.f32 %v6161, %v6169
  %v6174 = vmul.f32 %v6162, %v6170
  %v6175 = vpack.c.bf16 %v6171, %v6171
  %v6176 = vpack.c.bf16 %v6172, %v6172
  %v6177 = vpack.c.bf16 %v6173, %v6173
  %v6178 = vpack.c.bf16 %v6174, %v6174
  %v6179 = vld [vmem:[%s3] sm:$0xf]
  %v6180 = vld [vmem:[%s3 + $0x4] sm:$0xf]
  %v6181 = vld [vmem:[%s3 + $0x8] sm:$0xf]
  %v6182 = vld [vmem:[%s3 + $0xc] sm:$0xf]
  %v6183 = vld [vmem:[%s3 + $0x10] sm:$0xf]
  %v6184 = vld [vmem:[%s3 + $0x14] sm:$0xf]
  %v6185 = vld [vmem:[%s3 + $0x18] sm:$0xf]
  %v6186 = vld [vmem:[%s3 + $0x1c] sm:$0xf]
  %v6187 = vld [vmem:[%s3 + $0x20] sm:$0xf]
  %v6188 = vld [vmem:[%s3 + $0x24] sm:$0xf]
  %v6189 = vld [vmem:[%s3 + $0x28] sm:$0xf]
  %v6190 = vld [vmem:[%s3 + $0x2c] sm:$0xf]
  %v6191 = vld [vmem:[%s3 + $0x30] sm:$0xf]
  %v6192 = vld [vmem:[%s3 + $0x34] sm:$0xf]
  %v6193 = vld [vmem:[%s3 + $0x38] sm:$0xf]
  %v6194 = vld [vmem:[%s3 + $0x3c] sm:$0xf]
  %v6195 = vld [vmem:[%s3 + $0x40] sm:$0xf]
  %v6196 = vld [vmem:[%s3 + $0x44] sm:$0xf]
  %v6197 = vld [vmem:[%s3 + $0x48] sm:$0xf]
  %v6198 = vld [vmem:[%s3 + $0x4c] sm:$0xf]
  %v6199 = vld [vmem:[%s3 + $0x50] sm:$0xf]
  %v6200 = vld [vmem:[%s3 + $0x54] sm:$0xf]
  %v6201 = vld [vmem:[%s3 + $0x58] sm:$0xf]
  %v6202 = vld [vmem:[%s3 + $0x5c] sm:$0xf]
  %v6203 = vld [vmem:[%s3 + $0x60] sm:$0xf]
  %v6204 = vld [vmem:[%s3 + $0x64] sm:$0xf]
  %v6205 = vld [vmem:[%s3 + $0x68] sm:$0xf]
  %v6206 = vld [vmem:[%s3 + $0x6c] sm:$0xf]
  %v6207 = vld [vmem:[%s3 + $0x70] sm:$0xf]
  %v6208 = vld [vmem:[%s3 + $0x74] sm:$0xf]
  %v6209 = vld [vmem:[%s3 + $0x78] sm:$0xf]
  %v6210 = vld [vmem:[%s3 + $0x7c] sm:$0xf]
  %v6211 = vld [vmem:[%s3 + $0x80] sm:$0xf]
  %v6212 = vld [vmem:[%s3 + $0x84] sm:$0xf]
  %v6213 = vld [vmem:[%s3 + $0x88] sm:$0xf]
  %v6214 = vld [vmem:[%s3 + $0x8c] sm:$0xf]
  %v6215 = vld [vmem:[%s3 + $0x90] sm:$0xf]
  %v6216 = vld [vmem:[%s3 + $0x94] sm:$0xf]
  %v6217 = vld [vmem:[%s3 + $0x98] sm:$0xf]
  %v6218 = vld [vmem:[%s3 + $0x9c] sm:$0xf]
  %v6219 = vld [vmem:[%s3 + $0xa0] sm:$0xf]
  %v6220 = vld [vmem:[%s3 + $0xa4] sm:$0xf]
  %v6221 = vld [vmem:[%s3 + $0xa8] sm:$0xf]
  %v6222 = vld [vmem:[%s3 + $0xac] sm:$0xf]
  %v6223 = vld [vmem:[%s3 + $0xb0] sm:$0xf]
  %v6224 = vld [vmem:[%s3 + $0xb4] sm:$0xf]
  %v6225 = vld [vmem:[%s3 + $0xb8] sm:$0xf]
  %v6226 = vld [vmem:[%s3 + $0xbc] sm:$0xf]
  %v6227 = vld [vmem:[%s3 + $0xc0] sm:$0xf]
  %v6228 = vld [vmem:[%s3 + $0xc4] sm:$0xf]
  %v6229 = vld [vmem:[%s3 + $0xc8] sm:$0xf]
  %v6230 = vld [vmem:[%s3 + $0xcc] sm:$0xf]
  %v6231 = vld [vmem:[%s3 + $0xd0] sm:$0xf]
  %v6232 = vld [vmem:[%s3 + $0xd4] sm:$0xf]
  %v6233 = vld [vmem:[%s3 + $0xd8] sm:$0xf]
  %v6234 = vld [vmem:[%s3 + $0xdc] sm:$0xf]
  %v6235 = vld [vmem:[%s3 + $0xe0] sm:$0xf]
  %v6236 = vld [vmem:[%s3 + $0xe4] sm:$0xf]
  %v6237 = vld [vmem:[%s3 + $0xe8] sm:$0xf]
  %v6238 = vld [vmem:[%s3 + $0xec] sm:$0xf]
  %v6239 = vld [vmem:[%s3 + $0xf0] sm:$0xf]
  %v6240 = vld [vmem:[%s3 + $0xf4] sm:$0xf]
  %v6241 = vld [vmem:[%s3 + $0xf8] sm:$0xf]
  %v6242 = vld [vmem:[%s3 + $0xfc] sm:$0xf]
  %v6243 = vld [vmem:[%s4] sm:$0x1]
  %v6245 = vperm.slane %v6243, 0
  %v6311 = vunpack.c.l.b16 %v6179
  %v6312 = vunpack.c.l.b16 %v6180
  %v6313 = vunpack.c.l.b16 %v6181
  %v6314 = vunpack.c.l.b16 %v6182
  %v6315 = vunpack.c.l.b16 %v6183
  %v6316 = vunpack.c.l.b16 %v6184
  %v6317 = vunpack.c.l.b16 %v6185
  %v6318 = vunpack.c.l.b16 %v6186
  %v6319 = vunpack.c.l.b16 %v6187
  %v6320 = vunpack.c.l.b16 %v6188
  %v6321 = vunpack.c.l.b16 %v6189
  %v6322 = vunpack.c.l.b16 %v6190
  %v6323 = vunpack.c.l.b16 %v6191
  %v6324 = vunpack.c.l.b16 %v6192
  %v6325 = vunpack.c.l.b16 %v6193
  %v6326 = vunpack.c.l.b16 %v6194
  %v6327 = vunpack.c.l.b16 %v6195
  %v6328 = vunpack.c.l.b16 %v6196
  %v6329 = vunpack.c.l.b16 %v6197
  %v6330 = vunpack.c.l.b16 %v6198
  %v6331 = vunpack.c.l.b16 %v6199
  %v6332 = vunpack.c.l.b16 %v6200
  %v6333 = vunpack.c.l.b16 %v6201
  %v6334 = vunpack.c.l.b16 %v6202
  %v6335 = vunpack.c.l.b16 %v6203
  %v6336 = vunpack.c.l.b16 %v6204
  %v6337 = vunpack.c.l.b16 %v6205
  %v6338 = vunpack.c.l.b16 %v6206
  %v6339 = vunpack.c.l.b16 %v6207
  %v6340 = vunpack.c.l.b16 %v6208
  %v6341 = vunpack.c.l.b16 %v6209
  %v6342 = vunpack.c.l.b16 %v6210
  %v6343 = vunpack.c.l.b16 %v6211
  %v6344 = vunpack.c.l.b16 %v6212
  %v6345 = vunpack.c.l.b16 %v6213
  %v6346 = vunpack.c.l.b16 %v6214
  %v6347 = vunpack.c.l.b16 %v6215
  %v6348 = vunpack.c.l.b16 %v6216
  %v6349 = vunpack.c.l.b16 %v6217
  %v6350 = vunpack.c.l.b16 %v6218
  %v6351 = vunpack.c.l.b16 %v6219
  %v6352 = vunpack.c.l.b16 %v6220
  %v6353 = vunpack.c.l.b16 %v6221
  %v6354 = vunpack.c.l.b16 %v6222
  %v6355 = vunpack.c.l.b16 %v6223
  %v6356 = vunpack.c.l.b16 %v6224
  %v6357 = vunpack.c.l.b16 %v6225
  %v6358 = vunpack.c.l.b16 %v6226
  %v6359 = vunpack.c.l.b16 %v6227
  %v6360 = vunpack.c.l.b16 %v6228
  %v6361 = vunpack.c.l.b16 %v6229
  %v6362 = vunpack.c.l.b16 %v6230
  %v6363 = vunpack.c.l.b16 %v6231
  %v6364 = vunpack.c.l.b16 %v6232
  %v6365 = vunpack.c.l.b16 %v6233
  %v6366 = vunpack.c.l.b16 %v6234
  %v6367 = vunpack.c.l.b16 %v6235
  %v6368 = vunpack.c.l.b16 %v6236
  %v6369 = vunpack.c.l.b16 %v6237
  %v6370 = vunpack.c.l.b16 %v6238
  %v6371 = vunpack.c.l.b16 %v6239
  %v6372 = vunpack.c.l.b16 %v6240
  %v6373 = vunpack.c.l.b16 %v6241
  %v6374 = vunpack.c.l.b16 %v6242
  %v6375 = vpack.c.b16 %v6312, %v6311
  %v6376 = vpack.c.b16 %v6314, %v6313
  %v6377 = vpack.c.b16 %v6316, %v6315
  %v6378 = vpack.c.b16 %v6318, %v6317
  %v6379 = vpack.c.b16 %v6320, %v6319
  %v6380 = vpack.c.b16 %v6322, %v6321
  %v6381 = vpack.c.b16 %v6324, %v6323
  %v6382 = vpack.c.b16 %v6326, %v6325
  %v6383 = vpack.c.b16 %v6328, %v6327
  %v6384 = vpack.c.b16 %v6330, %v6329
  %v6385 = vpack.c.b16 %v6332, %v6331
  %v6386 = vpack.c.b16 %v6334, %v6333
  %v6387 = vpack.c.b16 %v6336, %v6335
  %v6388 = vpack.c.b16 %v6338, %v6337
  %v6389 = vpack.c.b16 %v6340, %v6339
  %v6390 = vpack.c.b16 %v6342, %v6341
  %v6391 = vpack.c.b16 %v6344, %v6343
  %v6392 = vpack.c.b16 %v6346, %v6345
  %v6393 = vpack.c.b16 %v6348, %v6347
  %v6394 = vpack.c.b16 %v6350, %v6349
  %v6395 = vpack.c.b16 %v6352, %v6351
  %v6396 = vpack.c.b16 %v6354, %v6353
  %v6397 = vpack.c.b16 %v6356, %v6355
  %v6398 = vpack.c.b16 %v6358, %v6357
  %v6399 = vpack.c.b16 %v6360, %v6359
  %v6400 = vpack.c.b16 %v6362, %v6361
  %v6401 = vpack.c.b16 %v6364, %v6363
  %v6402 = vpack.c.b16 %v6366, %v6365
  %v6403 = vpack.c.b16 %v6368, %v6367
  %v6404 = vpack.c.b16 %v6370, %v6369
  %v6405 = vpack.c.b16 %v6372, %v6371
  %v6406 = vpack.c.b16 %v6374, %v6373
  %6439 = vmatpush.bf16.msra.mxu0 %v6382
  %6440 = vmatpush.bf16.msra.mxu0 %v6381
  %6441 = vmatpush.bf16.msra.mxu0 %v6380
  %6442 = vmatpush.bf16.msra.mxu0 %v6379
  %6443 = vmatpush.bf16.msra.mxu0 %v6378
  %6444 = vmatpush.bf16.msra.mxu0 %v6377
  %6445 = vmatpush.bf16.msra.mxu0 %v6376
  %6446 = vmatpush.bf16.msra.mxu0 %v6375
  %6447 = vmatmul.bf16.gmra.mxu0 %v6175
  %v6448 = vpop.f32.mrf.mxu0
  %v6449 = vadd.f32 %v6245, %v6448
  %v6450 = vpop.f32.mrf.mxu0
  %6451 = vdwg.mxu0
  %6452 = vmatpush.bf16.msra.mxu0 %v6390
  %6453 = vmatpush.bf16.msra.mxu0 %v6389
  %6454 = vmatpush.bf16.msra.mxu0 %v6388
  %6455 = vmatpush.bf16.msra.mxu0 %v6387
  %6456 = vmatpush.bf16.msra.mxu0 %v6386
  %6457 = vmatpush.bf16.msra.mxu0 %v6385
  %6458 = vmatpush.bf16.msra.mxu0 %v6384
  %6459 = vmatpush.bf16.msra.mxu0 %v6383
  %6460 = vmatmul.bf16.gmra.mxu0 %v6176
  %v6461 = vpop.f32.mrf.mxu0
  %v6462 = vadd.f32 %v6449, %v6461
  %v6463 = vpop.f32.mrf.mxu0
  %6464 = vdwg.mxu0
  %6465 = vmatpush.bf16.msra.mxu0 %v6398
  %6466 = vmatpush.bf16.msra.mxu0 %v6397
  %6467 = vmatpush.bf16.msra.mxu0 %v6396
  %6468 = vmatpush.bf16.msra.mxu0 %v6395
  %6469 = vmatpush.bf16.msra.mxu0 %v6394
  %6470 = vmatpush.bf16.msra.mxu0 %v6393
  %6471 = vmatpush.bf16.msra.mxu0 %v6392
  %6472 = vmatpush.bf16.msra.mxu0 %v6391
  %6473 = vmatmul.bf16.gmra.mxu0 %v6177
  %v6474 = vpop.f32.mrf.mxu0
  %v6475 = vadd.f32 %v6462, %v6474
  %v6476 = vpop.f32.mrf.mxu0
  %6477 = vdwg.mxu0
  %6478 = vmatpush.bf16.msra.mxu0 %v6406
  %6479 = vmatpush.bf16.msra.mxu0 %v6405
  %6480 = vmatpush.bf16.msra.mxu0 %v6404
  %6481 = vmatpush.bf16.msra.mxu0 %v6403
  %6482 = vmatpush.bf16.msra.mxu0 %v6402
  %6483 = vmatpush.bf16.msra.mxu0 %v6401
  %6484 = vmatpush.bf16.msra.mxu0 %v6400
  %6485 = vmatpush.bf16.msra.mxu0 %v6399
  %6486 = vmatmul.bf16.gmra.mxu0 %v6178
  %v6487 = vpop.f32.mrf.mxu0
  %v6488 = vadd.f32 %v6475, %v6487
  %v6489 = vpop.f32.mrf.mxu0
  %6490 = vdwg.mxu0
  %6491 = vst [vmem:[%s5] sm:$0xff] %v6488
  // Predicated region
  $region22: #{value_network_forward.7} parent=0 // pred_check
    _
  $region23: #{value_network_forward.7} parent=0 // pred_check_branch
    %6493 = sbr.rel (0) target = $region25
  $region24: #{value_network_forward.7} parent=0 // pred_region
    _
  $region25: #{value_network_forward.7} parent=0 // pred_fallthru
    _
  // Predicated region
  $region26: #{value_network_forward.7} parent=0 // pred_check
    _
  $region27: #{value_network_forward.7} parent=0 // pred_check_branch
    %6495 = sbr.rel (0) target = $region29
  $region28: #{value_network_forward.7} parent=0 // pred_region
    _
  $region29: #{value_network_forward.7} parent=0 // pred_fallthru
    _

</llo_original>
